<compile_context>
chip_gen: v6e
topology: v6e:2x2x1
jax: 0.10.0
libtpu: 0.0.40
codegen_flags: <defaults>
</compile_context>

<pallas_src>
import jax
import jax.numpy as jnp
from jax.experimental import pallas as pl
from jax.experimental.pallas import tpu as pltpu

# --------------------------- scaled-down ConViT configuration ---------------------------
IMG = 16            # image size          (convit_base: 224)
PATCH = 4           # patch size          (convit_base: 16)
IN_CH = 1           # in_chans=1 as in the PyTorch module
DIM = 32            # embed dim           (convit_base: 768)
HEADS = 4           # attention heads     (convit_base: 16)
HEAD_DIM = DIM // HEADS
N_PATCH = (IMG // PATCH) ** 2            # 16 patch tokens
MLP_HIDDEN = 4 * DIM                     # mlp_ratio = 4
LOCAL_BLOCKS = 1                         # GPSA blocks   (convit_base: 10)
GLOBAL_BLOCKS = 1                        # MHSA blocks   (convit_base: 2)
HEAD_HIDDEN = 1024                       # custom head hidden width (as in the module)
NUM_CLASSES = 3
LN_EPS = 1e-6
BN_EPS = 1e-5
SCALE = HEAD_DIM ** -0.5


# ------------------------------- shared math helpers ------------------------------------
# (used both inside the Pallas kernel and by the pure-jnp reference)
def _softmax_last(x):
    m = jnp.max(x, axis=-1, keepdims=True)
    e = jnp.exp(x - m)
    return e / jnp.sum(e, axis=-1, keepdims=True)


def _sigmoid(x):
    return 1.0 / (1.0 + jnp.exp(-x))


def _gelu(x):
    # tanh-form GELU: exp/tanh run on the EUP (separate VLIW slot).
    c = 0.7978845608028654  # sqrt(2/pi)
    return 0.5 * x * (1.0 + jnp.tanh(c * (x + 0.044715 * x * x * x)))


def _layernorm(x, g, b):
    mu = jnp.mean(x, axis=-1, keepdims=True)
    xc = x - mu
    var = jnp.mean(xc * xc, axis=-1, keepdims=True)
    return xc * jax.lax.rsqrt(var + LN_EPS) * g + b


# ------------------------------- fused forward kernel -----------------------------------
def _convit_kernel(*refs):
    """Entire ConViT forward in one kernel; every intermediate stays in VMEM/vregs."""
    out_ref = refs[-1]
    it = iter(refs[:-1])
    nxt = lambda: next(it)[...]          # load next parameter fully into VMEM/vregs

    xp = nxt()                           # (B*N_PATCH, IN_CH*PATCH*PATCH) patch pixels
    pe_w, pe_b = nxt(), nxt()            # (PP, DIM), (1, DIM)
    pos_embed = nxt()                    # (N_PATCH, DIM)
    cls_tok = nxt()                      # (1, DIM)

    B = xp.shape[0] // N_PATCH
    N = N_PATCH

    # ---- patch embedding + positional embedding (one matmul for the whole batch) ----
    x_all = jnp.dot(xp, pe_w, preferred_element_type=jnp.float32) + pe_b   # (B*N, DIM)
    x_all = x_all + (pos_embed if B == 1
                     else jnp.concatenate([pos_embed] * B, axis=0))

    def mha_one(q, k, v, proj_w, pos_attn=None, g_sig=None):
        """Multi-head attention for one batch row-block.  Heads are static lane
        slices; per-head output folded straight into the projection (no lane concat).
        Returns the projected attention output (bias/residual added by caller)."""
        n = q.shape[0]
        y = jnp.zeros((n, DIM), jnp.float32)
        for h in range(HEADS):
            lo, hi = h * HEAD_DIM, (h + 1) * HEAD_DIM
            qh = q[:, lo:hi] * SCALE
            kh = k[:, lo:hi]
            vh = v[:, lo:hi]
            # tiny K=8 contraction; kept as one dot per head (proven lowering).
            s = jnp.einsum('nd,md->nm', qh, kh, preferred_element_type=jnp.float32)
            a = _softmax_last(s)
            if pos_attn is not None:                         # GPSA gating
                g = g_sig[0:1, h:h + 1]                      # (1,1) gate for this head
                a = (1.0 - g) * a + g * pos_attn[h]
                a = a / jnp.sum(a, axis=-1, keepdims=True)   # timm GPSA renormalization
            oh = jnp.dot(a, vh, preferred_element_type=jnp.float32)          # (n, hd)
            y = y + jnp.dot(oh, proj_w[lo:hi, :], preferred_element_type=jnp.float32)
        return y

    def mlp_residual(x, ln_g, ln_b, w1, b1, w2, b2):
        xn = _layernorm(x, ln_g, ln_b)
        hdn = _gelu(jnp.dot(xn, w1, preferred_element_type=jnp.float32) + b1)
        return x + jnp.dot(hdn, w2, preferred_element_type=jnp.float32) + b2

    # -------------------- local GPSA blocks (patch tokens only) --------------------
    # Batch stays stacked: LN / QK / V / MLP matmuls each cover the whole batch.
    for _ in range(LOCAL_BLOCKS):
        ln1_g, ln1_b = nxt(), nxt()
        qk_w, qk_b = nxt(), nxt()
        v_w, v_b = nxt(), nxt()
        pos_logits = nxt()               # (HEADS, N, N), input independent
        gating = nxt()                   # (1, HEADS)
        proj_w, proj_b = nxt(), nxt()
        ln2_g, ln2_b = nxt(), nxt()
        fc1_w, fc1_b = nxt(), nxt()
        fc2_w, fc2_b = nxt(), nxt()

        g_sig = _sigmoid(gating)                                          # (1, HEADS)
        pos_attn = [_softmax_last(pos_logits[h]) for h in range(HEADS)]   # once / block

        xn = _layernorm(x_all, ln1_g, ln1_b)                              # (B*N, DIM)
        qk = jnp.dot(xn, qk_w, preferred_element_type=jnp.float32) + qk_b  # (B*N, 2*DIM)
        v = jnp.dot(xn, v_w, preferred_element_type=jnp.float32) + v_b     # (B*N, DIM)
        y_parts = [
            mha_one(qk[b * N:(b + 1) * N, :DIM], qk[b * N:(b + 1) * N, DIM:],
                    v[b * N:(b + 1) * N, :], proj_w, pos_attn=pos_attn, g_sig=g_sig)
            for b in range(B)
        ]
        y = y_parts[0] if B == 1 else jnp.concatenate(y_parts, axis=0)
        x_all = x_all + y + proj_b
        x_all = mlp_residual(x_all, ln2_g, ln2_b, fc1_w, fc1_b, fc2_w, fc2_b)

    # ------- append cls token (as the LAST row: attention is permutation equivariant,
    #         and a tile-aligned sublane concat is the cheap/safe layout) -------
    toks = [jnp.concatenate([x_all[b * N:(b + 1) * N, :], cls_tok], axis=0)
            for b in range(B)]                                            # each (17, 32)

    # -------------------------- global MHSA blocks --------------------------
    for _ in range(GLOBAL_BLOCKS):
        ln1_g, ln1_b = nxt(), nxt()
        qkv_w, qkv_b = nxt(), nxt()
        proj_w, proj_b = nxt(), nxt()
        ln2_g, ln2_b = nxt(), nxt()
        fc1_w, fc1_b = nxt(), nxt()
        fc2_w, fc2_b = nxt(), nxt()

        for b in range(B):
            x = toks[b]                                                   # (17, 32)
            xn = _layernorm(x, ln1_g, ln1_b)
            qkv = jnp.dot(xn, qkv_w, preferred_element_type=jnp.float32) + qkv_b
            y = mha_one(qkv[:, :DIM], qkv[:, DIM:2 * DIM], qkv[:, 2 * DIM:], proj_w)
            x = x + y + proj_b
            toks[b] = mlp_residual(x, ln2_g, ln2_b, fc1_w, fc1_b, fc2_w, fc2_b)

    # ---------- final norm on the cls tokens + fused custom classification head ----------
    # Batch-stacked head: one (B, DIM)@(DIM, 1024) matmul instead of B tiny ones.
    norm_g, norm_b = nxt(), nxt()
    h1_w, h1_b = nxt(), nxt()
    prelu_a = nxt()                                                       # (1, 1)
    bn_g, bn_b, bn_rm, bn_rv = nxt(), nxt(), nxt(), nxt()
    h2_w, h2_b = nxt(), nxt()

    cls_rows = [toks[b][N:N + 1, :] for b in range(B)]
    cls_all = cls_rows[0] if B == 1 else jnp.concatenate(cls_rows, axis=0)    # (B, DIM)
    f = _layernorm(cls_all, norm_g, norm_b)                                   # (B, 32)
    z = jnp.dot(f, h1_w, preferred_element_type=jnp.float32) + h1_b           # (B, 1024)
    z = jnp.maximum(z, 0.0) + prelu_a * jnp.minimum(z, 0.0)                   # PReLU
    z = (z - bn_rm) * jax.lax.rsqrt(bn_rv + BN_EPS) * bn_g + bn_b             # BN (eval)
    out_ref[...] = jnp.dot(z, h2_w, preferred_element_type=jnp.float32) + h2_b


# --------------------------------- host-side wrapper -------------------------------------
def extract_patches(x):
    # NCHW -> (B, N, C*P*P); patch vector order (C, ph, pw) matches Conv2d weight flatten.
    B, C, H, W = x.shape
    P = PATCH
    x = x.reshape(B, C, H // P, P, W // P, P)
    x = x.transpose(0, 2, 4, 1, 3, 5)
    return x.reshape(B, (H // P) * (W // P), C * P * P)


def _flat_params(params):
    flat = [params['pe_w'], params['pe_b'], params['pos_embed'], params['cls_token']]
    for p in params['gpsa_blocks']:
        flat += [p['ln1_g'], p['ln1_b'], p['qk_w'], p['qk_b'], p['v_w'], p['v_b'],
                 p['pos_logits'], p['gating'], p['proj_w'], p['proj_b'],
                 p['ln2_g'], p['ln2_b'], p['fc1_w'], p['fc1_b'], p['fc2_w'], p['fc2_b']]
    for p in params['mhsa_blocks']:
        flat += [p['ln1_g'], p['ln1_b'], p['qkv_w'], p['qkv_b'], p['proj_w'], p['proj_b'],
                 p['ln2_g'], p['ln2_b'], p['fc1_w'], p['fc1_b'], p['fc2_w'], p['fc2_b']]
    flat += [params['norm_g'], params['norm_b']]
    h = params['head']
    flat += [h['h1_w'], h['h1_b'], h['prelu_a'], h['bn_g'], h['bn_b'],
             h['bn_rm'], h['bn_rv'], h['h2_w'], h['h2_b']]
    return flat


@jax.jit
def convit_forward(x, params):
    B = x.shape[0]
    xp = extract_patches(x).reshape(B * N_PATCH, IN_CH * PATCH * PATCH)
    return pl.pallas_call(
        _convit_kernel,
        out_shape=jax.ShapeDtypeStruct((B, NUM_CLASSES), jnp.float32),
        # no grid: single invocation, every operand lives whole in VMEM (default specs)
    )(xp, *_flat_params(params))


# ------------------------------ pure-jnp reference (check) -------------------------------
def _ref_forward(x, params):
    B = x.shape[0]
    xp = extract_patches(x).reshape(B * N_PATCH, -1)
    tok = (xp @ params['pe_w'] + params['pe_b']).reshape(B, N_PATCH, DIM)
    tok = tok + params['pos_embed'][None]

    def split(t):
        return t.reshape(B, t.shape[1], HEADS, HEAD_DIM).transpose(0, 2, 1, 3)

    def block(x, p, gpsa):
        xn = _layernorm(x, p['ln1_g'], p['ln1_b'])
        if gpsa:
            qk = xn @ p['qk_w'] + p['qk_b']
            q, k = qk[..., :DIM], qk[..., DIM:]
            v = xn @ p['v_w'] + p['v_b']
        else:
            qkv = xn @ p['qkv_w'] + p['qkv_b']
            q, k, v = qkv[..., :DIM], qkv[..., DIM:2 * DIM], qkv[..., 2 * DIM:]
        qh, kh, vh = split(q) * SCALE, split(k), split(v)
        a = _softmax_last(jnp.einsum('bhnd,bhmd->bhnm', qh, kh))
        if gpsa:
            pos_a = _softmax_last(p['pos_logits'])[None]
            g = _sigmoid(p['gating']).reshape(1, HEADS, 1, 1)
            a = (1.0 - g) * a + g * pos_a
            a = a / jnp.sum(a, axis=-1, keepdims=True)
        o = jnp.einsum('bhnm,bhmd->bhnd', a, vh).transpose(0, 2, 1, 3)
        o = o.reshape(B, x.shape[1], DIM)
        x = x + o @ p['proj_w'] + p['proj_b']
        xn2 = _layernorm(x, p['ln2_g'], p['ln2_b'])
        return x + _gelu(xn2 @ p['fc1_w'] + p['fc1_b']) @ p['fc2_w'] + p['fc2_b']

    for p in params['gpsa_blocks']:
        tok = block(tok, p, gpsa=True)
    cls = jnp.broadcast_to(params['cls_token'][None], (B, 1, DIM))
    tok = jnp.concatenate([cls, tok], axis=1)
    for p in params['mhsa_blocks']:
        tok = block(tok, p, gpsa=False)
    f = _layernorm(tok[:, 0], params['norm_g'], params['norm_b'])
    h = params['head']
    z = f @ h['h1_w'] + h['h1_b']
    z = jnp.maximum(z, 0.0) + h['prelu_a'] * jnp.minimum(z, 0.0)
    z = (z - h['bn_rm']) * jax.lax.rsqrt(h['bn_rv'] + BN_EPS) * h['bn_g'] + h['bn_b']
    return z @ h['h2_w'] + h['h2_b']


# -------------------------------- deterministic parameters -------------------------------
def rel_pos_indices(num_patches):
    g = int(num_patches ** 0.5)
    ind = jnp.arange(g)[None, :] - jnp.arange(g)[:, None]
    indx = jnp.tile(ind, (g, g))
    indy = jnp.repeat(jnp.repeat(ind, g, axis=0), g, axis=1)
    indd = indx ** 2 + indy ** 2
    return jnp.stack([indx, indy, indd], axis=-1).astype(jnp.float32)    # (N, N, 3)


def init_params(key):
    def nrm(k, shape, s=0.02):
        return s * jax.random.normal(k, shape, jnp.float32)

    keys = iter(jax.random.split(key, 64))
    rel = rel_pos_indices(N_PATCH)

    def block_params(gpsa):
        p = dict(
            ln1_g=jnp.ones((1, DIM)), ln1_b=jnp.zeros((1, DIM)),
            ln2_g=jnp.ones((1, DIM)), ln2_b=jnp.zeros((1, DIM)),
            proj_w=nrm(next(keys), (DIM, DIM)), proj_b=jnp.zeros((1, DIM)),
            fc1_w=nrm(next(keys), (DIM, MLP_HIDDEN)), fc1_b=jnp.zeros((1, MLP_HIDDEN)),
            fc2_w=nrm(next(keys), (MLP_HIDDEN, DIM)), fc2_b=jnp.zeros((1, DIM)),
        )
        if gpsa:
            p.update(
                qk_w=nrm(next(keys), (DIM, 2 * DIM)), qk_b=jnp.zeros((1, 2 * DIM)),
                v_w=nrm(next(keys), (DIM, DIM)), v_b=jnp.zeros((1, DIM)),
                gating=jnp.ones((1, HEADS)),                              # timm init
            )
            pos_w = nrm(next(keys), (3, HEADS), s=0.5)
            pos_b = jnp.zeros((HEADS,))
            # pos_proj(rel_indices) is input-independent -> precomputed as a parameter.
            p['pos_logits'] = jnp.transpose(rel @ pos_w + pos_b, (2, 0, 1))   # (H, N, N)
        else:
            p.update(qkv_w=nrm(next(keys), (DIM, 3 * DIM)), qkv_b=jnp.zeros((1, 3 * DIM)))
        return p

    return dict(
        pe_w=nrm(next(keys), (IN_CH * PATCH * PATCH, DIM)), pe_b=jnp.zeros((1, DIM)),
        pos_embed=nrm(next(keys), (N_PATCH, DIM)),
        cls_token=nrm(next(keys), (1, DIM)),
        gpsa_blocks=[block_params(True) for _ in range(LOCAL_BLOCKS)],
        mhsa_blocks=[block_params(False) for _ in range(GLOBAL_BLOCKS)],
        norm_g=jnp.ones((1, DIM)), norm_b=jnp.zeros((1, DIM)),
        head=dict(
            h1_w=nrm(next(keys), (DIM, HEAD_HIDDEN)), h1_b=jnp.zeros((1, HEAD_HIDDEN)),
            prelu_a=jnp.full((1, 1), 0.25, jnp.float32),
            bn_g=jnp.ones((1, HEAD_HIDDEN)), bn_b=jnp.zeros((1, HEAD_HIDDEN)),
            bn_rm=jnp.zeros((1, HEAD_HIDDEN)), bn_rv=jnp.ones((1, HEAD_HIDDEN)),
            h2_w=nrm(next(keys), (HEAD_HIDDEN, NUM_CLASSES)), h2_b=jnp.zeros((1, NUM_CLASSES)),
        ),
    )


if __name__ == "__main__":
    key = jax.random.PRNGKey(0)
    pkey, xkey = jax.random.split(key)
    params = init_params(pkey)
    x = jax.random.normal(xkey, (2, IN_CH, IMG, IMG), jnp.float32)   # NCHW like PyTorch
    out = jax.block_until_ready(convit_forward(x, params))
    ref = jax.block_until_ready(_ref_forward(x, params))
    assert out.shape == (2, NUM_CLASSES)
    assert bool(jnp.all(jnp.isfinite(out)))
    assert bool(jnp.allclose(out, ref, rtol=2e-3, atol=2e-3)), (out, ref)
    print("KERNEL_OK")
</pallas_src>

<mosaic_0001>
module attributes {stable_mosaic.version = 11 : i64} {
  func.func @_convit_kernel(%arg0: memref<32x16xf32, #tpu.memory_space<vmem>>, %arg1: memref<16x32xf32, #tpu.memory_space<vmem>>, %arg2: memref<1x32xf32, #tpu.memory_space<vmem>>, %arg3: memref<16x32xf32, #tpu.memory_space<vmem>>, %arg4: memref<1x32xf32, #tpu.memory_space<vmem>>, %arg5: memref<1x32xf32, #tpu.memory_space<vmem>>, %arg6: memref<1x32xf32, #tpu.memory_space<vmem>>, %arg7: memref<32x64xf32, #tpu.memory_space<vmem>>, %arg8: memref<1x64xf32, #tpu.memory_space<vmem>>, %arg9: memref<32x32xf32, #tpu.memory_space<vmem>>, %arg10: memref<1x32xf32, #tpu.memory_space<vmem>>, %arg11: memref<4x16x16xf32, #tpu.memory_space<vmem>>, %arg12: memref<1x4xf32, #tpu.memory_space<vmem>>, %arg13: memref<32x32xf32, #tpu.memory_space<vmem>>, %arg14: memref<1x32xf32, #tpu.memory_space<vmem>>, %arg15: memref<1x32xf32, #tpu.memory_space<vmem>>, %arg16: memref<1x32xf32, #tpu.memory_space<vmem>>, %arg17: memref<32x128xf32, #tpu.memory_space<vmem>>, %arg18: memref<1x128xf32, #tpu.memory_space<vmem>>, %arg19: memref<128x32xf32, #tpu.memory_space<vmem>>, %arg20: memref<1x32xf32, #tpu.memory_space<vmem>>, %arg21: memref<1x32xf32, #tpu.memory_space<vmem>>, %arg22: memref<1x32xf32, #tpu.memory_space<vmem>>, %arg23: memref<32x96xf32, #tpu.memory_space<vmem>>, %arg24: memref<1x96xf32, #tpu.memory_space<vmem>>, %arg25: memref<32x32xf32, #tpu.memory_space<vmem>>, %arg26: memref<1x32xf32, #tpu.memory_space<vmem>>, %arg27: memref<1x32xf32, #tpu.memory_space<vmem>>, %arg28: memref<1x32xf32, #tpu.memory_space<vmem>>, %arg29: memref<32x128xf32, #tpu.memory_space<vmem>>, %arg30: memref<1x128xf32, #tpu.memory_space<vmem>>, %arg31: memref<128x32xf32, #tpu.memory_space<vmem>>, %arg32: memref<1x32xf32, #tpu.memory_space<vmem>>, %arg33: memref<1x32xf32, #tpu.memory_space<vmem>>, %arg34: memref<1x32xf32, #tpu.memory_space<vmem>>, %arg35: memref<32x1024xf32, #tpu.memory_space<vmem>>, %arg36: memref<1x1024xf32, #tpu.memory_space<vmem>>, %arg37: memref<1x1xf32, #tpu.memory_space<vmem>>, %arg38: memref<1x1024xf32, #tpu.memory_space<vmem>>, %arg39: memref<1x1024xf32, #tpu.memory_space<vmem>>, %arg40: memref<1x1024xf32, #tpu.memory_space<vmem>>, %arg41: memref<1x1024xf32, #tpu.memory_space<vmem>>, %arg42: memref<1024x3xf32, #tpu.memory_space<vmem>>, %arg43: memref<1x3xf32, #tpu.memory_space<vmem>>, %arg44: memref<2x3xf32, #tpu.memory_space<vmem>>) attributes {dimension_semantics = [], scalar_prefetch = 0 : i64, scratch_operands = 0 : i64, tpu.core_type = #tpu.core_type<tc>} {
    %c0 = arith.constant 0 : index
    %c0_0 = arith.constant 0 : index
    %0 = vector.load %arg0[%c0, %c0_0] : memref<32x16xf32, #tpu.memory_space<vmem>>, vector<32x16xf32>
    %c0_1 = arith.constant 0 : index
    %c0_2 = arith.constant 0 : index
    %1 = vector.load %arg1[%c0_1, %c0_2] : memref<16x32xf32, #tpu.memory_space<vmem>>, vector<16x32xf32>
    %c0_3 = arith.constant 0 : index
    %c0_4 = arith.constant 0 : index
    %2 = vector.load %arg2[%c0_3, %c0_4] : memref<1x32xf32, #tpu.memory_space<vmem>>, vector<1x32xf32>
    %c0_5 = arith.constant 0 : index
    %c0_6 = arith.constant 0 : index
    %3 = vector.load %arg3[%c0_5, %c0_6] : memref<16x32xf32, #tpu.memory_space<vmem>>, vector<16x32xf32>
    %c0_7 = arith.constant 0 : index
    %c0_8 = arith.constant 0 : index
    %4 = vector.load %arg4[%c0_7, %c0_8] : memref<1x32xf32, #tpu.memory_space<vmem>>, vector<1x32xf32>
    %cst = arith.constant dense<0.000000e+00> : vector<32x32xf32>
    %5 = tpu.matmul %0, %1, %cst {dimension_numbers = #tpu.dot_dimension_numbers<[1], [0], [0], [1], [0, 0, 1, 1], [], []>} : vector<32x16xf32>, vector<16x32xf32>, vector<32x32xf32> -> vector<32x32xf32>
    %6 = vector.broadcast %2 : vector<1x32xf32> to vector<32x32xf32>
    %7 = arith.addf %5, %6 : vector<32x32xf32>
    %8 = tpu.concatenate %3, %3 in 0 : vector<16x32xf32>, vector<16x32xf32> -> vector<32x32xf32>
    %9 = arith.addf %7, %8 : vector<32x32xf32>
    %c0_9 = arith.constant 0 : index
    %c0_10 = arith.constant 0 : index
    %10 = vector.load %arg5[%c0_9, %c0_10] : memref<1x32xf32, #tpu.memory_space<vmem>>, vector<1x32xf32>
    %c0_11 = arith.constant 0 : index
    %c0_12 = arith.constant 0 : index
    %11 = vector.load %arg6[%c0_11, %c0_12] : memref<1x32xf32, #tpu.memory_space<vmem>>, vector<1x32xf32>
    %c0_13 = arith.constant 0 : index
    %c0_14 = arith.constant 0 : index
    %12 = vector.load %arg7[%c0_13, %c0_14] : memref<32x64xf32, #tpu.memory_space<vmem>>, vector<32x64xf32>
    %c0_15 = arith.constant 0 : index
    %c0_16 = arith.constant 0 : index
    %13 = vector.load %arg8[%c0_15, %c0_16] : memref<1x64xf32, #tpu.memory_space<vmem>>, vector<1x64xf32>
    %c0_17 = arith.constant 0 : index
    %c0_18 = arith.constant 0 : index
    %14 = vector.load %arg9[%c0_17, %c0_18] : memref<32x32xf32, #tpu.memory_space<vmem>>, vector<32x32xf32>
    %c0_19 = arith.constant 0 : index
    %c0_20 = arith.constant 0 : index
    %15 = vector.load %arg10[%c0_19, %c0_20] : memref<1x32xf32, #tpu.memory_space<vmem>>, vector<1x32xf32>
    %c0_21 = arith.constant 0 : index
    %c0_22 = arith.constant 0 : index
    %c0_23 = arith.constant 0 : index
    %16 = vector.load %arg11[%c0_21, %c0_22, %c0_23] : memref<4x16x16xf32, #tpu.memory_space<vmem>>, vector<4x16x16xf32>
    %c0_24 = arith.constant 0 : index
    %c0_25 = arith.constant 0 : index
    %17 = vector.load %arg12[%c0_24, %c0_25] : memref<1x4xf32, #tpu.memory_space<vmem>>, vector<1x4xf32>
    %c0_26 = arith.constant 0 : index
    %c0_27 = arith.constant 0 : index
    %18 = vector.load %arg13[%c0_26, %c0_27] : memref<32x32xf32, #tpu.memory_space<vmem>>, vector<32x32xf32>
    %c0_28 = arith.constant 0 : index
    %c0_29 = arith.constant 0 : index
    %19 = vector.load %arg14[%c0_28, %c0_29] : memref<1x32xf32, #tpu.memory_space<vmem>>, vector<1x32xf32>
    %c0_30 = arith.constant 0 : index
    %c0_31 = arith.constant 0 : index
    %20 = vector.load %arg15[%c0_30, %c0_31] : memref<1x32xf32, #tpu.memory_space<vmem>>, vector<1x32xf32>
    %c0_32 = arith.constant 0 : index
    %c0_33 = arith.constant 0 : index
    %21 = vector.load %arg16[%c0_32, %c0_33] : memref<1x32xf32, #tpu.memory_space<vmem>>, vector<1x32xf32>
    %c0_34 = arith.constant 0 : index
    %c0_35 = arith.constant 0 : index
    %22 = vector.load %arg17[%c0_34, %c0_35] : memref<32x128xf32, #tpu.memory_space<vmem>>, vector<32x128xf32>
    %c0_36 = arith.constant 0 : index
    %c0_37 = arith.constant 0 : index
    %23 = vector.load %arg18[%c0_36, %c0_37] : memref<1x128xf32, #tpu.memory_space<vmem>>, vector<1x128xf32>
    %c0_38 = arith.constant 0 : index
    %c0_39 = arith.constant 0 : index
    %24 = vector.load %arg19[%c0_38, %c0_39] : memref<128x32xf32, #tpu.memory_space<vmem>>, vector<128x32xf32>
    %c0_40 = arith.constant 0 : index
    %c0_41 = arith.constant 0 : index
    %25 = vector.load %arg20[%c0_40, %c0_41] : memref<1x32xf32, #tpu.memory_space<vmem>>, vector<1x32xf32>
    %cst_42 = arith.constant 0.000000e+00 : f32
    %26 = vector.broadcast %cst_42 : f32 to vector<1x4xf32>
    %27 = arith.subf %26, %17 : vector<1x4xf32>
    %28 = math.exp %27 : vector<1x4xf32>
    %cst_43 = arith.constant 1.000000e+00 : f32
    %29 = vector.broadcast %cst_43 : f32 to vector<1x4xf32>
    %30 = arith.addf %29, %28 : vector<1x4xf32>
    %cst_44 = arith.constant 1.000000e+00 : f32
    %31 = vector.broadcast %cst_44 : f32 to vector<1x4xf32>
    %32 = arith.divf %31, %30 : vector<1x4xf32>
    %33 = vector.extract_strided_slice %16 {offsets = [0, 0, 0], sizes = [1, 16, 16], strides = [1, 1, 1]} : vector<4x16x16xf32> to vector<1x16x16xf32>
    %34 = vector.shape_cast %33 : vector<1x16x16xf32> to vector<16x16xf32>
    %cst_45 = arith.constant dense<0xFF800000> : vector<16xf32>
    %35 = vector.multi_reduction <maximumf>, %34, %cst_45 [1] : vector<16x16xf32> to vector<16xf32>
    %36 = vector.shape_cast %35 : vector<16xf32> to vector<16x1xf32>
    %37 = vector.broadcast %36 : vector<16x1xf32> to vector<16x16xf32>
    %38 = arith.subf %34, %37 : vector<16x16xf32>
    %39 = math.exp %38 : vector<16x16xf32>
    %cst_46 = arith.constant dense<0.000000e+00> : vector<16xf32>
    %40 = vector.multi_reduction <add>, %39, %cst_46 [1] : vector<16x16xf32> to vector<16xf32>
    %41 = vector.shape_cast %40 : vector<16xf32> to vector<16x1xf32>
    %42 = vector.broadcast %41 : vector<16x1xf32> to vector<16x16xf32>
    %43 = arith.divf %39, %42 : vector<16x16xf32>
    %44 = vector.extract_strided_slice %16 {offsets = [1, 0, 0], sizes = [1, 16, 16], strides = [1, 1, 1]} : vector<4x16x16xf32> to vector<1x16x16xf32>
    %45 = vector.shape_cast %44 : vector<1x16x16xf32> to vector<16x16xf32>
    %cst_47 = arith.constant dense<0xFF800000> : vector<16xf32>
    %46 = vector.multi_reduction <maximumf>, %45, %cst_47 [1] : vector<16x16xf32> to vector<16xf32>
    %47 = vector.shape_cast %46 : vector<16xf32> to vector<16x1xf32>
    %48 = vector.broadcast %47 : vector<16x1xf32> to vector<16x16xf32>
    %49 = arith.subf %45, %48 : vector<16x16xf32>
    %50 = math.exp %49 : vector<16x16xf32>
    %cst_48 = arith.constant dense<0.000000e+00> : vector<16xf32>
    %51 = vector.multi_reduction <add>, %50, %cst_48 [1] : vector<16x16xf32> to vector<16xf32>
    %52 = vector.shape_cast %51 : vector<16xf32> to vector<16x1xf32>
    %53 = vector.broadcast %52 : vector<16x1xf32> to vector<16x16xf32>
    %54 = arith.divf %50, %53 : vector<16x16xf32>
    %55 = vector.extract_strided_slice %16 {offsets = [2, 0, 0], sizes = [1, 16, 16], strides = [1, 1, 1]} : vector<4x16x16xf32> to vector<1x16x16xf32>
    %56 = vector.shape_cast %55 : vector<1x16x16xf32> to vector<16x16xf32>
    %cst_49 = arith.constant dense<0xFF800000> : vector<16xf32>
    %57 = vector.multi_reduction <maximumf>, %56, %cst_49 [1] : vector<16x16xf32> to vector<16xf32>
    %58 = vector.shape_cast %57 : vector<16xf32> to vector<16x1xf32>
    %59 = vector.broadcast %58 : vector<16x1xf32> to vector<16x16xf32>
    %60 = arith.subf %56, %59 : vector<16x16xf32>
    %61 = math.exp %60 : vector<16x16xf32>
    %cst_50 = arith.constant dense<0.000000e+00> : vector<16xf32>
    %62 = vector.multi_reduction <add>, %61, %cst_50 [1] : vector<16x16xf32> to vector<16xf32>
    %63 = vector.shape_cast %62 : vector<16xf32> to vector<16x1xf32>
    %64 = vector.broadcast %63 : vector<16x1xf32> to vector<16x16xf32>
    %65 = arith.divf %61, %64 : vector<16x16xf32>
    %66 = vector.extract_strided_slice %16 {offsets = [3, 0, 0], sizes = [1, 16, 16], strides = [1, 1, 1]} : vector<4x16x16xf32> to vector<1x16x16xf32>
    %67 = vector.shape_cast %66 : vector<1x16x16xf32> to vector<16x16xf32>
    %cst_51 = arith.constant dense<0xFF800000> : vector<16xf32>
    %68 = vector.multi_reduction <maximumf>, %67, %cst_51 [1] : vector<16x16xf32> to vector<16xf32>
    %69 = vector.shape_cast %68 : vector<16xf32> to vector<16x1xf32>
    %70 = vector.broadcast %69 : vector<16x1xf32> to vector<16x16xf32>
    %71 = arith.subf %67, %70 : vector<16x16xf32>
    %72 = math.exp %71 : vector<16x16xf32>
    %cst_52 = arith.constant dense<0.000000e+00> : vector<16xf32>
    %73 = vector.multi_reduction <add>, %72, %cst_52 [1] : vector<16x16xf32> to vector<16xf32>
    %74 = vector.shape_cast %73 : vector<16xf32> to vector<16x1xf32>
    %75 = vector.broadcast %74 : vector<16x1xf32> to vector<16x16xf32>
    %76 = arith.divf %72, %75 : vector<16x16xf32>
    %cst_53 = arith.constant dense<0.000000e+00> : vector<32xf32>
    %77 = vector.multi_reduction <add>, %9, %cst_53 [1] : vector<32x32xf32> to vector<32xf32>
    %78 = vector.shape_cast %77 : vector<32xf32> to vector<32x1xf32>
    %cst_54 = arith.constant 3.200000e+01 : f32
    %79 = vector.broadcast %cst_54 : f32 to vector<32x1xf32>
    %80 = arith.divf %78, %79 : vector<32x1xf32>
    %81 = vector.broadcast %80 : vector<32x1xf32> to vector<32x32xf32>
    %82 = arith.subf %9, %81 : vector<32x32xf32>
    %83 = arith.mulf %82, %82 : vector<32x32xf32>
    %cst_55 = arith.constant dense<0.000000e+00> : vector<32xf32>
    %84 = vector.multi_reduction <add>, %83, %cst_55 [1] : vector<32x32xf32> to vector<32xf32>
    %85 = vector.shape_cast %84 : vector<32xf32> to vector<32x1xf32>
    %cst_56 = arith.constant 3.200000e+01 : f32
    %86 = vector.broadcast %cst_56 : f32 to vector<32x1xf32>
    %87 = arith.divf %85, %86 : vector<32x1xf32>
    %cst_57 = arith.constant 9.99999997E-7 : f32
    %88 = vector.broadcast %cst_57 : f32 to vector<32x1xf32>
    %89 = arith.addf %87, %88 : vector<32x1xf32>
    %90 = math.rsqrt %89 : vector<32x1xf32>
    %91 = vector.broadcast %90 : vector<32x1xf32> to vector<32x32xf32>
    %92 = arith.mulf %82, %91 : vector<32x32xf32>
    %93 = vector.broadcast %10 : vector<1x32xf32> to vector<32x32xf32>
    %94 = arith.mulf %92, %93 : vector<32x32xf32>
    %95 = vector.broadcast %11 : vector<1x32xf32> to vector<32x32xf32>
    %96 = arith.addf %94, %95 : vector<32x32xf32>
    %cst_58 = arith.constant dense<0.000000e+00> : vector<32x64xf32>
    %97 = tpu.matmul %96, %12, %cst_58 {dimension_numbers = #tpu.dot_dimension_numbers<[1], [0], [0], [1], [0, 0, 1, 1], [], []>} : vector<32x32xf32>, vector<32x64xf32>, vector<32x64xf32> -> vector<32x64xf32>
    %98 = vector.broadcast %13 : vector<1x64xf32> to vector<32x64xf32>
    %99 = arith.addf %97, %98 : vector<32x64xf32>
    %cst_59 = arith.constant dense<0.000000e+00> : vector<32x32xf32>
    %100 = tpu.matmul %96, %14, %cst_59 {dimension_numbers = #tpu.dot_dimension_numbers<[1], [0], [0], [1], [0, 0, 1, 1], [], []>} : vector<32x32xf32>, vector<32x32xf32>, vector<32x32xf32> -> vector<32x32xf32>
    %101 = vector.broadcast %15 : vector<1x32xf32> to vector<32x32xf32>
    %102 = arith.addf %100, %101 : vector<32x32xf32>
    %103 = vector.extract_strided_slice %99 {offsets = [0, 0], sizes = [16, 32], strides = [1, 1]} : vector<32x64xf32> to vector<16x32xf32>
    %104 = vector.extract_strided_slice %99 {offsets = [0, 32], sizes = [16, 32], strides = [1, 1]} : vector<32x64xf32> to vector<16x32xf32>
    %105 = vector.extract_strided_slice %102 {offsets = [0, 0], sizes = [16, 32], strides = [1, 1]} : vector<32x32xf32> to vector<16x32xf32>
    %cst_60 = arith.constant 0.000000e+00 : f32
    %106 = vector.broadcast %cst_60 : f32 to vector<16x32xf32>
    %107 = vector.extract_strided_slice %103 {offsets = [0, 0], sizes = [16, 8], strides = [1, 1]} : vector<16x32xf32> to vector<16x8xf32>
    %cst_61 = arith.constant 0.353553385 : f32
    %108 = vector.broadcast %cst_61 : f32 to vector<16x8xf32>
    %109 = arith.mulf %107, %108 : vector<16x8xf32>
    %110 = vector.extract_strided_slice %104 {offsets = [0, 0], sizes = [16, 8], strides = [1, 1]} : vector<16x32xf32> to vector<16x8xf32>
    %111 = vector.extract_strided_slice %105 {offsets = [0, 0], sizes = [16, 8], strides = [1, 1]} : vector<16x32xf32> to vector<16x8xf32>
    "tpu.trace_start"() <{level = 10 : i32, message = "nd,md->nm"}> : () -> ()
    %cst_62 = arith.constant dense<0.000000e+00> : vector<16x16xf32>
    %112 = tpu.matmul %109, %110, %cst_62 {dimension_numbers = #tpu.dot_dimension_numbers<[1], [1], [0], [0], [0, 0, 1, 0], [], []>} : vector<16x8xf32>, vector<16x8xf32>, vector<16x16xf32> -> vector<16x16xf32>
    "tpu.trace_stop"() : () -> ()
    %cst_63 = arith.constant dense<0xFF800000> : vector<16xf32>
    %113 = vector.multi_reduction <maximumf>, %112, %cst_63 [1] : vector<16x16xf32> to vector<16xf32>
    %114 = vector.shape_cast %113 : vector<16xf32> to vector<16x1xf32>
    %115 = vector.broadcast %114 : vector<16x1xf32> to vector<16x16xf32>
    %116 = arith.subf %112, %115 : vector<16x16xf32>
    %117 = math.exp %116 : vector<16x16xf32>
    %cst_64 = arith.constant dense<0.000000e+00> : vector<16xf32>
    %118 = vector.multi_reduction <add>, %117, %cst_64 [1] : vector<16x16xf32> to vector<16xf32>
    %119 = vector.shape_cast %118 : vector<16xf32> to vector<16x1xf32>
    %120 = vector.broadcast %119 : vector<16x1xf32> to vector<16x16xf32>
    %121 = arith.divf %117, %120 : vector<16x16xf32>
    %122 = vector.extract_strided_slice %32 {offsets = [0, 0], sizes = [1, 1], strides = [1, 1]} : vector<1x4xf32> to vector<1x1xf32>
    %cst_65 = arith.constant 1.000000e+00 : f32
    %123 = vector.broadcast %cst_65 : f32 to vector<1x1xf32>
    %124 = arith.subf %123, %122 : vector<1x1xf32>
    %125 = vector.broadcast %124 : vector<1x1xf32> to vector<16x16xf32>
    %126 = arith.mulf %125, %121 : vector<16x16xf32>
    %127 = vector.broadcast %122 : vector<1x1xf32> to vector<16x16xf32>
    %128 = arith.mulf %127, %43 : vector<16x16xf32>
    %129 = arith.addf %126, %128 : vector<16x16xf32>
    %cst_66 = arith.constant dense<0.000000e+00> : vector<16xf32>
    %130 = vector.multi_reduction <add>, %129, %cst_66 [1] : vector<16x16xf32> to vector<16xf32>
    %131 = vector.shape_cast %130 : vector<16xf32> to vector<16x1xf32>
    %132 = vector.broadcast %131 : vector<16x1xf32> to vector<16x16xf32>
    %133 = arith.divf %129, %132 : vector<16x16xf32>
    %cst_67 = arith.constant dense<0.000000e+00> : vector<16x8xf32>
    %134 = tpu.matmul %133, %111, %cst_67 {dimension_numbers = #tpu.dot_dimension_numbers<[1], [0], [0], [1], [0, 0, 1, 1], [], []>} : vector<16x16xf32>, vector<16x8xf32>, vector<16x8xf32> -> vector<16x8xf32>
    %135 = vector.extract_strided_slice %18 {offsets = [0, 0], sizes = [8, 32], strides = [1, 1]} : vector<32x32xf32> to vector<8x32xf32>
    %cst_68 = arith.constant dense<0.000000e+00> : vector<16x32xf32>
    %136 = tpu.matmul %134, %135, %cst_68 {dimension_numbers = #tpu.dot_dimension_numbers<[1], [0], [0], [1], [0, 0, 1, 1], [], []>} : vector<16x8xf32>, vector<8x32xf32>, vector<16x32xf32> -> vector<16x32xf32>
    %137 = arith.addf %106, %136 : vector<16x32xf32>
    %138 = vector.extract_strided_slice %103 {offsets = [0, 8], sizes = [16, 8], strides = [1, 1]} : vector<16x32xf32> to vector<16x8xf32>
    %cst_69 = arith.constant 0.353553385 : f32
    %139 = vector.broadcast %cst_69 : f32 to vector<16x8xf32>
    %140 = arith.mulf %138, %139 : vector<16x8xf32>
    %141 = vector.extract_strided_slice %104 {offsets = [0, 8], sizes = [16, 8], strides = [1, 1]} : vector<16x32xf32> to vector<16x8xf32>
    %142 = vector.extract_strided_slice %105 {offsets = [0, 8], sizes = [16, 8], strides = [1, 1]} : vector<16x32xf32> to vector<16x8xf32>
    "tpu.trace_start"() <{level = 10 : i32, message = "nd,md->nm"}> : () -> ()
    %cst_70 = arith.constant dense<0.000000e+00> : vector<16x16xf32>
    %143 = tpu.matmul %140, %141, %cst_70 {dimension_numbers = #tpu.dot_dimension_numbers<[1], [1], [0], [0], [0, 0, 1, 0], [], []>} : vector<16x8xf32>, vector<16x8xf32>, vector<16x16xf32> -> vector<16x16xf32>
    "tpu.trace_stop"() : () -> ()
    %cst_71 = arith.constant dense<0xFF800000> : vector<16xf32>
    %144 = vector.multi_reduction <maximumf>, %143, %cst_71 [1] : vector<16x16xf32> to vector<16xf32>
    %145 = vector.shape_cast %144 : vector<16xf32> to vector<16x1xf32>
    %146 = vector.broadcast %145 : vector<16x1xf32> to vector<16x16xf32>
    %147 = arith.subf %143, %146 : vector<16x16xf32>
    %148 = math.exp %147 : vector<16x16xf32>
    %cst_72 = arith.constant dense<0.000000e+00> : vector<16xf32>
    %149 = vector.multi_reduction <add>, %148, %cst_72 [1] : vector<16x16xf32> to vector<16xf32>
    %150 = vector.shape_cast %149 : vector<16xf32> to vector<16x1xf32>
    %151 = vector.broadcast %150 : vector<16x1xf32> to vector<16x16xf32>
    %152 = arith.divf %148, %151 : vector<16x16xf32>
    %153 = vector.extract_strided_slice %32 {offsets = [0, 1], sizes = [1, 1], strides = [1, 1]} : vector<1x4xf32> to vector<1x1xf32>
    %cst_73 = arith.constant 1.000000e+00 : f32
    %154 = vector.broadcast %cst_73 : f32 to vector<1x1xf32>
    %155 = arith.subf %154, %153 : vector<1x1xf32>
    %156 = vector.broadcast %155 : vector<1x1xf32> to vector<16x16xf32>
    %157 = arith.mulf %156, %152 : vector<16x16xf32>
    %158 = vector.broadcast %153 : vector<1x1xf32> to vector<16x16xf32>
    %159 = arith.mulf %158, %54 : vector<16x16xf32>
    %160 = arith.addf %157, %159 : vector<16x16xf32>
    %cst_74 = arith.constant dense<0.000000e+00> : vector<16xf32>
    %161 = vector.multi_reduction <add>, %160, %cst_74 [1] : vector<16x16xf32> to vector<16xf32>
    %162 = vector.shape_cast %161 : vector<16xf32> to vector<16x1xf32>
    %163 = vector.broadcast %162 : vector<16x1xf32> to vector<16x16xf32>
    %164 = arith.divf %160, %163 : vector<16x16xf32>
    %cst_75 = arith.constant dense<0.000000e+00> : vector<16x8xf32>
    %165 = tpu.matmul %164, %142, %cst_75 {dimension_numbers = #tpu.dot_dimension_numbers<[1], [0], [0], [1], [0, 0, 1, 1], [], []>} : vector<16x16xf32>, vector<16x8xf32>, vector<16x8xf32> -> vector<16x8xf32>
    %166 = vector.extract_strided_slice %18 {offsets = [8, 0], sizes = [8, 32], strides = [1, 1]} : vector<32x32xf32> to vector<8x32xf32>
    %cst_76 = arith.constant dense<0.000000e+00> : vector<16x32xf32>
    %167 = tpu.matmul %165, %166, %cst_76 {dimension_numbers = #tpu.dot_dimension_numbers<[1], [0], [0], [1], [0, 0, 1, 1], [], []>} : vector<16x8xf32>, vector<8x32xf32>, vector<16x32xf32> -> vector<16x32xf32>
    %168 = arith.addf %137, %167 : vector<16x32xf32>
    %169 = vector.extract_strided_slice %103 {offsets = [0, 16], sizes = [16, 8], strides = [1, 1]} : vector<16x32xf32> to vector<16x8xf32>
    %cst_77 = arith.constant 0.353553385 : f32
    %170 = vector.broadcast %cst_77 : f32 to vector<16x8xf32>
    %171 = arith.mulf %169, %170 : vector<16x8xf32>
    %172 = vector.extract_strided_slice %104 {offsets = [0, 16], sizes = [16, 8], strides = [1, 1]} : vector<16x32xf32> to vector<16x8xf32>
    %173 = vector.extract_strided_slice %105 {offsets = [0, 16], sizes = [16, 8], strides = [1, 1]} : vector<16x32xf32> to vector<16x8xf32>
    "tpu.trace_start"() <{level = 10 : i32, message = "nd,md->nm"}> : () -> ()
    %cst_78 = arith.constant dense<0.000000e+00> : vector<16x16xf32>
    %174 = tpu.matmul %171, %172, %cst_78 {dimension_numbers = #tpu.dot_dimension_numbers<[1], [1], [0], [0], [0, 0, 1, 0], [], []>} : vector<16x8xf32>, vector<16x8xf32>, vector<16x16xf32> -> vector<16x16xf32>
    "tpu.trace_stop"() : () -> ()
    %cst_79 = arith.constant dense<0xFF800000> : vector<16xf32>
    %175 = vector.multi_reduction <maximumf>, %174, %cst_79 [1] : vector<16x16xf32> to vector<16xf32>
    %176 = vector.shape_cast %175 : vector<16xf32> to vector<16x1xf32>
    %177 = vector.broadcast %176 : vector<16x1xf32> to vector<16x16xf32>
    %178 = arith.subf %174, %177 : vector<16x16xf32>
    %179 = math.exp %178 : vector<16x16xf32>
    %cst_80 = arith.constant dense<0.000000e+00> : vector<16xf32>
    %180 = vector.multi_reduction <add>, %179, %cst_80 [1] : vector<16x16xf32> to vector<16xf32>
    %181 = vector.shape_cast %180 : vector<16xf32> to vector<16x1xf32>
    %182 = vector.broadcast %181 : vector<16x1xf32> to vector<16x16xf32>
    %183 = arith.divf %179, %182 : vector<16x16xf32>
    %184 = vector.extract_strided_slice %32 {offsets = [0, 2], sizes = [1, 1], strides = [1, 1]} : vector<1x4xf32> to vector<1x1xf32>
    %cst_81 = arith.constant 1.000000e+00 : f32
    %185 = vector.broadcast %cst_81 : f32 to vector<1x1xf32>
    %186 = arith.subf %185, %184 : vector<1x1xf32>
    %187 = vector.broadcast %186 : vector<1x1xf32> to vector<16x16xf32>
    %188 = arith.mulf %187, %183 : vector<16x16xf32>
    %189 = vector.broadcast %184 : vector<1x1xf32> to vector<16x16xf32>
    %190 = arith.mulf %189, %65 : vector<16x16xf32>
    %191 = arith.addf %188, %190 : vector<16x16xf32>
    %cst_82 = arith.constant dense<0.000000e+00> : vector<16xf32>
    %192 = vector.multi_reduction <add>, %191, %cst_82 [1] : vector<16x16xf32> to vector<16xf32>
    %193 = vector.shape_cast %192 : vector<16xf32> to vector<16x1xf32>
    %194 = vector.broadcast %193 : vector<16x1xf32> to vector<16x16xf32>
    %195 = arith.divf %191, %194 : vector<16x16xf32>
    %cst_83 = arith.constant dense<0.000000e+00> : vector<16x8xf32>
    %196 = tpu.matmul %195, %173, %cst_83 {dimension_numbers = #tpu.dot_dimension_numbers<[1], [0], [0], [1], [0, 0, 1, 1], [], []>} : vector<16x16xf32>, vector<16x8xf32>, vector<16x8xf32> -> vector<16x8xf32>
    %197 = vector.extract_strided_slice %18 {offsets = [16, 0], sizes = [8, 32], strides = [1, 1]} : vector<32x32xf32> to vector<8x32xf32>
    %cst_84 = arith.constant dense<0.000000e+00> : vector<16x32xf32>
    %198 = tpu.matmul %196, %197, %cst_84 {dimension_numbers = #tpu.dot_dimension_numbers<[1], [0], [0], [1], [0, 0, 1, 1], [], []>} : vector<16x8xf32>, vector<8x32xf32>, vector<16x32xf32> -> vector<16x32xf32>
    %199 = arith.addf %168, %198 : vector<16x32xf32>
    %200 = vector.extract_strided_slice %103 {offsets = [0, 24], sizes = [16, 8], strides = [1, 1]} : vector<16x32xf32> to vector<16x8xf32>
    %cst_85 = arith.constant 0.353553385 : f32
    %201 = vector.broadcast %cst_85 : f32 to vector<16x8xf32>
    %202 = arith.mulf %200, %201 : vector<16x8xf32>
    %203 = vector.extract_strided_slice %104 {offsets = [0, 24], sizes = [16, 8], strides = [1, 1]} : vector<16x32xf32> to vector<16x8xf32>
    %204 = vector.extract_strided_slice %105 {offsets = [0, 24], sizes = [16, 8], strides = [1, 1]} : vector<16x32xf32> to vector<16x8xf32>
    "tpu.trace_start"() <{level = 10 : i32, message = "nd,md->nm"}> : () -> ()
    %cst_86 = arith.constant dense<0.000000e+00> : vector<16x16xf32>
    %205 = tpu.matmul %202, %203, %cst_86 {dimension_numbers = #tpu.dot_dimension_numbers<[1], [1], [0], [0], [0, 0, 1, 0], [], []>} : vector<16x8xf32>, vector<16x8xf32>, vector<16x16xf32> -> vector<16x16xf32>
    "tpu.trace_stop"() : () -> ()
    %cst_87 = arith.constant dense<0xFF800000> : vector<16xf32>
    %206 = vector.multi_reduction <maximumf>, %205, %cst_87 [1] : vector<16x16xf32> to vector<16xf32>
    %207 = vector.shape_cast %206 : vector<16xf32> to vector<16x1xf32>
    %208 = vector.broadcast %207 : vector<16x1xf32> to vector<16x16xf32>
    %209 = arith.subf %205, %208 : vector<16x16xf32>
    %210 = math.exp %209 : vector<16x16xf32>
    %cst_88 = arith.constant dense<0.000000e+00> : vector<16xf32>
    %211 = vector.multi_reduction <add>, %210, %cst_88 [1] : vector<16x16xf32> to vector<16xf32>
    %212 = vector.shape_cast %211 : vector<16xf32> to vector<16x1xf32>
    %213 = vector.broadcast %212 : vector<16x1xf32> to vector<16x16xf32>
    %214 = arith.divf %210, %213 : vector<16x16xf32>
    %215 = vector.extract_strided_slice %32 {offsets = [0, 3], sizes = [1, 1], strides = [1, 1]} : vector<1x4xf32> to vector<1x1xf32>
    %cst_89 = arith.constant 1.000000e+00 : f32
    %216 = vector.broadcast %cst_89 : f32 to vector<1x1xf32>
    %217 = arith.subf %216, %215 : vector<1x1xf32>
    %218 = vector.broadcast %217 : vector<1x1xf32> to vector<16x16xf32>
    %219 = arith.mulf %218, %214 : vector<16x16xf32>
    %220 = vector.broadcast %215 : vector<1x1xf32> to vector<16x16xf32>
    %221 = arith.mulf %220, %76 : vector<16x16xf32>
    %222 = arith.addf %219, %221 : vector<16x16xf32>
    %cst_90 = arith.constant dense<0.000000e+00> : vector<16xf32>
    %223 = vector.multi_reduction <add>, %222, %cst_90 [1] : vector<16x16xf32> to vector<16xf32>
    %224 = vector.shape_cast %223 : vector<16xf32> to vector<16x1xf32>
    %225 = vector.broadcast %224 : vector<16x1xf32> to vector<16x16xf32>
    %226 = arith.divf %222, %225 : vector<16x16xf32>
    %cst_91 = arith.constant dense<0.000000e+00> : vector<16x8xf32>
    %227 = tpu.matmul %226, %204, %cst_91 {dimension_numbers = #tpu.dot_dimension_numbers<[1], [0], [0], [1], [0, 0, 1, 1], [], []>} : vector<16x16xf32>, vector<16x8xf32>, vector<16x8xf32> -> vector<16x8xf32>
    %228 = vector.extract_strided_slice %18 {offsets = [24, 0], sizes = [8, 32], strides = [1, 1]} : vector<32x32xf32> to vector<8x32xf32>
    %cst_92 = arith.constant dense<0.000000e+00> : vector<16x32xf32>
    %229 = tpu.matmul %227, %228, %cst_92 {dimension_numbers = #tpu.dot_dimension_numbers<[1], [0], [0], [1], [0, 0, 1, 1], [], []>} : vector<16x8xf32>, vector<8x32xf32>, vector<16x32xf32> -> vector<16x32xf32>
    %230 = arith.addf %199, %229 : vector<16x32xf32>
    %231 = vector.extract_strided_slice %99 {offsets = [16, 0], sizes = [16, 32], strides = [1, 1]} : vector<32x64xf32> to vector<16x32xf32>
    %232 = vector.extract_strided_slice %99 {offsets = [16, 32], sizes = [16, 32], strides = [1, 1]} : vector<32x64xf32> to vector<16x32xf32>
    %233 = vector.extract_strided_slice %102 {offsets = [16, 0], sizes = [16, 32], strides = [1, 1]} : vector<32x32xf32> to vector<16x32xf32>
    %cst_93 = arith.constant 0.000000e+00 : f32
    %234 = vector.broadcast %cst_93 : f32 to vector<16x32xf32>
    %235 = vector.extract_strided_slice %231 {offsets = [0, 0], sizes = [16, 8], strides = [1, 1]} : vector<16x32xf32> to vector<16x8xf32>
    %cst_94 = arith.constant 0.353553385 : f32
    %236 = vector.broadcast %cst_94 : f32 to vector<16x8xf32>
    %237 = arith.mulf %235, %236 : vector<16x8xf32>
    %238 = vector.extract_strided_slice %232 {offsets = [0, 0], sizes = [16, 8], strides = [1, 1]} : vector<16x32xf32> to vector<16x8xf32>
    %239 = vector.extract_strided_slice %233 {offsets = [0, 0], sizes = [16, 8], strides = [1, 1]} : vector<16x32xf32> to vector<16x8xf32>
    "tpu.trace_start"() <{level = 10 : i32, message = "nd,md->nm"}> : () -> ()
    %cst_95 = arith.constant dense<0.000000e+00> : vector<16x16xf32>
    %240 = tpu.matmul %237, %238, %cst_95 {dimension_numbers = #tpu.dot_dimension_numbers<[1], [1], [0], [0], [0, 0, 1, 0], [], []>} : vector<16x8xf32>, vector<16x8xf32>, vector<16x16xf32> -> vector<16x16xf32>
    "tpu.trace_stop"() : () -> ()
    %cst_96 = arith.constant dense<0xFF800000> : vector<16xf32>
    %241 = vector.multi_reduction <maximumf>, %240, %cst_96 [1] : vector<16x16xf32> to vector<16xf32>
    %242 = vector.shape_cast %241 : vector<16xf32> to vector<16x1xf32>
    %243 = vector.broadcast %242 : vector<16x1xf32> to vector<16x16xf32>
    %244 = arith.subf %240, %243 : vector<16x16xf32>
    %245 = math.exp %244 : vector<16x16xf32>
    %cst_97 = arith.constant dense<0.000000e+00> : vector<16xf32>
    %246 = vector.multi_reduction <add>, %245, %cst_97 [1] : vector<16x16xf32> to vector<16xf32>
    %247 = vector.shape_cast %246 : vector<16xf32> to vector<16x1xf32>
    %248 = vector.broadcast %247 : vector<16x1xf32> to vector<16x16xf32>
    %249 = arith.divf %245, %248 : vector<16x16xf32>
    %250 = vector.extract_strided_slice %32 {offsets = [0, 0], sizes = [1, 1], strides = [1, 1]} : vector<1x4xf32> to vector<1x1xf32>
    %cst_98 = arith.constant 1.000000e+00 : f32
    %251 = vector.broadcast %cst_98 : f32 to vector<1x1xf32>
    %252 = arith.subf %251, %250 : vector<1x1xf32>
    %253 = vector.broadcast %252 : vector<1x1xf32> to vector<16x16xf32>
    %254 = arith.mulf %253, %249 : vector<16x16xf32>
    %255 = vector.broadcast %250 : vector<1x1xf32> to vector<16x16xf32>
    %256 = arith.mulf %255, %43 : vector<16x16xf32>
    %257 = arith.addf %254, %256 : vector<16x16xf32>
    %cst_99 = arith.constant dense<0.000000e+00> : vector<16xf32>
    %258 = vector.multi_reduction <add>, %257, %cst_99 [1] : vector<16x16xf32> to vector<16xf32>
    %259 = vector.shape_cast %258 : vector<16xf32> to vector<16x1xf32>
    %260 = vector.broadcast %259 : vector<16x1xf32> to vector<16x16xf32>
    %261 = arith.divf %257, %260 : vector<16x16xf32>
    %cst_100 = arith.constant dense<0.000000e+00> : vector<16x8xf32>
    %262 = tpu.matmul %261, %239, %cst_100 {dimension_numbers = #tpu.dot_dimension_numbers<[1], [0], [0], [1], [0, 0, 1, 1], [], []>} : vector<16x16xf32>, vector<16x8xf32>, vector<16x8xf32> -> vector<16x8xf32>
    %263 = vector.extract_strided_slice %18 {offsets = [0, 0], sizes = [8, 32], strides = [1, 1]} : vector<32x32xf32> to vector<8x32xf32>
    %cst_101 = arith.constant dense<0.000000e+00> : vector<16x32xf32>
    %264 = tpu.matmul %262, %263, %cst_101 {dimension_numbers = #tpu.dot_dimension_numbers<[1], [0], [0], [1], [0, 0, 1, 1], [], []>} : vector<16x8xf32>, vector<8x32xf32>, vector<16x32xf32> -> vector<16x32xf32>
    %265 = arith.addf %234, %264 : vector<16x32xf32>
    %266 = vector.extract_strided_slice %231 {offsets = [0, 8], sizes = [16, 8], strides = [1, 1]} : vector<16x32xf32> to vector<16x8xf32>
    %cst_102 = arith.constant 0.353553385 : f32
    %267 = vector.broadcast %cst_102 : f32 to vector<16x8xf32>
    %268 = arith.mulf %266, %267 : vector<16x8xf32>
    %269 = vector.extract_strided_slice %232 {offsets = [0, 8], sizes = [16, 8], strides = [1, 1]} : vector<16x32xf32> to vector<16x8xf32>
    %270 = vector.extract_strided_slice %233 {offsets = [0, 8], sizes = [16, 8], strides = [1, 1]} : vector<16x32xf32> to vector<16x8xf32>
    "tpu.trace_start"() <{level = 10 : i32, message = "nd,md->nm"}> : () -> ()
    %cst_103 = arith.constant dense<0.000000e+00> : vector<16x16xf32>
    %271 = tpu.matmul %268, %269, %cst_103 {dimension_numbers = #tpu.dot_dimension_numbers<[1], [1], [0], [0], [0, 0, 1, 0], [], []>} : vector<16x8xf32>, vector<16x8xf32>, vector<16x16xf32> -> vector<16x16xf32>
    "tpu.trace_stop"() : () -> ()
    %cst_104 = arith.constant dense<0xFF800000> : vector<16xf32>
    %272 = vector.multi_reduction <maximumf>, %271, %cst_104 [1] : vector<16x16xf32> to vector<16xf32>
    %273 = vector.shape_cast %272 : vector<16xf32> to vector<16x1xf32>
    %274 = vector.broadcast %273 : vector<16x1xf32> to vector<16x16xf32>
    %275 = arith.subf %271, %274 : vector<16x16xf32>
    %276 = math.exp %275 : vector<16x16xf32>
    %cst_105 = arith.constant dense<0.000000e+00> : vector<16xf32>
    %277 = vector.multi_reduction <add>, %276, %cst_105 [1] : vector<16x16xf32> to vector<16xf32>
    %278 = vector.shape_cast %277 : vector<16xf32> to vector<16x1xf32>
    %279 = vector.broadcast %278 : vector<16x1xf32> to vector<16x16xf32>
    %280 = arith.divf %276, %279 : vector<16x16xf32>
    %281 = vector.extract_strided_slice %32 {offsets = [0, 1], sizes = [1, 1], strides = [1, 1]} : vector<1x4xf32> to vector<1x1xf32>
    %cst_106 = arith.constant 1.000000e+00 : f32
    %282 = vector.broadcast %cst_106 : f32 to vector<1x1xf32>
    %283 = arith.subf %282, %281 : vector<1x1xf32>
    %284 = vector.broadcast %283 : vector<1x1xf32> to vector<16x16xf32>
    %285 = arith.mulf %284, %280 : vector<16x16xf32>
    %286 = vector.broadcast %281 : vector<1x1xf32> to vector<16x16xf32>
    %287 = arith.mulf %286, %54 : vector<16x16xf32>
    %288 = arith.addf %285, %287 : vector<16x16xf32>
    %cst_107 = arith.constant dense<0.000000e+00> : vector<16xf32>
    %289 = vector.multi_reduction <add>, %288, %cst_107 [1] : vector<16x16xf32> to vector<16xf32>
    %290 = vector.shape_cast %289 : vector<16xf32> to vector<16x1xf32>
    %291 = vector.broadcast %290 : vector<16x1xf32> to vector<16x16xf32>
    %292 = arith.divf %288, %291 : vector<16x16xf32>
    %cst_108 = arith.constant dense<0.000000e+00> : vector<16x8xf32>
    %293 = tpu.matmul %292, %270, %cst_108 {dimension_numbers = #tpu.dot_dimension_numbers<[1], [0], [0], [1], [0, 0, 1, 1], [], []>} : vector<16x16xf32>, vector<16x8xf32>, vector<16x8xf32> -> vector<16x8xf32>
    %294 = vector.extract_strided_slice %18 {offsets = [8, 0], sizes = [8, 32], strides = [1, 1]} : vector<32x32xf32> to vector<8x32xf32>
    %cst_109 = arith.constant dense<0.000000e+00> : vector<16x32xf32>
    %295 = tpu.matmul %293, %294, %cst_109 {dimension_numbers = #tpu.dot_dimension_numbers<[1], [0], [0], [1], [0, 0, 1, 1], [], []>} : vector<16x8xf32>, vector<8x32xf32>, vector<16x32xf32> -> vector<16x32xf32>
    %296 = arith.addf %265, %295 : vector<16x32xf32>
    %297 = vector.extract_strided_slice %231 {offsets = [0, 16], sizes = [16, 8], strides = [1, 1]} : vector<16x32xf32> to vector<16x8xf32>
    %cst_110 = arith.constant 0.353553385 : f32
    %298 = vector.broadcast %cst_110 : f32 to vector<16x8xf32>
    %299 = arith.mulf %297, %298 : vector<16x8xf32>
    %300 = vector.extract_strided_slice %232 {offsets = [0, 16], sizes = [16, 8], strides = [1, 1]} : vector<16x32xf32> to vector<16x8xf32>
    %301 = vector.extract_strided_slice %233 {offsets = [0, 16], sizes = [16, 8], strides = [1, 1]} : vector<16x32xf32> to vector<16x8xf32>
    "tpu.trace_start"() <{level = 10 : i32, message = "nd,md->nm"}> : () -> ()
    %cst_111 = arith.constant dense<0.000000e+00> : vector<16x16xf32>
    %302 = tpu.matmul %299, %300, %cst_111 {dimension_numbers = #tpu.dot_dimension_numbers<[1], [1], [0], [0], [0, 0, 1, 0], [], []>} : vector<16x8xf32>, vector<16x8xf32>, vector<16x16xf32> -> vector<16x16xf32>
    "tpu.trace_stop"() : () -> ()
    %cst_112 = arith.constant dense<0xFF800000> : vector<16xf32>
    %303 = vector.multi_reduction <maximumf>, %302, %cst_112 [1] : vector<16x16xf32> to vector<16xf32>
    %304 = vector.shape_cast %303 : vector<16xf32> to vector<16x1xf32>
    %305 = vector.broadcast %304 : vector<16x1xf32> to vector<16x16xf32>
    %306 = arith.subf %302, %305 : vector<16x16xf32>
    %307 = math.exp %306 : vector<16x16xf32>
    %cst_113 = arith.constant dense<0.000000e+00> : vector<16xf32>
    %308 = vector.multi_reduction <add>, %307, %cst_113 [1] : vector<16x16xf32> to vector<16xf32>
    %309 = vector.shape_cast %308 : vector<16xf32> to vector<16x1xf32>
    %310 = vector.broadcast %309 : vector<16x1xf32> to vector<16x16xf32>
    %311 = arith.divf %307, %310 : vector<16x16xf32>
    %312 = vector.extract_strided_slice %32 {offsets = [0, 2], sizes = [1, 1], strides = [1, 1]} : vector<1x4xf32> to vector<1x1xf32>
    %cst_114 = arith.constant 1.000000e+00 : f32
    %313 = vector.broadcast %cst_114 : f32 to vector<1x1xf32>
    %314 = arith.subf %313, %312 : vector<1x1xf32>
    %315 = vector.broadcast %314 : vector<1x1xf32> to vector<16x16xf32>
    %316 = arith.mulf %315, %311 : vector<16x16xf32>
    %317 = vector.broadcast %312 : vector<1x1xf32> to vector<16x16xf32>
    %318 = arith.mulf %317, %65 : vector<16x16xf32>
    %319 = arith.addf %316, %318 : vector<16x16xf32>
    %cst_115 = arith.constant dense<0.000000e+00> : vector<16xf32>
    %320 = vector.multi_reduction <add>, %319, %cst_115 [1] : vector<16x16xf32> to vector<16xf32>
    %321 = vector.shape_cast %320 : vector<16xf32> to vector<16x1xf32>
    %322 = vector.broadcast %321 : vector<16x1xf32> to vector<16x16xf32>
    %323 = arith.divf %319, %322 : vector<16x16xf32>
    %cst_116 = arith.constant dense<0.000000e+00> : vector<16x8xf32>
    %324 = tpu.matmul %323, %301, %cst_116 {dimension_numbers = #tpu.dot_dimension_numbers<[1], [0], [0], [1], [0, 0, 1, 1], [], []>} : vector<16x16xf32>, vector<16x8xf32>, vector<16x8xf32> -> vector<16x8xf32>
    %325 = vector.extract_strided_slice %18 {offsets = [16, 0], sizes = [8, 32], strides = [1, 1]} : vector<32x32xf32> to vector<8x32xf32>
    %cst_117 = arith.constant dense<0.000000e+00> : vector<16x32xf32>
    %326 = tpu.matmul %324, %325, %cst_117 {dimension_numbers = #tpu.dot_dimension_numbers<[1], [0], [0], [1], [0, 0, 1, 1], [], []>} : vector<16x8xf32>, vector<8x32xf32>, vector<16x32xf32> -> vector<16x32xf32>
    %327 = arith.addf %296, %326 : vector<16x32xf32>
    %328 = vector.extract_strided_slice %231 {offsets = [0, 24], sizes = [16, 8], strides = [1, 1]} : vector<16x32xf32> to vector<16x8xf32>
    %cst_118 = arith.constant 0.353553385 : f32
    %329 = vector.broadcast %cst_118 : f32 to vector<16x8xf32>
    %330 = arith.mulf %328, %329 : vector<16x8xf32>
    %331 = vector.extract_strided_slice %232 {offsets = [0, 24], sizes = [16, 8], strides = [1, 1]} : vector<16x32xf32> to vector<16x8xf32>
    %332 = vector.extract_strided_slice %233 {offsets = [0, 24], sizes = [16, 8], strides = [1, 1]} : vector<16x32xf32> to vector<16x8xf32>
    "tpu.trace_start"() <{level = 10 : i32, message = "nd,md->nm"}> : () -> ()
    %cst_119 = arith.constant dense<0.000000e+00> : vector<16x16xf32>
    %333 = tpu.matmul %330, %331, %cst_119 {dimension_numbers = #tpu.dot_dimension_numbers<[1], [1], [0], [0], [0, 0, 1, 0], [], []>} : vector<16x8xf32>, vector<16x8xf32>, vector<16x16xf32> -> vector<16x16xf32>
    "tpu.trace_stop"() : () -> ()
    %cst_120 = arith.constant dense<0xFF800000> : vector<16xf32>
    %334 = vector.multi_reduction <maximumf>, %333, %cst_120 [1] : vector<16x16xf32> to vector<16xf32>
    %335 = vector.shape_cast %334 : vector<16xf32> to vector<16x1xf32>
    %336 = vector.broadcast %335 : vector<16x1xf32> to vector<16x16xf32>
    %337 = arith.subf %333, %336 : vector<16x16xf32>
    %338 = math.exp %337 : vector<16x16xf32>
    %cst_121 = arith.constant dense<0.000000e+00> : vector<16xf32>
    %339 = vector.multi_reduction <add>, %338, %cst_121 [1] : vector<16x16xf32> to vector<16xf32>
    %340 = vector.shape_cast %339 : vector<16xf32> to vector<16x1xf32>
    %341 = vector.broadcast %340 : vector<16x1xf32> to vector<16x16xf32>
    %342 = arith.divf %338, %341 : vector<16x16xf32>
    %343 = vector.extract_strided_slice %32 {offsets = [0, 3], sizes = [1, 1], strides = [1, 1]} : vector<1x4xf32> to vector<1x1xf32>
    %cst_122 = arith.constant 1.000000e+00 : f32
    %344 = vector.broadcast %cst_122 : f32 to vector<1x1xf32>
    %345 = arith.subf %344, %343 : vector<1x1xf32>
    %346 = vector.broadcast %345 : vector<1x1xf32> to vector<16x16xf32>
    %347 = arith.mulf %346, %342 : vector<16x16xf32>
    %348 = vector.broadcast %343 : vector<1x1xf32> to vector<16x16xf32>
    %349 = arith.mulf %348, %76 : vector<16x16xf32>
    %350 = arith.addf %347, %349 : vector<16x16xf32>
    %cst_123 = arith.constant dense<0.000000e+00> : vector<16xf32>
    %351 = vector.multi_reduction <add>, %350, %cst_123 [1] : vector<16x16xf32> to vector<16xf32>
    %352 = vector.shape_cast %351 : vector<16xf32> to vector<16x1xf32>
    %353 = vector.broadcast %352 : vector<16x1xf32> to vector<16x16xf32>
    %354 = arith.divf %350, %353 : vector<16x16xf32>
    %cst_124 = arith.constant dense<0.000000e+00> : vector<16x8xf32>
    %355 = tpu.matmul %354, %332, %cst_124 {dimension_numbers = #tpu.dot_dimension_numbers<[1], [0], [0], [1], [0, 0, 1, 1], [], []>} : vector<16x16xf32>, vector<16x8xf32>, vector<16x8xf32> -> vector<16x8xf32>
    %356 = vector.extract_strided_slice %18 {offsets = [24, 0], sizes = [8, 32], strides = [1, 1]} : vector<32x32xf32> to vector<8x32xf32>
    %cst_125 = arith.constant dense<0.000000e+00> : vector<16x32xf32>
    %357 = tpu.matmul %355, %356, %cst_125 {dimension_numbers = #tpu.dot_dimension_numbers<[1], [0], [0], [1], [0, 0, 1, 1], [], []>} : vector<16x8xf32>, vector<8x32xf32>, vector<16x32xf32> -> vector<16x32xf32>
    %358 = arith.addf %327, %357 : vector<16x32xf32>
    %359 = tpu.concatenate %230, %358 in 0 : vector<16x32xf32>, vector<16x32xf32> -> vector<32x32xf32>
    %360 = arith.addf %9, %359 : vector<32x32xf32>
    %361 = vector.broadcast %19 : vector<1x32xf32> to vector<32x32xf32>
    %362 = arith.addf %360, %361 : vector<32x32xf32>
    %cst_126 = arith.constant dense<0.000000e+00> : vector<32xf32>
    %363 = vector.multi_reduction <add>, %362, %cst_126 [1] : vector<32x32xf32> to vector<32xf32>
    %364 = vector.shape_cast %363 : vector<32xf32> to vector<32x1xf32>
    %cst_127 = arith.constant 3.200000e+01 : f32
    %365 = vector.broadcast %cst_127 : f32 to vector<32x1xf32>
    %366 = arith.divf %364, %365 : vector<32x1xf32>
    %367 = vector.broadcast %366 : vector<32x1xf32> to vector<32x32xf32>
    %368 = arith.subf %362, %367 : vector<32x32xf32>
    %369 = arith.mulf %368, %368 : vector<32x32xf32>
    %cst_128 = arith.constant dense<0.000000e+00> : vector<32xf32>
    %370 = vector.multi_reduction <add>, %369, %cst_128 [1] : vector<32x32xf32> to vector<32xf32>
    %371 = vector.shape_cast %370 : vector<32xf32> to vector<32x1xf32>
    %cst_129 = arith.constant 3.200000e+01 : f32
    %372 = vector.broadcast %cst_129 : f32 to vector<32x1xf32>
    %373 = arith.divf %371, %372 : vector<32x1xf32>
    %cst_130 = arith.constant 9.99999997E-7 : f32
    %374 = vector.broadcast %cst_130 : f32 to vector<32x1xf32>
    %375 = arith.addf %373, %374 : vector<32x1xf32>
    %376 = math.rsqrt %375 : vector<32x1xf32>
    %377 = vector.broadcast %376 : vector<32x1xf32> to vector<32x32xf32>
    %378 = arith.mulf %368, %377 : vector<32x32xf32>
    %379 = vector.broadcast %20 : vector<1x32xf32> to vector<32x32xf32>
    %380 = arith.mulf %378, %379 : vector<32x32xf32>
    %381 = vector.broadcast %21 : vector<1x32xf32> to vector<32x32xf32>
    %382 = arith.addf %380, %381 : vector<32x32xf32>
    %cst_131 = arith.constant dense<0.000000e+00> : vector<32x128xf32>
    %383 = tpu.matmul %382, %22, %cst_131 {dimension_numbers = #tpu.dot_dimension_numbers<[1], [0], [0], [1], [0, 0, 1, 1], [], []>} : vector<32x32xf32>, vector<32x128xf32>, vector<32x128xf32> -> vector<32x128xf32>
    %384 = vector.broadcast %23 : vector<1x128xf32> to vector<32x128xf32>
    %385 = arith.addf %383, %384 : vector<32x128xf32>
    %cst_132 = arith.constant 5.000000e-01 : f32
    %386 = vector.broadcast %cst_132 : f32 to vector<32x128xf32>
    %387 = arith.mulf %386, %385 : vector<32x128xf32>
    %cst_133 = arith.constant 4.471500e-02 : f32
    %388 = vector.broadcast %cst_133 : f32 to vector<32x128xf32>
    %389 = arith.mulf %388, %385 : vector<32x128xf32>
    %390 = arith.mulf %389, %385 : vector<32x128xf32>
    %391 = arith.mulf %390, %385 : vector<32x128xf32>
    %392 = arith.addf %385, %391 : vector<32x128xf32>
    %cst_134 = arith.constant 0.797884583 : f32
    %393 = vector.broadcast %cst_134 : f32 to vector<32x128xf32>
    %394 = arith.mulf %393, %392 : vector<32x128xf32>
    %395 = math.tanh %394 : vector<32x128xf32>
    %cst_135 = arith.constant 1.000000e+00 : f32
    %396 = vector.broadcast %cst_135 : f32 to vector<32x128xf32>
    %397 = arith.addf %396, %395 : vector<32x128xf32>
    %398 = arith.mulf %387, %397 : vector<32x128xf32>
    %cst_136 = arith.constant dense<0.000000e+00> : vector<32x32xf32>
    %399 = tpu.matmul %398, %24, %cst_136 {dimension_numbers = #tpu.dot_dimension_numbers<[1], [0], [0], [1], [0, 0, 1, 1], [], []>} : vector<32x128xf32>, vector<128x32xf32>, vector<32x32xf32> -> vector<32x32xf32>
    %400 = arith.addf %362, %399 : vector<32x32xf32>
    %401 = vector.broadcast %25 : vector<1x32xf32> to vector<32x32xf32>
    %402 = arith.addf %400, %401 : vector<32x32xf32>
    %403 = vector.extract_strided_slice %402 {offsets = [0, 0], sizes = [16, 32], strides = [1, 1]} : vector<32x32xf32> to vector<16x32xf32>
    %404 = tpu.concatenate %403, %4 in 0 : vector<16x32xf32>, vector<1x32xf32> -> vector<17x32xf32>
    %405 = vector.extract_strided_slice %402 {offsets = [16, 0], sizes = [16, 32], strides = [1, 1]} : vector<32x32xf32> to vector<16x32xf32>
    %406 = tpu.concatenate %405, %4 in 0 : vector<16x32xf32>, vector<1x32xf32> -> vector<17x32xf32>
    %c0_137 = arith.constant 0 : index
    %c0_138 = arith.constant 0 : index
    %407 = vector.load %arg21[%c0_137, %c0_138] : memref<1x32xf32, #tpu.memory_space<vmem>>, vector<1x32xf32>
    %c0_139 = arith.constant 0 : index
    %c0_140 = arith.constant 0 : index
    %408 = vector.load %arg22[%c0_139, %c0_140] : memref<1x32xf32, #tpu.memory_space<vmem>>, vector<1x32xf32>
    %c0_141 = arith.constant 0 : index
    %c0_142 = arith.constant 0 : index
    %409 = vector.load %arg23[%c0_141, %c0_142] : memref<32x96xf32, #tpu.memory_space<vmem>>, vector<32x96xf32>
    %c0_143 = arith.constant 0 : index
    %c0_144 = arith.constant 0 : index
    %410 = vector.load %arg24[%c0_143, %c0_144] : memref<1x96xf32, #tpu.memory_space<vmem>>, vector<1x96xf32>
    %c0_145 = arith.constant 0 : index
    %c0_146 = arith.constant 0 : index
    %411 = vector.load %arg25[%c0_145, %c0_146] : memref<32x32xf32, #tpu.memory_space<vmem>>, vector<32x32xf32>
    %c0_147 = arith.constant 0 : index
    %c0_148 = arith.constant 0 : index
    %412 = vector.load %arg26[%c0_147, %c0_148] : memref<1x32xf32, #tpu.memory_space<vmem>>, vector<1x32xf32>
    %c0_149 = arith.constant 0 : index
    %c0_150 = arith.constant 0 : index
    %413 = vector.load %arg27[%c0_149, %c0_150] : memref<1x32xf32, #tpu.memory_space<vmem>>, vector<1x32xf32>
    %c0_151 = arith.constant 0 : index
    %c0_152 = arith.constant 0 : index
    %414 = vector.load %arg28[%c0_151, %c0_152] : memref<1x32xf32, #tpu.memory_space<vmem>>, vector<1x32xf32>
    %c0_153 = arith.constant 0 : index
    %c0_154 = arith.constant 0 : index
    %415 = vector.load %arg29[%c0_153, %c0_154] : memref<32x128xf32, #tpu.memory_space<vmem>>, vector<32x128xf32>
    %c0_155 = arith.constant 0 : index
    %c0_156 = arith.constant 0 : index
    %416 = vector.load %arg30[%c0_155, %c0_156] : memref<1x128xf32, #tpu.memory_space<vmem>>, vector<1x128xf32>
    %c0_157 = arith.constant 0 : index
    %c0_158 = arith.constant 0 : index
    %417 = vector.load %arg31[%c0_157, %c0_158] : memref<128x32xf32, #tpu.memory_space<vmem>>, vector<128x32xf32>
    %c0_159 = arith.constant 0 : index
    %c0_160 = arith.constant 0 : index
    %418 = vector.load %arg32[%c0_159, %c0_160] : memref<1x32xf32, #tpu.memory_space<vmem>>, vector<1x32xf32>
    %cst_161 = arith.constant dense<0.000000e+00> : vector<17xf32>
    %419 = vector.multi_reduction <add>, %404, %cst_161 [1] : vector<17x32xf32> to vector<17xf32>
    %420 = vector.shape_cast %419 : vector<17xf32> to vector<17x1xf32>
    %cst_162 = arith.constant 3.200000e+01 : f32
    %421 = vector.broadcast %cst_162 : f32 to vector<17x1xf32>
    %422 = arith.divf %420, %421 : vector<17x1xf32>
    %423 = vector.broadcast %422 : vector<17x1xf32> to vector<17x32xf32>
    %424 = arith.subf %404, %423 : vector<17x32xf32>
    %425 = arith.mulf %424, %424 : vector<17x32xf32>
    %cst_163 = arith.constant dense<0.000000e+00> : vector<17xf32>
    %426 = vector.multi_reduction <add>, %425, %cst_163 [1] : vector<17x32xf32> to vector<17xf32>
    %427 = vector.shape_cast %426 : vector<17xf32> to vector<17x1xf32>
    %cst_164 = arith.constant 3.200000e+01 : f32
    %428 = vector.broadcast %cst_164 : f32 to vector<17x1xf32>
    %429 = arith.divf %427, %428 : vector<17x1xf32>
    %cst_165 = arith.constant 9.99999997E-7 : f32
    %430 = vector.broadcast %cst_165 : f32 to vector<17x1xf32>
    %431 = arith.addf %429, %430 : vector<17x1xf32>
    %432 = math.rsqrt %431 : vector<17x1xf32>
    %433 = vector.broadcast %432 : vector<17x1xf32> to vector<17x32xf32>
    %434 = arith.mulf %424, %433 : vector<17x32xf32>
    %435 = vector.broadcast %407 : vector<1x32xf32> to vector<17x32xf32>
    %436 = arith.mulf %434, %435 : vector<17x32xf32>
    %437 = vector.broadcast %408 : vector<1x32xf32> to vector<17x32xf32>
    %438 = arith.addf %436, %437 : vector<17x32xf32>
    %cst_166 = arith.constant dense<0.000000e+00> : vector<17x96xf32>
    %439 = tpu.matmul %438, %409, %cst_166 {dimension_numbers = #tpu.dot_dimension_numbers<[1], [0], [0], [1], [0, 0, 1, 1], [], []>} : vector<17x32xf32>, vector<32x96xf32>, vector<17x96xf32> -> vector<17x96xf32>
    %440 = vector.broadcast %410 : vector<1x96xf32> to vector<17x96xf32>
    %441 = arith.addf %439, %440 : vector<17x96xf32>
    %442 = vector.extract_strided_slice %441 {offsets = [0, 0], sizes = [17, 32], strides = [1, 1]} : vector<17x96xf32> to vector<17x32xf32>
    %443 = vector.extract_strided_slice %441 {offsets = [0, 32], sizes = [17, 32], strides = [1, 1]} : vector<17x96xf32> to vector<17x32xf32>
    %444 = vector.extract_strided_slice %441 {offsets = [0, 64], sizes = [17, 32], strides = [1, 1]} : vector<17x96xf32> to vector<17x32xf32>
    %cst_167 = arith.constant 0.000000e+00 : f32
    %445 = vector.broadcast %cst_167 : f32 to vector<17x32xf32>
    %446 = vector.extract_strided_slice %442 {offsets = [0, 0], sizes = [17, 8], strides = [1, 1]} : vector<17x32xf32> to vector<17x8xf32>
    %cst_168 = arith.constant 0.353553385 : f32
    %447 = vector.broadcast %cst_168 : f32 to vector<17x8xf32>
    %448 = arith.mulf %446, %447 : vector<17x8xf32>
    %449 = vector.extract_strided_slice %443 {offsets = [0, 0], sizes = [17, 8], strides = [1, 1]} : vector<17x32xf32> to vector<17x8xf32>
    %450 = vector.extract_strided_slice %444 {offsets = [0, 0], sizes = [17, 8], strides = [1, 1]} : vector<17x32xf32> to vector<17x8xf32>
    "tpu.trace_start"() <{level = 10 : i32, message = "nd,md->nm"}> : () -> ()
    %cst_169 = arith.constant dense<0.000000e+00> : vector<17x17xf32>
    %451 = tpu.matmul %448, %449, %cst_169 {dimension_numbers = #tpu.dot_dimension_numbers<[1], [1], [0], [0], [0, 0, 1, 0], [], []>} : vector<17x8xf32>, vector<17x8xf32>, vector<17x17xf32> -> vector<17x17xf32>
    "tpu.trace_stop"() : () -> ()
    %cst_170 = arith.constant dense<0xFF800000> : vector<17xf32>
    %452 = vector.multi_reduction <maximumf>, %451, %cst_170 [1] : vector<17x17xf32> to vector<17xf32>
    %453 = vector.shape_cast %452 : vector<17xf32> to vector<17x1xf32>
    %454 = vector.broadcast %453 : vector<17x1xf32> to vector<17x17xf32>
    %455 = arith.subf %451, %454 : vector<17x17xf32>
    %456 = math.exp %455 : vector<17x17xf32>
    %cst_171 = arith.constant dense<0.000000e+00> : vector<17xf32>
    %457 = vector.multi_reduction <add>, %456, %cst_171 [1] : vector<17x17xf32> to vector<17xf32>
    %458 = vector.shape_cast %457 : vector<17xf32> to vector<17x1xf32>
    %459 = vector.broadcast %458 : vector<17x1xf32> to vector<17x17xf32>
    %460 = arith.divf %456, %459 : vector<17x17xf32>
    %cst_172 = arith.constant dense<0.000000e+00> : vector<17x8xf32>
    %461 = tpu.matmul %460, %450, %cst_172 {dimension_numbers = #tpu.dot_dimension_numbers<[1], [0], [0], [1], [0, 0, 1, 1], [], []>} : vector<17x17xf32>, vector<17x8xf32>, vector<17x8xf32> -> vector<17x8xf32>
    %462 = vector.extract_strided_slice %411 {offsets = [0, 0], sizes = [8, 32], strides = [1, 1]} : vector<32x32xf32> to vector<8x32xf32>
    %cst_173 = arith.constant dense<0.000000e+00> : vector<17x32xf32>
    %463 = tpu.matmul %461, %462, %cst_173 {dimension_numbers = #tpu.dot_dimension_numbers<[1], [0], [0], [1], [0, 0, 1, 1], [], []>} : vector<17x8xf32>, vector<8x32xf32>, vector<17x32xf32> -> vector<17x32xf32>
    %464 = arith.addf %445, %463 : vector<17x32xf32>
    %465 = vector.extract_strided_slice %442 {offsets = [0, 8], sizes = [17, 8], strides = [1, 1]} : vector<17x32xf32> to vector<17x8xf32>
    %cst_174 = arith.constant 0.353553385 : f32
    %466 = vector.broadcast %cst_174 : f32 to vector<17x8xf32>
    %467 = arith.mulf %465, %466 : vector<17x8xf32>
    %468 = vector.extract_strided_slice %443 {offsets = [0, 8], sizes = [17, 8], strides = [1, 1]} : vector<17x32xf32> to vector<17x8xf32>
    %469 = vector.extract_strided_slice %444 {offsets = [0, 8], sizes = [17, 8], strides = [1, 1]} : vector<17x32xf32> to vector<17x8xf32>
    "tpu.trace_start"() <{level = 10 : i32, message = "nd,md->nm"}> : () -> ()
    %cst_175 = arith.constant dense<0.000000e+00> : vector<17x17xf32>
    %470 = tpu.matmul %467, %468, %cst_175 {dimension_numbers = #tpu.dot_dimension_numbers<[1], [1], [0], [0], [0, 0, 1, 0], [], []>} : vector<17x8xf32>, vector<17x8xf32>, vector<17x17xf32> -> vector<17x17xf32>
    "tpu.trace_stop"() : () -> ()
    %cst_176 = arith.constant dense<0xFF800000> : vector<17xf32>
    %471 = vector.multi_reduction <maximumf>, %470, %cst_176 [1] : vector<17x17xf32> to vector<17xf32>
    %472 = vector.shape_cast %471 : vector<17xf32> to vector<17x1xf32>
    %473 = vector.broadcast %472 : vector<17x1xf32> to vector<17x17xf32>
    %474 = arith.subf %470, %473 : vector<17x17xf32>
    %475 = math.exp %474 : vector<17x17xf32>
    %cst_177 = arith.constant dense<0.000000e+00> : vector<17xf32>
    %476 = vector.multi_reduction <add>, %475, %cst_177 [1] : vector<17x17xf32> to vector<17xf32>
    %477 = vector.shape_cast %476 : vector<17xf32> to vector<17x1xf32>
    %478 = vector.broadcast %477 : vector<17x1xf32> to vector<17x17xf32>
    %479 = arith.divf %475, %478 : vector<17x17xf32>
    %cst_178 = arith.constant dense<0.000000e+00> : vector<17x8xf32>
    %480 = tpu.matmul %479, %469, %cst_178 {dimension_numbers = #tpu.dot_dimension_numbers<[1], [0], [0], [1], [0, 0, 1, 1], [], []>} : vector<17x17xf32>, vector<17x8xf32>, vector<17x8xf32> -> vector<17x8xf32>
    %481 = vector.extract_strided_slice %411 {offsets = [8, 0], sizes = [8, 32], strides = [1, 1]} : vector<32x32xf32> to vector<8x32xf32>
    %cst_179 = arith.constant dense<0.000000e+00> : vector<17x32xf32>
    %482 = tpu.matmul %480, %481, %cst_179 {dimension_numbers = #tpu.dot_dimension_numbers<[1], [0], [0], [1], [0, 0, 1, 1], [], []>} : vector<17x8xf32>, vector<8x32xf32>, vector<17x32xf32> -> vector<17x32xf32>
    %483 = arith.addf %464, %482 : vector<17x32xf32>
    %484 = vector.extract_strided_slice %442 {offsets = [0, 16], sizes = [17, 8], strides = [1, 1]} : vector<17x32xf32> to vector<17x8xf32>
    %cst_180 = arith.constant 0.353553385 : f32
    %485 = vector.broadcast %cst_180 : f32 to vector<17x8xf32>
    %486 = arith.mulf %484, %485 : vector<17x8xf32>
    %487 = vector.extract_strided_slice %443 {offsets = [0, 16], sizes = [17, 8], strides = [1, 1]} : vector<17x32xf32> to vector<17x8xf32>
    %488 = vector.extract_strided_slice %444 {offsets = [0, 16], sizes = [17, 8], strides = [1, 1]} : vector<17x32xf32> to vector<17x8xf32>
    "tpu.trace_start"() <{level = 10 : i32, message = "nd,md->nm"}> : () -> ()
    %cst_181 = arith.constant dense<0.000000e+00> : vector<17x17xf32>
    %489 = tpu.matmul %486, %487, %cst_181 {dimension_numbers = #tpu.dot_dimension_numbers<[1], [1], [0], [0], [0, 0, 1, 0], [], []>} : vector<17x8xf32>, vector<17x8xf32>, vector<17x17xf32> -> vector<17x17xf32>
    "tpu.trace_stop"() : () -> ()
    %cst_182 = arith.constant dense<0xFF800000> : vector<17xf32>
    %490 = vector.multi_reduction <maximumf>, %489, %cst_182 [1] : vector<17x17xf32> to vector<17xf32>
    %491 = vector.shape_cast %490 : vector<17xf32> to vector<17x1xf32>
    %492 = vector.broadcast %491 : vector<17x1xf32> to vector<17x17xf32>
    %493 = arith.subf %489, %492 : vector<17x17xf32>
    %494 = math.exp %493 : vector<17x17xf32>
    %cst_183 = arith.constant dense<0.000000e+00> : vector<17xf32>
    %495 = vector.multi_reduction <add>, %494, %cst_183 [1] : vector<17x17xf32> to vector<17xf32>
    %496 = vector.shape_cast %495 : vector<17xf32> to vector<17x1xf32>
    %497 = vector.broadcast %496 : vector<17x1xf32> to vector<17x17xf32>
    %498 = arith.divf %494, %497 : vector<17x17xf32>
    %cst_184 = arith.constant dense<0.000000e+00> : vector<17x8xf32>
    %499 = tpu.matmul %498, %488, %cst_184 {dimension_numbers = #tpu.dot_dimension_numbers<[1], [0], [0], [1], [0, 0, 1, 1], [], []>} : vector<17x17xf32>, vector<17x8xf32>, vector<17x8xf32> -> vector<17x8xf32>
    %500 = vector.extract_strided_slice %411 {offsets = [16, 0], sizes = [8, 32], strides = [1, 1]} : vector<32x32xf32> to vector<8x32xf32>
    %cst_185 = arith.constant dense<0.000000e+00> : vector<17x32xf32>
    %501 = tpu.matmul %499, %500, %cst_185 {dimension_numbers = #tpu.dot_dimension_numbers<[1], [0], [0], [1], [0, 0, 1, 1], [], []>} : vector<17x8xf32>, vector<8x32xf32>, vector<17x32xf32> -> vector<17x32xf32>
    %502 = arith.addf %483, %501 : vector<17x32xf32>
    %503 = vector.extract_strided_slice %442 {offsets = [0, 24], sizes = [17, 8], strides = [1, 1]} : vector<17x32xf32> to vector<17x8xf32>
    %cst_186 = arith.constant 0.353553385 : f32
    %504 = vector.broadcast %cst_186 : f32 to vector<17x8xf32>
    %505 = arith.mulf %503, %504 : vector<17x8xf32>
    %506 = vector.extract_strided_slice %443 {offsets = [0, 24], sizes = [17, 8], strides = [1, 1]} : vector<17x32xf32> to vector<17x8xf32>
    %507 = vector.extract_strided_slice %444 {offsets = [0, 24], sizes = [17, 8], strides = [1, 1]} : vector<17x32xf32> to vector<17x8xf32>
    "tpu.trace_start"() <{level = 10 : i32, message = "nd,md->nm"}> : () -> ()
    %cst_187 = arith.constant dense<0.000000e+00> : vector<17x17xf32>
    %508 = tpu.matmul %505, %506, %cst_187 {dimension_numbers = #tpu.dot_dimension_numbers<[1], [1], [0], [0], [0, 0, 1, 0], [], []>} : vector<17x8xf32>, vector<17x8xf32>, vector<17x17xf32> -> vector<17x17xf32>
    "tpu.trace_stop"() : () -> ()
    %cst_188 = arith.constant dense<0xFF800000> : vector<17xf32>
    %509 = vector.multi_reduction <maximumf>, %508, %cst_188 [1] : vector<17x17xf32> to vector<17xf32>
    %510 = vector.shape_cast %509 : vector<17xf32> to vector<17x1xf32>
    %511 = vector.broadcast %510 : vector<17x1xf32> to vector<17x17xf32>
    %512 = arith.subf %508, %511 : vector<17x17xf32>
    %513 = math.exp %512 : vector<17x17xf32>
    %cst_189 = arith.constant dense<0.000000e+00> : vector<17xf32>
    %514 = vector.multi_reduction <add>, %513, %cst_189 [1] : vector<17x17xf32> to vector<17xf32>
    %515 = vector.shape_cast %514 : vector<17xf32> to vector<17x1xf32>
    %516 = vector.broadcast %515 : vector<17x1xf32> to vector<17x17xf32>
    %517 = arith.divf %513, %516 : vector<17x17xf32>
    %cst_190 = arith.constant dense<0.000000e+00> : vector<17x8xf32>
    %518 = tpu.matmul %517, %507, %cst_190 {dimension_numbers = #tpu.dot_dimension_numbers<[1], [0], [0], [1], [0, 0, 1, 1], [], []>} : vector<17x17xf32>, vector<17x8xf32>, vector<17x8xf32> -> vector<17x8xf32>
    %519 = vector.extract_strided_slice %411 {offsets = [24, 0], sizes = [8, 32], strides = [1, 1]} : vector<32x32xf32> to vector<8x32xf32>
    %cst_191 = arith.constant dense<0.000000e+00> : vector<17x32xf32>
    %520 = tpu.matmul %518, %519, %cst_191 {dimension_numbers = #tpu.dot_dimension_numbers<[1], [0], [0], [1], [0, 0, 1, 1], [], []>} : vector<17x8xf32>, vector<8x32xf32>, vector<17x32xf32> -> vector<17x32xf32>
    %521 = arith.addf %502, %520 : vector<17x32xf32>
    %522 = arith.addf %404, %521 : vector<17x32xf32>
    %523 = vector.broadcast %412 : vector<1x32xf32> to vector<17x32xf32>
    %524 = arith.addf %522, %523 : vector<17x32xf32>
    %cst_192 = arith.constant dense<0.000000e+00> : vector<17xf32>
    %525 = vector.multi_reduction <add>, %524, %cst_192 [1] : vector<17x32xf32> to vector<17xf32>
    %526 = vector.shape_cast %525 : vector<17xf32> to vector<17x1xf32>
    %cst_193 = arith.constant 3.200000e+01 : f32
    %527 = vector.broadcast %cst_193 : f32 to vector<17x1xf32>
    %528 = arith.divf %526, %527 : vector<17x1xf32>
    %529 = vector.broadcast %528 : vector<17x1xf32> to vector<17x32xf32>
    %530 = arith.subf %524, %529 : vector<17x32xf32>
    %531 = arith.mulf %530, %530 : vector<17x32xf32>
    %cst_194 = arith.constant dense<0.000000e+00> : vector<17xf32>
    %532 = vector.multi_reduction <add>, %531, %cst_194 [1] : vector<17x32xf32> to vector<17xf32>
    %533 = vector.shape_cast %532 : vector<17xf32> to vector<17x1xf32>
    %cst_195 = arith.constant 3.200000e+01 : f32
    %534 = vector.broadcast %cst_195 : f32 to vector<17x1xf32>
    %535 = arith.divf %533, %534 : vector<17x1xf32>
    %cst_196 = arith.constant 9.99999997E-7 : f32
    %536 = vector.broadcast %cst_196 : f32 to vector<17x1xf32>
    %537 = arith.addf %535, %536 : vector<17x1xf32>
    %538 = math.rsqrt %537 : vector<17x1xf32>
    %539 = vector.broadcast %538 : vector<17x1xf32> to vector<17x32xf32>
    %540 = arith.mulf %530, %539 : vector<17x32xf32>
    %541 = vector.broadcast %413 : vector<1x32xf32> to vector<17x32xf32>
    %542 = arith.mulf %540, %541 : vector<17x32xf32>
    %543 = vector.broadcast %414 : vector<1x32xf32> to vector<17x32xf32>
    %544 = arith.addf %542, %543 : vector<17x32xf32>
    %cst_197 = arith.constant dense<0.000000e+00> : vector<17x128xf32>
    %545 = tpu.matmul %544, %415, %cst_197 {dimension_numbers = #tpu.dot_dimension_numbers<[1], [0], [0], [1], [0, 0, 1, 1], [], []>} : vector<17x32xf32>, vector<32x128xf32>, vector<17x128xf32> -> vector<17x128xf32>
    %546 = vector.broadcast %416 : vector<1x128xf32> to vector<17x128xf32>
    %547 = arith.addf %545, %546 : vector<17x128xf32>
    %cst_198 = arith.constant 5.000000e-01 : f32
    %548 = vector.broadcast %cst_198 : f32 to vector<17x128xf32>
    %549 = arith.mulf %548, %547 : vector<17x128xf32>
    %cst_199 = arith.constant 4.471500e-02 : f32
    %550 = vector.broadcast %cst_199 : f32 to vector<17x128xf32>
    %551 = arith.mulf %550, %547 : vector<17x128xf32>
    %552 = arith.mulf %551, %547 : vector<17x128xf32>
    %553 = arith.mulf %552, %547 : vector<17x128xf32>
    %554 = arith.addf %547, %553 : vector<17x128xf32>
    %cst_200 = arith.constant 0.797884583 : f32
    %555 = vector.broadcast %cst_200 : f32 to vector<17x128xf32>
    %556 = arith.mulf %555, %554 : vector<17x128xf32>
    %557 = math.tanh %556 : vector<17x128xf32>
    %cst_201 = arith.constant 1.000000e+00 : f32
    %558 = vector.broadcast %cst_201 : f32 to vector<17x128xf32>
    %559 = arith.addf %558, %557 : vector<17x128xf32>
    %560 = arith.mulf %549, %559 : vector<17x128xf32>
    %cst_202 = arith.constant dense<0.000000e+00> : vector<17x32xf32>
    %561 = tpu.matmul %560, %417, %cst_202 {dimension_numbers = #tpu.dot_dimension_numbers<[1], [0], [0], [1], [0, 0, 1, 1], [], []>} : vector<17x128xf32>, vector<128x32xf32>, vector<17x32xf32> -> vector<17x32xf32>
    %562 = arith.addf %524, %561 : vector<17x32xf32>
    %563 = vector.broadcast %418 : vector<1x32xf32> to vector<17x32xf32>
    %564 = arith.addf %562, %563 : vector<17x32xf32>
    %cst_203 = arith.constant dense<0.000000e+00> : vector<17xf32>
    %565 = vector.multi_reduction <add>, %406, %cst_203 [1] : vector<17x32xf32> to vector<17xf32>
    %566 = vector.shape_cast %565 : vector<17xf32> to vector<17x1xf32>
    %cst_204 = arith.constant 3.200000e+01 : f32
    %567 = vector.broadcast %cst_204 : f32 to vector<17x1xf32>
    %568 = arith.divf %566, %567 : vector<17x1xf32>
    %569 = vector.broadcast %568 : vector<17x1xf32> to vector<17x32xf32>
    %570 = arith.subf %406, %569 : vector<17x32xf32>
    %571 = arith.mulf %570, %570 : vector<17x32xf32>
    %cst_205 = arith.constant dense<0.000000e+00> : vector<17xf32>
    %572 = vector.multi_reduction <add>, %571, %cst_205 [1] : vector<17x32xf32> to vector<17xf32>
    %573 = vector.shape_cast %572 : vector<17xf32> to vector<17x1xf32>
    %cst_206 = arith.constant 3.200000e+01 : f32
    %574 = vector.broadcast %cst_206 : f32 to vector<17x1xf32>
    %575 = arith.divf %573, %574 : vector<17x1xf32>
    %cst_207 = arith.constant 9.99999997E-7 : f32
    %576 = vector.broadcast %cst_207 : f32 to vector<17x1xf32>
    %577 = arith.addf %575, %576 : vector<17x1xf32>
    %578 = math.rsqrt %577 : vector<17x1xf32>
    %579 = vector.broadcast %578 : vector<17x1xf32> to vector<17x32xf32>
    %580 = arith.mulf %570, %579 : vector<17x32xf32>
    %581 = vector.broadcast %407 : vector<1x32xf32> to vector<17x32xf32>
    %582 = arith.mulf %580, %581 : vector<17x32xf32>
    %583 = vector.broadcast %408 : vector<1x32xf32> to vector<17x32xf32>
    %584 = arith.addf %582, %583 : vector<17x32xf32>
    %cst_208 = arith.constant dense<0.000000e+00> : vector<17x96xf32>
    %585 = tpu.matmul %584, %409, %cst_208 {dimension_numbers = #tpu.dot_dimension_numbers<[1], [0], [0], [1], [0, 0, 1, 1], [], []>} : vector<17x32xf32>, vector<32x96xf32>, vector<17x96xf32> -> vector<17x96xf32>
    %586 = vector.broadcast %410 : vector<1x96xf32> to vector<17x96xf32>
    %587 = arith.addf %585, %586 : vector<17x96xf32>
    %588 = vector.extract_strided_slice %587 {offsets = [0, 0], sizes = [17, 32], strides = [1, 1]} : vector<17x96xf32> to vector<17x32xf32>
    %589 = vector.extract_strided_slice %587 {offsets = [0, 32], sizes = [17, 32], strides = [1, 1]} : vector<17x96xf32> to vector<17x32xf32>
    %590 = vector.extract_strided_slice %587 {offsets = [0, 64], sizes = [17, 32], strides = [1, 1]} : vector<17x96xf32> to vector<17x32xf32>
    %cst_209 = arith.constant 0.000000e+00 : f32
    %591 = vector.broadcast %cst_209 : f32 to vector<17x32xf32>
    %592 = vector.extract_strided_slice %588 {offsets = [0, 0], sizes = [17, 8], strides = [1, 1]} : vector<17x32xf32> to vector<17x8xf32>
    %cst_210 = arith.constant 0.353553385 : f32
    %593 = vector.broadcast %cst_210 : f32 to vector<17x8xf32>
    %594 = arith.mulf %592, %593 : vector<17x8xf32>
    %595 = vector.extract_strided_slice %589 {offsets = [0, 0], sizes = [17, 8], strides = [1, 1]} : vector<17x32xf32> to vector<17x8xf32>
    %596 = vector.extract_strided_slice %590 {offsets = [0, 0], sizes = [17, 8], strides = [1, 1]} : vector<17x32xf32> to vector<17x8xf32>
    "tpu.trace_start"() <{level = 10 : i32, message = "nd,md->nm"}> : () -> ()
    %cst_211 = arith.constant dense<0.000000e+00> : vector<17x17xf32>
    %597 = tpu.matmul %594, %595, %cst_211 {dimension_numbers = #tpu.dot_dimension_numbers<[1], [1], [0], [0], [0, 0, 1, 0], [], []>} : vector<17x8xf32>, vector<17x8xf32>, vector<17x17xf32> -> vector<17x17xf32>
    "tpu.trace_stop"() : () -> ()
    %cst_212 = arith.constant dense<0xFF800000> : vector<17xf32>
    %598 = vector.multi_reduction <maximumf>, %597, %cst_212 [1] : vector<17x17xf32> to vector<17xf32>
    %599 = vector.shape_cast %598 : vector<17xf32> to vector<17x1xf32>
    %600 = vector.broadcast %599 : vector<17x1xf32> to vector<17x17xf32>
    %601 = arith.subf %597, %600 : vector<17x17xf32>
    %602 = math.exp %601 : vector<17x17xf32>
    %cst_213 = arith.constant dense<0.000000e+00> : vector<17xf32>
    %603 = vector.multi_reduction <add>, %602, %cst_213 [1] : vector<17x17xf32> to vector<17xf32>
    %604 = vector.shape_cast %603 : vector<17xf32> to vector<17x1xf32>
    %605 = vector.broadcast %604 : vector<17x1xf32> to vector<17x17xf32>
    %606 = arith.divf %602, %605 : vector<17x17xf32>
    %cst_214 = arith.constant dense<0.000000e+00> : vector<17x8xf32>
    %607 = tpu.matmul %606, %596, %cst_214 {dimension_numbers = #tpu.dot_dimension_numbers<[1], [0], [0], [1], [0, 0, 1, 1], [], []>} : vector<17x17xf32>, vector<17x8xf32>, vector<17x8xf32> -> vector<17x8xf32>
    %608 = vector.extract_strided_slice %411 {offsets = [0, 0], sizes = [8, 32], strides = [1, 1]} : vector<32x32xf32> to vector<8x32xf32>
    %cst_215 = arith.constant dense<0.000000e+00> : vector<17x32xf32>
    %609 = tpu.matmul %607, %608, %cst_215 {dimension_numbers = #tpu.dot_dimension_numbers<[1], [0], [0], [1], [0, 0, 1, 1], [], []>} : vector<17x8xf32>, vector<8x32xf32>, vector<17x32xf32> -> vector<17x32xf32>
    %610 = arith.addf %591, %609 : vector<17x32xf32>
    %611 = vector.extract_strided_slice %588 {offsets = [0, 8], sizes = [17, 8], strides = [1, 1]} : vector<17x32xf32> to vector<17x8xf32>
    %cst_216 = arith.constant 0.353553385 : f32
    %612 = vector.broadcast %cst_216 : f32 to vector<17x8xf32>
    %613 = arith.mulf %611, %612 : vector<17x8xf32>
    %614 = vector.extract_strided_slice %589 {offsets = [0, 8], sizes = [17, 8], strides = [1, 1]} : vector<17x32xf32> to vector<17x8xf32>
    %615 = vector.extract_strided_slice %590 {offsets = [0, 8], sizes = [17, 8], strides = [1, 1]} : vector<17x32xf32> to vector<17x8xf32>
    "tpu.trace_start"() <{level = 10 : i32, message = "nd,md->nm"}> : () -> ()
    %cst_217 = arith.constant dense<0.000000e+00> : vector<17x17xf32>
    %616 = tpu.matmul %613, %614, %cst_217 {dimension_numbers = #tpu.dot_dimension_numbers<[1], [1], [0], [0], [0, 0, 1, 0], [], []>} : vector<17x8xf32>, vector<17x8xf32>, vector<17x17xf32> -> vector<17x17xf32>
    "tpu.trace_stop"() : () -> ()
    %cst_218 = arith.constant dense<0xFF800000> : vector<17xf32>
    %617 = vector.multi_reduction <maximumf>, %616, %cst_218 [1] : vector<17x17xf32> to vector<17xf32>
    %618 = vector.shape_cast %617 : vector<17xf32> to vector<17x1xf32>
    %619 = vector.broadcast %618 : vector<17x1xf32> to vector<17x17xf32>
    %620 = arith.subf %616, %619 : vector<17x17xf32>
    %621 = math.exp %620 : vector<17x17xf32>
    %cst_219 = arith.constant dense<0.000000e+00> : vector<17xf32>
    %622 = vector.multi_reduction <add>, %621, %cst_219 [1] : vector<17x17xf32> to vector<17xf32>
    %623 = vector.shape_cast %622 : vector<17xf32> to vector<17x1xf32>
    %624 = vector.broadcast %623 : vector<17x1xf32> to vector<17x17xf32>
    %625 = arith.divf %621, %624 : vector<17x17xf32>
    %cst_220 = arith.constant dense<0.000000e+00> : vector<17x8xf32>
    %626 = tpu.matmul %625, %615, %cst_220 {dimension_numbers = #tpu.dot_dimension_numbers<[1], [0], [0], [1], [0, 0, 1, 1], [], []>} : vector<17x17xf32>, vector<17x8xf32>, vector<17x8xf32> -> vector<17x8xf32>
    %627 = vector.extract_strided_slice %411 {offsets = [8, 0], sizes = [8, 32], strides = [1, 1]} : vector<32x32xf32> to vector<8x32xf32>
    %cst_221 = arith.constant dense<0.000000e+00> : vector<17x32xf32>
    %628 = tpu.matmul %626, %627, %cst_221 {dimension_numbers = #tpu.dot_dimension_numbers<[1], [0], [0], [1], [0, 0, 1, 1], [], []>} : vector<17x8xf32>, vector<8x32xf32>, vector<17x32xf32> -> vector<17x32xf32>
    %629 = arith.addf %610, %628 : vector<17x32xf32>
    %630 = vector.extract_strided_slice %588 {offsets = [0, 16], sizes = [17, 8], strides = [1, 1]} : vector<17x32xf32> to vector<17x8xf32>
    %cst_222 = arith.constant 0.353553385 : f32
    %631 = vector.broadcast %cst_222 : f32 to vector<17x8xf32>
    %632 = arith.mulf %630, %631 : vector<17x8xf32>
    %633 = vector.extract_strided_slice %589 {offsets = [0, 16], sizes = [17, 8], strides = [1, 1]} : vector<17x32xf32> to vector<17x8xf32>
    %634 = vector.extract_strided_slice %590 {offsets = [0, 16], sizes = [17, 8], strides = [1, 1]} : vector<17x32xf32> to vector<17x8xf32>
    "tpu.trace_start"() <{level = 10 : i32, message = "nd,md->nm"}> : () -> ()
    %cst_223 = arith.constant dense<0.000000e+00> : vector<17x17xf32>
    %635 = tpu.matmul %632, %633, %cst_223 {dimension_numbers = #tpu.dot_dimension_numbers<[1], [1], [0], [0], [0, 0, 1, 0], [], []>} : vector<17x8xf32>, vector<17x8xf32>, vector<17x17xf32> -> vector<17x17xf32>
    "tpu.trace_stop"() : () -> ()
    %cst_224 = arith.constant dense<0xFF800000> : vector<17xf32>
    %636 = vector.multi_reduction <maximumf>, %635, %cst_224 [1] : vector<17x17xf32> to vector<17xf32>
    %637 = vector.shape_cast %636 : vector<17xf32> to vector<17x1xf32>
    %638 = vector.broadcast %637 : vector<17x1xf32> to vector<17x17xf32>
    %639 = arith.subf %635, %638 : vector<17x17xf32>
    %640 = math.exp %639 : vector<17x17xf32>
    %cst_225 = arith.constant dense<0.000000e+00> : vector<17xf32>
    %641 = vector.multi_reduction <add>, %640, %cst_225 [1] : vector<17x17xf32> to vector<17xf32>
    %642 = vector.shape_cast %641 : vector<17xf32> to vector<17x1xf32>
    %643 = vector.broadcast %642 : vector<17x1xf32> to vector<17x17xf32>
    %644 = arith.divf %640, %643 : vector<17x17xf32>
    %cst_226 = arith.constant dense<0.000000e+00> : vector<17x8xf32>
    %645 = tpu.matmul %644, %634, %cst_226 {dimension_numbers = #tpu.dot_dimension_numbers<[1], [0], [0], [1], [0, 0, 1, 1], [], []>} : vector<17x17xf32>, vector<17x8xf32>, vector<17x8xf32> -> vector<17x8xf32>
    %646 = vector.extract_strided_slice %411 {offsets = [16, 0], sizes = [8, 32], strides = [1, 1]} : vector<32x32xf32> to vector<8x32xf32>
    %cst_227 = arith.constant dense<0.000000e+00> : vector<17x32xf32>
    %647 = tpu.matmul %645, %646, %cst_227 {dimension_numbers = #tpu.dot_dimension_numbers<[1], [0], [0], [1], [0, 0, 1, 1], [], []>} : vector<17x8xf32>, vector<8x32xf32>, vector<17x32xf32> -> vector<17x32xf32>
    %648 = arith.addf %629, %647 : vector<17x32xf32>
    %649 = vector.extract_strided_slice %588 {offsets = [0, 24], sizes = [17, 8], strides = [1, 1]} : vector<17x32xf32> to vector<17x8xf32>
    %cst_228 = arith.constant 0.353553385 : f32
    %650 = vector.broadcast %cst_228 : f32 to vector<17x8xf32>
    %651 = arith.mulf %649, %650 : vector<17x8xf32>
    %652 = vector.extract_strided_slice %589 {offsets = [0, 24], sizes = [17, 8], strides = [1, 1]} : vector<17x32xf32> to vector<17x8xf32>
    %653 = vector.extract_strided_slice %590 {offsets = [0, 24], sizes = [17, 8], strides = [1, 1]} : vector<17x32xf32> to vector<17x8xf32>
    "tpu.trace_start"() <{level = 10 : i32, message = "nd,md->nm"}> : () -> ()
    %cst_229 = arith.constant dense<0.000000e+00> : vector<17x17xf32>
    %654 = tpu.matmul %651, %652, %cst_229 {dimension_numbers = #tpu.dot_dimension_numbers<[1], [1], [0], [0], [0, 0, 1, 0], [], []>} : vector<17x8xf32>, vector<17x8xf32>, vector<17x17xf32> -> vector<17x17xf32>
    "tpu.trace_stop"() : () -> ()
    %cst_230 = arith.constant dense<0xFF800000> : vector<17xf32>
    %655 = vector.multi_reduction <maximumf>, %654, %cst_230 [1] : vector<17x17xf32> to vector<17xf32>
    %656 = vector.shape_cast %655 : vector<17xf32> to vector<17x1xf32>
    %657 = vector.broadcast %656 : vector<17x1xf32> to vector<17x17xf32>
    %658 = arith.subf %654, %657 : vector<17x17xf32>
    %659 = math.exp %658 : vector<17x17xf32>
    %cst_231 = arith.constant dense<0.000000e+00> : vector<17xf32>
    %660 = vector.multi_reduction <add>, %659, %cst_231 [1] : vector<17x17xf32> to vector<17xf32>
    %661 = vector.shape_cast %660 : vector<17xf32> to vector<17x1xf32>
    %662 = vector.broadcast %661 : vector<17x1xf32> to vector<17x17xf32>
    %663 = arith.divf %659, %662 : vector<17x17xf32>
    %cst_232 = arith.constant dense<0.000000e+00> : vector<17x8xf32>
    %664 = tpu.matmul %663, %653, %cst_232 {dimension_numbers = #tpu.dot_dimension_numbers<[1], [0], [0], [1], [0, 0, 1, 1], [], []>} : vector<17x17xf32>, vector<17x8xf32>, vector<17x8xf32> -> vector<17x8xf32>
    %665 = vector.extract_strided_slice %411 {offsets = [24, 0], sizes = [8, 32], strides = [1, 1]} : vector<32x32xf32> to vector<8x32xf32>
    %cst_233 = arith.constant dense<0.000000e+00> : vector<17x32xf32>
    %666 = tpu.matmul %664, %665, %cst_233 {dimension_numbers = #tpu.dot_dimension_numbers<[1], [0], [0], [1], [0, 0, 1, 1], [], []>} : vector<17x8xf32>, vector<8x32xf32>, vector<17x32xf32> -> vector<17x32xf32>
    %667 = arith.addf %648, %666 : vector<17x32xf32>
    %668 = arith.addf %406, %667 : vector<17x32xf32>
    %669 = vector.broadcast %412 : vector<1x32xf32> to vector<17x32xf32>
    %670 = arith.addf %668, %669 : vector<17x32xf32>
    %cst_234 = arith.constant dense<0.000000e+00> : vector<17xf32>
    %671 = vector.multi_reduction <add>, %670, %cst_234 [1] : vector<17x32xf32> to vector<17xf32>
    %672 = vector.shape_cast %671 : vector<17xf32> to vector<17x1xf32>
    %cst_235 = arith.constant 3.200000e+01 : f32
    %673 = vector.broadcast %cst_235 : f32 to vector<17x1xf32>
    %674 = arith.divf %672, %673 : vector<17x1xf32>
    %675 = vector.broadcast %674 : vector<17x1xf32> to vector<17x32xf32>
    %676 = arith.subf %670, %675 : vector<17x32xf32>
    %677 = arith.mulf %676, %676 : vector<17x32xf32>
    %cst_236 = arith.constant dense<0.000000e+00> : vector<17xf32>
    %678 = vector.multi_reduction <add>, %677, %cst_236 [1] : vector<17x32xf32> to vector<17xf32>
    %679 = vector.shape_cast %678 : vector<17xf32> to vector<17x1xf32>
    %cst_237 = arith.constant 3.200000e+01 : f32
    %680 = vector.broadcast %cst_237 : f32 to vector<17x1xf32>
    %681 = arith.divf %679, %680 : vector<17x1xf32>
    %cst_238 = arith.constant 9.99999997E-7 : f32
    %682 = vector.broadcast %cst_238 : f32 to vector<17x1xf32>
    %683 = arith.addf %681, %682 : vector<17x1xf32>
    %684 = math.rsqrt %683 : vector<17x1xf32>
    %685 = vector.broadcast %684 : vector<17x1xf32> to vector<17x32xf32>
    %686 = arith.mulf %676, %685 : vector<17x32xf32>
    %687 = vector.broadcast %413 : vector<1x32xf32> to vector<17x32xf32>
    %688 = arith.mulf %686, %687 : vector<17x32xf32>
    %689 = vector.broadcast %414 : vector<1x32xf32> to vector<17x32xf32>
    %690 = arith.addf %688, %689 : vector<17x32xf32>
    %cst_239 = arith.constant dense<0.000000e+00> : vector<17x128xf32>
    %691 = tpu.matmul %690, %415, %cst_239 {dimension_numbers = #tpu.dot_dimension_numbers<[1], [0], [0], [1], [0, 0, 1, 1], [], []>} : vector<17x32xf32>, vector<32x128xf32>, vector<17x128xf32> -> vector<17x128xf32>
    %692 = vector.broadcast %416 : vector<1x128xf32> to vector<17x128xf32>
    %693 = arith.addf %691, %692 : vector<17x128xf32>
    %cst_240 = arith.constant 5.000000e-01 : f32
    %694 = vector.broadcast %cst_240 : f32 to vector<17x128xf32>
    %695 = arith.mulf %694, %693 : vector<17x128xf32>
    %cst_241 = arith.constant 4.471500e-02 : f32
    %696 = vector.broadcast %cst_241 : f32 to vector<17x128xf32>
    %697 = arith.mulf %696, %693 : vector<17x128xf32>
    %698 = arith.mulf %697, %693 : vector<17x128xf32>
    %699 = arith.mulf %698, %693 : vector<17x128xf32>
    %700 = arith.addf %693, %699 : vector<17x128xf32>
    %cst_242 = arith.constant 0.797884583 : f32
    %701 = vector.broadcast %cst_242 : f32 to vector<17x128xf32>
    %702 = arith.mulf %701, %700 : vector<17x128xf32>
    %703 = math.tanh %702 : vector<17x128xf32>
    %cst_243 = arith.constant 1.000000e+00 : f32
    %704 = vector.broadcast %cst_243 : f32 to vector<17x128xf32>
    %705 = arith.addf %704, %703 : vector<17x128xf32>
    %706 = arith.mulf %695, %705 : vector<17x128xf32>
    %cst_244 = arith.constant dense<0.000000e+00> : vector<17x32xf32>
    %707 = tpu.matmul %706, %417, %cst_244 {dimension_numbers = #tpu.dot_dimension_numbers<[1], [0], [0], [1], [0, 0, 1, 1], [], []>} : vector<17x128xf32>, vector<128x32xf32>, vector<17x32xf32> -> vector<17x32xf32>
    %708 = arith.addf %670, %707 : vector<17x32xf32>
    %709 = vector.broadcast %418 : vector<1x32xf32> to vector<17x32xf32>
    %710 = arith.addf %708, %709 : vector<17x32xf32>
    %c0_245 = arith.constant 0 : index
    %c0_246 = arith.constant 0 : index
    %711 = vector.load %arg33[%c0_245, %c0_246] : memref<1x32xf32, #tpu.memory_space<vmem>>, vector<1x32xf32>
    %c0_247 = arith.constant 0 : index
    %c0_248 = arith.constant 0 : index
    %712 = vector.load %arg34[%c0_247, %c0_248] : memref<1x32xf32, #tpu.memory_space<vmem>>, vector<1x32xf32>
    %c0_249 = arith.constant 0 : index
    %c0_250 = arith.constant 0 : index
    %713 = vector.load %arg35[%c0_249, %c0_250] : memref<32x1024xf32, #tpu.memory_space<vmem>>, vector<32x1024xf32>
    %c0_251 = arith.constant 0 : index
    %c0_252 = arith.constant 0 : index
    %714 = vector.load %arg36[%c0_251, %c0_252] : memref<1x1024xf32, #tpu.memory_space<vmem>>, vector<1x1024xf32>
    %c0_253 = arith.constant 0 : index
    %c0_254 = arith.constant 0 : index
    %715 = vector.load %arg37[%c0_253, %c0_254] : memref<1x1xf32, #tpu.memory_space<vmem>>, vector<1x1xf32>
    %c0_255 = arith.constant 0 : index
    %c0_256 = arith.constant 0 : index
    %716 = vector.load %arg38[%c0_255, %c0_256] : memref<1x1024xf32, #tpu.memory_space<vmem>>, vector<1x1024xf32>
    %c0_257 = arith.constant 0 : index
    %c0_258 = arith.constant 0 : index
    %717 = vector.load %arg39[%c0_257, %c0_258] : memref<1x1024xf32, #tpu.memory_space<vmem>>, vector<1x1024xf32>
    %c0_259 = arith.constant 0 : index
    %c0_260 = arith.constant 0 : index
    %718 = vector.load %arg40[%c0_259, %c0_260] : memref<1x1024xf32, #tpu.memory_space<vmem>>, vector<1x1024xf32>
    %c0_261 = arith.constant 0 : index
    %c0_262 = arith.constant 0 : index
    %719 = vector.load %arg41[%c0_261, %c0_262] : memref<1x1024xf32, #tpu.memory_space<vmem>>, vector<1x1024xf32>
    %c0_263 = arith.constant 0 : index
    %c0_264 = arith.constant 0 : index
    %720 = vector.load %arg42[%c0_263, %c0_264] : memref<1024x3xf32, #tpu.memory_space<vmem>>, vector<1024x3xf32>
    %c0_265 = arith.constant 0 : index
    %c0_266 = arith.constant 0 : index
    %721 = vector.load %arg43[%c0_265, %c0_266] : memref<1x3xf32, #tpu.memory_space<vmem>>, vector<1x3xf32>
    %722 = vector.extract_strided_slice %564 {offsets = [16, 0], sizes = [1, 32], strides = [1, 1]} : vector<17x32xf32> to vector<1x32xf32>
    %723 = vector.extract_strided_slice %710 {offsets = [16, 0], sizes = [1, 32], strides = [1, 1]} : vector<17x32xf32> to vector<1x32xf32>
    %724 = tpu.concatenate %722, %723 in 0 : vector<1x32xf32>, vector<1x32xf32> -> vector<2x32xf32>
    %cst_267 = arith.constant dense<0.000000e+00> : vector<2xf32>
    %725 = vector.multi_reduction <add>, %724, %cst_267 [1] : vector<2x32xf32> to vector<2xf32>
    %726 = vector.shape_cast %725 : vector<2xf32> to vector<2x1xf32>
    %cst_268 = arith.constant 3.200000e+01 : f32
    %727 = vector.broadcast %cst_268 : f32 to vector<2x1xf32>
    %728 = arith.divf %726, %727 : vector<2x1xf32>
    %729 = vector.broadcast %728 : vector<2x1xf32> to vector<2x32xf32>
    %730 = arith.subf %724, %729 : vector<2x32xf32>
    %731 = arith.mulf %730, %730 : vector<2x32xf32>
    %cst_269 = arith.constant dense<0.000000e+00> : vector<2xf32>
    %732 = vector.multi_reduction <add>, %731, %cst_269 [1] : vector<2x32xf32> to vector<2xf32>
    %733 = vector.shape_cast %732 : vector<2xf32> to vector<2x1xf32>
    %cst_270 = arith.constant 3.200000e+01 : f32
    %734 = vector.broadcast %cst_270 : f32 to vector<2x1xf32>
    %735 = arith.divf %733, %734 : vector<2x1xf32>
    %cst_271 = arith.constant 9.99999997E-7 : f32
    %736 = vector.broadcast %cst_271 : f32 to vector<2x1xf32>
    %737 = arith.addf %735, %736 : vector<2x1xf32>
    %738 = math.rsqrt %737 : vector<2x1xf32>
    %739 = vector.broadcast %738 : vector<2x1xf32> to vector<2x32xf32>
    %740 = arith.mulf %730, %739 : vector<2x32xf32>
    %741 = vector.broadcast %711 : vector<1x32xf32> to vector<2x32xf32>
    %742 = arith.mulf %740, %741 : vector<2x32xf32>
    %743 = vector.broadcast %712 : vector<1x32xf32> to vector<2x32xf32>
    %744 = arith.addf %742, %743 : vector<2x32xf32>
    %cst_272 = arith.constant dense<0.000000e+00> : vector<2x1024xf32>
    %745 = tpu.matmul %744, %713, %cst_272 {dimension_numbers = #tpu.dot_dimension_numbers<[1], [0], [0], [1], [0, 0, 1, 1], [], []>} : vector<2x32xf32>, vector<32x1024xf32>, vector<2x1024xf32> -> vector<2x1024xf32>
    %746 = vector.broadcast %714 : vector<1x1024xf32> to vector<2x1024xf32>
    %747 = arith.addf %745, %746 : vector<2x1024xf32>
    %cst_273 = arith.constant 0.000000e+00 : f32
    %748 = vector.broadcast %cst_273 : f32 to vector<2x1024xf32>
    %749 = arith.maximumf %747, %748 : vector<2x1024xf32>
    %cst_274 = arith.constant 0.000000e+00 : f32
    %750 = vector.broadcast %cst_274 : f32 to vector<2x1024xf32>
    %751 = arith.minimumf %747, %750 : vector<2x1024xf32>
    %752 = vector.broadcast %715 : vector<1x1xf32> to vector<2x1024xf32>
    %753 = arith.mulf %752, %751 : vector<2x1024xf32>
    %754 = arith.addf %749, %753 : vector<2x1024xf32>
    %755 = vector.broadcast %718 : vector<1x1024xf32> to vector<2x1024xf32>
    %756 = arith.subf %754, %755 : vector<2x1024xf32>
    %cst_275 = arith.constant 9.99999974E-6 : f32
    %757 = vector.broadcast %cst_275 : f32 to vector<1x1024xf32>
    %758 = arith.addf %719, %757 : vector<1x1024xf32>
    %759 = math.rsqrt %758 : vector<1x1024xf32>
    %760 = vector.broadcast %759 : vector<1x1024xf32> to vector<2x1024xf32>
    %761 = arith.mulf %756, %760 : vector<2x1024xf32>
    %762 = vector.broadcast %716 : vector<1x1024xf32> to vector<2x1024xf32>
    %763 = arith.mulf %761, %762 : vector<2x1024xf32>
    %764 = vector.broadcast %717 : vector<1x1024xf32> to vector<2x1024xf32>
    %765 = arith.addf %763, %764 : vector<2x1024xf32>
    %cst_276 = arith.constant dense<0.000000e+00> : vector<2x3xf32>
    %766 = tpu.matmul %765, %720, %cst_276 {dimension_numbers = #tpu.dot_dimension_numbers<[1], [0], [0], [1], [0, 0, 1, 1], [], []>} : vector<2x1024xf32>, vector<1024x3xf32>, vector<2x3xf32> -> vector<2x3xf32>
    %767 = vector.broadcast %721 : vector<1x3xf32> to vector<2x3xf32>
    %768 = arith.addf %766, %767 : vector<2x3xf32>
    %c0_277 = arith.constant 0 : index
    %c0_278 = arith.constant 0 : index
    %769 = vector.load %arg44[%c0_277, %c0_278] : memref<2x3xf32, #tpu.memory_space<vmem>>, vector<2x3xf32>
    tpu.vector_store %arg44[%c0_277, %c0_278], %768 {strides = array<i32>} : memref<2x3xf32, #tpu.memory_space<vmem>>, vector<2x3xf32>,
    return
  }
}

</mosaic_0001>

<llo_original>
// kernel: convit_forward.1
$region0: #{convit_forward.1}
  #allocation0 [shape = 'u32[]', space=smem, size = 0x4, offset = 0x4, fixed_abs, tag = 'smem constant byte address 0x4 - core index']
  #allocation1 [shape = 'u32[144,128]{1,0:T(1,128)}', space=vmem, size = 0x12000, scoped, tag = 'internal scratch']
  #allocation2 [shape = 'f32[1,1]{1,0:T(1,128)S(1)}', space=vmem, size = 0x200, scoped, tag = 'scoped memory for convit_forward.1']
  %s0 = inlined_call_operand.smem [shape: u32[45], index: -1, kind: input, shape index: {}]
  %s1 = sld [smem:[%s0]]
  %s2 = scalar_lea.smem %s0, 1
  %s3 = sld [smem:[%s2]]
  %s4 = scalar_lea.smem %s0, 2
  %s5 = sld [smem:[%s4]]
  %s6 = scalar_lea.smem %s0, 3
  %s7 = sld [smem:[%s6]]
  %s8 = scalar_lea.smem %s0, 4
  %s9 = sld [smem:[%s8]]
  %s10 = scalar_lea.smem %s0, 5
  %s11 = sld [smem:[%s10]]
  %s12 = scalar_lea.smem %s0, 6
  %s13 = sld [smem:[%s12]]
  %s14 = scalar_lea.smem %s0, 7
  %s15 = sld [smem:[%s14]]
  %s16 = scalar_lea.smem %s0, 8
  %s17 = sld [smem:[%s16]]
  %s18 = scalar_lea.smem %s0, 9
  %s19 = sld [smem:[%s18]]
  %s20 = scalar_lea.smem %s0, 10
  %s21 = sld [smem:[%s20]]
  %s22 = scalar_lea.smem %s0, 11
  %s23 = sld [smem:[%s22]]
  %s24 = scalar_lea.smem %s0, 12
  %s25 = sld [smem:[%s24]]
  %s26 = scalar_lea.smem %s0, 13
  %s27 = sld [smem:[%s26]]
  %s28 = scalar_lea.smem %s0, 14
  %s29 = sld [smem:[%s28]]
  %s30 = scalar_lea.smem %s0, 15
  %s31 = sld [smem:[%s30]]
  %s32 = scalar_lea.smem %s0, 16
  %s33 = sld [smem:[%s32]]
  %s34 = scalar_lea.smem %s0, 17
  %s35 = sld [smem:[%s34]]
  %s36 = scalar_lea.smem %s0, 18
  %s37 = sld [smem:[%s36]]
  %s38 = scalar_lea.smem %s0, 19
  %s39 = sld [smem:[%s38]]
  %s40 = scalar_lea.smem %s0, 20
  %s41 = sld [smem:[%s40]]
  %s42 = scalar_lea.smem %s0, 21
  %s43 = sld [smem:[%s42]]
  %s44 = scalar_lea.smem %s0, 22
  %s45 = sld [smem:[%s44]]
  %s46 = scalar_lea.smem %s0, 23
  %s47 = sld [smem:[%s46]]
  %s48 = scalar_lea.smem %s0, 24
  %s49 = sld [smem:[%s48]]
  %s50 = scalar_lea.smem %s0, 25
  %s51 = sld [smem:[%s50]]
  %s52 = scalar_lea.smem %s0, 26
  %s53 = sld [smem:[%s52]]
  %s54 = scalar_lea.smem %s0, 27
  %s55 = sld [smem:[%s54]]
  %s56 = scalar_lea.smem %s0, 28
  %s57 = sld [smem:[%s56]]
  %s58 = scalar_lea.smem %s0, 29
  %s59 = sld [smem:[%s58]]
  %s60 = scalar_lea.smem %s0, 30
  %s61 = sld [smem:[%s60]]
  %s62 = scalar_lea.smem %s0, 31
  %s63 = sld [smem:[%s62]]
  %s64 = scalar_lea.smem %s0, 32
  %s65 = sld [smem:[%s64]]
  %s66 = scalar_lea.smem %s0, 33
  %s67 = sld [smem:[%s66]]
  %s68 = scalar_lea.smem %s0, 34
  %s69 = sld [smem:[%s68]]
  %s70 = scalar_lea.smem %s0, 35
  %s71 = sld [smem:[%s70]]
  %s72 = scalar_lea.smem %s0, 36
  %s73 = sld [smem:[%s72]]
  %s74 = scalar_lea.smem %s0, 37
  %s75 = sld [smem:[%s74]]
  %s76 = scalar_lea.smem %s0, 38
  %s77 = sld [smem:[%s76]]
  %s78 = scalar_lea.smem %s0, 39
  %s79 = sld [smem:[%s78]]
  %s80 = scalar_lea.smem %s0, 40
  %s81 = sld [smem:[%s80]]
  %s82 = scalar_lea.smem %s0, 41
  %s83 = sld [smem:[%s82]]
  %s84 = scalar_lea.smem %s0, 42
  %s85 = sld [smem:[%s84]]
  %s86 = scalar_lea.smem %s0, 43
  %s87 = sld [smem:[%s86]]
  %s88 = scalar_lea.smem %s0, 44
  %s89 = sld [smem:[%s88]]
  %s90 = sld [smem:[#allocation0]]
  $region190: #{convit_forward.1} parent=0
    _
  %s92 = ssub.s32 1, %s90
  %s93 = scalar_select 0, %s92, %s90
  %v94 = vstv %s75
  %95 = vst [vmem:[#allocation2] sm:$0x1] %v94
  $region1: #{convit_forward.1} parent=0
    #allocation3 [shape = 'u8[512]{0}', space=vmem, size = 0x400, scoped, tag = 'input window, operand 43, single buffered']
    #allocation4 [shape = 's32[1]{0}', space=sflag, size = 0x4, scoped, tag = 'scoped memory for convit_forward.1']
    #allocation5 [shape = 's32[1]{0}', space=sflag, size = 0x4, scoped, tag = 'scoped memory for convit_forward.1']
    #allocation6 [shape = 'u8[1024]{0}', space=vmem, size = 0x400, scoped, tag = 'output window, operand 0, single buffered']
    %96 = vsyncpa [#allocation4], 0
    %97 = vsyncpa [#allocation5], 0
    // Predicated region
    $region2: #{convit_forward.1} parent=1 // pred_check
      _
    $region3: #{convit_forward.1} parent=1 // pred_check_branch
      %99 = sbr.rel (0) target = $region5
    $region4: #{convit_forward.1} parent=1 // pred_region
      _
    $region5: #{convit_forward.1} parent=1 // pred_fallthru
      _
    // Predicated region
    $region6: #{convit_forward.1} parent=1 // pred_check
      _
    $region7: #{convit_forward.1} parent=1 // pred_check_branch
      %101 = sbr.rel (0) target = $region9
    $region8: #{convit_forward.1} parent=1 // pred_region
      _
    $region9: #{convit_forward.1} parent=1 // pred_fallthru
      _
    // Predicated region
    $region10: #{convit_forward.1} parent=1 // pred_check
      _
    $region11: #{convit_forward.1} parent=1 // pred_check_branch
      %103 = sbr.rel (0) target = $region13
    $region12: #{convit_forward.1} parent=1 // pred_region
      _
    $region13: #{convit_forward.1} parent=1 // pred_fallthru
      _
    // Predicated region
    $region14: #{convit_forward.1} parent=1 // pred_check
      _
    $region15: #{convit_forward.1} parent=1 // pred_check_branch
      %105 = sbr.rel (0) target = $region17
    $region16: #{convit_forward.1} parent=1 // pred_region
      _
    $region17: #{convit_forward.1} parent=1 // pred_fallthru
      _
    // Predicated region
    $region18: #{convit_forward.1} parent=1 // pred_check
      _
    $region19: #{convit_forward.1} parent=1 // pred_check_branch
      %107 = sbr.rel (0) target = $region21
    $region20: #{convit_forward.1} parent=1 // pred_region
      _
    $region21: #{convit_forward.1} parent=1 // pred_fallthru
      _
    // Predicated region
    $region22: #{convit_forward.1} parent=1 // pred_check
      _
    $region23: #{convit_forward.1} parent=1 // pred_check_branch
      %109 = sbr.rel (0) target = $region25
    $region24: #{convit_forward.1} parent=1 // pred_region
      _
    $region25: #{convit_forward.1} parent=1 // pred_fallthru
      _
    // Predicated region
    $region26: #{convit_forward.1} parent=1 // pred_check
      _
    $region27: #{convit_forward.1} parent=1 // pred_check_branch
      %111 = sbr.rel (0) target = $region29
    $region28: #{convit_forward.1} parent=1 // pred_region
      _
    $region29: #{convit_forward.1} parent=1 // pred_fallthru
      _
    // Predicated region
    $region30: #{convit_forward.1} parent=1 // pred_check
      _
    $region31: #{convit_forward.1} parent=1 // pred_check_branch
      %113 = sbr.rel (0) target = $region33
    $region32: #{convit_forward.1} parent=1 // pred_region
      _
    $region33: #{convit_forward.1} parent=1 // pred_fallthru
      _
    // Predicated region
    $region34: #{convit_forward.1} parent=1 // pred_check
      _
    $region35: #{convit_forward.1} parent=1 // pred_check_branch
      %115 = sbr.rel (0) target = $region37
    $region36: #{convit_forward.1} parent=1 // pred_region
      _
    $region37: #{convit_forward.1} parent=1 // pred_fallthru
      _
    // Predicated region
    $region38: #{convit_forward.1} parent=1 // pred_check
      _
    $region39: #{convit_forward.1} parent=1 // pred_check_branch
      %117 = sbr.rel (0) target = $region41
    $region40: #{convit_forward.1} parent=1 // pred_region
      _
    $region41: #{convit_forward.1} parent=1 // pred_fallthru
      _
    // Predicated region
    $region42: #{convit_forward.1} parent=1 // pred_check
      _
    $region43: #{convit_forward.1} parent=1 // pred_check_branch
      %119 = sbr.rel (0) target = $region45
    $region44: #{convit_forward.1} parent=1 // pred_region
      _
    $region45: #{convit_forward.1} parent=1 // pred_fallthru
      _
    // Predicated region
    $region46: #{convit_forward.1} parent=1 // pred_check
      _
    $region47: #{convit_forward.1} parent=1 // pred_check_branch
      %121 = sbr.rel (0) target = $region49
    $region48: #{convit_forward.1} parent=1 // pred_region
      _
    $region49: #{convit_forward.1} parent=1 // pred_fallthru
      _
    // Predicated region
    $region50: #{convit_forward.1} parent=1 // pred_check
      _
    $region51: #{convit_forward.1} parent=1 // pred_check_branch
      %123 = sbr.rel (0) target = $region53
    $region52: #{convit_forward.1} parent=1 // pred_region
      _
    $region53: #{convit_forward.1} parent=1 // pred_fallthru
      _
    // Predicated region
    $region54: #{convit_forward.1} parent=1 // pred_check
      _
    $region55: #{convit_forward.1} parent=1 // pred_check_branch
      %125 = sbr.rel (0) target = $region57
    $region56: #{convit_forward.1} parent=1 // pred_region
      _
    $region57: #{convit_forward.1} parent=1 // pred_fallthru
      _
    // Predicated region
    $region58: #{convit_forward.1} parent=1 // pred_check
      _
    $region59: #{convit_forward.1} parent=1 // pred_check_branch
      %127 = sbr.rel (0) target = $region61
    $region60: #{convit_forward.1} parent=1 // pred_region
      _
    $region61: #{convit_forward.1} parent=1 // pred_fallthru
      _
    // Predicated region
    $region62: #{convit_forward.1} parent=1 // pred_check
      _
    $region63: #{convit_forward.1} parent=1 // pred_check_branch
      %129 = sbr.rel (0) target = $region65
    $region64: #{convit_forward.1} parent=1 // pred_region
      _
    $region65: #{convit_forward.1} parent=1 // pred_fallthru
      _
    // Predicated region
    $region66: #{convit_forward.1} parent=1 // pred_check
      _
    $region67: #{convit_forward.1} parent=1 // pred_check_branch
      %131 = sbr.rel (0) target = $region69
    $region68: #{convit_forward.1} parent=1 // pred_region
      _
    $region69: #{convit_forward.1} parent=1 // pred_fallthru
      _
    // Predicated region
    $region70: #{convit_forward.1} parent=1 // pred_check
      _
    $region71: #{convit_forward.1} parent=1 // pred_check_branch
      %133 = sbr.rel (0) target = $region73
    $region72: #{convit_forward.1} parent=1 // pred_region
      _
    $region73: #{convit_forward.1} parent=1 // pred_fallthru
      _
    // Predicated region
    $region74: #{convit_forward.1} parent=1 // pred_check
      _
    $region75: #{convit_forward.1} parent=1 // pred_check_branch
      %135 = sbr.rel (0) target = $region77
    $region76: #{convit_forward.1} parent=1 // pred_region
      _
    $region77: #{convit_forward.1} parent=1 // pred_fallthru
      _
    // Predicated region
    $region78: #{convit_forward.1} parent=1 // pred_check
      _
    $region79: #{convit_forward.1} parent=1 // pred_check_branch
      %137 = sbr.rel (0) target = $region81
    $region80: #{convit_forward.1} parent=1 // pred_region
      _
    $region81: #{convit_forward.1} parent=1 // pred_fallthru
      _
    // Predicated region
    $region82: #{convit_forward.1} parent=1 // pred_check
      _
    $region83: #{convit_forward.1} parent=1 // pred_check_branch
      %139 = sbr.rel (0) target = $region85
    $region84: #{convit_forward.1} parent=1 // pred_region
      _
    $region85: #{convit_forward.1} parent=1 // pred_fallthru
      _
    // Predicated region
    $region86: #{convit_forward.1} parent=1 // pred_check
      _
    $region87: #{convit_forward.1} parent=1 // pred_check_branch
      %141 = sbr.rel (0) target = $region89
    $region88: #{convit_forward.1} parent=1 // pred_region
      _
    $region89: #{convit_forward.1} parent=1 // pred_fallthru
      _
    // Predicated region
    $region90: #{convit_forward.1} parent=1 // pred_check
      _
    $region91: #{convit_forward.1} parent=1 // pred_check_branch
      %143 = sbr.rel (0) target = $region93
    $region92: #{convit_forward.1} parent=1 // pred_region
      _
    $region93: #{convit_forward.1} parent=1 // pred_fallthru
      _
    // Predicated region
    $region94: #{convit_forward.1} parent=1 // pred_check
      _
    $region95: #{convit_forward.1} parent=1 // pred_check_branch
      %145 = sbr.rel (0) target = $region97
    $region96: #{convit_forward.1} parent=1 // pred_region
      _
    $region97: #{convit_forward.1} parent=1 // pred_fallthru
      _
    // Predicated region
    $region98: #{convit_forward.1} parent=1 // pred_check
      _
    $region99: #{convit_forward.1} parent=1 // pred_check_branch
      %147 = sbr.rel (0) target = $region101
    $region100: #{convit_forward.1} parent=1 // pred_region
      _
    $region101: #{convit_forward.1} parent=1 // pred_fallthru
      _
    // Predicated region
    $region102: #{convit_forward.1} parent=1 // pred_check
      _
    $region103: #{convit_forward.1} parent=1 // pred_check_branch
      %149 = sbr.rel (0) target = $region105
    $region104: #{convit_forward.1} parent=1 // pred_region
      _
    $region105: #{convit_forward.1} parent=1 // pred_fallthru
      _
    // Predicated region
    $region106: #{convit_forward.1} parent=1 // pred_check
      _
    $region107: #{convit_forward.1} parent=1 // pred_check_branch
      %151 = sbr.rel (0) target = $region109
    $region108: #{convit_forward.1} parent=1 // pred_region
      _
    $region109: #{convit_forward.1} parent=1 // pred_fallthru
      _
    // Predicated region
    $region110: #{convit_forward.1} parent=1 // pred_check
      _
    $region111: #{convit_forward.1} parent=1 // pred_check_branch
      %153 = sbr.rel (0) target = $region113
    $region112: #{convit_forward.1} parent=1 // pred_region
      _
    $region113: #{convit_forward.1} parent=1 // pred_fallthru
      _
    // Predicated region
    $region114: #{convit_forward.1} parent=1 // pred_check
      _
    $region115: #{convit_forward.1} parent=1 // pred_check_branch
      %155 = sbr.rel (0) target = $region117
    $region116: #{convit_forward.1} parent=1 // pred_region
      _
    $region117: #{convit_forward.1} parent=1 // pred_fallthru
      _
    // Predicated region
    $region118: #{convit_forward.1} parent=1 // pred_check
      _
    $region119: #{convit_forward.1} parent=1 // pred_check_branch
      %157 = sbr.rel (0) target = $region121
    $region120: #{convit_forward.1} parent=1 // pred_region
      _
    $region121: #{convit_forward.1} parent=1 // pred_fallthru
      _
    // Predicated region
    $region122: #{convit_forward.1} parent=1 // pred_check
      _
    $region123: #{convit_forward.1} parent=1 // pred_check_branch
      %159 = sbr.rel (0) target = $region125
    $region124: #{convit_forward.1} parent=1 // pred_region
      _
    $region125: #{convit_forward.1} parent=1 // pred_fallthru
      _
    // Predicated region
    $region126: #{convit_forward.1} parent=1 // pred_check
      _
    $region127: #{convit_forward.1} parent=1 // pred_check_branch
      %161 = sbr.rel (0) target = $region129
    $region128: #{convit_forward.1} parent=1 // pred_region
      _
    $region129: #{convit_forward.1} parent=1 // pred_fallthru
      _
    // Predicated region
    $region130: #{convit_forward.1} parent=1 // pred_check
      _
    $region131: #{convit_forward.1} parent=1 // pred_check_branch
      %163 = sbr.rel (0) target = $region133
    $region132: #{convit_forward.1} parent=1 // pred_region
      _
    $region133: #{convit_forward.1} parent=1 // pred_fallthru
      _
    // Predicated region
    $region134: #{convit_forward.1} parent=1 // pred_check
      _
    $region135: #{convit_forward.1} parent=1 // pred_check_branch
      %165 = sbr.rel (0) target = $region137
    $region136: #{convit_forward.1} parent=1 // pred_region
      _
    $region137: #{convit_forward.1} parent=1 // pred_fallthru
      _
    // Predicated region
    $region138: #{convit_forward.1} parent=1 // pred_check
      _
    $region139: #{convit_forward.1} parent=1 // pred_check_branch
      %167 = sbr.rel (0) target = $region141
    $region140: #{convit_forward.1} parent=1 // pred_region
      _
    $region141: #{convit_forward.1} parent=1 // pred_fallthru
      _
    // Predicated region
    $region142: #{convit_forward.1} parent=1 // pred_check
      _
    $region143: #{convit_forward.1} parent=1 // pred_check_branch
      %169 = sbr.rel (0) target = $region145
    $region144: #{convit_forward.1} parent=1 // pred_region
      _
    $region145: #{convit_forward.1} parent=1 // pred_fallthru
      _
    // Predicated region
    $region146: #{convit_forward.1} parent=1 // pred_check
      _
    $region147: #{convit_forward.1} parent=1 // pred_check_branch
      %171 = sbr.rel (0) target = $region149
    $region148: #{convit_forward.1} parent=1 // pred_region
      _
    $region149: #{convit_forward.1} parent=1 // pred_fallthru
      _
    // Predicated region
    $region150: #{convit_forward.1} parent=1 // pred_check
      _
    $region151: #{convit_forward.1} parent=1 // pred_check_branch
      %173 = sbr.rel (0) target = $region153
    $region152: #{convit_forward.1} parent=1 // pred_region
      _
    $region153: #{convit_forward.1} parent=1 // pred_fallthru
      _
    // Predicated region
    $region154: #{convit_forward.1} parent=1 // pred_check
      _
    $region155: #{convit_forward.1} parent=1 // pred_check_branch
      %175 = sbr.rel (0) target = $region157
    $region156: #{convit_forward.1} parent=1 // pred_region
      _
    $region157: #{convit_forward.1} parent=1 // pred_fallthru
      _
    // Predicated region
    $region158: #{convit_forward.1} parent=1 // pred_check
      _
    $region159: #{convit_forward.1} parent=1 // pred_check_branch
      %177 = sbr.rel (0) target = $region161
    $region160: #{convit_forward.1} parent=1 // pred_region
      _
    $region161: #{convit_forward.1} parent=1 // pred_fallthru
      _
    // Predicated region
    $region162: #{convit_forward.1} parent=1 // pred_check
      _
    $region163: #{convit_forward.1} parent=1 // pred_check_branch
      %179 = sbr.rel (0) target = $region165
    $region164: #{convit_forward.1} parent=1 // pred_region
      _
    $region165: #{convit_forward.1} parent=1 // pred_fallthru
      _
    // Predicated region
    $region166: #{convit_forward.1} parent=1 // pred_check
      _
    $region167: #{convit_forward.1} parent=1 // pred_check_branch
      %181 = sbr.rel (0) target = $region169
    $region168: #{convit_forward.1} parent=1 // pred_region
      _
    $region169: #{convit_forward.1} parent=1 // pred_fallthru
      _
    // Predicated region
    $region170: #{convit_forward.1} parent=1 // pred_check
      _
    $region171: #{convit_forward.1} parent=1 // pred_check_branch
      %183 = sbr.rel (0) target = $region173
    $region172: #{convit_forward.1} parent=1 // pred_region
      _
    $region173: #{convit_forward.1} parent=1 // pred_fallthru
      _
    // Predicated region
    $region174: #{convit_forward.1} parent=1 // pred_check
      _
    $region175: #{convit_forward.1} parent=1 // pred_check_branch
      %185 = sbr.rel (0) target = $region177
    $region176: #{convit_forward.1} parent=1 // pred_region
      %s187 = ssub.s32 16, 16
      %188 = vsyncadd [#allocation4], %s187
      %s190 = sshll.u32 [#allocation3], 4
      %s191 = int_to_ptr.vmem [resolvable:$true] %s190
      %193 = dma.hbm_to_vmem [thread:$0]  %s87, 16, %s191, [#allocation4]
    $region177: #{convit_forward.1} parent=1 // pred_fallthru
      _
    // Predicated region
    $region178: #{convit_forward.1} parent=1 // pred_check
      _
    $region179: #{convit_forward.1} parent=1 // pred_check_branch
      %195 = sbr.rel (0) target = $region181
    $region180: #{convit_forward.1} parent=1 // pred_region
      %196 = dma.done [#allocation4], 16
    $region181: #{convit_forward.1} parent=1 // pred_fallthru
      _
    %v197 = vld [vmem:[%s1] sm:$0xff]
    %v198 = vld [vmem:[%s1 + $0x8] sm:$0xff]
    %v199 = vld [vmem:[%s1 + $0x10] sm:$0xff]
    %v200 = vld [vmem:[%s1 + $0x18] sm:$0xff]
    %v201 = vld [vmem:[%s3] sm:$0xff]
    %v202 = vld [vmem:[%s3 + $0x8] sm:$0xff]
    %v203 = vld [vmem:[%s5] sm:$0x1]
    %v204 = vld [vmem:[%s7] sm:$0xff]
    %v205 = vld [vmem:[%s7 + $0x8] sm:$0xff]
    %v206 = vld [vmem:[%s9] sm:$0x1]
    %v208 = vlaneseq
    %v209 = vshrl.u32 %v208, 7
    %v210 = vsub.s32 0, %v209
    %v211 = vrot.slane %v203, %v210
    %vm213 = vcmask 130048
    %v215 = vsel %vm213, %v197, 0
    %v218 = vsel %vm213, %v198, 0
    %v221 = vsel %vm213, %v199, 0
    %v224 = vsel %vm213, %v200, 0
    %226 = vmatprep.subr.mxu0 0.0
    %227 = vmatpush1.msra.mxu0 0.0
    %228 = vmatprep.subr.mxu0 0.0
    %229 = vmatpush1.msra.mxu0 0.0
    %230 = vmatprep.subr.mxu0 0.0
    %231 = vmatpush1.msra.mxu0 0.0
    %232 = vmatprep.subr.mxu0 0.0
    %233 = vmatpush1.msra.mxu0 0.0
    %234 = vmatprep.subr.mxu0 0.0
    %235 = vmatpush1.msra.mxu0 0.0
    %236 = vmatprep.subr.mxu0 0.0
    %237 = vmatpush1.msra.mxu0 0.0
    %238 = vmatprep.subr.mxu0 0.0
    %239 = vmatpush1.msra.mxu0 0.0
    %240 = vmatprep.subr.mxu0 0.0
    %241 = vmatpush1.msra.mxu0 0.0
    %242 = vmatprep.subr.mxu0 0.0
    %243 = vmatpush1.msra.mxu0 0.0
    %244 = vmatprep.subr.mxu0 0.0
    %245 = vmatpush1.msra.mxu0 0.0
    %246 = vmatprep.subr.mxu0 0.0
    %247 = vmatpush1.msra.mxu0 0.0
    %248 = vmatprep.subr.mxu0 0.0
    %249 = vmatpush1.msra.mxu0 0.0
    %250 = vmatprep.subr.mxu0 0.0
    %251 = vmatpush1.msra.mxu0 0.0
    %252 = vmatprep.subr.mxu0 0.0
    %253 = vmatpush1.msra.mxu0 0.0
    %254 = vmatprep.subr.mxu0 0.0
    %255 = vmatpush1.msra.mxu0 %v202
    %256 = vmatprep.subr.mxu0 0.0
    %257 = vmatpush1.msra.mxu0 %v201
    %258 = vmatprep.subr.mxu0 0.0
    %259 = vmatpush2.msra.mxu0 0.0
    %260 = vmatprep.subr.mxu0 0.0
    %261 = vmatpush2.msra.mxu0 0.0
    %262 = vmatprep.subr.mxu0 0.0
    %263 = vmatpush2.msra.mxu0 0.0
    %264 = vmatprep.subr.mxu0 0.0
    %265 = vmatpush2.msra.mxu0 0.0
    %266 = vmatprep.subr.mxu0 0.0
    %267 = vmatpush2.msra.mxu0 0.0
    %268 = vmatprep.subr.mxu0 0.0
    %269 = vmatpush2.msra.mxu0 0.0
    %270 = vmatprep.subr.mxu0 0.0
    %271 = vmatpush2.msra.mxu0 0.0
    %272 = vmatprep.subr.mxu0 0.0
    %273 = vmatpush2.msra.mxu0 0.0
    %274 = vmatprep.subr.mxu0 0.0
    %275 = vmatpush2.msra.mxu0 0.0
    %276 = vmatprep.subr.mxu0 0.0
    %277 = vmatpush2.msra.mxu0 0.0
    %278 = vmatprep.subr.mxu0 0.0
    %279 = vmatpush2.msra.mxu0 0.0
    %280 = vmatprep.subr.mxu0 0.0
    %281 = vmatpush2.msra.mxu0 0.0
    %282 = vmatprep.subr.mxu0 0.0
    %283 = vmatpush2.msra.mxu0 0.0
    %284 = vmatprep.subr.mxu0 0.0
    %285 = vmatpush2.msra.mxu0 0.0
    %286 = vmatprep.subr.mxu0 0.0
    %287 = vmatpush2.msra.mxu0 0.0
    %288 = vmatprep.subr.mxu0 0.0
    %289 = vmatpush2.msra.mxu0 0.0
    %290 = vmatprep.mubr.f32.mxu0 0.0
    %291 = vmatmul.mubr.f32.gmra.mxu0 %v215
    %v292 = vpop.f32.mrf.mxu0
    %v293 = vadd.f32 %v211, %v292
    %v294 = vpop.f32.mrf.mxu0
    %295 = vmatprep.mubr.f32.mxu0 0.0
    %296 = vmatmul.mubr.f32.gmra.mxu0 %v218
    %v297 = vpop.f32.mrf.mxu0
    %v298 = vadd.f32 %v211, %v297
    %v299 = vpop.f32.mrf.mxu0
    %300 = vmatprep.mubr.f32.mxu0 0.0
    %301 = vmatmul.mubr.f32.gmra.mxu0 %v221
    %v302 = vpop.f32.mrf.mxu0
    %v303 = vadd.f32 %v211, %v302
    %v304 = vpop.f32.mrf.mxu0
    %305 = vmatprep.mubr.f32.mxu0 0.0
    %306 = vmatmul.mubr.f32.gmra.mxu0 %v224
    %v307 = vpop.f32.mrf.mxu0
    %v308 = vadd.f32 %v211, %v307
    %v309 = vpop.f32.mrf.mxu0
    %310 = vdwg.mxu0
    %v311 = vadd.f32 %v293, %v204
    %v312 = vadd.f32 %v298, %v205
    %v313 = vadd.f32 %v303, %v204
    %v314 = vadd.f32 %v308, %v205
    %v315 = vld [vmem:[%s11] sm:$0x1]
    %v316 = vld [vmem:[%s13] sm:$0x1]
    %v317 = vld [vmem:[%s15] sm:$0xff]
    %v318 = vld [vmem:[%s15 + $0x8] sm:$0xff]
    %v319 = vld [vmem:[%s15 + $0x10] sm:$0xff]
    %v320 = vld [vmem:[%s15 + $0x18] sm:$0xff]
    %v321 = vld [vmem:[%s17] sm:$0x1]
    %v322 = vld [vmem:[%s19] sm:$0xff]
    %v323 = vld [vmem:[%s19 + $0x8] sm:$0xff]
    %v324 = vld [vmem:[%s19 + $0x10] sm:$0xff]
    %v325 = vld [vmem:[%s19 + $0x18] sm:$0xff]
    %v326 = vld [vmem:[%s21] sm:$0x1]
    %v327 = vld [vmem:[%s23] sm:$0xff]
    %v328 = vld [vmem:[%s23 + $0x8] sm:$0xff]
    %v329 = vld [vmem:[%s23 + $0x10] sm:$0xff]
    %v330 = vld [vmem:[%s23 + $0x18] sm:$0xff]
    %v331 = vld [vmem:[%s23 + $0x20] sm:$0xff]
    %v332 = vld [vmem:[%s23 + $0x28] sm:$0xff]
    %v333 = vld [vmem:[%s23 + $0x30] sm:$0xff]
    %v334 = vld [vmem:[%s23 + $0x38] sm:$0xff]
    %v335 = vld [vmem:[%s25] sm:$0x1]
    %v336 = vld [vmem:[%s27] sm:$0xff]
    %v337 = vld [vmem:[%s27 + $0x8] sm:$0xff]
    %v338 = vld [vmem:[%s27 + $0x10] sm:$0xff]
    %v339 = vld [vmem:[%s27 + $0x18] sm:$0xff]
    %v340 = vld [vmem:[%s29] sm:$0x1]
    %v341 = vld [vmem:[%s31] sm:$0x1]
    %v342 = vld [vmem:[%s33] sm:$0x1]
    %v343 = vld [vmem:[%s35] sm:$0xff]
    %v344 = vld [vmem:[%s35 + $0x8] sm:$0xff]
    %v345 = vld [vmem:[%s35 + $0x10] sm:$0xff]
    %v346 = vld [vmem:[%s35 + $0x18] sm:$0xff]
    %v347 = vld [vmem:[%s37] sm:$0x1]
    %v348 = vld [vmem:[%s39] sm:$0xff]
    %v349 = vld [vmem:[%s39 + $0x8] sm:$0xff]
    %v350 = vld [vmem:[%s39 + $0x10] sm:$0xff]
    %v351 = vld [vmem:[%s39 + $0x18] sm:$0xff]
    %v352 = vld [vmem:[%s39 + $0x20] sm:$0xff]
    %v353 = vld [vmem:[%s39 + $0x28] sm:$0xff]
    %v354 = vld [vmem:[%s39 + $0x30] sm:$0xff]
    %v355 = vld [vmem:[%s39 + $0x38] sm:$0xff]
    %v356 = vld [vmem:[%s39 + $0x40] sm:$0xff]
    %v357 = vld [vmem:[%s39 + $0x48] sm:$0xff]
    %v358 = vld [vmem:[%s39 + $0x50] sm:$0xff]
    %v359 = vld [vmem:[%s39 + $0x58] sm:$0xff]
    %v360 = vld [vmem:[%s39 + $0x60] sm:$0xff]
    %v361 = vld [vmem:[%s39 + $0x68] sm:$0xff]
    %v362 = vld [vmem:[%s39 + $0x70] sm:$0xff]
    %v363 = vld [vmem:[%s39 + $0x78] sm:$0xff]
    %v364 = vld [vmem:[%s41] sm:$0x1]
    %v365 = vsub.f32 0.0, %v335
    %v366 = vmul.f32 %v365, 1.442695
    %v367 = vpow.pop %v366
    %v368 = vadd.f32 %v367, 1.0
    %v369 = vrcp.pop %v368
    %v370 = vmul.f32 1.0, %v369
    %v371 = vsel %vm213, %v327, -inf
    %372 = vmax.xlane.f32.xlu0 %v371
    %v373 = vpop.xlane.xlu0 %372
    %v374 = vsel %vm213, %v328, -inf
    %375 = vmax.xlane.f32.xlu0 %v374
    %v376 = vpop.xlane.xlu0 %375
    %v377 = vsub.f32 %v327, %v373
    %v378 = vsub.f32 %v328, %v376
    %v379 = vmul.f32 %v377, 1.442695
    %v380 = vpow.pop %v379
    %v381 = vmul.f32 %v378, 1.442695
    %v382 = vpow.pop %v381
    %v383 = vsel %vm213, %v380, 0.0
    %384 = vadd.xlane.f32.xlu0 %v383
    %v385 = vpop.xlane.xlu0 %384
    %v386 = vsel %vm213, %v382, 0.0
    %387 = vadd.xlane.f32.xlu0 %v386
    %v388 = vpop.xlane.xlu0 %387
    %v389 = vrcp.pop %v385
    %v390 = vmul.f32 %v380, %v389
    %v391 = vrcp.pop %v388
    %v392 = vmul.f32 %v382, %v391
    %v393 = vsel %vm213, %v329, -inf
    %394 = vmax.xlane.f32.xlu0 %v393
    %v395 = vpop.xlane.xlu0 %394
    %v396 = vsel %vm213, %v330, -inf
    %397 = vmax.xlane.f32.xlu0 %v396
    %v398 = vpop.xlane.xlu0 %397
    %v399 = vsub.f32 %v329, %v395
    %v400 = vsub.f32 %v330, %v398
    %v401 = vmul.f32 %v399, 1.442695
    %v402 = vpow.pop %v401
    %v403 = vmul.f32 %v400, 1.442695
    %v404 = vpow.pop %v403
    %v405 = vsel %vm213, %v402, 0.0
    %406 = vadd.xlane.f32.xlu0 %v405
    %v407 = vpop.xlane.xlu0 %406
    %v408 = vsel %vm213, %v404, 0.0
    %409 = vadd.xlane.f32.xlu0 %v408
    %v410 = vpop.xlane.xlu0 %409
    %v411 = vrcp.pop %v407
    %v412 = vmul.f32 %v402, %v411
    %v413 = vrcp.pop %v410
    %v414 = vmul.f32 %v404, %v413
    %v415 = vsel %vm213, %v331, -inf
    %416 = vmax.xlane.f32.xlu0 %v415
    %v417 = vpop.xlane.xlu0 %416
    %v418 = vsel %vm213, %v332, -inf
    %419 = vmax.xlane.f32.xlu0 %v418
    %v420 = vpop.xlane.xlu0 %419
    %v421 = vsub.f32 %v331, %v417
    %v422 = vsub.f32 %v332, %v420
    %v423 = vmul.f32 %v421, 1.442695
    %v424 = vpow.pop %v423
    %v425 = vmul.f32 %v422, 1.442695
    %v426 = vpow.pop %v425
    %v427 = vsel %vm213, %v424, 0.0
    %428 = vadd.xlane.f32.xlu0 %v427
    %v429 = vpop.xlane.xlu0 %428
    %v430 = vsel %vm213, %v426, 0.0
    %431 = vadd.xlane.f32.xlu0 %v430
    %v432 = vpop.xlane.xlu0 %431
    %v433 = vrcp.pop %v429
    %v434 = vmul.f32 %v424, %v433
    %v435 = vrcp.pop %v432
    %v436 = vmul.f32 %v426, %v435
    %v437 = vsel %vm213, %v333, -inf
    %438 = vmax.xlane.f32.xlu0 %v437
    %v439 = vpop.xlane.xlu0 %438
    %v440 = vsel %vm213, %v334, -inf
    %441 = vmax.xlane.f32.xlu0 %v440
    %v442 = vpop.xlane.xlu0 %441
    %v443 = vsub.f32 %v333, %v439
    %v444 = vsub.f32 %v334, %v442
    %v445 = vmul.f32 %v443, 1.442695
    %v446 = vpow.pop %v445
    %v447 = vmul.f32 %v444, 1.442695
    %v448 = vpow.pop %v447
    %v449 = vsel %vm213, %v446, 0.0
    %450 = vadd.xlane.f32.xlu0 %v449
    %v451 = vpop.xlane.xlu0 %450
    %v452 = vsel %vm213, %v448, 0.0
    %453 = vadd.xlane.f32.xlu0 %v452
    %v454 = vpop.xlane.xlu0 %453
    %v455 = vrcp.pop %v451
    %v456 = vmul.f32 %v446, %v455
    %v457 = vrcp.pop %v454
    %v458 = vmul.f32 %v448, %v457
    %vm459 = vcmask 261120
    %v460 = vsel %vm459, %v311, 0.0
    %461 = vadd.xlane.f32.xlu0 %v460
    %v462 = vpop.xlane.xlu0 %461
    %v463 = vsel %vm459, %v312, 0.0
    %464 = vadd.xlane.f32.xlu0 %v463
    %v465 = vpop.xlane.xlu0 %464
    %v466 = vsel %vm459, %v313, 0.0
    %467 = vadd.xlane.f32.xlu0 %v466
    %v468 = vpop.xlane.xlu0 %467
    %v469 = vsel %vm459, %v314, 0.0
    %470 = vadd.xlane.f32.xlu0 %v469
    %v471 = vpop.xlane.xlu0 %470
    %v472 = vrcp.pop 32.0
    %v473 = vmul.f32 %v462, %v472
    %v474 = vmul.f32 %v465, %v472
    %v475 = vmul.f32 %v468, %v472
    %v476 = vmul.f32 %v471, %v472
    %v477 = vsub.f32 %v311, %v473
    %v478 = vsub.f32 %v312, %v474
    %v479 = vsub.f32 %v313, %v475
    %v480 = vsub.f32 %v314, %v476
    %v481 = vmul.f32 %v477, %v477
    %v482 = vmul.f32 %v478, %v478
    %v483 = vmul.f32 %v479, %v479
    %v484 = vmul.f32 %v480, %v480
    %v485 = vsel %vm459, %v481, 0.0
    %486 = vadd.xlane.f32.xlu0 %v485
    %v487 = vpop.xlane.xlu0 %486
    %v488 = vsel %vm459, %v482, 0.0
    %489 = vadd.xlane.f32.xlu0 %v488
    %v490 = vpop.xlane.xlu0 %489
    %v491 = vsel %vm459, %v483, 0.0
    %492 = vadd.xlane.f32.xlu0 %v491
    %v493 = vpop.xlane.xlu0 %492
    %v494 = vsel %vm459, %v484, 0.0
    %495 = vadd.xlane.f32.xlu0 %v494
    %v496 = vpop.xlane.xlu0 %495
    %v497 = vmul.f32 %v487, %v472
    %v498 = vmul.f32 %v490, %v472
    %v499 = vmul.f32 %v493, %v472
    %v500 = vmul.f32 %v496, %v472
    %v501 = vadd.f32 %v497, 1e-06
    %v502 = vadd.f32 %v498, 1e-06
    %v503 = vadd.f32 %v499, 1e-06
    %v504 = vadd.f32 %v500, 1e-06
    %v505 = vrsqrt.pop %v501
    %v506 = vrsqrt.pop %v502
    %v507 = vrsqrt.pop %v503
    %v508 = vrsqrt.pop %v504
    %v509 = vmul.f32 %v477, %v505
    %v510 = vmul.f32 %v478, %v506
    %v511 = vmul.f32 %v479, %v507
    %v512 = vmul.f32 %v480, %v508
    %v514 = vlaneseq
    %v515 = vshrl.u32 %v514, 7
    %v516 = vsub.s32 0, %v515
    %v517 = vrot.slane %v315, %v516
    %v519 = vmul.f32 %v509, %v517
    %v520 = vmul.f32 %v510, %v517
    %v521 = vmul.f32 %v511, %v517
    %v522 = vmul.f32 %v512, %v517
    %v524 = vlaneseq
    %v525 = vshrl.u32 %v524, 7
    %v526 = vsub.s32 0, %v525
    %v527 = vrot.slane %v316, %v526
    %v529 = vadd.f32 %v519, %v527
    %v530 = vadd.f32 %v520, %v527
    %v531 = vadd.f32 %v521, %v527
    %v532 = vadd.f32 %v522, %v527
    %v534 = vlaneseq
    %v535 = vshrl.u32 %v534, 7
    %v536 = vsub.s32 0, %v535
    %v537 = vrot.slane %v321, %v536
    %v540 = vsel %vm459, %v529, 0
    %v543 = vsel %vm459, %v530, 0
    %v546 = vsel %vm459, %v531, 0
    %v549 = vsel %vm459, %v532, 0
    %551 = vmatprep.subr.mxu0 0.0
    %552 = vmatpush1.msra.mxu0 0.0
    %553 = vmatprep.subr.mxu0 0.0
    %554 = vmatpush1.msra.mxu0 0.0
    %555 = vmatprep.subr.mxu0 0.0
    %556 = vmatpush1.msra.mxu0 0.0
    %557 = vmatprep.subr.mxu0 0.0
    %558 = vmatpush1.msra.mxu0 0.0
    %559 = vmatprep.subr.mxu0 0.0
    %560 = vmatpush1.msra.mxu0 0.0
    %561 = vmatprep.subr.mxu0 0.0
    %562 = vmatpush1.msra.mxu0 0.0
    %563 = vmatprep.subr.mxu0 0.0
    %564 = vmatpush1.msra.mxu0 0.0
    %565 = vmatprep.subr.mxu0 0.0
    %566 = vmatpush1.msra.mxu0 0.0
    %567 = vmatprep.subr.mxu0 0.0
    %568 = vmatpush1.msra.mxu0 0.0
    %569 = vmatprep.subr.mxu0 0.0
    %570 = vmatpush1.msra.mxu0 0.0
    %571 = vmatprep.subr.mxu0 0.0
    %572 = vmatpush1.msra.mxu0 0.0
    %573 = vmatprep.subr.mxu0 0.0
    %574 = vmatpush1.msra.mxu0 0.0
    %575 = vmatprep.subr.mxu0 0.0
    %576 = vmatpush1.msra.mxu0 %v320
    %577 = vmatprep.subr.mxu0 0.0
    %578 = vmatpush1.msra.mxu0 %v319
    %579 = vmatprep.subr.mxu0 0.0
    %580 = vmatpush1.msra.mxu0 %v318
    %581 = vmatprep.subr.mxu0 0.0
    %582 = vmatpush1.msra.mxu0 %v317
    %583 = vmatprep.subr.mxu0 0.0
    %584 = vmatpush2.msra.mxu0 0.0
    %585 = vmatprep.subr.mxu0 0.0
    %586 = vmatpush2.msra.mxu0 0.0
    %587 = vmatprep.subr.mxu0 0.0
    %588 = vmatpush2.msra.mxu0 0.0
    %589 = vmatprep.subr.mxu0 0.0
    %590 = vmatpush2.msra.mxu0 0.0
    %591 = vmatprep.subr.mxu0 0.0
    %592 = vmatpush2.msra.mxu0 0.0
    %593 = vmatprep.subr.mxu0 0.0
    %594 = vmatpush2.msra.mxu0 0.0
    %595 = vmatprep.subr.mxu0 0.0
    %596 = vmatpush2.msra.mxu0 0.0
    %597 = vmatprep.subr.mxu0 0.0
    %598 = vmatpush2.msra.mxu0 0.0
    %599 = vmatprep.subr.mxu0 0.0
    %600 = vmatpush2.msra.mxu0 0.0
    %601 = vmatprep.subr.mxu0 0.0
    %602 = vmatpush2.msra.mxu0 0.0
    %603 = vmatprep.subr.mxu0 0.0
    %604 = vmatpush2.msra.mxu0 0.0
    %605 = vmatprep.subr.mxu0 0.0
    %606 = vmatpush2.msra.mxu0 0.0
    %607 = vmatprep.subr.mxu0 0.0
    %608 = vmatpush2.msra.mxu0 0.0
    %609 = vmatprep.subr.mxu0 0.0
    %610 = vmatpush2.msra.mxu0 0.0
    %611 = vmatprep.subr.mxu0 0.0
    %612 = vmatpush2.msra.mxu0 0.0
    %613 = vmatprep.subr.mxu0 0.0
    %614 = vmatpush2.msra.mxu0 0.0
    %615 = vmatprep.mubr.f32.mxu0 0.0
    %616 = vmatmul.mubr.f32.gmra.mxu0 %v540
    %v617 = vpop.f32.mrf.mxu0
    %v618 = vadd.f32 %v537, %v617
    %v619 = vpop.f32.mrf.mxu0
    %620 = vmatprep.mubr.f32.mxu0 0.0
    %621 = vmatmul.mubr.f32.gmra.mxu0 %v543
    %v622 = vpop.f32.mrf.mxu0
    %v623 = vadd.f32 %v537, %v622
    %v624 = vpop.f32.mrf.mxu0
    %625 = vmatprep.mubr.f32.mxu0 0.0
    %626 = vmatmul.mubr.f32.gmra.mxu0 %v546
    %v627 = vpop.f32.mrf.mxu0
    %v628 = vadd.f32 %v537, %v627
    %v629 = vpop.f32.mrf.mxu0
    %630 = vmatprep.mubr.f32.mxu0 0.0
    %631 = vmatmul.mubr.f32.gmra.mxu0 %v549
    %v632 = vpop.f32.mrf.mxu0
    %v633 = vadd.f32 %v537, %v632
    %v634 = vpop.f32.mrf.mxu0
    %635 = vdwg.mxu0
    %v637 = vlaneseq
    %v638 = vshrl.u32 %v637, 7
    %v639 = vsub.s32 0, %v638
    %v640 = vrot.slane %v326, %v639
    %642 = vmatprep.subr.mxu0 0.0
    %643 = vmatpush1.msra.mxu0 0.0
    %644 = vmatprep.subr.mxu0 0.0
    %645 = vmatpush1.msra.mxu0 0.0
    %646 = vmatprep.subr.mxu0 0.0
    %647 = vmatpush1.msra.mxu0 0.0
    %648 = vmatprep.subr.mxu0 0.0
    %649 = vmatpush1.msra.mxu0 0.0
    %650 = vmatprep.subr.mxu0 0.0
    %651 = vmatpush1.msra.mxu0 0.0
    %652 = vmatprep.subr.mxu0 0.0
    %653 = vmatpush1.msra.mxu0 0.0
    %654 = vmatprep.subr.mxu0 0.0
    %655 = vmatpush1.msra.mxu0 0.0
    %656 = vmatprep.subr.mxu0 0.0
    %657 = vmatpush1.msra.mxu0 0.0
    %658 = vmatprep.subr.mxu0 0.0
    %659 = vmatpush1.msra.mxu0 0.0
    %660 = vmatprep.subr.mxu0 0.0
    %661 = vmatpush1.msra.mxu0 0.0
    %662 = vmatprep.subr.mxu0 0.0
    %663 = vmatpush1.msra.mxu0 0.0
    %664 = vmatprep.subr.mxu0 0.0
    %665 = vmatpush1.msra.mxu0 0.0
    %666 = vmatprep.subr.mxu0 0.0
    %667 = vmatpush1.msra.mxu0 %v325
    %668 = vmatprep.subr.mxu0 0.0
    %669 = vmatpush1.msra.mxu0 %v324
    %670 = vmatprep.subr.mxu0 0.0
    %671 = vmatpush1.msra.mxu0 %v323
    %672 = vmatprep.subr.mxu0 0.0
    %673 = vmatpush1.msra.mxu0 %v322
    %674 = vmatprep.subr.mxu0 0.0
    %675 = vmatpush2.msra.mxu0 0.0
    %676 = vmatprep.subr.mxu0 0.0
    %677 = vmatpush2.msra.mxu0 0.0
    %678 = vmatprep.subr.mxu0 0.0
    %679 = vmatpush2.msra.mxu0 0.0
    %680 = vmatprep.subr.mxu0 0.0
    %681 = vmatpush2.msra.mxu0 0.0
    %682 = vmatprep.subr.mxu0 0.0
    %683 = vmatpush2.msra.mxu0 0.0
    %684 = vmatprep.subr.mxu0 0.0
    %685 = vmatpush2.msra.mxu0 0.0
    %686 = vmatprep.subr.mxu0 0.0
    %687 = vmatpush2.msra.mxu0 0.0
    %688 = vmatprep.subr.mxu0 0.0
    %689 = vmatpush2.msra.mxu0 0.0
    %690 = vmatprep.subr.mxu0 0.0
    %691 = vmatpush2.msra.mxu0 0.0
    %692 = vmatprep.subr.mxu0 0.0
    %693 = vmatpush2.msra.mxu0 0.0
    %694 = vmatprep.subr.mxu0 0.0
    %695 = vmatpush2.msra.mxu0 0.0
    %696 = vmatprep.subr.mxu0 0.0
    %697 = vmatpush2.msra.mxu0 0.0
    %698 = vmatprep.subr.mxu0 0.0
    %699 = vmatpush2.msra.mxu0 0.0
    %700 = vmatprep.subr.mxu0 0.0
    %701 = vmatpush2.msra.mxu0 0.0
    %702 = vmatprep.subr.mxu0 0.0
    %703 = vmatpush2.msra.mxu0 0.0
    %704 = vmatprep.subr.mxu0 0.0
    %705 = vmatpush2.msra.mxu0 0.0
    %706 = vmatprep.mubr.f32.mxu0 0.0
    %707 = vmatmul.mubr.f32.gmra.mxu0 %v540
    %v708 = vpop.f32.mrf.mxu0
    %v709 = vadd.f32 %v640, %v708
    %v710 = vpop.f32.mrf.mxu0
    %711 = vmatprep.mubr.f32.mxu0 0.0
    %712 = vmatmul.mubr.f32.gmra.mxu0 %v543
    %v713 = vpop.f32.mrf.mxu0
    %v714 = vadd.f32 %v640, %v713
    %v715 = vpop.f32.mrf.mxu0
    %716 = vmatprep.mubr.f32.mxu0 0.0
    %717 = vmatmul.mubr.f32.gmra.mxu0 %v546
    %v718 = vpop.f32.mrf.mxu0
    %v719 = vadd.f32 %v640, %v718
    %v720 = vpop.f32.mrf.mxu0
    %721 = vmatprep.mubr.f32.mxu0 0.0
    %722 = vmatmul.mubr.f32.gmra.mxu0 %v549
    %v723 = vpop.f32.mrf.mxu0
    %v724 = vadd.f32 %v640, %v723
    %v725 = vpop.f32.mrf.mxu0
    %726 = vdwg.mxu0
    %v727 = vmul.f32 %v618, 0.35355338
    %v728 = vmul.f32 %v623, 0.35355338
    %731 = vrot.lane.b32.xlu0 %v618, 96
    %v732 = vpop.permute.xlu0 %731
    %733 = vrot.lane.b32.xlu0 %v623, 96
    %v734 = vpop.permute.xlu0 %733
    %vm735 = vcmask 64512
    %v737 = vsel %vm735, %v727, 0
    %v740 = vsel %vm735, %v728, 0
    %v742 = vsel %vm735, %v732, 0
    %v744 = vsel %vm735, %v734, 0
    %746 = vmatprep.subr.mxu0 0.0
    %747 = vmatpush1.xpose.msra.mxu0 0.0
    %748 = vmatprep.subr.mxu0 0.0
    %749 = vmatpush1.xpose.msra.mxu0 0.0
    %750 = vmatprep.subr.mxu0 0.0
    %751 = vmatpush1.xpose.msra.mxu0 0.0
    %752 = vmatprep.subr.mxu0 0.0
    %753 = vmatpush1.xpose.msra.mxu0 0.0
    %754 = vmatprep.subr.mxu0 0.0
    %755 = vmatpush1.xpose.msra.mxu0 0.0
    %756 = vmatprep.subr.mxu0 0.0
    %757 = vmatpush1.xpose.msra.mxu0 0.0
    %758 = vmatprep.subr.mxu0 0.0
    %759 = vmatpush1.xpose.msra.mxu0 0.0
    %760 = vmatprep.subr.mxu0 0.0
    %761 = vmatpush1.xpose.msra.mxu0 0.0
    %762 = vmatprep.subr.mxu0 0.0
    %763 = vmatpush1.xpose.msra.mxu0 0.0
    %764 = vmatprep.subr.mxu0 0.0
    %765 = vmatpush1.xpose.msra.mxu0 0.0
    %766 = vmatprep.subr.mxu0 0.0
    %767 = vmatpush1.xpose.msra.mxu0 0.0
    %768 = vmatprep.subr.mxu0 0.0
    %769 = vmatpush1.xpose.msra.mxu0 0.0
    %770 = vmatprep.subr.mxu0 0.0
    %771 = vmatpush1.xpose.msra.mxu0 0.0
    %772 = vmatprep.subr.mxu0 0.0
    %773 = vmatpush1.xpose.msra.mxu0 0.0
    %774 = vmatprep.subr.mxu0 0.0
    %775 = vmatpush1.xpose.msra.mxu0 %v744
    %776 = vmatprep.subr.mxu0 0.0
    %777 = vmatpush1.xpose.msra.mxu0 %v742
    %778 = vmatprep.subr.mxu0 0.0
    %779 = vmatpush2.xpose.msra.mxu0 0.0
    %780 = vmatprep.subr.mxu0 0.0
    %781 = vmatpush2.xpose.msra.mxu0 0.0
    %782 = vmatprep.subr.mxu0 0.0
    %783 = vmatpush2.xpose.msra.mxu0 0.0
    %784 = vmatprep.subr.mxu0 0.0
    %785 = vmatpush2.xpose.msra.mxu0 0.0
    %786 = vmatprep.subr.mxu0 0.0
    %787 = vmatpush2.xpose.msra.mxu0 0.0
    %788 = vmatprep.subr.mxu0 0.0
    %789 = vmatpush2.xpose.msra.mxu0 0.0
    %790 = vmatprep.subr.mxu0 0.0
    %791 = vmatpush2.xpose.msra.mxu0 0.0
    %792 = vmatprep.subr.mxu0 0.0
    %793 = vmatpush2.xpose.msra.mxu0 0.0
    %794 = vmatprep.subr.mxu0 0.0
    %795 = vmatpush2.xpose.msra.mxu0 0.0
    %796 = vmatprep.subr.mxu0 0.0
    %797 = vmatpush2.xpose.msra.mxu0 0.0
    %798 = vmatprep.subr.mxu0 0.0
    %799 = vmatpush2.xpose.msra.mxu0 0.0
    %800 = vmatprep.subr.mxu0 0.0
    %801 = vmatpush2.xpose.msra.mxu0 0.0
    %802 = vmatprep.subr.mxu0 0.0
    %803 = vmatpush2.xpose.msra.mxu0 0.0
    %804 = vmatprep.subr.mxu0 0.0
    %805 = vmatpush2.xpose.msra.mxu0 0.0
    %806 = vmatprep.subr.mxu0 0.0
    %807 = vmatpush2.xpose.msra.mxu0 0.0
    %808 = vmatprep.subr.mxu0 0.0
    %809 = vmatpush2.xpose.msra.mxu0 0.0
    %810 = vmatprep.mubr.f32.mxu0 0.0
    %811 = vmatmul.mubr.f32.gmra.mxu0 %v737
    %v812 = vpop.f32.mrf.mxu0
    %v813 = vadd.f32 0.0, %v812
    %v814 = vpop.f32.mrf.mxu0
    %815 = vmatprep.mubr.f32.mxu0 0.0
    %816 = vmatmul.mubr.f32.gmra.mxu0 %v740
    %v817 = vpop.f32.mrf.mxu0
    %v818 = vadd.f32 0.0, %v817
    %v819 = vpop.f32.mrf.mxu0
    %820 = vdwg.mxu0
    %v821 = vsel %vm213, %v813, -inf
    %822 = vmax.xlane.f32.xlu0 %v821
    %v823 = vpop.xlane.xlu0 %822
    %v824 = vsel %vm213, %v818, -inf
    %825 = vmax.xlane.f32.xlu0 %v824
    %v826 = vpop.xlane.xlu0 %825
    %v827 = vsub.f32 %v813, %v823
    %v828 = vsub.f32 %v818, %v826
    %v829 = vmul.f32 %v827, 1.442695
    %v830 = vpow.pop %v829
    %v831 = vmul.f32 %v828, 1.442695
    %v832 = vpow.pop %v831
    %v833 = vsel %vm213, %v830, 0.0
    %834 = vadd.xlane.f32.xlu0 %v833
    %v835 = vpop.xlane.xlu0 %834
    %v836 = vsel %vm213, %v832, 0.0
    %837 = vadd.xlane.f32.xlu0 %v836
    %v838 = vpop.xlane.xlu0 %837
    %v839 = vrcp.pop %v835
    %v840 = vmul.f32 %v830, %v839
    %v841 = vrcp.pop %v838
    %v842 = vmul.f32 %v832, %v841
    %v843 = vsub.f32 1.0, %v370
    %v845 = vlaneseq
    %v846 = vshrl.u32 %v845, 7
    %v847 = vsub.s32 0, %v846
    %v848 = vrot.slane %v843, %v847
    %849 = vset.pattern.permute.xlu0 0
    %850 = vperm.xlu0 %849, %v848
    %v851 = vpop.permute.xlu0 %850
    %v853 = vmul.f32 %v851, %v840
    %v854 = vmul.f32 %v851, %v842
    %v856 = vlaneseq
    %v857 = vshrl.u32 %v856, 7
    %v858 = vsub.s32 0, %v857
    %v859 = vrot.slane %v370, %v858
    %860 = vset.pattern.permute.xlu0 0
    %861 = vperm.xlu0 %860, %v859
    %v862 = vpop.permute.xlu0 %861
    %v864 = vmul.f32 %v862, %v390
    %v865 = vmul.f32 %v862, %v392
    %v866 = vadd.f32 %v853, %v864
    %v867 = vadd.f32 %v854, %v865
    %v868 = vsel %vm213, %v866, 0.0
    %869 = vadd.xlane.f32.xlu0 %v868
    %v870 = vpop.xlane.xlu0 %869
    %v871 = vsel %vm213, %v867, 0.0
    %872 = vadd.xlane.f32.xlu0 %v871
    %v873 = vpop.xlane.xlu0 %872
    %v874 = vrcp.pop %v870
    %v875 = vmul.f32 %v866, %v874
    %v876 = vrcp.pop %v873
    %v877 = vmul.f32 %v867, %v876
    %v879 = vsel %vm213, %v875, 0
    %v882 = vsel %vm213, %v877, 0
    %884 = vmatprep.subr.mxu0 0.0
    %885 = vmatpush1.msra.mxu0 0.0
    %886 = vmatprep.subr.mxu0 0.0
    %887 = vmatpush1.msra.mxu0 0.0
    %888 = vmatprep.subr.mxu0 0.0
    %889 = vmatpush1.msra.mxu0 0.0
    %890 = vmatprep.subr.mxu0 0.0
    %891 = vmatpush1.msra.mxu0 0.0
    %892 = vmatprep.subr.mxu0 0.0
    %893 = vmatpush1.msra.mxu0 0.0
    %894 = vmatprep.subr.mxu0 0.0
    %895 = vmatpush1.msra.mxu0 0.0
    %896 = vmatprep.subr.mxu0 0.0
    %897 = vmatpush1.msra.mxu0 0.0
    %898 = vmatprep.subr.mxu0 0.0
    %899 = vmatpush1.msra.mxu0 0.0
    %900 = vmatprep.subr.mxu0 0.0
    %901 = vmatpush1.msra.mxu0 0.0
    %902 = vmatprep.subr.mxu0 0.0
    %903 = vmatpush1.msra.mxu0 0.0
    %904 = vmatprep.subr.mxu0 0.0
    %905 = vmatpush1.msra.mxu0 0.0
    %906 = vmatprep.subr.mxu0 0.0
    %907 = vmatpush1.msra.mxu0 0.0
    %908 = vmatprep.subr.mxu0 0.0
    %909 = vmatpush1.msra.mxu0 0.0
    %910 = vmatprep.subr.mxu0 0.0
    %911 = vmatpush1.msra.mxu0 0.0
    %912 = vmatprep.subr.mxu0 0.0
    %913 = vmatpush1.msra.mxu0 %v714
    %914 = vmatprep.subr.mxu0 0.0
    %915 = vmatpush1.msra.mxu0 %v709
    %916 = vmatprep.subr.mxu0 0.0
    %917 = vmatpush2.msra.mxu0 0.0
    %918 = vmatprep.subr.mxu0 0.0
    %919 = vmatpush2.msra.mxu0 0.0
    %920 = vmatprep.subr.mxu0 0.0
    %921 = vmatpush2.msra.mxu0 0.0
    %922 = vmatprep.subr.mxu0 0.0
    %923 = vmatpush2.msra.mxu0 0.0
    %924 = vmatprep.subr.mxu0 0.0
    %925 = vmatpush2.msra.mxu0 0.0
    %926 = vmatprep.subr.mxu0 0.0
    %927 = vmatpush2.msra.mxu0 0.0
    %928 = vmatprep.subr.mxu0 0.0
    %929 = vmatpush2.msra.mxu0 0.0
    %930 = vmatprep.subr.mxu0 0.0
    %931 = vmatpush2.msra.mxu0 0.0
    %932 = vmatprep.subr.mxu0 0.0
    %933 = vmatpush2.msra.mxu0 0.0
    %934 = vmatprep.subr.mxu0 0.0
    %935 = vmatpush2.msra.mxu0 0.0
    %936 = vmatprep.subr.mxu0 0.0
    %937 = vmatpush2.msra.mxu0 0.0
    %938 = vmatprep.subr.mxu0 0.0
    %939 = vmatpush2.msra.mxu0 0.0
    %940 = vmatprep.subr.mxu0 0.0
    %941 = vmatpush2.msra.mxu0 0.0
    %942 = vmatprep.subr.mxu0 0.0
    %943 = vmatpush2.msra.mxu0 0.0
    %944 = vmatprep.subr.mxu0 0.0
    %945 = vmatpush2.msra.mxu0 0.0
    %946 = vmatprep.subr.mxu0 0.0
    %947 = vmatpush2.msra.mxu0 0.0
    %948 = vmatprep.mubr.f32.mxu0 0.0
    %949 = vmatmul.mubr.f32.gmra.mxu0 %v879
    %v950 = vpop.f32.mrf.mxu0
    %v951 = vadd.f32 0.0, %v950
    %v952 = vpop.f32.mrf.mxu0
    %953 = vmatprep.mubr.f32.mxu0 0.0
    %954 = vmatmul.mubr.f32.gmra.mxu0 %v882
    %v955 = vpop.f32.mrf.mxu0
    %v956 = vadd.f32 0.0, %v955
    %v957 = vpop.f32.mrf.mxu0
    %958 = vdwg.mxu0
    %959 = vrot.lane.b32.xlu0 %v727, 120
    %v960 = vpop.permute.xlu0 %959
    %961 = vrot.lane.b32.xlu0 %v728, 120
    %v962 = vpop.permute.xlu0 %961
    %963 = vrot.lane.b32.xlu0 %v618, 88
    %v964 = vpop.permute.xlu0 %963
    %965 = vrot.lane.b32.xlu0 %v623, 88
    %v966 = vpop.permute.xlu0 %965
    %v967 = vsel %vm735, %v960, 0
    %v969 = vsel %vm735, %v962, 0
    %v971 = vsel %vm735, %v964, 0
    %v973 = vsel %vm735, %v966, 0
    %975 = vmatprep.subr.mxu0 0.0
    %976 = vmatpush1.xpose.msra.mxu0 0.0
    %977 = vmatprep.subr.mxu0 0.0
    %978 = vmatpush1.xpose.msra.mxu0 0.0
    %979 = vmatprep.subr.mxu0 0.0
    %980 = vmatpush1.xpose.msra.mxu0 0.0
    %981 = vmatprep.subr.mxu0 0.0
    %982 = vmatpush1.xpose.msra.mxu0 0.0
    %983 = vmatprep.subr.mxu0 0.0
    %984 = vmatpush1.xpose.msra.mxu0 0.0
    %985 = vmatprep.subr.mxu0 0.0
    %986 = vmatpush1.xpose.msra.mxu0 0.0
    %987 = vmatprep.subr.mxu0 0.0
    %988 = vmatpush1.xpose.msra.mxu0 0.0
    %989 = vmatprep.subr.mxu0 0.0
    %990 = vmatpush1.xpose.msra.mxu0 0.0
    %991 = vmatprep.subr.mxu0 0.0
    %992 = vmatpush1.xpose.msra.mxu0 0.0
    %993 = vmatprep.subr.mxu0 0.0
    %994 = vmatpush1.xpose.msra.mxu0 0.0
    %995 = vmatprep.subr.mxu0 0.0
    %996 = vmatpush1.xpose.msra.mxu0 0.0
    %997 = vmatprep.subr.mxu0 0.0
    %998 = vmatpush1.xpose.msra.mxu0 0.0
    %999 = vmatprep.subr.mxu0 0.0
    %1000 = vmatpush1.xpose.msra.mxu0 0.0
    %1001 = vmatprep.subr.mxu0 0.0
    %1002 = vmatpush1.xpose.msra.mxu0 0.0
    %1003 = vmatprep.subr.mxu0 0.0
    %1004 = vmatpush1.xpose.msra.mxu0 %v973
    %1005 = vmatprep.subr.mxu0 0.0
    %1006 = vmatpush1.xpose.msra.mxu0 %v971
    %1007 = vmatprep.subr.mxu0 0.0
    %1008 = vmatpush2.xpose.msra.mxu0 0.0
    %1009 = vmatprep.subr.mxu0 0.0
    %1010 = vmatpush2.xpose.msra.mxu0 0.0
    %1011 = vmatprep.subr.mxu0 0.0
    %1012 = vmatpush2.xpose.msra.mxu0 0.0
    %1013 = vmatprep.subr.mxu0 0.0
    %1014 = vmatpush2.xpose.msra.mxu0 0.0
    %1015 = vmatprep.subr.mxu0 0.0
    %1016 = vmatpush2.xpose.msra.mxu0 0.0
    %1017 = vmatprep.subr.mxu0 0.0
    %1018 = vmatpush2.xpose.msra.mxu0 0.0
    %1019 = vmatprep.subr.mxu0 0.0
    %1020 = vmatpush2.xpose.msra.mxu0 0.0
    %1021 = vmatprep.subr.mxu0 0.0
    %1022 = vmatpush2.xpose.msra.mxu0 0.0
    %1023 = vmatprep.subr.mxu0 0.0
    %1024 = vmatpush2.xpose.msra.mxu0 0.0
    %1025 = vmatprep.subr.mxu0 0.0
    %1026 = vmatpush2.xpose.msra.mxu0 0.0
    %1027 = vmatprep.subr.mxu0 0.0
    %1028 = vmatpush2.xpose.msra.mxu0 0.0
    %1029 = vmatprep.subr.mxu0 0.0
    %1030 = vmatpush2.xpose.msra.mxu0 0.0
    %1031 = vmatprep.subr.mxu0 0.0
    %1032 = vmatpush2.xpose.msra.mxu0 0.0
    %1033 = vmatprep.subr.mxu0 0.0
    %1034 = vmatpush2.xpose.msra.mxu0 0.0
    %1035 = vmatprep.subr.mxu0 0.0
    %1036 = vmatpush2.xpose.msra.mxu0 0.0
    %1037 = vmatprep.subr.mxu0 0.0
    %1038 = vmatpush2.xpose.msra.mxu0 0.0
    %1039 = vmatprep.mubr.f32.mxu0 0.0
    %1040 = vmatmul.mubr.f32.gmra.mxu0 %v967
    %v1041 = vpop.f32.mrf.mxu0
    %v1042 = vadd.f32 0.0, %v1041
    %v1043 = vpop.f32.mrf.mxu0
    %1044 = vmatprep.mubr.f32.mxu0 0.0
    %1045 = vmatmul.mubr.f32.gmra.mxu0 %v969
    %v1046 = vpop.f32.mrf.mxu0
    %v1047 = vadd.f32 0.0, %v1046
    %v1048 = vpop.f32.mrf.mxu0
    %1049 = vdwg.mxu0
    %v1050 = vsel %vm213, %v1042, -inf
    %1051 = vmax.xlane.f32.xlu0 %v1050
    %v1052 = vpop.xlane.xlu0 %1051
    %v1053 = vsel %vm213, %v1047, -inf
    %1054 = vmax.xlane.f32.xlu0 %v1053
    %v1055 = vpop.xlane.xlu0 %1054
    %v1056 = vsub.f32 %v1042, %v1052
    %v1057 = vsub.f32 %v1047, %v1055
    %v1058 = vmul.f32 %v1056, 1.442695
    %v1059 = vpow.pop %v1058
    %v1060 = vmul.f32 %v1057, 1.442695
    %v1061 = vpow.pop %v1060
    %v1062 = vsel %vm213, %v1059, 0.0
    %1063 = vadd.xlane.f32.xlu0 %v1062
    %v1064 = vpop.xlane.xlu0 %1063
    %v1065 = vsel %vm213, %v1061, 0.0
    %1066 = vadd.xlane.f32.xlu0 %v1065
    %v1067 = vpop.xlane.xlu0 %1066
    %v1068 = vrcp.pop %v1064
    %v1069 = vmul.f32 %v1059, %v1068
    %v1070 = vrcp.pop %v1067
    %v1071 = vmul.f32 %v1061, %v1070
    %1072 = vset.pattern.permute.xlu0 1
    %1073 = vperm.xlu0 %1072, %v848
    %v1074 = vpop.permute.xlu0 %1073
    %v1076 = vmul.f32 %v1074, %v1069
    %v1077 = vmul.f32 %v1074, %v1071
    %1078 = vset.pattern.permute.xlu0 1
    %1079 = vperm.xlu0 %1078, %v859
    %v1080 = vpop.permute.xlu0 %1079
    %v1082 = vmul.f32 %v1080, %v412
    %v1083 = vmul.f32 %v1080, %v414
    %v1084 = vadd.f32 %v1076, %v1082
    %v1085 = vadd.f32 %v1077, %v1083
    %v1086 = vsel %vm213, %v1084, 0.0
    %1087 = vadd.xlane.f32.xlu0 %v1086
    %v1088 = vpop.xlane.xlu0 %1087
    %v1089 = vsel %vm213, %v1085, 0.0
    %1090 = vadd.xlane.f32.xlu0 %v1089
    %v1091 = vpop.xlane.xlu0 %1090
    %v1092 = vrcp.pop %v1088
    %v1093 = vmul.f32 %v1084, %v1092
    %v1094 = vrcp.pop %v1091
    %v1095 = vmul.f32 %v1085, %v1094
    %1098 = vrot.lane.b32.xlu0 %v709, 120
    %v1099 = vpop.permute.xlu0 %1098
    %1100 = vrot.lane.b32.xlu0 %v714, 120
    %v1101 = vpop.permute.xlu0 %1100
    %v1105 = vsel %vm213, %v1093, 0
    %v1108 = vsel %vm213, %v1095, 0
    %1110 = vmatprep.subr.mxu0 0.0
    %1111 = vmatpush1.msra.mxu0 0.0
    %1112 = vmatprep.subr.mxu0 0.0
    %1113 = vmatpush1.msra.mxu0 0.0
    %1114 = vmatprep.subr.mxu0 0.0
    %1115 = vmatpush1.msra.mxu0 0.0
    %1116 = vmatprep.subr.mxu0 0.0
    %1117 = vmatpush1.msra.mxu0 0.0
    %1118 = vmatprep.subr.mxu0 0.0
    %1119 = vmatpush1.msra.mxu0 0.0
    %1120 = vmatprep.subr.mxu0 0.0
    %1121 = vmatpush1.msra.mxu0 0.0
    %1122 = vmatprep.subr.mxu0 0.0
    %1123 = vmatpush1.msra.mxu0 0.0
    %1124 = vmatprep.subr.mxu0 0.0
    %1125 = vmatpush1.msra.mxu0 0.0
    %1126 = vmatprep.subr.mxu0 0.0
    %1127 = vmatpush1.msra.mxu0 0.0
    %1128 = vmatprep.subr.mxu0 0.0
    %1129 = vmatpush1.msra.mxu0 0.0
    %1130 = vmatprep.subr.mxu0 0.0
    %1131 = vmatpush1.msra.mxu0 0.0
    %1132 = vmatprep.subr.mxu0 0.0
    %1133 = vmatpush1.msra.mxu0 0.0
    %1134 = vmatprep.subr.mxu0 0.0
    %1135 = vmatpush1.msra.mxu0 0.0
    %1136 = vmatprep.subr.mxu0 0.0
    %1137 = vmatpush1.msra.mxu0 0.0
    %1138 = vmatprep.subr.mxu0 0.0
    %1139 = vmatpush1.msra.mxu0 %v1101
    %1140 = vmatprep.subr.mxu0 0.0
    %1141 = vmatpush1.msra.mxu0 %v1099
    %1142 = vmatprep.subr.mxu0 0.0
    %1143 = vmatpush2.msra.mxu0 0.0
    %1144 = vmatprep.subr.mxu0 0.0
    %1145 = vmatpush2.msra.mxu0 0.0
    %1146 = vmatprep.subr.mxu0 0.0
    %1147 = vmatpush2.msra.mxu0 0.0
    %1148 = vmatprep.subr.mxu0 0.0
    %1149 = vmatpush2.msra.mxu0 0.0
    %1150 = vmatprep.subr.mxu0 0.0
    %1151 = vmatpush2.msra.mxu0 0.0
    %1152 = vmatprep.subr.mxu0 0.0
    %1153 = vmatpush2.msra.mxu0 0.0
    %1154 = vmatprep.subr.mxu0 0.0
    %1155 = vmatpush2.msra.mxu0 0.0
    %1156 = vmatprep.subr.mxu0 0.0
    %1157 = vmatpush2.msra.mxu0 0.0
    %1158 = vmatprep.subr.mxu0 0.0
    %1159 = vmatpush2.msra.mxu0 0.0
    %1160 = vmatprep.subr.mxu0 0.0
    %1161 = vmatpush2.msra.mxu0 0.0
    %1162 = vmatprep.subr.mxu0 0.0
    %1163 = vmatpush2.msra.mxu0 0.0
    %1164 = vmatprep.subr.mxu0 0.0
    %1165 = vmatpush2.msra.mxu0 0.0
    %1166 = vmatprep.subr.mxu0 0.0
    %1167 = vmatpush2.msra.mxu0 0.0
    %1168 = vmatprep.subr.mxu0 0.0
    %1169 = vmatpush2.msra.mxu0 0.0
    %1170 = vmatprep.subr.mxu0 0.0
    %1171 = vmatpush2.msra.mxu0 0.0
    %1172 = vmatprep.subr.mxu0 0.0
    %1173 = vmatpush2.msra.mxu0 0.0
    %1174 = vmatprep.mubr.f32.mxu0 0.0
    %1175 = vmatmul.mubr.f32.gmra.mxu0 %v1105
    %v1176 = vpop.f32.mrf.mxu0
    %v1177 = vadd.f32 0.0, %v1176
    %v1178 = vpop.f32.mrf.mxu0
    %1179 = vmatprep.mubr.f32.mxu0 0.0
    %1180 = vmatmul.mubr.f32.gmra.mxu0 %v1108
    %v1181 = vpop.f32.mrf.mxu0
    %v1182 = vadd.f32 0.0, %v1181
    %v1183 = vpop.f32.mrf.mxu0
    %1184 = vdwg.mxu0
    %v1186 = vsel %vm735, %v1177, 0
    %v1189 = vsel %vm735, %v1182, 0
    %1191 = vmatprep.subr.mxu0 0.0
    %1192 = vmatpush1.msra.mxu0 0.0
    %1193 = vmatprep.subr.mxu0 0.0
    %1194 = vmatpush1.msra.mxu0 0.0
    %1195 = vmatprep.subr.mxu0 0.0
    %1196 = vmatpush1.msra.mxu0 0.0
    %1197 = vmatprep.subr.mxu0 0.0
    %1198 = vmatpush1.msra.mxu0 0.0
    %1199 = vmatprep.subr.mxu0 0.0
    %1200 = vmatpush1.msra.mxu0 0.0
    %1201 = vmatprep.subr.mxu0 0.0
    %1202 = vmatpush1.msra.mxu0 0.0
    %1203 = vmatprep.subr.mxu0 0.0
    %1204 = vmatpush1.msra.mxu0 0.0
    %1205 = vmatprep.subr.mxu0 0.0
    %1206 = vmatpush1.msra.mxu0 0.0
    %1207 = vmatprep.subr.mxu0 0.0
    %1208 = vmatpush1.msra.mxu0 0.0
    %1209 = vmatprep.subr.mxu0 0.0
    %1210 = vmatpush1.msra.mxu0 0.0
    %1211 = vmatprep.subr.mxu0 0.0
    %1212 = vmatpush1.msra.mxu0 0.0
    %1213 = vmatprep.subr.mxu0 0.0
    %1214 = vmatpush1.msra.mxu0 0.0
    %1215 = vmatprep.subr.mxu0 0.0
    %1216 = vmatpush1.msra.mxu0 0.0
    %1217 = vmatprep.subr.mxu0 0.0
    %1218 = vmatpush1.msra.mxu0 0.0
    %1219 = vmatprep.subr.mxu0 0.0
    %1220 = vmatpush1.msra.mxu0 0.0
    %1221 = vmatprep.subr.mxu0 0.0
    %1222 = vmatpush1.msra.mxu0 %v337
    %1223 = vmatprep.subr.mxu0 0.0
    %1224 = vmatpush2.msra.mxu0 0.0
    %1225 = vmatprep.subr.mxu0 0.0
    %1226 = vmatpush2.msra.mxu0 0.0
    %1227 = vmatprep.subr.mxu0 0.0
    %1228 = vmatpush2.msra.mxu0 0.0
    %1229 = vmatprep.subr.mxu0 0.0
    %1230 = vmatpush2.msra.mxu0 0.0
    %1231 = vmatprep.subr.mxu0 0.0
    %1232 = vmatpush2.msra.mxu0 0.0
    %1233 = vmatprep.subr.mxu0 0.0
    %1234 = vmatpush2.msra.mxu0 0.0
    %1235 = vmatprep.subr.mxu0 0.0
    %1236 = vmatpush2.msra.mxu0 0.0
    %1237 = vmatprep.subr.mxu0 0.0
    %1238 = vmatpush2.msra.mxu0 0.0
    %1239 = vmatprep.subr.mxu0 0.0
    %1240 = vmatpush2.msra.mxu0 0.0
    %1241 = vmatprep.subr.mxu0 0.0
    %1242 = vmatpush2.msra.mxu0 0.0
    %1243 = vmatprep.subr.mxu0 0.0
    %1244 = vmatpush2.msra.mxu0 0.0
    %1245 = vmatprep.subr.mxu0 0.0
    %1246 = vmatpush2.msra.mxu0 0.0
    %1247 = vmatprep.subr.mxu0 0.0
    %1248 = vmatpush2.msra.mxu0 0.0
    %1249 = vmatprep.subr.mxu0 0.0
    %1250 = vmatpush2.msra.mxu0 0.0
    %1251 = vmatprep.subr.mxu0 0.0
    %1252 = vmatpush2.msra.mxu0 0.0
    %1253 = vmatprep.subr.mxu0 0.0
    %1254 = vmatpush2.msra.mxu0 0.0
    %1255 = vmatprep.mubr.f32.mxu0 0.0
    %1256 = vmatmul.mubr.f32.gmra.mxu0 %v1186
    %v1257 = vpop.f32.mrf.mxu0
    %v1258 = vadd.f32 0.0, %v1257
    %v1259 = vpop.f32.mrf.mxu0
    %1260 = vmatprep.mubr.f32.mxu0 0.0
    %1261 = vmatmul.mubr.f32.gmra.mxu0 %v1189
    %v1262 = vpop.f32.mrf.mxu0
    %v1263 = vadd.f32 0.0, %v1262
    %v1264 = vpop.f32.mrf.mxu0
    %1265 = vdwg.mxu0
    %v1267 = vsel %vm735, %v951, 0
    %v1270 = vsel %vm735, %v956, 0
    %1272 = vmatprep.subr.mxu0 0.0
    %1273 = vmatpush1.msra.mxu0 0.0
    %1274 = vmatprep.subr.mxu0 0.0
    %1275 = vmatpush1.msra.mxu0 0.0
    %1276 = vmatprep.subr.mxu0 0.0
    %1277 = vmatpush1.msra.mxu0 0.0
    %1278 = vmatprep.subr.mxu0 0.0
    %1279 = vmatpush1.msra.mxu0 0.0
    %1280 = vmatprep.subr.mxu0 0.0
    %1281 = vmatpush1.msra.mxu0 0.0
    %1282 = vmatprep.subr.mxu0 0.0
    %1283 = vmatpush1.msra.mxu0 0.0
    %1284 = vmatprep.subr.mxu0 0.0
    %1285 = vmatpush1.msra.mxu0 0.0
    %1286 = vmatprep.subr.mxu0 0.0
    %1287 = vmatpush1.msra.mxu0 0.0
    %1288 = vmatprep.subr.mxu0 0.0
    %1289 = vmatpush1.msra.mxu0 0.0
    %1290 = vmatprep.subr.mxu0 0.0
    %1291 = vmatpush1.msra.mxu0 0.0
    %1292 = vmatprep.subr.mxu0 0.0
    %1293 = vmatpush1.msra.mxu0 0.0
    %1294 = vmatprep.subr.mxu0 0.0
    %1295 = vmatpush1.msra.mxu0 0.0
    %1296 = vmatprep.subr.mxu0 0.0
    %1297 = vmatpush1.msra.mxu0 0.0
    %1298 = vmatprep.subr.mxu0 0.0
    %1299 = vmatpush1.msra.mxu0 0.0
    %1300 = vmatprep.subr.mxu0 0.0
    %1301 = vmatpush1.msra.mxu0 0.0
    %1302 = vmatprep.subr.mxu0 0.0
    %1303 = vmatpush1.msra.mxu0 %v336
    %1304 = vmatprep.subr.mxu0 0.0
    %1305 = vmatpush2.msra.mxu0 0.0
    %1306 = vmatprep.subr.mxu0 0.0
    %1307 = vmatpush2.msra.mxu0 0.0
    %1308 = vmatprep.subr.mxu0 0.0
    %1309 = vmatpush2.msra.mxu0 0.0
    %1310 = vmatprep.subr.mxu0 0.0
    %1311 = vmatpush2.msra.mxu0 0.0
    %1312 = vmatprep.subr.mxu0 0.0
    %1313 = vmatpush2.msra.mxu0 0.0
    %1314 = vmatprep.subr.mxu0 0.0
    %1315 = vmatpush2.msra.mxu0 0.0
    %1316 = vmatprep.subr.mxu0 0.0
    %1317 = vmatpush2.msra.mxu0 0.0
    %1318 = vmatprep.subr.mxu0 0.0
    %1319 = vmatpush2.msra.mxu0 0.0
    %1320 = vmatprep.subr.mxu0 0.0
    %1321 = vmatpush2.msra.mxu0 0.0
    %1322 = vmatprep.subr.mxu0 0.0
    %1323 = vmatpush2.msra.mxu0 0.0
    %1324 = vmatprep.subr.mxu0 0.0
    %1325 = vmatpush2.msra.mxu0 0.0
    %1326 = vmatprep.subr.mxu0 0.0
    %1327 = vmatpush2.msra.mxu0 0.0
    %1328 = vmatprep.subr.mxu0 0.0
    %1329 = vmatpush2.msra.mxu0 0.0
    %1330 = vmatprep.subr.mxu0 0.0
    %1331 = vmatpush2.msra.mxu0 0.0
    %1332 = vmatprep.subr.mxu0 0.0
    %1333 = vmatpush2.msra.mxu0 0.0
    %1334 = vmatprep.subr.mxu0 0.0
    %1335 = vmatpush2.msra.mxu0 0.0
    %1336 = vmatprep.mubr.f32.mxu0 0.0
    %1337 = vmatmul.mubr.f32.gmra.mxu0 %v1267
    %v1338 = vpop.f32.mrf.mxu0
    %v1339 = vadd.f32 %v1258, %v1338
    %v1340 = vpop.f32.mrf.mxu0
    %1341 = vmatprep.mubr.f32.mxu0 0.0
    %1342 = vmatmul.mubr.f32.gmra.mxu0 %v1270
    %v1343 = vpop.f32.mrf.mxu0
    %v1344 = vadd.f32 %v1263, %v1343
    %v1345 = vpop.f32.mrf.mxu0
    %1346 = vdwg.mxu0
    %1347 = vrot.lane.b32.xlu0 %v727, 112
    %v1348 = vpop.permute.xlu0 %1347
    %1349 = vrot.lane.b32.xlu0 %v728, 112
    %v1350 = vpop.permute.xlu0 %1349
    %1351 = vrot.lane.b32.xlu0 %v618, 80
    %v1352 = vpop.permute.xlu0 %1351
    %1353 = vrot.lane.b32.xlu0 %v623, 80
    %v1354 = vpop.permute.xlu0 %1353
    %v1355 = vsel %vm735, %v1348, 0
    %v1357 = vsel %vm735, %v1350, 0
    %v1359 = vsel %vm735, %v1352, 0
    %v1361 = vsel %vm735, %v1354, 0
    %1363 = vmatprep.subr.mxu0 0.0
    %1364 = vmatpush1.xpose.msra.mxu0 0.0
    %1365 = vmatprep.subr.mxu0 0.0
    %1366 = vmatpush1.xpose.msra.mxu0 0.0
    %1367 = vmatprep.subr.mxu0 0.0
    %1368 = vmatpush1.xpose.msra.mxu0 0.0
    %1369 = vmatprep.subr.mxu0 0.0
    %1370 = vmatpush1.xpose.msra.mxu0 0.0
    %1371 = vmatprep.subr.mxu0 0.0
    %1372 = vmatpush1.xpose.msra.mxu0 0.0
    %1373 = vmatprep.subr.mxu0 0.0
    %1374 = vmatpush1.xpose.msra.mxu0 0.0
    %1375 = vmatprep.subr.mxu0 0.0
    %1376 = vmatpush1.xpose.msra.mxu0 0.0
    %1377 = vmatprep.subr.mxu0 0.0
    %1378 = vmatpush1.xpose.msra.mxu0 0.0
    %1379 = vmatprep.subr.mxu0 0.0
    %1380 = vmatpush1.xpose.msra.mxu0 0.0
    %1381 = vmatprep.subr.mxu0 0.0
    %1382 = vmatpush1.xpose.msra.mxu0 0.0
    %1383 = vmatprep.subr.mxu0 0.0
    %1384 = vmatpush1.xpose.msra.mxu0 0.0
    %1385 = vmatprep.subr.mxu0 0.0
    %1386 = vmatpush1.xpose.msra.mxu0 0.0
    %1387 = vmatprep.subr.mxu0 0.0
    %1388 = vmatpush1.xpose.msra.mxu0 0.0
    %1389 = vmatprep.subr.mxu0 0.0
    %1390 = vmatpush1.xpose.msra.mxu0 0.0
    %1391 = vmatprep.subr.mxu0 0.0
    %1392 = vmatpush1.xpose.msra.mxu0 %v1361
    %1393 = vmatprep.subr.mxu0 0.0
    %1394 = vmatpush1.xpose.msra.mxu0 %v1359
    %1395 = vmatprep.subr.mxu0 0.0
    %1396 = vmatpush2.xpose.msra.mxu0 0.0
    %1397 = vmatprep.subr.mxu0 0.0
    %1398 = vmatpush2.xpose.msra.mxu0 0.0
    %1399 = vmatprep.subr.mxu0 0.0
    %1400 = vmatpush2.xpose.msra.mxu0 0.0
    %1401 = vmatprep.subr.mxu0 0.0
    %1402 = vmatpush2.xpose.msra.mxu0 0.0
    %1403 = vmatprep.subr.mxu0 0.0
    %1404 = vmatpush2.xpose.msra.mxu0 0.0
    %1405 = vmatprep.subr.mxu0 0.0
    %1406 = vmatpush2.xpose.msra.mxu0 0.0
    %1407 = vmatprep.subr.mxu0 0.0
    %1408 = vmatpush2.xpose.msra.mxu0 0.0
    %1409 = vmatprep.subr.mxu0 0.0
    %1410 = vmatpush2.xpose.msra.mxu0 0.0
    %1411 = vmatprep.subr.mxu0 0.0
    %1412 = vmatpush2.xpose.msra.mxu0 0.0
    %1413 = vmatprep.subr.mxu0 0.0
    %1414 = vmatpush2.xpose.msra.mxu0 0.0
    %1415 = vmatprep.subr.mxu0 0.0
    %1416 = vmatpush2.xpose.msra.mxu0 0.0
    %1417 = vmatprep.subr.mxu0 0.0
    %1418 = vmatpush2.xpose.msra.mxu0 0.0
    %1419 = vmatprep.subr.mxu0 0.0
    %1420 = vmatpush2.xpose.msra.mxu0 0.0
    %1421 = vmatprep.subr.mxu0 0.0
    %1422 = vmatpush2.xpose.msra.mxu0 0.0
    %1423 = vmatprep.subr.mxu0 0.0
    %1424 = vmatpush2.xpose.msra.mxu0 0.0
    %1425 = vmatprep.subr.mxu0 0.0
    %1426 = vmatpush2.xpose.msra.mxu0 0.0
    %1427 = vmatprep.mubr.f32.mxu0 0.0
    %1428 = vmatmul.mubr.f32.gmra.mxu0 %v1355
    %v1429 = vpop.f32.mrf.mxu0
    %v1430 = vadd.f32 0.0, %v1429
    %v1431 = vpop.f32.mrf.mxu0
    %1432 = vmatprep.mubr.f32.mxu0 0.0
    %1433 = vmatmul.mubr.f32.gmra.mxu0 %v1357
    %v1434 = vpop.f32.mrf.mxu0
    %v1435 = vadd.f32 0.0, %v1434
    %v1436 = vpop.f32.mrf.mxu0
    %1437 = vdwg.mxu0
    %v1438 = vsel %vm213, %v1430, -inf
    %1439 = vmax.xlane.f32.xlu0 %v1438
    %v1440 = vpop.xlane.xlu0 %1439
    %v1441 = vsel %vm213, %v1435, -inf
    %1442 = vmax.xlane.f32.xlu0 %v1441
    %v1443 = vpop.xlane.xlu0 %1442
    %v1444 = vsub.f32 %v1430, %v1440
    %v1445 = vsub.f32 %v1435, %v1443
    %v1446 = vmul.f32 %v1444, 1.442695
    %v1447 = vpow.pop %v1446
    %v1448 = vmul.f32 %v1445, 1.442695
    %v1449 = vpow.pop %v1448
    %v1450 = vsel %vm213, %v1447, 0.0
    %1451 = vadd.xlane.f32.xlu0 %v1450
    %v1452 = vpop.xlane.xlu0 %1451
    %v1453 = vsel %vm213, %v1449, 0.0
    %1454 = vadd.xlane.f32.xlu0 %v1453
    %v1455 = vpop.xlane.xlu0 %1454
    %v1456 = vrcp.pop %v1452
    %v1457 = vmul.f32 %v1447, %v1456
    %v1458 = vrcp.pop %v1455
    %v1459 = vmul.f32 %v1449, %v1458
    %1460 = vset.pattern.permute.xlu0 2
    %1461 = vperm.xlu0 %1460, %v848
    %v1462 = vpop.permute.xlu0 %1461
    %v1464 = vmul.f32 %v1462, %v1457
    %v1465 = vmul.f32 %v1462, %v1459
    %1466 = vset.pattern.permute.xlu0 2
    %1467 = vperm.xlu0 %1466, %v859
    %v1468 = vpop.permute.xlu0 %1467
    %v1470 = vmul.f32 %v1468, %v434
    %v1471 = vmul.f32 %v1468, %v436
    %v1472 = vadd.f32 %v1464, %v1470
    %v1473 = vadd.f32 %v1465, %v1471
    %v1474 = vsel %vm213, %v1472, 0.0
    %1475 = vadd.xlane.f32.xlu0 %v1474
    %v1476 = vpop.xlane.xlu0 %1475
    %v1477 = vsel %vm213, %v1473, 0.0
    %1478 = vadd.xlane.f32.xlu0 %v1477
    %v1479 = vpop.xlane.xlu0 %1478
    %v1480 = vrcp.pop %v1476
    %v1481 = vmul.f32 %v1472, %v1480
    %v1482 = vrcp.pop %v1479
    %v1483 = vmul.f32 %v1473, %v1482
    %1484 = vrot.lane.b32.xlu0 %v709, 112
    %v1485 = vpop.permute.xlu0 %1484
    %1486 = vrot.lane.b32.xlu0 %v714, 112
    %v1487 = vpop.permute.xlu0 %1486
    %v1491 = vsel %vm213, %v1481, 0
    %v1494 = vsel %vm213, %v1483, 0
    %1496 = vmatprep.subr.mxu0 0.0
    %1497 = vmatpush1.msra.mxu0 0.0
    %1498 = vmatprep.subr.mxu0 0.0
    %1499 = vmatpush1.msra.mxu0 0.0
    %1500 = vmatprep.subr.mxu0 0.0
    %1501 = vmatpush1.msra.mxu0 0.0
    %1502 = vmatprep.subr.mxu0 0.0
    %1503 = vmatpush1.msra.mxu0 0.0
    %1504 = vmatprep.subr.mxu0 0.0
    %1505 = vmatpush1.msra.mxu0 0.0
    %1506 = vmatprep.subr.mxu0 0.0
    %1507 = vmatpush1.msra.mxu0 0.0
    %1508 = vmatprep.subr.mxu0 0.0
    %1509 = vmatpush1.msra.mxu0 0.0
    %1510 = vmatprep.subr.mxu0 0.0
    %1511 = vmatpush1.msra.mxu0 0.0
    %1512 = vmatprep.subr.mxu0 0.0
    %1513 = vmatpush1.msra.mxu0 0.0
    %1514 = vmatprep.subr.mxu0 0.0
    %1515 = vmatpush1.msra.mxu0 0.0
    %1516 = vmatprep.subr.mxu0 0.0
    %1517 = vmatpush1.msra.mxu0 0.0
    %1518 = vmatprep.subr.mxu0 0.0
    %1519 = vmatpush1.msra.mxu0 0.0
    %1520 = vmatprep.subr.mxu0 0.0
    %1521 = vmatpush1.msra.mxu0 0.0
    %1522 = vmatprep.subr.mxu0 0.0
    %1523 = vmatpush1.msra.mxu0 0.0
    %1524 = vmatprep.subr.mxu0 0.0
    %1525 = vmatpush1.msra.mxu0 %v1487
    %1526 = vmatprep.subr.mxu0 0.0
    %1527 = vmatpush1.msra.mxu0 %v1485
    %1528 = vmatprep.subr.mxu0 0.0
    %1529 = vmatpush2.msra.mxu0 0.0
    %1530 = vmatprep.subr.mxu0 0.0
    %1531 = vmatpush2.msra.mxu0 0.0
    %1532 = vmatprep.subr.mxu0 0.0
    %1533 = vmatpush2.msra.mxu0 0.0
    %1534 = vmatprep.subr.mxu0 0.0
    %1535 = vmatpush2.msra.mxu0 0.0
    %1536 = vmatprep.subr.mxu0 0.0
    %1537 = vmatpush2.msra.mxu0 0.0
    %1538 = vmatprep.subr.mxu0 0.0
    %1539 = vmatpush2.msra.mxu0 0.0
    %1540 = vmatprep.subr.mxu0 0.0
    %1541 = vmatpush2.msra.mxu0 0.0
    %1542 = vmatprep.subr.mxu0 0.0
    %1543 = vmatpush2.msra.mxu0 0.0
    %1544 = vmatprep.subr.mxu0 0.0
    %1545 = vmatpush2.msra.mxu0 0.0
    %1546 = vmatprep.subr.mxu0 0.0
    %1547 = vmatpush2.msra.mxu0 0.0
    %1548 = vmatprep.subr.mxu0 0.0
    %1549 = vmatpush2.msra.mxu0 0.0
    %1550 = vmatprep.subr.mxu0 0.0
    %1551 = vmatpush2.msra.mxu0 0.0
    %1552 = vmatprep.subr.mxu0 0.0
    %1553 = vmatpush2.msra.mxu0 0.0
    %1554 = vmatprep.subr.mxu0 0.0
    %1555 = vmatpush2.msra.mxu0 0.0
    %1556 = vmatprep.subr.mxu0 0.0
    %1557 = vmatpush2.msra.mxu0 0.0
    %1558 = vmatprep.subr.mxu0 0.0
    %1559 = vmatpush2.msra.mxu0 0.0
    %1560 = vmatprep.mubr.f32.mxu0 0.0
    %1561 = vmatmul.mubr.f32.gmra.mxu0 %v1491
    %v1562 = vpop.f32.mrf.mxu0
    %v1563 = vadd.f32 0.0, %v1562
    %v1564 = vpop.f32.mrf.mxu0
    %1565 = vmatprep.mubr.f32.mxu0 0.0
    %1566 = vmatmul.mubr.f32.gmra.mxu0 %v1494
    %v1567 = vpop.f32.mrf.mxu0
    %v1568 = vadd.f32 0.0, %v1567
    %v1569 = vpop.f32.mrf.mxu0
    %1570 = vdwg.mxu0
    %v1572 = vsel %vm735, %v1563, 0
    %v1575 = vsel %vm735, %v1568, 0
    %1577 = vmatprep.subr.mxu0 0.0
    %1578 = vmatpush1.msra.mxu0 0.0
    %1579 = vmatprep.subr.mxu0 0.0
    %1580 = vmatpush1.msra.mxu0 0.0
    %1581 = vmatprep.subr.mxu0 0.0
    %1582 = vmatpush1.msra.mxu0 0.0
    %1583 = vmatprep.subr.mxu0 0.0
    %1584 = vmatpush1.msra.mxu0 0.0
    %1585 = vmatprep.subr.mxu0 0.0
    %1586 = vmatpush1.msra.mxu0 0.0
    %1587 = vmatprep.subr.mxu0 0.0
    %1588 = vmatpush1.msra.mxu0 0.0
    %1589 = vmatprep.subr.mxu0 0.0
    %1590 = vmatpush1.msra.mxu0 0.0
    %1591 = vmatprep.subr.mxu0 0.0
    %1592 = vmatpush1.msra.mxu0 0.0
    %1593 = vmatprep.subr.mxu0 0.0
    %1594 = vmatpush1.msra.mxu0 0.0
    %1595 = vmatprep.subr.mxu0 0.0
    %1596 = vmatpush1.msra.mxu0 0.0
    %1597 = vmatprep.subr.mxu0 0.0
    %1598 = vmatpush1.msra.mxu0 0.0
    %1599 = vmatprep.subr.mxu0 0.0
    %1600 = vmatpush1.msra.mxu0 0.0
    %1601 = vmatprep.subr.mxu0 0.0
    %1602 = vmatpush1.msra.mxu0 0.0
    %1603 = vmatprep.subr.mxu0 0.0
    %1604 = vmatpush1.msra.mxu0 0.0
    %1605 = vmatprep.subr.mxu0 0.0
    %1606 = vmatpush1.msra.mxu0 0.0
    %1607 = vmatprep.subr.mxu0 0.0
    %1608 = vmatpush1.msra.mxu0 %v338
    %1609 = vmatprep.subr.mxu0 0.0
    %1610 = vmatpush2.msra.mxu0 0.0
    %1611 = vmatprep.subr.mxu0 0.0
    %1612 = vmatpush2.msra.mxu0 0.0
    %1613 = vmatprep.subr.mxu0 0.0
    %1614 = vmatpush2.msra.mxu0 0.0
    %1615 = vmatprep.subr.mxu0 0.0
    %1616 = vmatpush2.msra.mxu0 0.0
    %1617 = vmatprep.subr.mxu0 0.0
    %1618 = vmatpush2.msra.mxu0 0.0
    %1619 = vmatprep.subr.mxu0 0.0
    %1620 = vmatpush2.msra.mxu0 0.0
    %1621 = vmatprep.subr.mxu0 0.0
    %1622 = vmatpush2.msra.mxu0 0.0
    %1623 = vmatprep.subr.mxu0 0.0
    %1624 = vmatpush2.msra.mxu0 0.0
    %1625 = vmatprep.subr.mxu0 0.0
    %1626 = vmatpush2.msra.mxu0 0.0
    %1627 = vmatprep.subr.mxu0 0.0
    %1628 = vmatpush2.msra.mxu0 0.0
    %1629 = vmatprep.subr.mxu0 0.0
    %1630 = vmatpush2.msra.mxu0 0.0
    %1631 = vmatprep.subr.mxu0 0.0
    %1632 = vmatpush2.msra.mxu0 0.0
    %1633 = vmatprep.subr.mxu0 0.0
    %1634 = vmatpush2.msra.mxu0 0.0
    %1635 = vmatprep.subr.mxu0 0.0
    %1636 = vmatpush2.msra.mxu0 0.0
    %1637 = vmatprep.subr.mxu0 0.0
    %1638 = vmatpush2.msra.mxu0 0.0
    %1639 = vmatprep.subr.mxu0 0.0
    %1640 = vmatpush2.msra.mxu0 0.0
    %1641 = vmatprep.mubr.f32.mxu0 0.0
    %1642 = vmatmul.mubr.f32.gmra.mxu0 %v1572
    %v1643 = vpop.f32.mrf.mxu0
    %v1644 = vadd.f32 0.0, %v1643
    %v1645 = vpop.f32.mrf.mxu0
    %1646 = vmatprep.mubr.f32.mxu0 0.0
    %1647 = vmatmul.mubr.f32.gmra.mxu0 %v1575
    %v1648 = vpop.f32.mrf.mxu0
    %v1649 = vadd.f32 0.0, %v1648
    %v1650 = vpop.f32.mrf.mxu0
    %1651 = vdwg.mxu0
    %v1652 = vadd.f32 %v1339, %v1644
    %v1653 = vadd.f32 %v1344, %v1649
    %1654 = vrot.lane.b32.xlu0 %v727, 104
    %v1655 = vpop.permute.xlu0 %1654
    %1656 = vrot.lane.b32.xlu0 %v728, 104
    %v1657 = vpop.permute.xlu0 %1656
    %1658 = vrot.lane.b32.xlu0 %v618, 72
    %v1659 = vpop.permute.xlu0 %1658
    %1660 = vrot.lane.b32.xlu0 %v623, 72
    %v1661 = vpop.permute.xlu0 %1660
    %v1662 = vsel %vm735, %v1655, 0
    %v1664 = vsel %vm735, %v1657, 0
    %v1666 = vsel %vm735, %v1659, 0
    %v1668 = vsel %vm735, %v1661, 0
    %1670 = vmatprep.subr.mxu0 0.0
    %1671 = vmatpush1.xpose.msra.mxu0 0.0
    %1672 = vmatprep.subr.mxu0 0.0
    %1673 = vmatpush1.xpose.msra.mxu0 0.0
    %1674 = vmatprep.subr.mxu0 0.0
    %1675 = vmatpush1.xpose.msra.mxu0 0.0
    %1676 = vmatprep.subr.mxu0 0.0
    %1677 = vmatpush1.xpose.msra.mxu0 0.0
    %1678 = vmatprep.subr.mxu0 0.0
    %1679 = vmatpush1.xpose.msra.mxu0 0.0
    %1680 = vmatprep.subr.mxu0 0.0
    %1681 = vmatpush1.xpose.msra.mxu0 0.0
    %1682 = vmatprep.subr.mxu0 0.0
    %1683 = vmatpush1.xpose.msra.mxu0 0.0
    %1684 = vmatprep.subr.mxu0 0.0
    %1685 = vmatpush1.xpose.msra.mxu0 0.0
    %1686 = vmatprep.subr.mxu0 0.0
    %1687 = vmatpush1.xpose.msra.mxu0 0.0
    %1688 = vmatprep.subr.mxu0 0.0
    %1689 = vmatpush1.xpose.msra.mxu0 0.0
    %1690 = vmatprep.subr.mxu0 0.0
    %1691 = vmatpush1.xpose.msra.mxu0 0.0
    %1692 = vmatprep.subr.mxu0 0.0
    %1693 = vmatpush1.xpose.msra.mxu0 0.0
    %1694 = vmatprep.subr.mxu0 0.0
    %1695 = vmatpush1.xpose.msra.mxu0 0.0
    %1696 = vmatprep.subr.mxu0 0.0
    %1697 = vmatpush1.xpose.msra.mxu0 0.0
    %1698 = vmatprep.subr.mxu0 0.0
    %1699 = vmatpush1.xpose.msra.mxu0 %v1668
    %1700 = vmatprep.subr.mxu0 0.0
    %1701 = vmatpush1.xpose.msra.mxu0 %v1666
    %1702 = vmatprep.subr.mxu0 0.0
    %1703 = vmatpush2.xpose.msra.mxu0 0.0
    %1704 = vmatprep.subr.mxu0 0.0
    %1705 = vmatpush2.xpose.msra.mxu0 0.0
    %1706 = vmatprep.subr.mxu0 0.0
    %1707 = vmatpush2.xpose.msra.mxu0 0.0
    %1708 = vmatprep.subr.mxu0 0.0
    %1709 = vmatpush2.xpose.msra.mxu0 0.0
    %1710 = vmatprep.subr.mxu0 0.0
    %1711 = vmatpush2.xpose.msra.mxu0 0.0
    %1712 = vmatprep.subr.mxu0 0.0
    %1713 = vmatpush2.xpose.msra.mxu0 0.0
    %1714 = vmatprep.subr.mxu0 0.0
    %1715 = vmatpush2.xpose.msra.mxu0 0.0
    %1716 = vmatprep.subr.mxu0 0.0
    %1717 = vmatpush2.xpose.msra.mxu0 0.0
    %1718 = vmatprep.subr.mxu0 0.0
    %1719 = vmatpush2.xpose.msra.mxu0 0.0
    %1720 = vmatprep.subr.mxu0 0.0
    %1721 = vmatpush2.xpose.msra.mxu0 0.0
    %1722 = vmatprep.subr.mxu0 0.0
    %1723 = vmatpush2.xpose.msra.mxu0 0.0
    %1724 = vmatprep.subr.mxu0 0.0
    %1725 = vmatpush2.xpose.msra.mxu0 0.0
    %1726 = vmatprep.subr.mxu0 0.0
    %1727 = vmatpush2.xpose.msra.mxu0 0.0
    %1728 = vmatprep.subr.mxu0 0.0
    %1729 = vmatpush2.xpose.msra.mxu0 0.0
    %1730 = vmatprep.subr.mxu0 0.0
    %1731 = vmatpush2.xpose.msra.mxu0 0.0
    %1732 = vmatprep.subr.mxu0 0.0
    %1733 = vmatpush2.xpose.msra.mxu0 0.0
    %1734 = vmatprep.mubr.f32.mxu0 0.0
    %1735 = vmatmul.mubr.f32.gmra.mxu0 %v1662
    %v1736 = vpop.f32.mrf.mxu0
    %v1737 = vadd.f32 0.0, %v1736
    %v1738 = vpop.f32.mrf.mxu0
    %1739 = vmatprep.mubr.f32.mxu0 0.0
    %1740 = vmatmul.mubr.f32.gmra.mxu0 %v1664
    %v1741 = vpop.f32.mrf.mxu0
    %v1742 = vadd.f32 0.0, %v1741
    %v1743 = vpop.f32.mrf.mxu0
    %1744 = vdwg.mxu0
    %v1745 = vsel %vm213, %v1737, -inf
    %1746 = vmax.xlane.f32.xlu0 %v1745
    %v1747 = vpop.xlane.xlu0 %1746
    %v1748 = vsel %vm213, %v1742, -inf
    %1749 = vmax.xlane.f32.xlu0 %v1748
    %v1750 = vpop.xlane.xlu0 %1749
    %v1751 = vsub.f32 %v1737, %v1747
    %v1752 = vsub.f32 %v1742, %v1750
    %v1753 = vmul.f32 %v1751, 1.442695
    %v1754 = vpow.pop %v1753
    %v1755 = vmul.f32 %v1752, 1.442695
    %v1756 = vpow.pop %v1755
    %v1757 = vsel %vm213, %v1754, 0.0
    %1758 = vadd.xlane.f32.xlu0 %v1757
    %v1759 = vpop.xlane.xlu0 %1758
    %v1760 = vsel %vm213, %v1756, 0.0
    %1761 = vadd.xlane.f32.xlu0 %v1760
    %v1762 = vpop.xlane.xlu0 %1761
    %v1763 = vrcp.pop %v1759
    %v1764 = vmul.f32 %v1754, %v1763
    %v1765 = vrcp.pop %v1762
    %v1766 = vmul.f32 %v1756, %v1765
    %1767 = vset.pattern.permute.xlu0 3
    %1768 = vperm.xlu0 %1767, %v848
    %v1769 = vpop.permute.xlu0 %1768
    %v1771 = vmul.f32 %v1769, %v1764
    %v1772 = vmul.f32 %v1769, %v1766
    %1773 = vset.pattern.permute.xlu0 3
    %1774 = vperm.xlu0 %1773, %v859
    %v1775 = vpop.permute.xlu0 %1774
    %v1777 = vmul.f32 %v1775, %v456
    %v1778 = vmul.f32 %v1775, %v458
    %v1779 = vadd.f32 %v1771, %v1777
    %v1780 = vadd.f32 %v1772, %v1778
    %v1781 = vsel %vm213, %v1779, 0.0
    %1782 = vadd.xlane.f32.xlu0 %v1781
    %v1783 = vpop.xlane.xlu0 %1782
    %v1784 = vsel %vm213, %v1780, 0.0
    %1785 = vadd.xlane.f32.xlu0 %v1784
    %v1786 = vpop.xlane.xlu0 %1785
    %v1787 = vrcp.pop %v1783
    %v1788 = vmul.f32 %v1779, %v1787
    %v1789 = vrcp.pop %v1786
    %v1790 = vmul.f32 %v1780, %v1789
    %1791 = vrot.lane.b32.xlu0 %v709, 104
    %v1792 = vpop.permute.xlu0 %1791
    %1793 = vrot.lane.b32.xlu0 %v714, 104
    %v1794 = vpop.permute.xlu0 %1793
    %v1798 = vsel %vm213, %v1788, 0
    %v1801 = vsel %vm213, %v1790, 0
    %1803 = vmatprep.subr.mxu0 0.0
    %1804 = vmatpush1.msra.mxu0 0.0
    %1805 = vmatprep.subr.mxu0 0.0
    %1806 = vmatpush1.msra.mxu0 0.0
    %1807 = vmatprep.subr.mxu0 0.0
    %1808 = vmatpush1.msra.mxu0 0.0
    %1809 = vmatprep.subr.mxu0 0.0
    %1810 = vmatpush1.msra.mxu0 0.0
    %1811 = vmatprep.subr.mxu0 0.0
    %1812 = vmatpush1.msra.mxu0 0.0
    %1813 = vmatprep.subr.mxu0 0.0
    %1814 = vmatpush1.msra.mxu0 0.0
    %1815 = vmatprep.subr.mxu0 0.0
    %1816 = vmatpush1.msra.mxu0 0.0
    %1817 = vmatprep.subr.mxu0 0.0
    %1818 = vmatpush1.msra.mxu0 0.0
    %1819 = vmatprep.subr.mxu0 0.0
    %1820 = vmatpush1.msra.mxu0 0.0
    %1821 = vmatprep.subr.mxu0 0.0
    %1822 = vmatpush1.msra.mxu0 0.0
    %1823 = vmatprep.subr.mxu0 0.0
    %1824 = vmatpush1.msra.mxu0 0.0
    %1825 = vmatprep.subr.mxu0 0.0
    %1826 = vmatpush1.msra.mxu0 0.0
    %1827 = vmatprep.subr.mxu0 0.0
    %1828 = vmatpush1.msra.mxu0 0.0
    %1829 = vmatprep.subr.mxu0 0.0
    %1830 = vmatpush1.msra.mxu0 0.0
    %1831 = vmatprep.subr.mxu0 0.0
    %1832 = vmatpush1.msra.mxu0 %v1794
    %1833 = vmatprep.subr.mxu0 0.0
    %1834 = vmatpush1.msra.mxu0 %v1792
    %1835 = vmatprep.subr.mxu0 0.0
    %1836 = vmatpush2.msra.mxu0 0.0
    %1837 = vmatprep.subr.mxu0 0.0
    %1838 = vmatpush2.msra.mxu0 0.0
    %1839 = vmatprep.subr.mxu0 0.0
    %1840 = vmatpush2.msra.mxu0 0.0
    %1841 = vmatprep.subr.mxu0 0.0
    %1842 = vmatpush2.msra.mxu0 0.0
    %1843 = vmatprep.subr.mxu0 0.0
    %1844 = vmatpush2.msra.mxu0 0.0
    %1845 = vmatprep.subr.mxu0 0.0
    %1846 = vmatpush2.msra.mxu0 0.0
    %1847 = vmatprep.subr.mxu0 0.0
    %1848 = vmatpush2.msra.mxu0 0.0
    %1849 = vmatprep.subr.mxu0 0.0
    %1850 = vmatpush2.msra.mxu0 0.0
    %1851 = vmatprep.subr.mxu0 0.0
    %1852 = vmatpush2.msra.mxu0 0.0
    %1853 = vmatprep.subr.mxu0 0.0
    %1854 = vmatpush2.msra.mxu0 0.0
    %1855 = vmatprep.subr.mxu0 0.0
    %1856 = vmatpush2.msra.mxu0 0.0
    %1857 = vmatprep.subr.mxu0 0.0
    %1858 = vmatpush2.msra.mxu0 0.0
    %1859 = vmatprep.subr.mxu0 0.0
    %1860 = vmatpush2.msra.mxu0 0.0
    %1861 = vmatprep.subr.mxu0 0.0
    %1862 = vmatpush2.msra.mxu0 0.0
    %1863 = vmatprep.subr.mxu0 0.0
    %1864 = vmatpush2.msra.mxu0 0.0
    %1865 = vmatprep.subr.mxu0 0.0
    %1866 = vmatpush2.msra.mxu0 0.0
    %1867 = vmatprep.mubr.f32.mxu0 0.0
    %1868 = vmatmul.mubr.f32.gmra.mxu0 %v1798
    %v1869 = vpop.f32.mrf.mxu0
    %v1870 = vadd.f32 0.0, %v1869
    %v1871 = vpop.f32.mrf.mxu0
    %1872 = vmatprep.mubr.f32.mxu0 0.0
    %1873 = vmatmul.mubr.f32.gmra.mxu0 %v1801
    %v1874 = vpop.f32.mrf.mxu0
    %v1875 = vadd.f32 0.0, %v1874
    %v1876 = vpop.f32.mrf.mxu0
    %1877 = vdwg.mxu0
    %v1879 = vsel %vm735, %v1870, 0
    %v1882 = vsel %vm735, %v1875, 0
    %1884 = vmatprep.subr.mxu0 0.0
    %1885 = vmatpush1.msra.mxu0 0.0
    %1886 = vmatprep.subr.mxu0 0.0
    %1887 = vmatpush1.msra.mxu0 0.0
    %1888 = vmatprep.subr.mxu0 0.0
    %1889 = vmatpush1.msra.mxu0 0.0
    %1890 = vmatprep.subr.mxu0 0.0
    %1891 = vmatpush1.msra.mxu0 0.0
    %1892 = vmatprep.subr.mxu0 0.0
    %1893 = vmatpush1.msra.mxu0 0.0
    %1894 = vmatprep.subr.mxu0 0.0
    %1895 = vmatpush1.msra.mxu0 0.0
    %1896 = vmatprep.subr.mxu0 0.0
    %1897 = vmatpush1.msra.mxu0 0.0
    %1898 = vmatprep.subr.mxu0 0.0
    %1899 = vmatpush1.msra.mxu0 0.0
    %1900 = vmatprep.subr.mxu0 0.0
    %1901 = vmatpush1.msra.mxu0 0.0
    %1902 = vmatprep.subr.mxu0 0.0
    %1903 = vmatpush1.msra.mxu0 0.0
    %1904 = vmatprep.subr.mxu0 0.0
    %1905 = vmatpush1.msra.mxu0 0.0
    %1906 = vmatprep.subr.mxu0 0.0
    %1907 = vmatpush1.msra.mxu0 0.0
    %1908 = vmatprep.subr.mxu0 0.0
    %1909 = vmatpush1.msra.mxu0 0.0
    %1910 = vmatprep.subr.mxu0 0.0
    %1911 = vmatpush1.msra.mxu0 0.0
    %1912 = vmatprep.subr.mxu0 0.0
    %1913 = vmatpush1.msra.mxu0 0.0
    %1914 = vmatprep.subr.mxu0 0.0
    %1915 = vmatpush1.msra.mxu0 %v339
    %1916 = vmatprep.subr.mxu0 0.0
    %1917 = vmatpush2.msra.mxu0 0.0
    %1918 = vmatprep.subr.mxu0 0.0
    %1919 = vmatpush2.msra.mxu0 0.0
    %1920 = vmatprep.subr.mxu0 0.0
    %1921 = vmatpush2.msra.mxu0 0.0
    %1922 = vmatprep.subr.mxu0 0.0
    %1923 = vmatpush2.msra.mxu0 0.0
    %1924 = vmatprep.subr.mxu0 0.0
    %1925 = vmatpush2.msra.mxu0 0.0
    %1926 = vmatprep.subr.mxu0 0.0
    %1927 = vmatpush2.msra.mxu0 0.0
    %1928 = vmatprep.subr.mxu0 0.0
    %1929 = vmatpush2.msra.mxu0 0.0
    %1930 = vmatprep.subr.mxu0 0.0
    %1931 = vmatpush2.msra.mxu0 0.0
    %1932 = vmatprep.subr.mxu0 0.0
    %1933 = vmatpush2.msra.mxu0 0.0
    %1934 = vmatprep.subr.mxu0 0.0
    %1935 = vmatpush2.msra.mxu0 0.0
    %1936 = vmatprep.subr.mxu0 0.0
    %1937 = vmatpush2.msra.mxu0 0.0
    %1938 = vmatprep.subr.mxu0 0.0
    %1939 = vmatpush2.msra.mxu0 0.0
    %1940 = vmatprep.subr.mxu0 0.0
    %1941 = vmatpush2.msra.mxu0 0.0
    %1942 = vmatprep.subr.mxu0 0.0
    %1943 = vmatpush2.msra.mxu0 0.0
    %1944 = vmatprep.subr.mxu0 0.0
    %1945 = vmatpush2.msra.mxu0 0.0
    %1946 = vmatprep.subr.mxu0 0.0
    %1947 = vmatpush2.msra.mxu0 0.0
    %1948 = vmatprep.mubr.f32.mxu0 0.0
    %1949 = vmatmul.mubr.f32.gmra.mxu0 %v1879
    %v1950 = vpop.f32.mrf.mxu0
    %v1951 = vadd.f32 0.0, %v1950
    %v1952 = vpop.f32.mrf.mxu0
    %1953 = vmatprep.mubr.f32.mxu0 0.0
    %1954 = vmatmul.mubr.f32.gmra.mxu0 %v1882
    %v1955 = vpop.f32.mrf.mxu0
    %v1956 = vadd.f32 0.0, %v1955
    %v1957 = vpop.f32.mrf.mxu0
    %1958 = vdwg.mxu0
    %v1959 = vadd.f32 %v1652, %v1951
    %v1960 = vadd.f32 %v1653, %v1956
    %v1961 = vmul.f32 %v628, 0.35355338
    %v1962 = vmul.f32 %v633, 0.35355338
    %1965 = vrot.lane.b32.xlu0 %v628, 96
    %v1966 = vpop.permute.xlu0 %1965
    %1967 = vrot.lane.b32.xlu0 %v633, 96
    %v1968 = vpop.permute.xlu0 %1967
    %v1970 = vsel %vm735, %v1961, 0
    %v1973 = vsel %vm735, %v1962, 0
    %v1975 = vsel %vm735, %v1966, 0
    %v1977 = vsel %vm735, %v1968, 0
    %1979 = vmatprep.subr.mxu0 0.0
    %1980 = vmatpush1.xpose.msra.mxu0 0.0
    %1981 = vmatprep.subr.mxu0 0.0
    %1982 = vmatpush1.xpose.msra.mxu0 0.0
    %1983 = vmatprep.subr.mxu0 0.0
    %1984 = vmatpush1.xpose.msra.mxu0 0.0
    %1985 = vmatprep.subr.mxu0 0.0
    %1986 = vmatpush1.xpose.msra.mxu0 0.0
    %1987 = vmatprep.subr.mxu0 0.0
    %1988 = vmatpush1.xpose.msra.mxu0 0.0
    %1989 = vmatprep.subr.mxu0 0.0
    %1990 = vmatpush1.xpose.msra.mxu0 0.0
    %1991 = vmatprep.subr.mxu0 0.0
    %1992 = vmatpush1.xpose.msra.mxu0 0.0
    %1993 = vmatprep.subr.mxu0 0.0
    %1994 = vmatpush1.xpose.msra.mxu0 0.0
    %1995 = vmatprep.subr.mxu0 0.0
    %1996 = vmatpush1.xpose.msra.mxu0 0.0
    %1997 = vmatprep.subr.mxu0 0.0
    %1998 = vmatpush1.xpose.msra.mxu0 0.0
    %1999 = vmatprep.subr.mxu0 0.0
    %2000 = vmatpush1.xpose.msra.mxu0 0.0
    %2001 = vmatprep.subr.mxu0 0.0
    %2002 = vmatpush1.xpose.msra.mxu0 0.0
    %2003 = vmatprep.subr.mxu0 0.0
    %2004 = vmatpush1.xpose.msra.mxu0 0.0
    %2005 = vmatprep.subr.mxu0 0.0
    %2006 = vmatpush1.xpose.msra.mxu0 0.0
    %2007 = vmatprep.subr.mxu0 0.0
    %2008 = vmatpush1.xpose.msra.mxu0 %v1977
    %2009 = vmatprep.subr.mxu0 0.0
    %2010 = vmatpush1.xpose.msra.mxu0 %v1975
    %2011 = vmatprep.subr.mxu0 0.0
    %2012 = vmatpush2.xpose.msra.mxu0 0.0
    %2013 = vmatprep.subr.mxu0 0.0
    %2014 = vmatpush2.xpose.msra.mxu0 0.0
    %2015 = vmatprep.subr.mxu0 0.0
    %2016 = vmatpush2.xpose.msra.mxu0 0.0
    %2017 = vmatprep.subr.mxu0 0.0
    %2018 = vmatpush2.xpose.msra.mxu0 0.0
    %2019 = vmatprep.subr.mxu0 0.0
    %2020 = vmatpush2.xpose.msra.mxu0 0.0
    %2021 = vmatprep.subr.mxu0 0.0
    %2022 = vmatpush2.xpose.msra.mxu0 0.0
    %2023 = vmatprep.subr.mxu0 0.0
    %2024 = vmatpush2.xpose.msra.mxu0 0.0
    %2025 = vmatprep.subr.mxu0 0.0
    %2026 = vmatpush2.xpose.msra.mxu0 0.0
    %2027 = vmatprep.subr.mxu0 0.0
    %2028 = vmatpush2.xpose.msra.mxu0 0.0
    %2029 = vmatprep.subr.mxu0 0.0
    %2030 = vmatpush2.xpose.msra.mxu0 0.0
    %2031 = vmatprep.subr.mxu0 0.0
    %2032 = vmatpush2.xpose.msra.mxu0 0.0
    %2033 = vmatprep.subr.mxu0 0.0
    %2034 = vmatpush2.xpose.msra.mxu0 0.0
    %2035 = vmatprep.subr.mxu0 0.0
    %2036 = vmatpush2.xpose.msra.mxu0 0.0
    %2037 = vmatprep.subr.mxu0 0.0
    %2038 = vmatpush2.xpose.msra.mxu0 0.0
    %2039 = vmatprep.subr.mxu0 0.0
    %2040 = vmatpush2.xpose.msra.mxu0 0.0
    %2041 = vmatprep.subr.mxu0 0.0
    %2042 = vmatpush2.xpose.msra.mxu0 0.0
    %2043 = vmatprep.mubr.f32.mxu0 0.0
    %2044 = vmatmul.mubr.f32.gmra.mxu0 %v1970
    %v2045 = vpop.f32.mrf.mxu0
    %v2046 = vadd.f32 0.0, %v2045
    %v2047 = vpop.f32.mrf.mxu0
    %2048 = vmatprep.mubr.f32.mxu0 0.0
    %2049 = vmatmul.mubr.f32.gmra.mxu0 %v1973
    %v2050 = vpop.f32.mrf.mxu0
    %v2051 = vadd.f32 0.0, %v2050
    %v2052 = vpop.f32.mrf.mxu0
    %2053 = vdwg.mxu0
    %v2054 = vsel %vm213, %v2046, -inf
    %2055 = vmax.xlane.f32.xlu0 %v2054
    %v2056 = vpop.xlane.xlu0 %2055
    %v2057 = vsel %vm213, %v2051, -inf
    %2058 = vmax.xlane.f32.xlu0 %v2057
    %v2059 = vpop.xlane.xlu0 %2058
    %v2060 = vsub.f32 %v2046, %v2056
    %v2061 = vsub.f32 %v2051, %v2059
    %v2062 = vmul.f32 %v2060, 1.442695
    %v2063 = vpow.pop %v2062
    %v2064 = vmul.f32 %v2061, 1.442695
    %v2065 = vpow.pop %v2064
    %v2066 = vsel %vm213, %v2063, 0.0
    %2067 = vadd.xlane.f32.xlu0 %v2066
    %v2068 = vpop.xlane.xlu0 %2067
    %v2069 = vsel %vm213, %v2065, 0.0
    %2070 = vadd.xlane.f32.xlu0 %v2069
    %v2071 = vpop.xlane.xlu0 %2070
    %v2072 = vrcp.pop %v2068
    %v2073 = vmul.f32 %v2063, %v2072
    %v2074 = vrcp.pop %v2071
    %v2075 = vmul.f32 %v2065, %v2074
    %v2076 = vmul.f32 %v851, %v2073
    %v2077 = vmul.f32 %v851, %v2075
    %v2078 = vadd.f32 %v2076, %v864
    %v2079 = vadd.f32 %v2077, %v865
    %v2080 = vsel %vm213, %v2078, 0.0
    %2081 = vadd.xlane.f32.xlu0 %v2080
    %v2082 = vpop.xlane.xlu0 %2081
    %v2083 = vsel %vm213, %v2079, 0.0
    %2084 = vadd.xlane.f32.xlu0 %v2083
    %v2085 = vpop.xlane.xlu0 %2084
    %v2086 = vrcp.pop %v2082
    %v2087 = vmul.f32 %v2078, %v2086
    %v2088 = vrcp.pop %v2085
    %v2089 = vmul.f32 %v2079, %v2088
    %v2091 = vsel %vm213, %v2087, 0
    %v2094 = vsel %vm213, %v2089, 0
    %2096 = vmatprep.subr.mxu0 0.0
    %2097 = vmatpush1.msra.mxu0 0.0
    %2098 = vmatprep.subr.mxu0 0.0
    %2099 = vmatpush1.msra.mxu0 0.0
    %2100 = vmatprep.subr.mxu0 0.0
    %2101 = vmatpush1.msra.mxu0 0.0
    %2102 = vmatprep.subr.mxu0 0.0
    %2103 = vmatpush1.msra.mxu0 0.0
    %2104 = vmatprep.subr.mxu0 0.0
    %2105 = vmatpush1.msra.mxu0 0.0
    %2106 = vmatprep.subr.mxu0 0.0
    %2107 = vmatpush1.msra.mxu0 0.0
    %2108 = vmatprep.subr.mxu0 0.0
    %2109 = vmatpush1.msra.mxu0 0.0
    %2110 = vmatprep.subr.mxu0 0.0
    %2111 = vmatpush1.msra.mxu0 0.0
    %2112 = vmatprep.subr.mxu0 0.0
    %2113 = vmatpush1.msra.mxu0 0.0
    %2114 = vmatprep.subr.mxu0 0.0
    %2115 = vmatpush1.msra.mxu0 0.0
    %2116 = vmatprep.subr.mxu0 0.0
    %2117 = vmatpush1.msra.mxu0 0.0
    %2118 = vmatprep.subr.mxu0 0.0
    %2119 = vmatpush1.msra.mxu0 0.0
    %2120 = vmatprep.subr.mxu0 0.0
    %2121 = vmatpush1.msra.mxu0 0.0
    %2122 = vmatprep.subr.mxu0 0.0
    %2123 = vmatpush1.msra.mxu0 0.0
    %2124 = vmatprep.subr.mxu0 0.0
    %2125 = vmatpush1.msra.mxu0 %v724
    %2126 = vmatprep.subr.mxu0 0.0
    %2127 = vmatpush1.msra.mxu0 %v719
    %2128 = vmatprep.subr.mxu0 0.0
    %2129 = vmatpush2.msra.mxu0 0.0
    %2130 = vmatprep.subr.mxu0 0.0
    %2131 = vmatpush2.msra.mxu0 0.0
    %2132 = vmatprep.subr.mxu0 0.0
    %2133 = vmatpush2.msra.mxu0 0.0
    %2134 = vmatprep.subr.mxu0 0.0
    %2135 = vmatpush2.msra.mxu0 0.0
    %2136 = vmatprep.subr.mxu0 0.0
    %2137 = vmatpush2.msra.mxu0 0.0
    %2138 = vmatprep.subr.mxu0 0.0
    %2139 = vmatpush2.msra.mxu0 0.0
    %2140 = vmatprep.subr.mxu0 0.0
    %2141 = vmatpush2.msra.mxu0 0.0
    %2142 = vmatprep.subr.mxu0 0.0
    %2143 = vmatpush2.msra.mxu0 0.0
    %2144 = vmatprep.subr.mxu0 0.0
    %2145 = vmatpush2.msra.mxu0 0.0
    %2146 = vmatprep.subr.mxu0 0.0
    %2147 = vmatpush2.msra.mxu0 0.0
    %2148 = vmatprep.subr.mxu0 0.0
    %2149 = vmatpush2.msra.mxu0 0.0
    %2150 = vmatprep.subr.mxu0 0.0
    %2151 = vmatpush2.msra.mxu0 0.0
    %2152 = vmatprep.subr.mxu0 0.0
    %2153 = vmatpush2.msra.mxu0 0.0
    %2154 = vmatprep.subr.mxu0 0.0
    %2155 = vmatpush2.msra.mxu0 0.0
    %2156 = vmatprep.subr.mxu0 0.0
    %2157 = vmatpush2.msra.mxu0 0.0
    %2158 = vmatprep.subr.mxu0 0.0
    %2159 = vmatpush2.msra.mxu0 0.0
    %2160 = vmatprep.mubr.f32.mxu0 0.0
    %2161 = vmatmul.mubr.f32.gmra.mxu0 %v2091
    %v2162 = vpop.f32.mrf.mxu0
    %v2163 = vadd.f32 0.0, %v2162
    %v2164 = vpop.f32.mrf.mxu0
    %2165 = vmatprep.mubr.f32.mxu0 0.0
    %2166 = vmatmul.mubr.f32.gmra.mxu0 %v2094
    %v2167 = vpop.f32.mrf.mxu0
    %v2168 = vadd.f32 0.0, %v2167
    %v2169 = vpop.f32.mrf.mxu0
    %2170 = vdwg.mxu0
    %2171 = vrot.lane.b32.xlu0 %v1961, 120
    %v2172 = vpop.permute.xlu0 %2171
    %2173 = vrot.lane.b32.xlu0 %v1962, 120
    %v2174 = vpop.permute.xlu0 %2173
    %2175 = vrot.lane.b32.xlu0 %v628, 88
    %v2176 = vpop.permute.xlu0 %2175
    %2177 = vrot.lane.b32.xlu0 %v633, 88
    %v2178 = vpop.permute.xlu0 %2177
    %v2179 = vsel %vm735, %v2172, 0
    %v2181 = vsel %vm735, %v2174, 0
    %v2183 = vsel %vm735, %v2176, 0
    %v2185 = vsel %vm735, %v2178, 0
    %2187 = vmatprep.subr.mxu0 0.0
    %2188 = vmatpush1.xpose.msra.mxu0 0.0
    %2189 = vmatprep.subr.mxu0 0.0
    %2190 = vmatpush1.xpose.msra.mxu0 0.0
    %2191 = vmatprep.subr.mxu0 0.0
    %2192 = vmatpush1.xpose.msra.mxu0 0.0
    %2193 = vmatprep.subr.mxu0 0.0
    %2194 = vmatpush1.xpose.msra.mxu0 0.0
    %2195 = vmatprep.subr.mxu0 0.0
    %2196 = vmatpush1.xpose.msra.mxu0 0.0
    %2197 = vmatprep.subr.mxu0 0.0
    %2198 = vmatpush1.xpose.msra.mxu0 0.0
    %2199 = vmatprep.subr.mxu0 0.0
    %2200 = vmatpush1.xpose.msra.mxu0 0.0
    %2201 = vmatprep.subr.mxu0 0.0
    %2202 = vmatpush1.xpose.msra.mxu0 0.0
    %2203 = vmatprep.subr.mxu0 0.0
    %2204 = vmatpush1.xpose.msra.mxu0 0.0
    %2205 = vmatprep.subr.mxu0 0.0
    %2206 = vmatpush1.xpose.msra.mxu0 0.0
    %2207 = vmatprep.subr.mxu0 0.0
    %2208 = vmatpush1.xpose.msra.mxu0 0.0
    %2209 = vmatprep.subr.mxu0 0.0
    %2210 = vmatpush1.xpose.msra.mxu0 0.0
    %2211 = vmatprep.subr.mxu0 0.0
    %2212 = vmatpush1.xpose.msra.mxu0 0.0
    %2213 = vmatprep.subr.mxu0 0.0
    %2214 = vmatpush1.xpose.msra.mxu0 0.0
    %2215 = vmatprep.subr.mxu0 0.0
    %2216 = vmatpush1.xpose.msra.mxu0 %v2185
    %2217 = vmatprep.subr.mxu0 0.0
    %2218 = vmatpush1.xpose.msra.mxu0 %v2183
    %2219 = vmatprep.subr.mxu0 0.0
    %2220 = vmatpush2.xpose.msra.mxu0 0.0
    %2221 = vmatprep.subr.mxu0 0.0
    %2222 = vmatpush2.xpose.msra.mxu0 0.0
    %2223 = vmatprep.subr.mxu0 0.0
    %2224 = vmatpush2.xpose.msra.mxu0 0.0
    %2225 = vmatprep.subr.mxu0 0.0
    %2226 = vmatpush2.xpose.msra.mxu0 0.0
    %2227 = vmatprep.subr.mxu0 0.0
    %2228 = vmatpush2.xpose.msra.mxu0 0.0
    %2229 = vmatprep.subr.mxu0 0.0
    %2230 = vmatpush2.xpose.msra.mxu0 0.0
    %2231 = vmatprep.subr.mxu0 0.0
    %2232 = vmatpush2.xpose.msra.mxu0 0.0
    %2233 = vmatprep.subr.mxu0 0.0
    %2234 = vmatpush2.xpose.msra.mxu0 0.0
    %2235 = vmatprep.subr.mxu0 0.0
    %2236 = vmatpush2.xpose.msra.mxu0 0.0
    %2237 = vmatprep.subr.mxu0 0.0
    %2238 = vmatpush2.xpose.msra.mxu0 0.0
    %2239 = vmatprep.subr.mxu0 0.0
    %2240 = vmatpush2.xpose.msra.mxu0 0.0
    %2241 = vmatprep.subr.mxu0 0.0
    %2242 = vmatpush2.xpose.msra.mxu0 0.0
    %2243 = vmatprep.subr.mxu0 0.0
    %2244 = vmatpush2.xpose.msra.mxu0 0.0
    %2245 = vmatprep.subr.mxu0 0.0
    %2246 = vmatpush2.xpose.msra.mxu0 0.0
    %2247 = vmatprep.subr.mxu0 0.0
    %2248 = vmatpush2.xpose.msra.mxu0 0.0
    %2249 = vmatprep.subr.mxu0 0.0
    %2250 = vmatpush2.xpose.msra.mxu0 0.0
    %2251 = vmatprep.mubr.f32.mxu0 0.0
    %2252 = vmatmul.mubr.f32.gmra.mxu0 %v2179
    %v2253 = vpop.f32.mrf.mxu0
    %v2254 = vadd.f32 0.0, %v2253
    %v2255 = vpop.f32.mrf.mxu0
    %2256 = vmatprep.mubr.f32.mxu0 0.0
    %2257 = vmatmul.mubr.f32.gmra.mxu0 %v2181
    %v2258 = vpop.f32.mrf.mxu0
    %v2259 = vadd.f32 0.0, %v2258
    %v2260 = vpop.f32.mrf.mxu0
    %2261 = vdwg.mxu0
    %v2262 = vsel %vm213, %v2254, -inf
    %2263 = vmax.xlane.f32.xlu0 %v2262
    %v2264 = vpop.xlane.xlu0 %2263
    %v2265 = vsel %vm213, %v2259, -inf
    %2266 = vmax.xlane.f32.xlu0 %v2265
    %v2267 = vpop.xlane.xlu0 %2266
    %v2268 = vsub.f32 %v2254, %v2264
    %v2269 = vsub.f32 %v2259, %v2267
    %v2270 = vmul.f32 %v2268, 1.442695
    %v2271 = vpow.pop %v2270
    %v2272 = vmul.f32 %v2269, 1.442695
    %v2273 = vpow.pop %v2272
    %v2274 = vsel %vm213, %v2271, 0.0
    %2275 = vadd.xlane.f32.xlu0 %v2274
    %v2276 = vpop.xlane.xlu0 %2275
    %v2277 = vsel %vm213, %v2273, 0.0
    %2278 = vadd.xlane.f32.xlu0 %v2277
    %v2279 = vpop.xlane.xlu0 %2278
    %v2280 = vrcp.pop %v2276
    %v2281 = vmul.f32 %v2271, %v2280
    %v2282 = vrcp.pop %v2279
    %v2283 = vmul.f32 %v2273, %v2282
    %v2284 = vmul.f32 %v1074, %v2281
    %v2285 = vmul.f32 %v1074, %v2283
    %v2286 = vadd.f32 %v2284, %v1082
    %v2287 = vadd.f32 %v2285, %v1083
    %v2288 = vsel %vm213, %v2286, 0.0
    %2289 = vadd.xlane.f32.xlu0 %v2288
    %v2290 = vpop.xlane.xlu0 %2289
    %v2291 = vsel %vm213, %v2287, 0.0
    %2292 = vadd.xlane.f32.xlu0 %v2291
    %v2293 = vpop.xlane.xlu0 %2292
    %v2294 = vrcp.pop %v2290
    %v2295 = vmul.f32 %v2286, %v2294
    %v2296 = vrcp.pop %v2293
    %v2297 = vmul.f32 %v2287, %v2296
    %2300 = vrot.lane.b32.xlu0 %v719, 120
    %v2301 = vpop.permute.xlu0 %2300
    %2302 = vrot.lane.b32.xlu0 %v724, 120
    %v2303 = vpop.permute.xlu0 %2302
    %v2307 = vsel %vm213, %v2295, 0
    %v2310 = vsel %vm213, %v2297, 0
    %2312 = vmatprep.subr.mxu0 0.0
    %2313 = vmatpush1.msra.mxu0 0.0
    %2314 = vmatprep.subr.mxu0 0.0
    %2315 = vmatpush1.msra.mxu0 0.0
    %2316 = vmatprep.subr.mxu0 0.0
    %2317 = vmatpush1.msra.mxu0 0.0
    %2318 = vmatprep.subr.mxu0 0.0
    %2319 = vmatpush1.msra.mxu0 0.0
    %2320 = vmatprep.subr.mxu0 0.0
    %2321 = vmatpush1.msra.mxu0 0.0
    %2322 = vmatprep.subr.mxu0 0.0
    %2323 = vmatpush1.msra.mxu0 0.0
    %2324 = vmatprep.subr.mxu0 0.0
    %2325 = vmatpush1.msra.mxu0 0.0
    %2326 = vmatprep.subr.mxu0 0.0
    %2327 = vmatpush1.msra.mxu0 0.0
    %2328 = vmatprep.subr.mxu0 0.0
    %2329 = vmatpush1.msra.mxu0 0.0
    %2330 = vmatprep.subr.mxu0 0.0
    %2331 = vmatpush1.msra.mxu0 0.0
    %2332 = vmatprep.subr.mxu0 0.0
    %2333 = vmatpush1.msra.mxu0 0.0
    %2334 = vmatprep.subr.mxu0 0.0
    %2335 = vmatpush1.msra.mxu0 0.0
    %2336 = vmatprep.subr.mxu0 0.0
    %2337 = vmatpush1.msra.mxu0 0.0
    %2338 = vmatprep.subr.mxu0 0.0
    %2339 = vmatpush1.msra.mxu0 0.0
    %2340 = vmatprep.subr.mxu0 0.0
    %2341 = vmatpush1.msra.mxu0 %v2303
    %2342 = vmatprep.subr.mxu0 0.0
    %2343 = vmatpush1.msra.mxu0 %v2301
    %2344 = vmatprep.subr.mxu0 0.0
    %2345 = vmatpush2.msra.mxu0 0.0
    %2346 = vmatprep.subr.mxu0 0.0
    %2347 = vmatpush2.msra.mxu0 0.0
    %2348 = vmatprep.subr.mxu0 0.0
    %2349 = vmatpush2.msra.mxu0 0.0
    %2350 = vmatprep.subr.mxu0 0.0
    %2351 = vmatpush2.msra.mxu0 0.0
    %2352 = vmatprep.subr.mxu0 0.0
    %2353 = vmatpush2.msra.mxu0 0.0
    %2354 = vmatprep.subr.mxu0 0.0
    %2355 = vmatpush2.msra.mxu0 0.0
    %2356 = vmatprep.subr.mxu0 0.0
    %2357 = vmatpush2.msra.mxu0 0.0
    %2358 = vmatprep.subr.mxu0 0.0
    %2359 = vmatpush2.msra.mxu0 0.0
    %2360 = vmatprep.subr.mxu0 0.0
    %2361 = vmatpush2.msra.mxu0 0.0
    %2362 = vmatprep.subr.mxu0 0.0
    %2363 = vmatpush2.msra.mxu0 0.0
    %2364 = vmatprep.subr.mxu0 0.0
    %2365 = vmatpush2.msra.mxu0 0.0
    %2366 = vmatprep.subr.mxu0 0.0
    %2367 = vmatpush2.msra.mxu0 0.0
    %2368 = vmatprep.subr.mxu0 0.0
    %2369 = vmatpush2.msra.mxu0 0.0
    %2370 = vmatprep.subr.mxu0 0.0
    %2371 = vmatpush2.msra.mxu0 0.0
    %2372 = vmatprep.subr.mxu0 0.0
    %2373 = vmatpush2.msra.mxu0 0.0
    %2374 = vmatprep.subr.mxu0 0.0
    %2375 = vmatpush2.msra.mxu0 0.0
    %2376 = vmatprep.mubr.f32.mxu0 0.0
    %2377 = vmatmul.mubr.f32.gmra.mxu0 %v2307
    %v2378 = vpop.f32.mrf.mxu0
    %v2379 = vadd.f32 0.0, %v2378
    %v2380 = vpop.f32.mrf.mxu0
    %2381 = vmatprep.mubr.f32.mxu0 0.0
    %2382 = vmatmul.mubr.f32.gmra.mxu0 %v2310
    %v2383 = vpop.f32.mrf.mxu0
    %v2384 = vadd.f32 0.0, %v2383
    %v2385 = vpop.f32.mrf.mxu0
    %2386 = vdwg.mxu0
    %v2388 = vsel %vm735, %v2379, 0
    %v2391 = vsel %vm735, %v2384, 0
    %2393 = vmatprep.subr.mxu0 0.0
    %2394 = vmatpush1.msra.mxu0 0.0
    %2395 = vmatprep.subr.mxu0 0.0
    %2396 = vmatpush1.msra.mxu0 0.0
    %2397 = vmatprep.subr.mxu0 0.0
    %2398 = vmatpush1.msra.mxu0 0.0
    %2399 = vmatprep.subr.mxu0 0.0
    %2400 = vmatpush1.msra.mxu0 0.0
    %2401 = vmatprep.subr.mxu0 0.0
    %2402 = vmatpush1.msra.mxu0 0.0
    %2403 = vmatprep.subr.mxu0 0.0
    %2404 = vmatpush1.msra.mxu0 0.0
    %2405 = vmatprep.subr.mxu0 0.0
    %2406 = vmatpush1.msra.mxu0 0.0
    %2407 = vmatprep.subr.mxu0 0.0
    %2408 = vmatpush1.msra.mxu0 0.0
    %2409 = vmatprep.subr.mxu0 0.0
    %2410 = vmatpush1.msra.mxu0 0.0
    %2411 = vmatprep.subr.mxu0 0.0
    %2412 = vmatpush1.msra.mxu0 0.0
    %2413 = vmatprep.subr.mxu0 0.0
    %2414 = vmatpush1.msra.mxu0 0.0
    %2415 = vmatprep.subr.mxu0 0.0
    %2416 = vmatpush1.msra.mxu0 0.0
    %2417 = vmatprep.subr.mxu0 0.0
    %2418 = vmatpush1.msra.mxu0 0.0
    %2419 = vmatprep.subr.mxu0 0.0
    %2420 = vmatpush1.msra.mxu0 0.0
    %2421 = vmatprep.subr.mxu0 0.0
    %2422 = vmatpush1.msra.mxu0 0.0
    %2423 = vmatprep.subr.mxu0 0.0
    %2424 = vmatpush1.msra.mxu0 %v337
    %2425 = vmatprep.subr.mxu0 0.0
    %2426 = vmatpush2.msra.mxu0 0.0
    %2427 = vmatprep.subr.mxu0 0.0
    %2428 = vmatpush2.msra.mxu0 0.0
    %2429 = vmatprep.subr.mxu0 0.0
    %2430 = vmatpush2.msra.mxu0 0.0
    %2431 = vmatprep.subr.mxu0 0.0
    %2432 = vmatpush2.msra.mxu0 0.0
    %2433 = vmatprep.subr.mxu0 0.0
    %2434 = vmatpush2.msra.mxu0 0.0
    %2435 = vmatprep.subr.mxu0 0.0
    %2436 = vmatpush2.msra.mxu0 0.0
    %2437 = vmatprep.subr.mxu0 0.0
    %2438 = vmatpush2.msra.mxu0 0.0
    %2439 = vmatprep.subr.mxu0 0.0
    %2440 = vmatpush2.msra.mxu0 0.0
    %2441 = vmatprep.subr.mxu0 0.0
    %2442 = vmatpush2.msra.mxu0 0.0
    %2443 = vmatprep.subr.mxu0 0.0
    %2444 = vmatpush2.msra.mxu0 0.0
    %2445 = vmatprep.subr.mxu0 0.0
    %2446 = vmatpush2.msra.mxu0 0.0
    %2447 = vmatprep.subr.mxu0 0.0
    %2448 = vmatpush2.msra.mxu0 0.0
    %2449 = vmatprep.subr.mxu0 0.0
    %2450 = vmatpush2.msra.mxu0 0.0
    %2451 = vmatprep.subr.mxu0 0.0
    %2452 = vmatpush2.msra.mxu0 0.0
    %2453 = vmatprep.subr.mxu0 0.0
    %2454 = vmatpush2.msra.mxu0 0.0
    %2455 = vmatprep.subr.mxu0 0.0
    %2456 = vmatpush2.msra.mxu0 0.0
    %2457 = vmatprep.mubr.f32.mxu0 0.0
    %2458 = vmatmul.mubr.f32.gmra.mxu0 %v2388
    %v2459 = vpop.f32.mrf.mxu0
    %v2460 = vadd.f32 0.0, %v2459
    %v2461 = vpop.f32.mrf.mxu0
    %2462 = vmatprep.mubr.f32.mxu0 0.0
    %2463 = vmatmul.mubr.f32.gmra.mxu0 %v2391
    %v2464 = vpop.f32.mrf.mxu0
    %v2465 = vadd.f32 0.0, %v2464
    %v2466 = vpop.f32.mrf.mxu0
    %2467 = vdwg.mxu0
    %v2469 = vsel %vm735, %v2163, 0
    %v2472 = vsel %vm735, %v2168, 0
    %2474 = vmatprep.subr.mxu0 0.0
    %2475 = vmatpush1.msra.mxu0 0.0
    %2476 = vmatprep.subr.mxu0 0.0
    %2477 = vmatpush1.msra.mxu0 0.0
    %2478 = vmatprep.subr.mxu0 0.0
    %2479 = vmatpush1.msra.mxu0 0.0
    %2480 = vmatprep.subr.mxu0 0.0
    %2481 = vmatpush1.msra.mxu0 0.0
    %2482 = vmatprep.subr.mxu0 0.0
    %2483 = vmatpush1.msra.mxu0 0.0
    %2484 = vmatprep.subr.mxu0 0.0
    %2485 = vmatpush1.msra.mxu0 0.0
    %2486 = vmatprep.subr.mxu0 0.0
    %2487 = vmatpush1.msra.mxu0 0.0
    %2488 = vmatprep.subr.mxu0 0.0
    %2489 = vmatpush1.msra.mxu0 0.0
    %2490 = vmatprep.subr.mxu0 0.0
    %2491 = vmatpush1.msra.mxu0 0.0
    %2492 = vmatprep.subr.mxu0 0.0
    %2493 = vmatpush1.msra.mxu0 0.0
    %2494 = vmatprep.subr.mxu0 0.0
    %2495 = vmatpush1.msra.mxu0 0.0
    %2496 = vmatprep.subr.mxu0 0.0
    %2497 = vmatpush1.msra.mxu0 0.0
    %2498 = vmatprep.subr.mxu0 0.0
    %2499 = vmatpush1.msra.mxu0 0.0
    %2500 = vmatprep.subr.mxu0 0.0
    %2501 = vmatpush1.msra.mxu0 0.0
    %2502 = vmatprep.subr.mxu0 0.0
    %2503 = vmatpush1.msra.mxu0 0.0
    %2504 = vmatprep.subr.mxu0 0.0
    %2505 = vmatpush1.msra.mxu0 %v336
    %2506 = vmatprep.subr.mxu0 0.0
    %2507 = vmatpush2.msra.mxu0 0.0
    %2508 = vmatprep.subr.mxu0 0.0
    %2509 = vmatpush2.msra.mxu0 0.0
    %2510 = vmatprep.subr.mxu0 0.0
    %2511 = vmatpush2.msra.mxu0 0.0
    %2512 = vmatprep.subr.mxu0 0.0
    %2513 = vmatpush2.msra.mxu0 0.0
    %2514 = vmatprep.subr.mxu0 0.0
    %2515 = vmatpush2.msra.mxu0 0.0
    %2516 = vmatprep.subr.mxu0 0.0
    %2517 = vmatpush2.msra.mxu0 0.0
    %2518 = vmatprep.subr.mxu0 0.0
    %2519 = vmatpush2.msra.mxu0 0.0
    %2520 = vmatprep.subr.mxu0 0.0
    %2521 = vmatpush2.msra.mxu0 0.0
    %2522 = vmatprep.subr.mxu0 0.0
    %2523 = vmatpush2.msra.mxu0 0.0
    %2524 = vmatprep.subr.mxu0 0.0
    %2525 = vmatpush2.msra.mxu0 0.0
    %2526 = vmatprep.subr.mxu0 0.0
    %2527 = vmatpush2.msra.mxu0 0.0
    %2528 = vmatprep.subr.mxu0 0.0
    %2529 = vmatpush2.msra.mxu0 0.0
    %2530 = vmatprep.subr.mxu0 0.0
    %2531 = vmatpush2.msra.mxu0 0.0
    %2532 = vmatprep.subr.mxu0 0.0
    %2533 = vmatpush2.msra.mxu0 0.0
    %2534 = vmatprep.subr.mxu0 0.0
    %2535 = vmatpush2.msra.mxu0 0.0
    %2536 = vmatprep.subr.mxu0 0.0
    %2537 = vmatpush2.msra.mxu0 0.0
    %2538 = vmatprep.mubr.f32.mxu0 0.0
    %2539 = vmatmul.mubr.f32.gmra.mxu0 %v2469
    %v2540 = vpop.f32.mrf.mxu0
    %v2541 = vadd.f32 %v2460, %v2540
    %v2542 = vpop.f32.mrf.mxu0
    %2543 = vmatprep.mubr.f32.mxu0 0.0
    %2544 = vmatmul.mubr.f32.gmra.mxu0 %v2472
    %v2545 = vpop.f32.mrf.mxu0
    %v2546 = vadd.f32 %v2465, %v2545
    %v2547 = vpop.f32.mrf.mxu0
    %2548 = vdwg.mxu0
    %2549 = vrot.lane.b32.xlu0 %v1961, 112
    %v2550 = vpop.permute.xlu0 %2549
    %2551 = vrot.lane.b32.xlu0 %v1962, 112
    %v2552 = vpop.permute.xlu0 %2551
    %2553 = vrot.lane.b32.xlu0 %v628, 80
    %v2554 = vpop.permute.xlu0 %2553
    %2555 = vrot.lane.b32.xlu0 %v633, 80
    %v2556 = vpop.permute.xlu0 %2555
    %v2557 = vsel %vm735, %v2550, 0
    %v2559 = vsel %vm735, %v2552, 0
    %v2561 = vsel %vm735, %v2554, 0
    %v2563 = vsel %vm735, %v2556, 0
    %2565 = vmatprep.subr.mxu0 0.0
    %2566 = vmatpush1.xpose.msra.mxu0 0.0
    %2567 = vmatprep.subr.mxu0 0.0
    %2568 = vmatpush1.xpose.msra.mxu0 0.0
    %2569 = vmatprep.subr.mxu0 0.0
    %2570 = vmatpush1.xpose.msra.mxu0 0.0
    %2571 = vmatprep.subr.mxu0 0.0
    %2572 = vmatpush1.xpose.msra.mxu0 0.0
    %2573 = vmatprep.subr.mxu0 0.0
    %2574 = vmatpush1.xpose.msra.mxu0 0.0
    %2575 = vmatprep.subr.mxu0 0.0
    %2576 = vmatpush1.xpose.msra.mxu0 0.0
    %2577 = vmatprep.subr.mxu0 0.0
    %2578 = vmatpush1.xpose.msra.mxu0 0.0
    %2579 = vmatprep.subr.mxu0 0.0
    %2580 = vmatpush1.xpose.msra.mxu0 0.0
    %2581 = vmatprep.subr.mxu0 0.0
    %2582 = vmatpush1.xpose.msra.mxu0 0.0
    %2583 = vmatprep.subr.mxu0 0.0
    %2584 = vmatpush1.xpose.msra.mxu0 0.0
    %2585 = vmatprep.subr.mxu0 0.0
    %2586 = vmatpush1.xpose.msra.mxu0 0.0
    %2587 = vmatprep.subr.mxu0 0.0
    %2588 = vmatpush1.xpose.msra.mxu0 0.0
    %2589 = vmatprep.subr.mxu0 0.0
    %2590 = vmatpush1.xpose.msra.mxu0 0.0
    %2591 = vmatprep.subr.mxu0 0.0
    %2592 = vmatpush1.xpose.msra.mxu0 0.0
    %2593 = vmatprep.subr.mxu0 0.0
    %2594 = vmatpush1.xpose.msra.mxu0 %v2563
    %2595 = vmatprep.subr.mxu0 0.0
    %2596 = vmatpush1.xpose.msra.mxu0 %v2561
    %2597 = vmatprep.subr.mxu0 0.0
    %2598 = vmatpush2.xpose.msra.mxu0 0.0
    %2599 = vmatprep.subr.mxu0 0.0
    %2600 = vmatpush2.xpose.msra.mxu0 0.0
    %2601 = vmatprep.subr.mxu0 0.0
    %2602 = vmatpush2.xpose.msra.mxu0 0.0
    %2603 = vmatprep.subr.mxu0 0.0
    %2604 = vmatpush2.xpose.msra.mxu0 0.0
    %2605 = vmatprep.subr.mxu0 0.0
    %2606 = vmatpush2.xpose.msra.mxu0 0.0
    %2607 = vmatprep.subr.mxu0 0.0
    %2608 = vmatpush2.xpose.msra.mxu0 0.0
    %2609 = vmatprep.subr.mxu0 0.0
    %2610 = vmatpush2.xpose.msra.mxu0 0.0
    %2611 = vmatprep.subr.mxu0 0.0
    %2612 = vmatpush2.xpose.msra.mxu0 0.0
    %2613 = vmatprep.subr.mxu0 0.0
    %2614 = vmatpush2.xpose.msra.mxu0 0.0
    %2615 = vmatprep.subr.mxu0 0.0
    %2616 = vmatpush2.xpose.msra.mxu0 0.0
    %2617 = vmatprep.subr.mxu0 0.0
    %2618 = vmatpush2.xpose.msra.mxu0 0.0
    %2619 = vmatprep.subr.mxu0 0.0
    %2620 = vmatpush2.xpose.msra.mxu0 0.0
    %2621 = vmatprep.subr.mxu0 0.0
    %2622 = vmatpush2.xpose.msra.mxu0 0.0
    %2623 = vmatprep.subr.mxu0 0.0
    %2624 = vmatpush2.xpose.msra.mxu0 0.0
    %2625 = vmatprep.subr.mxu0 0.0
    %2626 = vmatpush2.xpose.msra.mxu0 0.0
    %2627 = vmatprep.subr.mxu0 0.0
    %2628 = vmatpush2.xpose.msra.mxu0 0.0
    %2629 = vmatprep.mubr.f32.mxu0 0.0
    %2630 = vmatmul.mubr.f32.gmra.mxu0 %v2557
    %v2631 = vpop.f32.mrf.mxu0
    %v2632 = vadd.f32 0.0, %v2631
    %v2633 = vpop.f32.mrf.mxu0
    %2634 = vmatprep.mubr.f32.mxu0 0.0
    %2635 = vmatmul.mubr.f32.gmra.mxu0 %v2559
    %v2636 = vpop.f32.mrf.mxu0
    %v2637 = vadd.f32 0.0, %v2636
    %v2638 = vpop.f32.mrf.mxu0
    %2639 = vdwg.mxu0
    %v2640 = vsel %vm213, %v2632, -inf
    %2641 = vmax.xlane.f32.xlu0 %v2640
    %v2642 = vpop.xlane.xlu0 %2641
    %v2643 = vsel %vm213, %v2637, -inf
    %2644 = vmax.xlane.f32.xlu0 %v2643
    %v2645 = vpop.xlane.xlu0 %2644
    %v2646 = vsub.f32 %v2632, %v2642
    %v2647 = vsub.f32 %v2637, %v2645
    %v2648 = vmul.f32 %v2646, 1.442695
    %v2649 = vpow.pop %v2648
    %v2650 = vmul.f32 %v2647, 1.442695
    %v2651 = vpow.pop %v2650
    %v2652 = vsel %vm213, %v2649, 0.0
    %2653 = vadd.xlane.f32.xlu0 %v2652
    %v2654 = vpop.xlane.xlu0 %2653
    %v2655 = vsel %vm213, %v2651, 0.0
    %2656 = vadd.xlane.f32.xlu0 %v2655
    %v2657 = vpop.xlane.xlu0 %2656
    %v2658 = vrcp.pop %v2654
    %v2659 = vmul.f32 %v2649, %v2658
    %v2660 = vrcp.pop %v2657
    %v2661 = vmul.f32 %v2651, %v2660
    %v2662 = vmul.f32 %v1462, %v2659
    %v2663 = vmul.f32 %v1462, %v2661
    %v2664 = vadd.f32 %v2662, %v1470
    %v2665 = vadd.f32 %v2663, %v1471
    %v2666 = vsel %vm213, %v2664, 0.0
    %2667 = vadd.xlane.f32.xlu0 %v2666
    %v2668 = vpop.xlane.xlu0 %2667
    %v2669 = vsel %vm213, %v2665, 0.0
    %2670 = vadd.xlane.f32.xlu0 %v2669
    %v2671 = vpop.xlane.xlu0 %2670
    %v2672 = vrcp.pop %v2668
    %v2673 = vmul.f32 %v2664, %v2672
    %v2674 = vrcp.pop %v2671
    %v2675 = vmul.f32 %v2665, %v2674
    %2676 = vrot.lane.b32.xlu0 %v719, 112
    %v2677 = vpop.permute.xlu0 %2676
    %2678 = vrot.lane.b32.xlu0 %v724, 112
    %v2679 = vpop.permute.xlu0 %2678
    %v2683 = vsel %vm213, %v2673, 0
    %v2686 = vsel %vm213, %v2675, 0
    %2688 = vmatprep.subr.mxu0 0.0
    %2689 = vmatpush1.msra.mxu0 0.0
    %2690 = vmatprep.subr.mxu0 0.0
    %2691 = vmatpush1.msra.mxu0 0.0
    %2692 = vmatprep.subr.mxu0 0.0
    %2693 = vmatpush1.msra.mxu0 0.0
    %2694 = vmatprep.subr.mxu0 0.0
    %2695 = vmatpush1.msra.mxu0 0.0
    %2696 = vmatprep.subr.mxu0 0.0
    %2697 = vmatpush1.msra.mxu0 0.0
    %2698 = vmatprep.subr.mxu0 0.0
    %2699 = vmatpush1.msra.mxu0 0.0
    %2700 = vmatprep.subr.mxu0 0.0
    %2701 = vmatpush1.msra.mxu0 0.0
    %2702 = vmatprep.subr.mxu0 0.0
    %2703 = vmatpush1.msra.mxu0 0.0
    %2704 = vmatprep.subr.mxu0 0.0
    %2705 = vmatpush1.msra.mxu0 0.0
    %2706 = vmatprep.subr.mxu0 0.0
    %2707 = vmatpush1.msra.mxu0 0.0
    %2708 = vmatprep.subr.mxu0 0.0
    %2709 = vmatpush1.msra.mxu0 0.0
    %2710 = vmatprep.subr.mxu0 0.0
    %2711 = vmatpush1.msra.mxu0 0.0
    %2712 = vmatprep.subr.mxu0 0.0
    %2713 = vmatpush1.msra.mxu0 0.0
    %2714 = vmatprep.subr.mxu0 0.0
    %2715 = vmatpush1.msra.mxu0 0.0
    %2716 = vmatprep.subr.mxu0 0.0
    %2717 = vmatpush1.msra.mxu0 %v2679
    %2718 = vmatprep.subr.mxu0 0.0
    %2719 = vmatpush1.msra.mxu0 %v2677
    %2720 = vmatprep.subr.mxu0 0.0
    %2721 = vmatpush2.msra.mxu0 0.0
    %2722 = vmatprep.subr.mxu0 0.0
    %2723 = vmatpush2.msra.mxu0 0.0
    %2724 = vmatprep.subr.mxu0 0.0
    %2725 = vmatpush2.msra.mxu0 0.0
    %2726 = vmatprep.subr.mxu0 0.0
    %2727 = vmatpush2.msra.mxu0 0.0
    %2728 = vmatprep.subr.mxu0 0.0
    %2729 = vmatpush2.msra.mxu0 0.0
    %2730 = vmatprep.subr.mxu0 0.0
    %2731 = vmatpush2.msra.mxu0 0.0
    %2732 = vmatprep.subr.mxu0 0.0
    %2733 = vmatpush2.msra.mxu0 0.0
    %2734 = vmatprep.subr.mxu0 0.0
    %2735 = vmatpush2.msra.mxu0 0.0
    %2736 = vmatprep.subr.mxu0 0.0
    %2737 = vmatpush2.msra.mxu0 0.0
    %2738 = vmatprep.subr.mxu0 0.0
    %2739 = vmatpush2.msra.mxu0 0.0
    %2740 = vmatprep.subr.mxu0 0.0
    %2741 = vmatpush2.msra.mxu0 0.0
    %2742 = vmatprep.subr.mxu0 0.0
    %2743 = vmatpush2.msra.mxu0 0.0
    %2744 = vmatprep.subr.mxu0 0.0
    %2745 = vmatpush2.msra.mxu0 0.0
    %2746 = vmatprep.subr.mxu0 0.0
    %2747 = vmatpush2.msra.mxu0 0.0
    %2748 = vmatprep.subr.mxu0 0.0
    %2749 = vmatpush2.msra.mxu0 0.0
    %2750 = vmatprep.subr.mxu0 0.0
    %2751 = vmatpush2.msra.mxu0 0.0
    %2752 = vmatprep.mubr.f32.mxu0 0.0
    %2753 = vmatmul.mubr.f32.gmra.mxu0 %v2683
    %v2754 = vpop.f32.mrf.mxu0
    %v2755 = vadd.f32 0.0, %v2754
    %v2756 = vpop.f32.mrf.mxu0
    %2757 = vmatprep.mubr.f32.mxu0 0.0
    %2758 = vmatmul.mubr.f32.gmra.mxu0 %v2686
    %v2759 = vpop.f32.mrf.mxu0
    %v2760 = vadd.f32 0.0, %v2759
    %v2761 = vpop.f32.mrf.mxu0
    %2762 = vdwg.mxu0
    %v2764 = vsel %vm735, %v2755, 0
    %v2767 = vsel %vm735, %v2760, 0
    %2769 = vmatprep.subr.mxu0 0.0
    %2770 = vmatpush1.msra.mxu0 0.0
    %2771 = vmatprep.subr.mxu0 0.0
    %2772 = vmatpush1.msra.mxu0 0.0
    %2773 = vmatprep.subr.mxu0 0.0
    %2774 = vmatpush1.msra.mxu0 0.0
    %2775 = vmatprep.subr.mxu0 0.0
    %2776 = vmatpush1.msra.mxu0 0.0
    %2777 = vmatprep.subr.mxu0 0.0
    %2778 = vmatpush1.msra.mxu0 0.0
    %2779 = vmatprep.subr.mxu0 0.0
    %2780 = vmatpush1.msra.mxu0 0.0
    %2781 = vmatprep.subr.mxu0 0.0
    %2782 = vmatpush1.msra.mxu0 0.0
    %2783 = vmatprep.subr.mxu0 0.0
    %2784 = vmatpush1.msra.mxu0 0.0
    %2785 = vmatprep.subr.mxu0 0.0
    %2786 = vmatpush1.msra.mxu0 0.0
    %2787 = vmatprep.subr.mxu0 0.0
    %2788 = vmatpush1.msra.mxu0 0.0
    %2789 = vmatprep.subr.mxu0 0.0
    %2790 = vmatpush1.msra.mxu0 0.0
    %2791 = vmatprep.subr.mxu0 0.0
    %2792 = vmatpush1.msra.mxu0 0.0
    %2793 = vmatprep.subr.mxu0 0.0
    %2794 = vmatpush1.msra.mxu0 0.0
    %2795 = vmatprep.subr.mxu0 0.0
    %2796 = vmatpush1.msra.mxu0 0.0
    %2797 = vmatprep.subr.mxu0 0.0
    %2798 = vmatpush1.msra.mxu0 0.0
    %2799 = vmatprep.subr.mxu0 0.0
    %2800 = vmatpush1.msra.mxu0 %v338
    %2801 = vmatprep.subr.mxu0 0.0
    %2802 = vmatpush2.msra.mxu0 0.0
    %2803 = vmatprep.subr.mxu0 0.0
    %2804 = vmatpush2.msra.mxu0 0.0
    %2805 = vmatprep.subr.mxu0 0.0
    %2806 = vmatpush2.msra.mxu0 0.0
    %2807 = vmatprep.subr.mxu0 0.0
    %2808 = vmatpush2.msra.mxu0 0.0
    %2809 = vmatprep.subr.mxu0 0.0
    %2810 = vmatpush2.msra.mxu0 0.0
    %2811 = vmatprep.subr.mxu0 0.0
    %2812 = vmatpush2.msra.mxu0 0.0
    %2813 = vmatprep.subr.mxu0 0.0
    %2814 = vmatpush2.msra.mxu0 0.0
    %2815 = vmatprep.subr.mxu0 0.0
    %2816 = vmatpush2.msra.mxu0 0.0
    %2817 = vmatprep.subr.mxu0 0.0
    %2818 = vmatpush2.msra.mxu0 0.0
    %2819 = vmatprep.subr.mxu0 0.0
    %2820 = vmatpush2.msra.mxu0 0.0
    %2821 = vmatprep.subr.mxu0 0.0
    %2822 = vmatpush2.msra.mxu0 0.0
    %2823 = vmatprep.subr.mxu0 0.0
    %2824 = vmatpush2.msra.mxu0 0.0
    %2825 = vmatprep.subr.mxu0 0.0
    %2826 = vmatpush2.msra.mxu0 0.0
    %2827 = vmatprep.subr.mxu0 0.0
    %2828 = vmatpush2.msra.mxu0 0.0
    %2829 = vmatprep.subr.mxu0 0.0
    %2830 = vmatpush2.msra.mxu0 0.0
    %2831 = vmatprep.subr.mxu0 0.0
    %2832 = vmatpush2.msra.mxu0 0.0
    %2833 = vmatprep.mubr.f32.mxu0 0.0
    %2834 = vmatmul.mubr.f32.gmra.mxu0 %v2764
    %v2835 = vpop.f32.mrf.mxu0
    %v2836 = vadd.f32 0.0, %v2835
    %v2837 = vpop.f32.mrf.mxu0
    %2838 = vmatprep.mubr.f32.mxu0 0.0
    %2839 = vmatmul.mubr.f32.gmra.mxu0 %v2767
    %v2840 = vpop.f32.mrf.mxu0
    %v2841 = vadd.f32 0.0, %v2840
    %v2842 = vpop.f32.mrf.mxu0
    %2843 = vdwg.mxu0
    %v2844 = vadd.f32 %v2541, %v2836
    %v2845 = vadd.f32 %v2546, %v2841
    %2846 = vrot.lane.b32.xlu0 %v1961, 104
    %v2847 = vpop.permute.xlu0 %2846
    %2848 = vrot.lane.b32.xlu0 %v1962, 104
    %v2849 = vpop.permute.xlu0 %2848
    %2850 = vrot.lane.b32.xlu0 %v628, 72
    %v2851 = vpop.permute.xlu0 %2850
    %2852 = vrot.lane.b32.xlu0 %v633, 72
    %v2853 = vpop.permute.xlu0 %2852
    %v2854 = vsel %vm735, %v2847, 0
    %v2856 = vsel %vm735, %v2849, 0
    %v2858 = vsel %vm735, %v2851, 0
    %v2860 = vsel %vm735, %v2853, 0
    %2862 = vmatprep.subr.mxu0 0.0
    %2863 = vmatpush1.xpose.msra.mxu0 0.0
    %2864 = vmatprep.subr.mxu0 0.0
    %2865 = vmatpush1.xpose.msra.mxu0 0.0
    %2866 = vmatprep.subr.mxu0 0.0
    %2867 = vmatpush1.xpose.msra.mxu0 0.0
    %2868 = vmatprep.subr.mxu0 0.0
    %2869 = vmatpush1.xpose.msra.mxu0 0.0
    %2870 = vmatprep.subr.mxu0 0.0
    %2871 = vmatpush1.xpose.msra.mxu0 0.0
    %2872 = vmatprep.subr.mxu0 0.0
    %2873 = vmatpush1.xpose.msra.mxu0 0.0
    %2874 = vmatprep.subr.mxu0 0.0
    %2875 = vmatpush1.xpose.msra.mxu0 0.0
    %2876 = vmatprep.subr.mxu0 0.0
    %2877 = vmatpush1.xpose.msra.mxu0 0.0
    %2878 = vmatprep.subr.mxu0 0.0
    %2879 = vmatpush1.xpose.msra.mxu0 0.0
    %2880 = vmatprep.subr.mxu0 0.0
    %2881 = vmatpush1.xpose.msra.mxu0 0.0
    %2882 = vmatprep.subr.mxu0 0.0
    %2883 = vmatpush1.xpose.msra.mxu0 0.0
    %2884 = vmatprep.subr.mxu0 0.0
    %2885 = vmatpush1.xpose.msra.mxu0 0.0
    %2886 = vmatprep.subr.mxu0 0.0
    %2887 = vmatpush1.xpose.msra.mxu0 0.0
    %2888 = vmatprep.subr.mxu0 0.0
    %2889 = vmatpush1.xpose.msra.mxu0 0.0
    %2890 = vmatprep.subr.mxu0 0.0
    %2891 = vmatpush1.xpose.msra.mxu0 %v2860
    %2892 = vmatprep.subr.mxu0 0.0
    %2893 = vmatpush1.xpose.msra.mxu0 %v2858
    %2894 = vmatprep.subr.mxu0 0.0
    %2895 = vmatpush2.xpose.msra.mxu0 0.0
    %2896 = vmatprep.subr.mxu0 0.0
    %2897 = vmatpush2.xpose.msra.mxu0 0.0
    %2898 = vmatprep.subr.mxu0 0.0
    %2899 = vmatpush2.xpose.msra.mxu0 0.0
    %2900 = vmatprep.subr.mxu0 0.0
    %2901 = vmatpush2.xpose.msra.mxu0 0.0
    %2902 = vmatprep.subr.mxu0 0.0
    %2903 = vmatpush2.xpose.msra.mxu0 0.0
    %2904 = vmatprep.subr.mxu0 0.0
    %2905 = vmatpush2.xpose.msra.mxu0 0.0
    %2906 = vmatprep.subr.mxu0 0.0
    %2907 = vmatpush2.xpose.msra.mxu0 0.0
    %2908 = vmatprep.subr.mxu0 0.0
    %2909 = vmatpush2.xpose.msra.mxu0 0.0
    %2910 = vmatprep.subr.mxu0 0.0
    %2911 = vmatpush2.xpose.msra.mxu0 0.0
    %2912 = vmatprep.subr.mxu0 0.0
    %2913 = vmatpush2.xpose.msra.mxu0 0.0
    %2914 = vmatprep.subr.mxu0 0.0
    %2915 = vmatpush2.xpose.msra.mxu0 0.0
    %2916 = vmatprep.subr.mxu0 0.0
    %2917 = vmatpush2.xpose.msra.mxu0 0.0
    %2918 = vmatprep.subr.mxu0 0.0
    %2919 = vmatpush2.xpose.msra.mxu0 0.0
    %2920 = vmatprep.subr.mxu0 0.0
    %2921 = vmatpush2.xpose.msra.mxu0 0.0
    %2922 = vmatprep.subr.mxu0 0.0
    %2923 = vmatpush2.xpose.msra.mxu0 0.0
    %2924 = vmatprep.subr.mxu0 0.0
    %2925 = vmatpush2.xpose.msra.mxu0 0.0
    %2926 = vmatprep.mubr.f32.mxu0 0.0
    %2927 = vmatmul.mubr.f32.gmra.mxu0 %v2854
    %v2928 = vpop.f32.mrf.mxu0
    %v2929 = vadd.f32 0.0, %v2928
    %v2930 = vpop.f32.mrf.mxu0
    %2931 = vmatprep.mubr.f32.mxu0 0.0
    %2932 = vmatmul.mubr.f32.gmra.mxu0 %v2856
    %v2933 = vpop.f32.mrf.mxu0
    %v2934 = vadd.f32 0.0, %v2933
    %v2935 = vpop.f32.mrf.mxu0
    %2936 = vdwg.mxu0
    %v2937 = vsel %vm213, %v2929, -inf
    %2938 = vmax.xlane.f32.xlu0 %v2937
    %v2939 = vpop.xlane.xlu0 %2938
    %v2940 = vsel %vm213, %v2934, -inf
    %2941 = vmax.xlane.f32.xlu0 %v2940
    %v2942 = vpop.xlane.xlu0 %2941
    %v2943 = vsub.f32 %v2929, %v2939
    %v2944 = vsub.f32 %v2934, %v2942
    %v2945 = vmul.f32 %v2943, 1.442695
    %v2946 = vpow.pop %v2945
    %v2947 = vmul.f32 %v2944, 1.442695
    %v2948 = vpow.pop %v2947
    %v2949 = vsel %vm213, %v2946, 0.0
    %2950 = vadd.xlane.f32.xlu0 %v2949
    %v2951 = vpop.xlane.xlu0 %2950
    %v2952 = vsel %vm213, %v2948, 0.0
    %2953 = vadd.xlane.f32.xlu0 %v2952
    %v2954 = vpop.xlane.xlu0 %2953
    %v2955 = vrcp.pop %v2951
    %v2956 = vmul.f32 %v2946, %v2955
    %v2957 = vrcp.pop %v2954
    %v2958 = vmul.f32 %v2948, %v2957
    %v2959 = vmul.f32 %v1769, %v2956
    %v2960 = vmul.f32 %v1769, %v2958
    %v2961 = vadd.f32 %v2959, %v1777
    %v2962 = vadd.f32 %v2960, %v1778
    %v2963 = vsel %vm213, %v2961, 0.0
    %2964 = vadd.xlane.f32.xlu0 %v2963
    %v2965 = vpop.xlane.xlu0 %2964
    %v2966 = vsel %vm213, %v2962, 0.0
    %2967 = vadd.xlane.f32.xlu0 %v2966
    %v2968 = vpop.xlane.xlu0 %2967
    %v2969 = vrcp.pop %v2965
    %v2970 = vmul.f32 %v2961, %v2969
    %v2971 = vrcp.pop %v2968
    %v2972 = vmul.f32 %v2962, %v2971
    %2973 = vrot.lane.b32.xlu0 %v719, 104
    %v2974 = vpop.permute.xlu0 %2973
    %2975 = vrot.lane.b32.xlu0 %v724, 104
    %v2976 = vpop.permute.xlu0 %2975
    %v2980 = vsel %vm213, %v2970, 0
    %v2983 = vsel %vm213, %v2972, 0
    %2985 = vmatprep.subr.mxu0 0.0
    %2986 = vmatpush1.msra.mxu0 0.0
    %2987 = vmatprep.subr.mxu0 0.0
    %2988 = vmatpush1.msra.mxu0 0.0
    %2989 = vmatprep.subr.mxu0 0.0
    %2990 = vmatpush1.msra.mxu0 0.0
    %2991 = vmatprep.subr.mxu0 0.0
    %2992 = vmatpush1.msra.mxu0 0.0
    %2993 = vmatprep.subr.mxu0 0.0
    %2994 = vmatpush1.msra.mxu0 0.0
    %2995 = vmatprep.subr.mxu0 0.0
    %2996 = vmatpush1.msra.mxu0 0.0
    %2997 = vmatprep.subr.mxu0 0.0
    %2998 = vmatpush1.msra.mxu0 0.0
    %2999 = vmatprep.subr.mxu0 0.0
    %3000 = vmatpush1.msra.mxu0 0.0
    %3001 = vmatprep.subr.mxu0 0.0
    %3002 = vmatpush1.msra.mxu0 0.0
    %3003 = vmatprep.subr.mxu0 0.0
    %3004 = vmatpush1.msra.mxu0 0.0
    %3005 = vmatprep.subr.mxu0 0.0
    %3006 = vmatpush1.msra.mxu0 0.0
    %3007 = vmatprep.subr.mxu0 0.0
    %3008 = vmatpush1.msra.mxu0 0.0
    %3009 = vmatprep.subr.mxu0 0.0
    %3010 = vmatpush1.msra.mxu0 0.0
    %3011 = vmatprep.subr.mxu0 0.0
    %3012 = vmatpush1.msra.mxu0 0.0
    %3013 = vmatprep.subr.mxu0 0.0
    %3014 = vmatpush1.msra.mxu0 %v2976
    %3015 = vmatprep.subr.mxu0 0.0
    %3016 = vmatpush1.msra.mxu0 %v2974
    %3017 = vmatprep.subr.mxu0 0.0
    %3018 = vmatpush2.msra.mxu0 0.0
    %3019 = vmatprep.subr.mxu0 0.0
    %3020 = vmatpush2.msra.mxu0 0.0
    %3021 = vmatprep.subr.mxu0 0.0
    %3022 = vmatpush2.msra.mxu0 0.0
    %3023 = vmatprep.subr.mxu0 0.0
    %3024 = vmatpush2.msra.mxu0 0.0
    %3025 = vmatprep.subr.mxu0 0.0
    %3026 = vmatpush2.msra.mxu0 0.0
    %3027 = vmatprep.subr.mxu0 0.0
    %3028 = vmatpush2.msra.mxu0 0.0
    %3029 = vmatprep.subr.mxu0 0.0
    %3030 = vmatpush2.msra.mxu0 0.0
    %3031 = vmatprep.subr.mxu0 0.0
    %3032 = vmatpush2.msra.mxu0 0.0
    %3033 = vmatprep.subr.mxu0 0.0
    %3034 = vmatpush2.msra.mxu0 0.0
    %3035 = vmatprep.subr.mxu0 0.0
    %3036 = vmatpush2.msra.mxu0 0.0
    %3037 = vmatprep.subr.mxu0 0.0
    %3038 = vmatpush2.msra.mxu0 0.0
    %3039 = vmatprep.subr.mxu0 0.0
    %3040 = vmatpush2.msra.mxu0 0.0
    %3041 = vmatprep.subr.mxu0 0.0
    %3042 = vmatpush2.msra.mxu0 0.0
    %3043 = vmatprep.subr.mxu0 0.0
    %3044 = vmatpush2.msra.mxu0 0.0
    %3045 = vmatprep.subr.mxu0 0.0
    %3046 = vmatpush2.msra.mxu0 0.0
    %3047 = vmatprep.subr.mxu0 0.0
    %3048 = vmatpush2.msra.mxu0 0.0
    %3049 = vmatprep.mubr.f32.mxu0 0.0
    %3050 = vmatmul.mubr.f32.gmra.mxu0 %v2980
    %v3051 = vpop.f32.mrf.mxu0
    %v3052 = vadd.f32 0.0, %v3051
    %v3053 = vpop.f32.mrf.mxu0
    %3054 = vmatprep.mubr.f32.mxu0 0.0
    %3055 = vmatmul.mubr.f32.gmra.mxu0 %v2983
    %v3056 = vpop.f32.mrf.mxu0
    %v3057 = vadd.f32 0.0, %v3056
    %v3058 = vpop.f32.mrf.mxu0
    %3059 = vdwg.mxu0
    %v3061 = vsel %vm735, %v3052, 0
    %v3064 = vsel %vm735, %v3057, 0
    %3066 = vmatprep.subr.mxu0 0.0
    %3067 = vmatpush1.msra.mxu0 0.0
    %3068 = vmatprep.subr.mxu0 0.0
    %3069 = vmatpush1.msra.mxu0 0.0
    %3070 = vmatprep.subr.mxu0 0.0
    %3071 = vmatpush1.msra.mxu0 0.0
    %3072 = vmatprep.subr.mxu0 0.0
    %3073 = vmatpush1.msra.mxu0 0.0
    %3074 = vmatprep.subr.mxu0 0.0
    %3075 = vmatpush1.msra.mxu0 0.0
    %3076 = vmatprep.subr.mxu0 0.0
    %3077 = vmatpush1.msra.mxu0 0.0
    %3078 = vmatprep.subr.mxu0 0.0
    %3079 = vmatpush1.msra.mxu0 0.0
    %3080 = vmatprep.subr.mxu0 0.0
    %3081 = vmatpush1.msra.mxu0 0.0
    %3082 = vmatprep.subr.mxu0 0.0
    %3083 = vmatpush1.msra.mxu0 0.0
    %3084 = vmatprep.subr.mxu0 0.0
    %3085 = vmatpush1.msra.mxu0 0.0
    %3086 = vmatprep.subr.mxu0 0.0
    %3087 = vmatpush1.msra.mxu0 0.0
    %3088 = vmatprep.subr.mxu0 0.0
    %3089 = vmatpush1.msra.mxu0 0.0
    %3090 = vmatprep.subr.mxu0 0.0
    %3091 = vmatpush1.msra.mxu0 0.0
    %3092 = vmatprep.subr.mxu0 0.0
    %3093 = vmatpush1.msra.mxu0 0.0
    %3094 = vmatprep.subr.mxu0 0.0
    %3095 = vmatpush1.msra.mxu0 0.0
    %3096 = vmatprep.subr.mxu0 0.0
    %3097 = vmatpush1.msra.mxu0 %v339
    %3098 = vmatprep.subr.mxu0 0.0
    %3099 = vmatpush2.msra.mxu0 0.0
    %3100 = vmatprep.subr.mxu0 0.0
    %3101 = vmatpush2.msra.mxu0 0.0
    %3102 = vmatprep.subr.mxu0 0.0
    %3103 = vmatpush2.msra.mxu0 0.0
    %3104 = vmatprep.subr.mxu0 0.0
    %3105 = vmatpush2.msra.mxu0 0.0
    %3106 = vmatprep.subr.mxu0 0.0
    %3107 = vmatpush2.msra.mxu0 0.0
    %3108 = vmatprep.subr.mxu0 0.0
    %3109 = vmatpush2.msra.mxu0 0.0
    %3110 = vmatprep.subr.mxu0 0.0
    %3111 = vmatpush2.msra.mxu0 0.0
    %3112 = vmatprep.subr.mxu0 0.0
    %3113 = vmatpush2.msra.mxu0 0.0
    %3114 = vmatprep.subr.mxu0 0.0
    %3115 = vmatpush2.msra.mxu0 0.0
    %3116 = vmatprep.subr.mxu0 0.0
    %3117 = vmatpush2.msra.mxu0 0.0
    %3118 = vmatprep.subr.mxu0 0.0
    %3119 = vmatpush2.msra.mxu0 0.0
    %3120 = vmatprep.subr.mxu0 0.0
    %3121 = vmatpush2.msra.mxu0 0.0
    %3122 = vmatprep.subr.mxu0 0.0
    %3123 = vmatpush2.msra.mxu0 0.0
    %3124 = vmatprep.subr.mxu0 0.0
    %3125 = vmatpush2.msra.mxu0 0.0
    %3126 = vmatprep.subr.mxu0 0.0
    %3127 = vmatpush2.msra.mxu0 0.0
    %3128 = vmatprep.subr.mxu0 0.0
    %3129 = vmatpush2.msra.mxu0 0.0
    %3130 = vmatprep.mubr.f32.mxu0 0.0
    %3131 = vmatmul.mubr.f32.gmra.mxu0 %v3061
    %v3132 = vpop.f32.mrf.mxu0
    %v3133 = vadd.f32 0.0, %v3132
    %v3134 = vpop.f32.mrf.mxu0
    %3135 = vmatprep.mubr.f32.mxu0 0.0
    %3136 = vmatmul.mubr.f32.gmra.mxu0 %v3064
    %v3137 = vpop.f32.mrf.mxu0
    %v3138 = vadd.f32 0.0, %v3137
    %v3139 = vpop.f32.mrf.mxu0
    %3140 = vdwg.mxu0
    %v3141 = vadd.f32 %v2844, %v3133
    %v3142 = vadd.f32 %v2845, %v3138
    %v3143 = vadd.f32 %v311, %v1959
    %v3144 = vadd.f32 %v312, %v1960
    %v3145 = vadd.f32 %v313, %v3141
    %v3146 = vadd.f32 %v314, %v3142
    %v3148 = vlaneseq
    %v3149 = vshrl.u32 %v3148, 7
    %v3150 = vsub.s32 0, %v3149
    %v3151 = vrot.slane %v340, %v3150
    %v3153 = vadd.f32 %v3143, %v3151
    %v3154 = vadd.f32 %v3144, %v3151
    %v3155 = vadd.f32 %v3145, %v3151
    %v3156 = vadd.f32 %v3146, %v3151
    %v3157 = vsel %vm459, %v3153, 0.0
    %3158 = vadd.xlane.f32.xlu0 %v3157
    %v3159 = vpop.xlane.xlu0 %3158
    %v3160 = vsel %vm459, %v3154, 0.0
    %3161 = vadd.xlane.f32.xlu0 %v3160
    %v3162 = vpop.xlane.xlu0 %3161
    %v3163 = vsel %vm459, %v3155, 0.0
    %3164 = vadd.xlane.f32.xlu0 %v3163
    %v3165 = vpop.xlane.xlu0 %3164
    %v3166 = vsel %vm459, %v3156, 0.0
    %3167 = vadd.xlane.f32.xlu0 %v3166
    %v3168 = vpop.xlane.xlu0 %3167
    %v3169 = vmul.f32 %v3159, %v472
    %v3170 = vmul.f32 %v3162, %v472
    %v3171 = vmul.f32 %v3165, %v472
    %v3172 = vmul.f32 %v3168, %v472
    %v3173 = vsub.f32 %v3153, %v3169
    %v3174 = vsub.f32 %v3154, %v3170
    %v3175 = vsub.f32 %v3155, %v3171
    %v3176 = vsub.f32 %v3156, %v3172
    %v3177 = vmul.f32 %v3173, %v3173
    %v3178 = vmul.f32 %v3174, %v3174
    %v3179 = vmul.f32 %v3175, %v3175
    %v3180 = vmul.f32 %v3176, %v3176
    %v3181 = vsel %vm459, %v3177, 0.0
    %3182 = vadd.xlane.f32.xlu0 %v3181
    %v3183 = vpop.xlane.xlu0 %3182
    %v3184 = vsel %vm459, %v3178, 0.0
    %3185 = vadd.xlane.f32.xlu0 %v3184
    %v3186 = vpop.xlane.xlu0 %3185
    %v3187 = vsel %vm459, %v3179, 0.0
    %3188 = vadd.xlane.f32.xlu0 %v3187
    %v3189 = vpop.xlane.xlu0 %3188
    %v3190 = vsel %vm459, %v3180, 0.0
    %3191 = vadd.xlane.f32.xlu0 %v3190
    %v3192 = vpop.xlane.xlu0 %3191
    %v3193 = vmul.f32 %v3183, %v472
    %v3194 = vmul.f32 %v3186, %v472
    %v3195 = vmul.f32 %v3189, %v472
    %v3196 = vmul.f32 %v3192, %v472
    %v3197 = vadd.f32 %v3193, 1e-06
    %v3198 = vadd.f32 %v3194, 1e-06
    %v3199 = vadd.f32 %v3195, 1e-06
    %v3200 = vadd.f32 %v3196, 1e-06
    %v3201 = vrsqrt.pop %v3197
    %v3202 = vrsqrt.pop %v3198
    %v3203 = vrsqrt.pop %v3199
    %v3204 = vrsqrt.pop %v3200
    %v3205 = vmul.f32 %v3173, %v3201
    %v3206 = vmul.f32 %v3174, %v3202
    %v3207 = vmul.f32 %v3175, %v3203
    %v3208 = vmul.f32 %v3176, %v3204
    %v3210 = vlaneseq
    %v3211 = vshrl.u32 %v3210, 7
    %v3212 = vsub.s32 0, %v3211
    %v3213 = vrot.slane %v341, %v3212
    %v3215 = vmul.f32 %v3205, %v3213
    %v3216 = vmul.f32 %v3206, %v3213
    %v3217 = vmul.f32 %v3207, %v3213
    %v3218 = vmul.f32 %v3208, %v3213
    %v3220 = vlaneseq
    %v3221 = vshrl.u32 %v3220, 7
    %v3222 = vsub.s32 0, %v3221
    %v3223 = vrot.slane %v342, %v3222
    %v3225 = vadd.f32 %v3215, %v3223
    %v3226 = vadd.f32 %v3216, %v3223
    %v3227 = vadd.f32 %v3217, %v3223
    %v3228 = vadd.f32 %v3218, %v3223
    %v3230 = vlaneseq
    %v3231 = vshrl.u32 %v3230, 7
    %v3232 = vsub.s32 0, %v3231
    %v3233 = vrot.slane %v347, %v3232
    %v3236 = vsel %vm459, %v3225, 0
    %v3239 = vsel %vm459, %v3226, 0
    %v3242 = vsel %vm459, %v3227, 0
    %v3245 = vsel %vm459, %v3228, 0
    %3247 = vmatprep.subr.mxu0 0.0
    %3248 = vmatpush1.msra.mxu0 0.0
    %3249 = vmatprep.subr.mxu0 0.0
    %3250 = vmatpush1.msra.mxu0 0.0
    %3251 = vmatprep.subr.mxu0 0.0
    %3252 = vmatpush1.msra.mxu0 0.0
    %3253 = vmatprep.subr.mxu0 0.0
    %3254 = vmatpush1.msra.mxu0 0.0
    %3255 = vmatprep.subr.mxu0 0.0
    %3256 = vmatpush1.msra.mxu0 0.0
    %3257 = vmatprep.subr.mxu0 0.0
    %3258 = vmatpush1.msra.mxu0 0.0
    %3259 = vmatprep.subr.mxu0 0.0
    %3260 = vmatpush1.msra.mxu0 0.0
    %3261 = vmatprep.subr.mxu0 0.0
    %3262 = vmatpush1.msra.mxu0 0.0
    %3263 = vmatprep.subr.mxu0 0.0
    %3264 = vmatpush1.msra.mxu0 0.0
    %3265 = vmatprep.subr.mxu0 0.0
    %3266 = vmatpush1.msra.mxu0 0.0
    %3267 = vmatprep.subr.mxu0 0.0
    %3268 = vmatpush1.msra.mxu0 0.0
    %3269 = vmatprep.subr.mxu0 0.0
    %3270 = vmatpush1.msra.mxu0 0.0
    %3271 = vmatprep.subr.mxu0 0.0
    %3272 = vmatpush1.msra.mxu0 %v346
    %3273 = vmatprep.subr.mxu0 0.0
    %3274 = vmatpush1.msra.mxu0 %v345
    %3275 = vmatprep.subr.mxu0 0.0
    %3276 = vmatpush1.msra.mxu0 %v344
    %3277 = vmatprep.subr.mxu0 0.0
    %3278 = vmatpush1.msra.mxu0 %v343
    %3279 = vmatprep.subr.mxu0 0.0
    %3280 = vmatpush2.msra.mxu0 0.0
    %3281 = vmatprep.subr.mxu0 0.0
    %3282 = vmatpush2.msra.mxu0 0.0
    %3283 = vmatprep.subr.mxu0 0.0
    %3284 = vmatpush2.msra.mxu0 0.0
    %3285 = vmatprep.subr.mxu0 0.0
    %3286 = vmatpush2.msra.mxu0 0.0
    %3287 = vmatprep.subr.mxu0 0.0
    %3288 = vmatpush2.msra.mxu0 0.0
    %3289 = vmatprep.subr.mxu0 0.0
    %3290 = vmatpush2.msra.mxu0 0.0
    %3291 = vmatprep.subr.mxu0 0.0
    %3292 = vmatpush2.msra.mxu0 0.0
    %3293 = vmatprep.subr.mxu0 0.0
    %3294 = vmatpush2.msra.mxu0 0.0
    %3295 = vmatprep.subr.mxu0 0.0
    %3296 = vmatpush2.msra.mxu0 0.0
    %3297 = vmatprep.subr.mxu0 0.0
    %3298 = vmatpush2.msra.mxu0 0.0
    %3299 = vmatprep.subr.mxu0 0.0
    %3300 = vmatpush2.msra.mxu0 0.0
    %3301 = vmatprep.subr.mxu0 0.0
    %3302 = vmatpush2.msra.mxu0 0.0
    %3303 = vmatprep.subr.mxu0 0.0
    %3304 = vmatpush2.msra.mxu0 0.0
    %3305 = vmatprep.subr.mxu0 0.0
    %3306 = vmatpush2.msra.mxu0 0.0
    %3307 = vmatprep.subr.mxu0 0.0
    %3308 = vmatpush2.msra.mxu0 0.0
    %3309 = vmatprep.subr.mxu0 0.0
    %3310 = vmatpush2.msra.mxu0 0.0
    %3311 = vmatprep.mubr.f32.mxu0 0.0
    %3312 = vmatmul.mubr.f32.gmra.mxu0 %v3236
    %v3313 = vpop.f32.mrf.mxu0
    %v3314 = vadd.f32 %v3233, %v3313
    %v3315 = vpop.f32.mrf.mxu0
    %3316 = vmatprep.mubr.f32.mxu0 0.0
    %3317 = vmatmul.mubr.f32.gmra.mxu0 %v3239
    %v3318 = vpop.f32.mrf.mxu0
    %v3319 = vadd.f32 %v3233, %v3318
    %v3320 = vpop.f32.mrf.mxu0
    %3321 = vmatprep.mubr.f32.mxu0 0.0
    %3322 = vmatmul.mubr.f32.gmra.mxu0 %v3242
    %v3323 = vpop.f32.mrf.mxu0
    %v3324 = vadd.f32 %v3233, %v3323
    %v3325 = vpop.f32.mrf.mxu0
    %3326 = vmatprep.mubr.f32.mxu0 0.0
    %3327 = vmatmul.mubr.f32.gmra.mxu0 %v3245
    %v3328 = vpop.f32.mrf.mxu0
    %v3329 = vadd.f32 %v3233, %v3328
    %v3330 = vpop.f32.mrf.mxu0
    %3331 = vdwg.mxu0
    %v3332 = vmul.f32 %v3314, 0.5
    %v3333 = vmul.f32 %v3319, 0.5
    %v3334 = vmul.f32 %v3324, 0.5
    %v3335 = vmul.f32 %v3329, 0.5
    %v3336 = vmul.f32 %v3314, 0.044715
    %v3337 = vmul.f32 %v3319, 0.044715
    %v3338 = vmul.f32 %v3324, 0.044715
    %v3339 = vmul.f32 %v3329, 0.044715
    %v3340 = vmul.f32 %v3336, %v3314
    %v3341 = vmul.f32 %v3337, %v3319
    %v3342 = vmul.f32 %v3338, %v3324
    %v3343 = vmul.f32 %v3339, %v3329
    %v3344 = vmul.f32 %v3340, %v3314
    %v3345 = vmul.f32 %v3341, %v3319
    %v3346 = vmul.f32 %v3342, %v3324
    %v3347 = vmul.f32 %v3343, %v3329
    %v3348 = vadd.f32 %v3314, %v3344
    %v3349 = vadd.f32 %v3319, %v3345
    %v3350 = vadd.f32 %v3324, %v3346
    %v3351 = vadd.f32 %v3329, %v3347
    %v3352 = vmul.f32 %v3348, 0.7978846
    %v3353 = vmul.f32 %v3349, 0.7978846
    %v3354 = vmul.f32 %v3350, 0.7978846
    %v3355 = vmul.f32 %v3351, 0.7978846
    %v3356 = vtanh.pop %v3352
    %v3357 = vtanh.pop %v3353
    %v3358 = vtanh.pop %v3354
    %v3359 = vtanh.pop %v3355
    %v3360 = vadd.f32 %v3356, 1.0
    %v3361 = vadd.f32 %v3357, 1.0
    %v3362 = vadd.f32 %v3358, 1.0
    %v3363 = vadd.f32 %v3359, 1.0
    %v3364 = vmul.f32 %v3332, %v3360
    %v3365 = vmul.f32 %v3333, %v3361
    %v3366 = vmul.f32 %v3334, %v3362
    %v3367 = vmul.f32 %v3335, %v3363
    %3368 = vmatprep.subr.mxu0 0.0
    %3369 = vmatpush1.msra.mxu0 %v363
    %3370 = vmatprep.subr.mxu0 0.0
    %3371 = vmatpush1.msra.mxu0 %v362
    %3372 = vmatprep.subr.mxu0 0.0
    %3373 = vmatpush1.msra.mxu0 %v361
    %3374 = vmatprep.subr.mxu0 0.0
    %3375 = vmatpush1.msra.mxu0 %v360
    %3376 = vmatprep.subr.mxu0 0.0
    %3377 = vmatpush1.msra.mxu0 %v359
    %3378 = vmatprep.subr.mxu0 0.0
    %3379 = vmatpush1.msra.mxu0 %v358
    %3380 = vmatprep.subr.mxu0 0.0
    %3381 = vmatpush1.msra.mxu0 %v357
    %3382 = vmatprep.subr.mxu0 0.0
    %3383 = vmatpush1.msra.mxu0 %v356
    %3384 = vmatprep.subr.mxu0 0.0
    %3385 = vmatpush1.msra.mxu0 %v355
    %3386 = vmatprep.subr.mxu0 0.0
    %3387 = vmatpush1.msra.mxu0 %v354
    %3388 = vmatprep.subr.mxu0 0.0
    %3389 = vmatpush1.msra.mxu0 %v353
    %3390 = vmatprep.subr.mxu0 0.0
    %3391 = vmatpush1.msra.mxu0 %v352
    %3392 = vmatprep.subr.mxu0 0.0
    %3393 = vmatpush1.msra.mxu0 %v351
    %3394 = vmatprep.subr.mxu0 0.0
    %3395 = vmatpush1.msra.mxu0 %v350
    %3396 = vmatprep.subr.mxu0 0.0
    %3397 = vmatpush1.msra.mxu0 %v349
    %3398 = vmatprep.subr.mxu0 0.0
    %3399 = vmatpush1.msra.mxu0 %v348
    %3400 = vmatprep.subr.mxu0 0.0
    %3401 = vmatpush2.msra.mxu0 0.0
    %3402 = vmatprep.subr.mxu0 0.0
    %3403 = vmatpush2.msra.mxu0 0.0
    %3404 = vmatprep.subr.mxu0 0.0
    %3405 = vmatpush2.msra.mxu0 0.0
    %3406 = vmatprep.subr.mxu0 0.0
    %3407 = vmatpush2.msra.mxu0 0.0
    %3408 = vmatprep.subr.mxu0 0.0
    %3409 = vmatpush2.msra.mxu0 0.0
    %3410 = vmatprep.subr.mxu0 0.0
    %3411 = vmatpush2.msra.mxu0 0.0
    %3412 = vmatprep.subr.mxu0 0.0
    %3413 = vmatpush2.msra.mxu0 0.0
    %3414 = vmatprep.subr.mxu0 0.0
    %3415 = vmatpush2.msra.mxu0 0.0
    %3416 = vmatprep.subr.mxu0 0.0
    %3417 = vmatpush2.msra.mxu0 0.0
    %3418 = vmatprep.subr.mxu0 0.0
    %3419 = vmatpush2.msra.mxu0 0.0
    %3420 = vmatprep.subr.mxu0 0.0
    %3421 = vmatpush2.msra.mxu0 0.0
    %3422 = vmatprep.subr.mxu0 0.0
    %3423 = vmatpush2.msra.mxu0 0.0
    %3424 = vmatprep.subr.mxu0 0.0
    %3425 = vmatpush2.msra.mxu0 0.0
    %3426 = vmatprep.subr.mxu0 0.0
    %3427 = vmatpush2.msra.mxu0 0.0
    %3428 = vmatprep.subr.mxu0 0.0
    %3429 = vmatpush2.msra.mxu0 0.0
    %3430 = vmatprep.subr.mxu0 0.0
    %3431 = vmatpush2.msra.mxu0 0.0
    %3432 = vmatprep.mubr.f32.mxu0 0.0
    %3433 = vmatmul.mubr.f32.gmra.mxu0 %v3364
    %v3434 = vpop.f32.mrf.mxu0
    %v3435 = vadd.f32 0.0, %v3434
    %v3436 = vpop.f32.mrf.mxu0
    %3437 = vmatprep.mubr.f32.mxu0 0.0
    %3438 = vmatmul.mubr.f32.gmra.mxu0 %v3365
    %v3439 = vpop.f32.mrf.mxu0
    %v3440 = vadd.f32 0.0, %v3439
    %v3441 = vpop.f32.mrf.mxu0
    %3442 = vmatprep.mubr.f32.mxu0 0.0
    %3443 = vmatmul.mubr.f32.gmra.mxu0 %v3366
    %v3444 = vpop.f32.mrf.mxu0
    %v3445 = vadd.f32 0.0, %v3444
    %v3446 = vpop.f32.mrf.mxu0
    %3447 = vmatprep.mubr.f32.mxu0 0.0
    %3448 = vmatmul.mubr.f32.gmra.mxu0 %v3367
    %v3449 = vpop.f32.mrf.mxu0
    %v3450 = vadd.f32 0.0, %v3449
    %v3451 = vpop.f32.mrf.mxu0
    %3452 = vdwg.mxu0
    %v3453 = vadd.f32 %v3153, %v3435
    %v3454 = vadd.f32 %v3154, %v3440
    %v3455 = vadd.f32 %v3155, %v3445
    %v3456 = vadd.f32 %v3156, %v3450
    %v3458 = vlaneseq
    %v3459 = vshrl.u32 %v3458, 7
    %v3460 = vsub.s32 0, %v3459
    %v3461 = vrot.slane %v364, %v3460
    %v3463 = vadd.f32 %v3453, %v3461
    %v3464 = vadd.f32 %v3454, %v3461
    %v3465 = vadd.f32 %v3455, %v3461
    %v3466 = vadd.f32 %v3456, %v3461
    %v3467 = vld [vmem:[%s43] sm:$0x1]
    %v3468 = vld [vmem:[%s45] sm:$0x1]
    %v3469 = vld [vmem:[%s47] sm:$0xff]
    %v3470 = vld [vmem:[%s47 + $0x8] sm:$0xff]
    %v3471 = vld [vmem:[%s47 + $0x10] sm:$0xff]
    %v3472 = vld [vmem:[%s47 + $0x18] sm:$0xff]
    %v3473 = vld [vmem:[%s49] sm:$0x1]
    %v3474 = vld [vmem:[%s51] sm:$0xff]
    %v3475 = vld [vmem:[%s51 + $0x8] sm:$0xff]
    %v3476 = vld [vmem:[%s51 + $0x10] sm:$0xff]
    %v3477 = vld [vmem:[%s51 + $0x18] sm:$0xff]
    %v3478 = vld [vmem:[%s53] sm:$0x1]
    %v3479 = vld [vmem:[%s55] sm:$0x1]
    %v3480 = vld [vmem:[%s57] sm:$0x1]
    %v3481 = vld [vmem:[%s59] sm:$0xff]
    %v3482 = vld [vmem:[%s59 + $0x8] sm:$0xff]
    %v3483 = vld [vmem:[%s59 + $0x10] sm:$0xff]
    %v3484 = vld [vmem:[%s59 + $0x18] sm:$0xff]
    %v3485 = vld [vmem:[%s61] sm:$0x1]
    %v3486 = vld [vmem:[%s63] sm:$0xff]
    %v3487 = vld [vmem:[%s63 + $0x8] sm:$0xff]
    %v3488 = vld [vmem:[%s63 + $0x10] sm:$0xff]
    %v3489 = vld [vmem:[%s63 + $0x18] sm:$0xff]
    %v3490 = vld [vmem:[%s63 + $0x20] sm:$0xff]
    %v3491 = vld [vmem:[%s63 + $0x28] sm:$0xff]
    %v3492 = vld [vmem:[%s63 + $0x30] sm:$0xff]
    %v3493 = vld [vmem:[%s63 + $0x38] sm:$0xff]
    %v3494 = vld [vmem:[%s63 + $0x40] sm:$0xff]
    %v3495 = vld [vmem:[%s63 + $0x48] sm:$0xff]
    %v3496 = vld [vmem:[%s63 + $0x50] sm:$0xff]
    %v3497 = vld [vmem:[%s63 + $0x58] sm:$0xff]
    %v3498 = vld [vmem:[%s63 + $0x60] sm:$0xff]
    %v3499 = vld [vmem:[%s63 + $0x68] sm:$0xff]
    %v3500 = vld [vmem:[%s63 + $0x70] sm:$0xff]
    %v3501 = vld [vmem:[%s63 + $0x78] sm:$0xff]
    %v3502 = vld [vmem:[%s65] sm:$0x1]
    %v3503 = vsel %vm459, %v3463, 0.0
    %3504 = vadd.xlane.f32.xlu0 %v3503
    %v3505 = vpop.xlane.xlu0 %3504
    %v3506 = vsel %vm459, %v3464, 0.0
    %3507 = vadd.xlane.f32.xlu0 %v3506
    %v3508 = vpop.xlane.xlu0 %3507
    %vm3509 = vcmask 253952
    %v3510 = vsel %vm3509, %v206, 0.0
    %3511 = vadd.xlane.f32.xlu0 %v3510
    %v3512 = vpop.xlane.xlu0 %3511
    %v3513 = vmul.f32 %v3505, %v472
    %v3514 = vmul.f32 %v3508, %v472
    %v3515 = vmul.f32 %v3512, %v472
    %v3516 = vsub.f32 %v3463, %v3513
    %v3517 = vsub.f32 %v3464, %v3514
    %v3518 = vsub.f32 %v206, %v3515
    %v3519 = vmul.f32 %v3516, %v3516
    %v3520 = vmul.f32 %v3517, %v3517
    %v3521 = vmul.f32 %v3518, %v3518
    %v3522 = vsel %vm459, %v3519, 0.0
    %3523 = vadd.xlane.f32.xlu0 %v3522
    %v3524 = vpop.xlane.xlu0 %3523
    %v3525 = vsel %vm459, %v3520, 0.0
    %3526 = vadd.xlane.f32.xlu0 %v3525
    %v3527 = vpop.xlane.xlu0 %3526
    %v3528 = vsel %vm3509, %v3521, 0.0
    %3529 = vadd.xlane.f32.xlu0 %v3528
    %v3530 = vpop.xlane.xlu0 %3529
    %v3531 = vmul.f32 %v3524, %v472
    %v3532 = vmul.f32 %v3527, %v472
    %v3533 = vmul.f32 %v3530, %v472
    %v3534 = vadd.f32 %v3531, 1e-06
    %v3535 = vadd.f32 %v3532, 1e-06
    %v3536 = vadd.f32 %v3533, 1e-06
    %v3537 = vrsqrt.pop %v3534
    %v3538 = vrsqrt.pop %v3535
    %v3539 = vrsqrt.pop %v3536
    %v3540 = vmul.f32 %v3516, %v3537
    %v3541 = vmul.f32 %v3517, %v3538
    %v3542 = vmul.f32 %v3518, %v3539
    %v3544 = vlaneseq
    %v3545 = vshrl.u32 %v3544, 7
    %v3546 = vsub.s32 0, %v3545
    %v3547 = vrot.slane %v3467, %v3546
    %v3549 = vmul.f32 %v3540, %v3547
    %v3550 = vmul.f32 %v3541, %v3547
    %v3551 = vmul.f32 %v3542, %v3547
    %v3553 = vlaneseq
    %v3554 = vshrl.u32 %v3553, 7
    %v3555 = vsub.s32 0, %v3554
    %v3556 = vrot.slane %v3468, %v3555
    %v3558 = vadd.f32 %v3549, %v3556
    %v3559 = vadd.f32 %v3550, %v3556
    %v3560 = vadd.f32 %v3551, %v3556
    %v3562 = vlaneseq
    %v3563 = vshrl.u32 %v3562, 7
    %v3564 = vsub.s32 0, %v3563
    %v3565 = vrot.slane %v3473, %v3564
    %v3568 = vsel %vm459, %v3558, 0
    %v3571 = vsel %vm459, %v3559, 0
    %v3574 = vsel %vm459, %v3560, 0
    %3576 = vmatprep.subr.mxu0 0.0
    %3577 = vmatpush1.msra.mxu0 0.0
    %3578 = vmatprep.subr.mxu0 0.0
    %3579 = vmatpush1.msra.mxu0 0.0
    %3580 = vmatprep.subr.mxu0 0.0
    %3581 = vmatpush1.msra.mxu0 0.0
    %3582 = vmatprep.subr.mxu0 0.0
    %3583 = vmatpush1.msra.mxu0 0.0
    %3584 = vmatprep.subr.mxu0 0.0
    %3585 = vmatpush1.msra.mxu0 0.0
    %3586 = vmatprep.subr.mxu0 0.0
    %3587 = vmatpush1.msra.mxu0 0.0
    %3588 = vmatprep.subr.mxu0 0.0
    %3589 = vmatpush1.msra.mxu0 0.0
    %3590 = vmatprep.subr.mxu0 0.0
    %3591 = vmatpush1.msra.mxu0 0.0
    %3592 = vmatprep.subr.mxu0 0.0
    %3593 = vmatpush1.msra.mxu0 0.0
    %3594 = vmatprep.subr.mxu0 0.0
    %3595 = vmatpush1.msra.mxu0 0.0
    %3596 = vmatprep.subr.mxu0 0.0
    %3597 = vmatpush1.msra.mxu0 0.0
    %3598 = vmatprep.subr.mxu0 0.0
    %3599 = vmatpush1.msra.mxu0 0.0
    %3600 = vmatprep.subr.mxu0 0.0
    %3601 = vmatpush1.msra.mxu0 %v3472
    %3602 = vmatprep.subr.mxu0 0.0
    %3603 = vmatpush1.msra.mxu0 %v3471
    %3604 = vmatprep.subr.mxu0 0.0
    %3605 = vmatpush1.msra.mxu0 %v3470
    %3606 = vmatprep.subr.mxu0 0.0
    %3607 = vmatpush1.msra.mxu0 %v3469
    %3608 = vmatprep.subr.mxu0 0.0
    %3609 = vmatpush2.msra.mxu0 0.0
    %3610 = vmatprep.subr.mxu0 0.0
    %3611 = vmatpush2.msra.mxu0 0.0
    %3612 = vmatprep.subr.mxu0 0.0
    %3613 = vmatpush2.msra.mxu0 0.0
    %3614 = vmatprep.subr.mxu0 0.0
    %3615 = vmatpush2.msra.mxu0 0.0
    %3616 = vmatprep.subr.mxu0 0.0
    %3617 = vmatpush2.msra.mxu0 0.0
    %3618 = vmatprep.subr.mxu0 0.0
    %3619 = vmatpush2.msra.mxu0 0.0
    %3620 = vmatprep.subr.mxu0 0.0
    %3621 = vmatpush2.msra.mxu0 0.0
    %3622 = vmatprep.subr.mxu0 0.0
    %3623 = vmatpush2.msra.mxu0 0.0
    %3624 = vmatprep.subr.mxu0 0.0
    %3625 = vmatpush2.msra.mxu0 0.0
    %3626 = vmatprep.subr.mxu0 0.0
    %3627 = vmatpush2.msra.mxu0 0.0
    %3628 = vmatprep.subr.mxu0 0.0
    %3629 = vmatpush2.msra.mxu0 0.0
    %3630 = vmatprep.subr.mxu0 0.0
    %3631 = vmatpush2.msra.mxu0 0.0
    %3632 = vmatprep.subr.mxu0 0.0
    %3633 = vmatpush2.msra.mxu0 0.0
    %3634 = vmatprep.subr.mxu0 0.0
    %3635 = vmatpush2.msra.mxu0 0.0
    %3636 = vmatprep.subr.mxu0 0.0
    %3637 = vmatpush2.msra.mxu0 0.0
    %3638 = vmatprep.subr.mxu0 0.0
    %3639 = vmatpush2.msra.mxu0 0.0
    %3640 = vmatprep.mubr.f32.mxu0 0.0
    %3641 = vmatmul.mubr.f32.gmra.mxu0 %v3568
    %v3642 = vpop.f32.mrf.mxu0
    %v3643 = vadd.f32 %v3565, %v3642
    %v3644 = vpop.f32.mrf.mxu0
    %3645 = vmatprep.mubr.f32.mxu0 0.0
    %3646 = vmatmul.mubr.f32.gmra.mxu0 %v3571
    %v3647 = vpop.f32.mrf.mxu0
    %v3648 = vadd.f32 %v3565, %v3647
    %v3649 = vpop.f32.mrf.mxu0
    %3650 = vmatprep.mubr.f32.mxu0 0.0
    %3651 = vmatmul.mubr.f32.gmra.mxu0 %v3574
    %v3652 = vpop.f32.mrf.mxu0
    %v3653 = vadd.f32 %v3565, %v3652
    %v3654 = vpop.f32.mrf.mxu0
    %3655 = vdwg.mxu0
    %v3656 = vmul.f32 %v3643, 0.35355338
    %v3657 = vmul.f32 %v3648, 0.35355338
    %v3658 = vmul.f32 %v3653, 0.35355338
    %3662 = vrot.lane.b32.xlu0 %v3643, 96
    %v3663 = vpop.permute.xlu0 %3662
    %3664 = vrot.lane.b32.xlu0 %v3648, 96
    %v3665 = vpop.permute.xlu0 %3664
    %3666 = vrot.lane.b32.xlu0 %v3653, 96
    %v3667 = vpop.permute.xlu0 %3666
    %v3669 = vsel %vm735, %v3656, 0
    %v3672 = vsel %vm735, %v3657, 0
    %v3675 = vsel %vm735, %v3658, 0
    %v3677 = vsel %vm735, %v3663, 0
    %v3679 = vsel %vm735, %v3665, 0
    %v3681 = vsel %vm735, %v3667, 0
    %3683 = vmatprep.subr.mxu0 0.0
    %3684 = vmatpush1.xpose.msra.mxu0 0.0
    %3685 = vmatprep.subr.mxu0 0.0
    %3686 = vmatpush1.xpose.msra.mxu0 0.0
    %3687 = vmatprep.subr.mxu0 0.0
    %3688 = vmatpush1.xpose.msra.mxu0 0.0
    %3689 = vmatprep.subr.mxu0 0.0
    %3690 = vmatpush1.xpose.msra.mxu0 0.0
    %3691 = vmatprep.subr.mxu0 0.0
    %3692 = vmatpush1.xpose.msra.mxu0 0.0
    %3693 = vmatprep.subr.mxu0 0.0
    %3694 = vmatpush1.xpose.msra.mxu0 0.0
    %3695 = vmatprep.subr.mxu0 0.0
    %3696 = vmatpush1.xpose.msra.mxu0 0.0
    %3697 = vmatprep.subr.mxu0 0.0
    %3698 = vmatpush1.xpose.msra.mxu0 0.0
    %3699 = vmatprep.subr.mxu0 0.0
    %3700 = vmatpush1.xpose.msra.mxu0 0.0
    %3701 = vmatprep.subr.mxu0 0.0
    %3702 = vmatpush1.xpose.msra.mxu0 0.0
    %3703 = vmatprep.subr.mxu0 0.0
    %3704 = vmatpush1.xpose.msra.mxu0 0.0
    %3705 = vmatprep.subr.mxu0 0.0
    %3706 = vmatpush1.xpose.msra.mxu0 0.0
    %3707 = vmatprep.subr.mxu0 0.0
    %3708 = vmatpush1.xpose.msra.mxu0 0.0
    %3709 = vmatprep.subr.mxu0 0.0
    %3710 = vmatpush1.xpose.msra.mxu0 %v3681
    %3711 = vmatprep.subr.mxu0 0.0
    %3712 = vmatpush1.xpose.msra.mxu0 %v3679
    %3713 = vmatprep.subr.mxu0 0.0
    %3714 = vmatpush1.xpose.msra.mxu0 %v3677
    %3715 = vmatprep.subr.mxu0 0.0
    %3716 = vmatpush2.xpose.msra.mxu0 0.0
    %3717 = vmatprep.subr.mxu0 0.0
    %3718 = vmatpush2.xpose.msra.mxu0 0.0
    %3719 = vmatprep.subr.mxu0 0.0
    %3720 = vmatpush2.xpose.msra.mxu0 0.0
    %3721 = vmatprep.subr.mxu0 0.0
    %3722 = vmatpush2.xpose.msra.mxu0 0.0
    %3723 = vmatprep.subr.mxu0 0.0
    %3724 = vmatpush2.xpose.msra.mxu0 0.0
    %3725 = vmatprep.subr.mxu0 0.0
    %3726 = vmatpush2.xpose.msra.mxu0 0.0
    %3727 = vmatprep.subr.mxu0 0.0
    %3728 = vmatpush2.xpose.msra.mxu0 0.0
    %3729 = vmatprep.subr.mxu0 0.0
    %3730 = vmatpush2.xpose.msra.mxu0 0.0
    %3731 = vmatprep.subr.mxu0 0.0
    %3732 = vmatpush2.xpose.msra.mxu0 0.0
    %3733 = vmatprep.subr.mxu0 0.0
    %3734 = vmatpush2.xpose.msra.mxu0 0.0
    %3735 = vmatprep.subr.mxu0 0.0
    %3736 = vmatpush2.xpose.msra.mxu0 0.0
    %3737 = vmatprep.subr.mxu0 0.0
    %3738 = vmatpush2.xpose.msra.mxu0 0.0
    %3739 = vmatprep.subr.mxu0 0.0
    %3740 = vmatpush2.xpose.msra.mxu0 0.0
    %3741 = vmatprep.subr.mxu0 0.0
    %3742 = vmatpush2.xpose.msra.mxu0 0.0
    %3743 = vmatprep.subr.mxu0 0.0
    %3744 = vmatpush2.xpose.msra.mxu0 0.0
    %3745 = vmatprep.subr.mxu0 0.0
    %3746 = vmatpush2.xpose.msra.mxu0 0.0
    %3747 = vmatprep.mubr.f32.mxu0 0.0
    %3748 = vmatmul.mubr.f32.gmra.mxu0 %v3669
    %v3749 = vpop.f32.mrf.mxu0
    %v3750 = vadd.f32 0.0, %v3749
    %v3751 = vpop.f32.mrf.mxu0
    %3752 = vmatprep.mubr.f32.mxu0 0.0
    %3753 = vmatmul.mubr.f32.gmra.mxu0 %v3672
    %v3754 = vpop.f32.mrf.mxu0
    %v3755 = vadd.f32 0.0, %v3754
    %v3756 = vpop.f32.mrf.mxu0
    %3757 = vmatprep.mubr.f32.mxu0 0.0
    %3758 = vmatmul.mubr.f32.gmra.mxu0 %v3675
    %v3759 = vpop.f32.mrf.mxu0
    %v3760 = vadd.f32 0.0, %v3759
    %v3761 = vpop.f32.mrf.mxu0
    %3762 = vdwg.mxu0
    %vm3763 = vcmask 138240
    %v3764 = vsel %vm3763, %v3750, -inf
    %3765 = vmax.xlane.f32.xlu0 %v3764
    %v3766 = vpop.xlane.xlu0 %3765
    %v3767 = vsel %vm3763, %v3755, -inf
    %3768 = vmax.xlane.f32.xlu0 %v3767
    %v3769 = vpop.xlane.xlu0 %3768
    %vm3770 = vcmask 131072
    %v3771 = vsel %vm3770, %v3760, -inf
    %3772 = vmax.xlane.f32.xlu0 %v3771
    %v3773 = vpop.xlane.xlu0 %3772
    %v3774 = vsub.f32 %v3750, %v3766
    %v3775 = vsub.f32 %v3755, %v3769
    %v3776 = vsub.f32 %v3760, %v3773
    %v3777 = vmul.f32 %v3774, 1.442695
    %v3778 = vpow.pop %v3777
    %v3779 = vmul.f32 %v3775, 1.442695
    %v3780 = vpow.pop %v3779
    %v3781 = vmul.f32 %v3776, 1.442695
    %v3782 = vpow.pop %v3781
    %v3783 = vsel %vm3763, %v3778, 0.0
    %3784 = vadd.xlane.f32.xlu0 %v3783
    %v3785 = vpop.xlane.xlu0 %3784
    %v3786 = vsel %vm3763, %v3780, 0.0
    %3787 = vadd.xlane.f32.xlu0 %v3786
    %v3788 = vpop.xlane.xlu0 %3787
    %v3789 = vsel %vm3770, %v3782, 0.0
    %3790 = vadd.xlane.f32.xlu0 %v3789
    %v3791 = vpop.xlane.xlu0 %3790
    %v3792 = vrcp.pop %v3785
    %v3793 = vmul.f32 %v3778, %v3792
    %v3794 = vrcp.pop %v3788
    %v3795 = vmul.f32 %v3780, %v3794
    %v3796 = vrcp.pop %v3791
    %v3797 = vmul.f32 %v3782, %v3796
    %3798 = vrot.lane.b32.xlu0 %v3643, 64
    %v3799 = vpop.permute.xlu0 %3798
    %3800 = vrot.lane.b32.xlu0 %v3648, 64
    %v3801 = vpop.permute.xlu0 %3800
    %3802 = vrot.lane.b32.xlu0 %v3653, 64
    %v3803 = vpop.permute.xlu0 %3802
    %v3807 = vsel %vm3763, %v3793, 0
    %v3810 = vsel %vm3763, %v3795, 0
    %v3813 = vsel %vm3763, %v3797, 0
    %vm3815 = vcmask 1040384
    %v3816 = vsel %vm3815, %v3803, 0
    %3818 = vmatprep.subr.mxu0 0.0
    %3819 = vmatpush1.msra.mxu0 0.0
    %3820 = vmatprep.subr.mxu0 0.0
    %3821 = vmatpush1.msra.mxu0 0.0
    %3822 = vmatprep.subr.mxu0 0.0
    %3823 = vmatpush1.msra.mxu0 0.0
    %3824 = vmatprep.subr.mxu0 0.0
    %3825 = vmatpush1.msra.mxu0 0.0
    %3826 = vmatprep.subr.mxu0 0.0
    %3827 = vmatpush1.msra.mxu0 0.0
    %3828 = vmatprep.subr.mxu0 0.0
    %3829 = vmatpush1.msra.mxu0 0.0
    %3830 = vmatprep.subr.mxu0 0.0
    %3831 = vmatpush1.msra.mxu0 0.0
    %3832 = vmatprep.subr.mxu0 0.0
    %3833 = vmatpush1.msra.mxu0 0.0
    %3834 = vmatprep.subr.mxu0 0.0
    %3835 = vmatpush1.msra.mxu0 0.0
    %3836 = vmatprep.subr.mxu0 0.0
    %3837 = vmatpush1.msra.mxu0 0.0
    %3838 = vmatprep.subr.mxu0 0.0
    %3839 = vmatpush1.msra.mxu0 0.0
    %3840 = vmatprep.subr.mxu0 0.0
    %3841 = vmatpush1.msra.mxu0 0.0
    %3842 = vmatprep.subr.mxu0 0.0
    %3843 = vmatpush1.msra.mxu0 0.0
    %3844 = vmatprep.subr.mxu0 0.0
    %3845 = vmatpush1.msra.mxu0 %v3816
    %3846 = vmatprep.subr.mxu0 0.0
    %3847 = vmatpush1.msra.mxu0 %v3801
    %3848 = vmatprep.subr.mxu0 0.0
    %3849 = vmatpush1.msra.mxu0 %v3799
    %3850 = vmatprep.subr.mxu0 0.0
    %3851 = vmatpush2.msra.mxu0 0.0
    %3852 = vmatprep.subr.mxu0 0.0
    %3853 = vmatpush2.msra.mxu0 0.0
    %3854 = vmatprep.subr.mxu0 0.0
    %3855 = vmatpush2.msra.mxu0 0.0
    %3856 = vmatprep.subr.mxu0 0.0
    %3857 = vmatpush2.msra.mxu0 0.0
    %3858 = vmatprep.subr.mxu0 0.0
    %3859 = vmatpush2.msra.mxu0 0.0
    %3860 = vmatprep.subr.mxu0 0.0
    %3861 = vmatpush2.msra.mxu0 0.0
    %3862 = vmatprep.subr.mxu0 0.0
    %3863 = vmatpush2.msra.mxu0 0.0
    %3864 = vmatprep.subr.mxu0 0.0
    %3865 = vmatpush2.msra.mxu0 0.0
    %3866 = vmatprep.subr.mxu0 0.0
    %3867 = vmatpush2.msra.mxu0 0.0
    %3868 = vmatprep.subr.mxu0 0.0
    %3869 = vmatpush2.msra.mxu0 0.0
    %3870 = vmatprep.subr.mxu0 0.0
    %3871 = vmatpush2.msra.mxu0 0.0
    %3872 = vmatprep.subr.mxu0 0.0
    %3873 = vmatpush2.msra.mxu0 0.0
    %3874 = vmatprep.subr.mxu0 0.0
    %3875 = vmatpush2.msra.mxu0 0.0
    %3876 = vmatprep.subr.mxu0 0.0
    %3877 = vmatpush2.msra.mxu0 0.0
    %3878 = vmatprep.subr.mxu0 0.0
    %3879 = vmatpush2.msra.mxu0 0.0
    %3880 = vmatprep.subr.mxu0 0.0
    %3881 = vmatpush2.msra.mxu0 0.0
    %3882 = vmatprep.mubr.f32.mxu0 0.0
    %3883 = vmatmul.mubr.f32.gmra.mxu0 %v3807
    %v3884 = vpop.f32.mrf.mxu0
    %v3885 = vadd.f32 0.0, %v3884
    %v3886 = vpop.f32.mrf.mxu0
    %3887 = vmatprep.mubr.f32.mxu0 0.0
    %3888 = vmatmul.mubr.f32.gmra.mxu0 %v3810
    %v3889 = vpop.f32.mrf.mxu0
    %v3890 = vadd.f32 0.0, %v3889
    %v3891 = vpop.f32.mrf.mxu0
    %3892 = vmatprep.mubr.f32.mxu0 0.0
    %3893 = vmatmul.mubr.f32.gmra.mxu0 %v3813
    %v3894 = vpop.f32.mrf.mxu0
    %v3895 = vadd.f32 0.0, %v3894
    %v3896 = vpop.f32.mrf.mxu0
    %3897 = vdwg.mxu0
    %3898 = vrot.lane.b32.xlu0 %v3656, 120
    %v3899 = vpop.permute.xlu0 %3898
    %3900 = vrot.lane.b32.xlu0 %v3657, 120
    %v3901 = vpop.permute.xlu0 %3900
    %3902 = vrot.lane.b32.xlu0 %v3658, 120
    %v3903 = vpop.permute.xlu0 %3902
    %3904 = vrot.lane.b32.xlu0 %v3643, 88
    %v3905 = vpop.permute.xlu0 %3904
    %3906 = vrot.lane.b32.xlu0 %v3648, 88
    %v3907 = vpop.permute.xlu0 %3906
    %3908 = vrot.lane.b32.xlu0 %v3653, 88
    %v3909 = vpop.permute.xlu0 %3908
    %v3910 = vsel %vm735, %v3899, 0
    %v3912 = vsel %vm735, %v3901, 0
    %v3914 = vsel %vm735, %v3903, 0
    %v3916 = vsel %vm735, %v3905, 0
    %v3918 = vsel %vm735, %v3907, 0
    %v3920 = vsel %vm735, %v3909, 0
    %3922 = vmatprep.subr.mxu0 0.0
    %3923 = vmatpush1.xpose.msra.mxu0 0.0
    %3924 = vmatprep.subr.mxu0 0.0
    %3925 = vmatpush1.xpose.msra.mxu0 0.0
    %3926 = vmatprep.subr.mxu0 0.0
    %3927 = vmatpush1.xpose.msra.mxu0 0.0
    %3928 = vmatprep.subr.mxu0 0.0
    %3929 = vmatpush1.xpose.msra.mxu0 0.0
    %3930 = vmatprep.subr.mxu0 0.0
    %3931 = vmatpush1.xpose.msra.mxu0 0.0
    %3932 = vmatprep.subr.mxu0 0.0
    %3933 = vmatpush1.xpose.msra.mxu0 0.0
    %3934 = vmatprep.subr.mxu0 0.0
    %3935 = vmatpush1.xpose.msra.mxu0 0.0
    %3936 = vmatprep.subr.mxu0 0.0
    %3937 = vmatpush1.xpose.msra.mxu0 0.0
    %3938 = vmatprep.subr.mxu0 0.0
    %3939 = vmatpush1.xpose.msra.mxu0 0.0
    %3940 = vmatprep.subr.mxu0 0.0
    %3941 = vmatpush1.xpose.msra.mxu0 0.0
    %3942 = vmatprep.subr.mxu0 0.0
    %3943 = vmatpush1.xpose.msra.mxu0 0.0
    %3944 = vmatprep.subr.mxu0 0.0
    %3945 = vmatpush1.xpose.msra.mxu0 0.0
    %3946 = vmatprep.subr.mxu0 0.0
    %3947 = vmatpush1.xpose.msra.mxu0 0.0
    %3948 = vmatprep.subr.mxu0 0.0
    %3949 = vmatpush1.xpose.msra.mxu0 %v3920
    %3950 = vmatprep.subr.mxu0 0.0
    %3951 = vmatpush1.xpose.msra.mxu0 %v3918
    %3952 = vmatprep.subr.mxu0 0.0
    %3953 = vmatpush1.xpose.msra.mxu0 %v3916
    %3954 = vmatprep.subr.mxu0 0.0
    %3955 = vmatpush2.xpose.msra.mxu0 0.0
    %3956 = vmatprep.subr.mxu0 0.0
    %3957 = vmatpush2.xpose.msra.mxu0 0.0
    %3958 = vmatprep.subr.mxu0 0.0
    %3959 = vmatpush2.xpose.msra.mxu0 0.0
    %3960 = vmatprep.subr.mxu0 0.0
    %3961 = vmatpush2.xpose.msra.mxu0 0.0
    %3962 = vmatprep.subr.mxu0 0.0
    %3963 = vmatpush2.xpose.msra.mxu0 0.0
    %3964 = vmatprep.subr.mxu0 0.0
    %3965 = vmatpush2.xpose.msra.mxu0 0.0
    %3966 = vmatprep.subr.mxu0 0.0
    %3967 = vmatpush2.xpose.msra.mxu0 0.0
    %3968 = vmatprep.subr.mxu0 0.0
    %3969 = vmatpush2.xpose.msra.mxu0 0.0
    %3970 = vmatprep.subr.mxu0 0.0
    %3971 = vmatpush2.xpose.msra.mxu0 0.0
    %3972 = vmatprep.subr.mxu0 0.0
    %3973 = vmatpush2.xpose.msra.mxu0 0.0
    %3974 = vmatprep.subr.mxu0 0.0
    %3975 = vmatpush2.xpose.msra.mxu0 0.0
    %3976 = vmatprep.subr.mxu0 0.0
    %3977 = vmatpush2.xpose.msra.mxu0 0.0
    %3978 = vmatprep.subr.mxu0 0.0
    %3979 = vmatpush2.xpose.msra.mxu0 0.0
    %3980 = vmatprep.subr.mxu0 0.0
    %3981 = vmatpush2.xpose.msra.mxu0 0.0
    %3982 = vmatprep.subr.mxu0 0.0
    %3983 = vmatpush2.xpose.msra.mxu0 0.0
    %3984 = vmatprep.subr.mxu0 0.0
    %3985 = vmatpush2.xpose.msra.mxu0 0.0
    %3986 = vmatprep.mubr.f32.mxu0 0.0
    %3987 = vmatmul.mubr.f32.gmra.mxu0 %v3910
    %v3988 = vpop.f32.mrf.mxu0
    %v3989 = vadd.f32 0.0, %v3988
    %v3990 = vpop.f32.mrf.mxu0
    %3991 = vmatprep.mubr.f32.mxu0 0.0
    %3992 = vmatmul.mubr.f32.gmra.mxu0 %v3912
    %v3993 = vpop.f32.mrf.mxu0
    %v3994 = vadd.f32 0.0, %v3993
    %v3995 = vpop.f32.mrf.mxu0
    %3996 = vmatprep.mubr.f32.mxu0 0.0
    %3997 = vmatmul.mubr.f32.gmra.mxu0 %v3914
    %v3998 = vpop.f32.mrf.mxu0
    %v3999 = vadd.f32 0.0, %v3998
    %v4000 = vpop.f32.mrf.mxu0
    %4001 = vdwg.mxu0
    %v4002 = vsel %vm3763, %v3989, -inf
    %4003 = vmax.xlane.f32.xlu0 %v4002
    %v4004 = vpop.xlane.xlu0 %4003
    %v4005 = vsel %vm3763, %v3994, -inf
    %4006 = vmax.xlane.f32.xlu0 %v4005
    %v4007 = vpop.xlane.xlu0 %4006
    %v4008 = vsel %vm3770, %v3999, -inf
    %4009 = vmax.xlane.f32.xlu0 %v4008
    %v4010 = vpop.xlane.xlu0 %4009
    %v4011 = vsub.f32 %v3989, %v4004
    %v4012 = vsub.f32 %v3994, %v4007
    %v4013 = vsub.f32 %v3999, %v4010
    %v4014 = vmul.f32 %v4011, 1.442695
    %v4015 = vpow.pop %v4014
    %v4016 = vmul.f32 %v4012, 1.442695
    %v4017 = vpow.pop %v4016
    %v4018 = vmul.f32 %v4013, 1.442695
    %v4019 = vpow.pop %v4018
    %v4020 = vsel %vm3763, %v4015, 0.0
    %4021 = vadd.xlane.f32.xlu0 %v4020
    %v4022 = vpop.xlane.xlu0 %4021
    %v4023 = vsel %vm3763, %v4017, 0.0
    %4024 = vadd.xlane.f32.xlu0 %v4023
    %v4025 = vpop.xlane.xlu0 %4024
    %v4026 = vsel %vm3770, %v4019, 0.0
    %4027 = vadd.xlane.f32.xlu0 %v4026
    %v4028 = vpop.xlane.xlu0 %4027
    %v4029 = vrcp.pop %v4022
    %v4030 = vmul.f32 %v4015, %v4029
    %v4031 = vrcp.pop %v4025
    %v4032 = vmul.f32 %v4017, %v4031
    %v4033 = vrcp.pop %v4028
    %v4034 = vmul.f32 %v4019, %v4033
    %4035 = vrot.lane.b32.xlu0 %v3643, 56
    %v4036 = vpop.permute.xlu0 %4035
    %4037 = vrot.lane.b32.xlu0 %v3648, 56
    %v4038 = vpop.permute.xlu0 %4037
    %4039 = vrot.lane.b32.xlu0 %v3653, 56
    %v4040 = vpop.permute.xlu0 %4039
    %v4044 = vsel %vm3763, %v4030, 0
    %v4047 = vsel %vm3763, %v4032, 0
    %v4050 = vsel %vm3763, %v4034, 0
    %v4052 = vsel %vm3815, %v4040, 0
    %4054 = vmatprep.subr.mxu0 0.0
    %4055 = vmatpush1.msra.mxu0 0.0
    %4056 = vmatprep.subr.mxu0 0.0
    %4057 = vmatpush1.msra.mxu0 0.0
    %4058 = vmatprep.subr.mxu0 0.0
    %4059 = vmatpush1.msra.mxu0 0.0
    %4060 = vmatprep.subr.mxu0 0.0
    %4061 = vmatpush1.msra.mxu0 0.0
    %4062 = vmatprep.subr.mxu0 0.0
    %4063 = vmatpush1.msra.mxu0 0.0
    %4064 = vmatprep.subr.mxu0 0.0
    %4065 = vmatpush1.msra.mxu0 0.0
    %4066 = vmatprep.subr.mxu0 0.0
    %4067 = vmatpush1.msra.mxu0 0.0
    %4068 = vmatprep.subr.mxu0 0.0
    %4069 = vmatpush1.msra.mxu0 0.0
    %4070 = vmatprep.subr.mxu0 0.0
    %4071 = vmatpush1.msra.mxu0 0.0
    %4072 = vmatprep.subr.mxu0 0.0
    %4073 = vmatpush1.msra.mxu0 0.0
    %4074 = vmatprep.subr.mxu0 0.0
    %4075 = vmatpush1.msra.mxu0 0.0
    %4076 = vmatprep.subr.mxu0 0.0
    %4077 = vmatpush1.msra.mxu0 0.0
    %4078 = vmatprep.subr.mxu0 0.0
    %4079 = vmatpush1.msra.mxu0 0.0
    %4080 = vmatprep.subr.mxu0 0.0
    %4081 = vmatpush1.msra.mxu0 %v4052
    %4082 = vmatprep.subr.mxu0 0.0
    %4083 = vmatpush1.msra.mxu0 %v4038
    %4084 = vmatprep.subr.mxu0 0.0
    %4085 = vmatpush1.msra.mxu0 %v4036
    %4086 = vmatprep.subr.mxu0 0.0
    %4087 = vmatpush2.msra.mxu0 0.0
    %4088 = vmatprep.subr.mxu0 0.0
    %4089 = vmatpush2.msra.mxu0 0.0
    %4090 = vmatprep.subr.mxu0 0.0
    %4091 = vmatpush2.msra.mxu0 0.0
    %4092 = vmatprep.subr.mxu0 0.0
    %4093 = vmatpush2.msra.mxu0 0.0
    %4094 = vmatprep.subr.mxu0 0.0
    %4095 = vmatpush2.msra.mxu0 0.0
    %4096 = vmatprep.subr.mxu0 0.0
    %4097 = vmatpush2.msra.mxu0 0.0
    %4098 = vmatprep.subr.mxu0 0.0
    %4099 = vmatpush2.msra.mxu0 0.0
    %4100 = vmatprep.subr.mxu0 0.0
    %4101 = vmatpush2.msra.mxu0 0.0
    %4102 = vmatprep.subr.mxu0 0.0
    %4103 = vmatpush2.msra.mxu0 0.0
    %4104 = vmatprep.subr.mxu0 0.0
    %4105 = vmatpush2.msra.mxu0 0.0
    %4106 = vmatprep.subr.mxu0 0.0
    %4107 = vmatpush2.msra.mxu0 0.0
    %4108 = vmatprep.subr.mxu0 0.0
    %4109 = vmatpush2.msra.mxu0 0.0
    %4110 = vmatprep.subr.mxu0 0.0
    %4111 = vmatpush2.msra.mxu0 0.0
    %4112 = vmatprep.subr.mxu0 0.0
    %4113 = vmatpush2.msra.mxu0 0.0
    %4114 = vmatprep.subr.mxu0 0.0
    %4115 = vmatpush2.msra.mxu0 0.0
    %4116 = vmatprep.subr.mxu0 0.0
    %4117 = vmatpush2.msra.mxu0 0.0
    %4118 = vmatprep.mubr.f32.mxu0 0.0
    %4119 = vmatmul.mubr.f32.gmra.mxu0 %v4044
    %v4120 = vpop.f32.mrf.mxu0
    %v4121 = vadd.f32 0.0, %v4120
    %v4122 = vpop.f32.mrf.mxu0
    %4123 = vmatprep.mubr.f32.mxu0 0.0
    %4124 = vmatmul.mubr.f32.gmra.mxu0 %v4047
    %v4125 = vpop.f32.mrf.mxu0
    %v4126 = vadd.f32 0.0, %v4125
    %v4127 = vpop.f32.mrf.mxu0
    %4128 = vmatprep.mubr.f32.mxu0 0.0
    %4129 = vmatmul.mubr.f32.gmra.mxu0 %v4050
    %v4130 = vpop.f32.mrf.mxu0
    %v4131 = vadd.f32 0.0, %v4130
    %v4132 = vpop.f32.mrf.mxu0
    %4133 = vdwg.mxu0
    %v4135 = vsel %vm735, %v4121, 0
    %v4138 = vsel %vm735, %v4126, 0
    %v4141 = vsel %vm735, %v4131, 0
    %4143 = vmatprep.subr.mxu0 0.0
    %4144 = vmatpush1.msra.mxu0 0.0
    %4145 = vmatprep.subr.mxu0 0.0
    %4146 = vmatpush1.msra.mxu0 0.0
    %4147 = vmatprep.subr.mxu0 0.0
    %4148 = vmatpush1.msra.mxu0 0.0
    %4149 = vmatprep.subr.mxu0 0.0
    %4150 = vmatpush1.msra.mxu0 0.0
    %4151 = vmatprep.subr.mxu0 0.0
    %4152 = vmatpush1.msra.mxu0 0.0
    %4153 = vmatprep.subr.mxu0 0.0
    %4154 = vmatpush1.msra.mxu0 0.0
    %4155 = vmatprep.subr.mxu0 0.0
    %4156 = vmatpush1.msra.mxu0 0.0
    %4157 = vmatprep.subr.mxu0 0.0
    %4158 = vmatpush1.msra.mxu0 0.0
    %4159 = vmatprep.subr.mxu0 0.0
    %4160 = vmatpush1.msra.mxu0 0.0
    %4161 = vmatprep.subr.mxu0 0.0
    %4162 = vmatpush1.msra.mxu0 0.0
    %4163 = vmatprep.subr.mxu0 0.0
    %4164 = vmatpush1.msra.mxu0 0.0
    %4165 = vmatprep.subr.mxu0 0.0
    %4166 = vmatpush1.msra.mxu0 0.0
    %4167 = vmatprep.subr.mxu0 0.0
    %4168 = vmatpush1.msra.mxu0 0.0
    %4169 = vmatprep.subr.mxu0 0.0
    %4170 = vmatpush1.msra.mxu0 0.0
    %4171 = vmatprep.subr.mxu0 0.0
    %4172 = vmatpush1.msra.mxu0 0.0
    %4173 = vmatprep.subr.mxu0 0.0
    %4174 = vmatpush1.msra.mxu0 %v3475
    %4175 = vmatprep.subr.mxu0 0.0
    %4176 = vmatpush2.msra.mxu0 0.0
    %4177 = vmatprep.subr.mxu0 0.0
    %4178 = vmatpush2.msra.mxu0 0.0
    %4179 = vmatprep.subr.mxu0 0.0
    %4180 = vmatpush2.msra.mxu0 0.0
    %4181 = vmatprep.subr.mxu0 0.0
    %4182 = vmatpush2.msra.mxu0 0.0
    %4183 = vmatprep.subr.mxu0 0.0
    %4184 = vmatpush2.msra.mxu0 0.0
    %4185 = vmatprep.subr.mxu0 0.0
    %4186 = vmatpush2.msra.mxu0 0.0
    %4187 = vmatprep.subr.mxu0 0.0
    %4188 = vmatpush2.msra.mxu0 0.0
    %4189 = vmatprep.subr.mxu0 0.0
    %4190 = vmatpush2.msra.mxu0 0.0
    %4191 = vmatprep.subr.mxu0 0.0
    %4192 = vmatpush2.msra.mxu0 0.0
    %4193 = vmatprep.subr.mxu0 0.0
    %4194 = vmatpush2.msra.mxu0 0.0
    %4195 = vmatprep.subr.mxu0 0.0
    %4196 = vmatpush2.msra.mxu0 0.0
    %4197 = vmatprep.subr.mxu0 0.0
    %4198 = vmatpush2.msra.mxu0 0.0
    %4199 = vmatprep.subr.mxu0 0.0
    %4200 = vmatpush2.msra.mxu0 0.0
    %4201 = vmatprep.subr.mxu0 0.0
    %4202 = vmatpush2.msra.mxu0 0.0
    %4203 = vmatprep.subr.mxu0 0.0
    %4204 = vmatpush2.msra.mxu0 0.0
    %4205 = vmatprep.subr.mxu0 0.0
    %4206 = vmatpush2.msra.mxu0 0.0
    %4207 = vmatprep.mubr.f32.mxu0 0.0
    %4208 = vmatmul.mubr.f32.gmra.mxu0 %v4135
    %v4209 = vpop.f32.mrf.mxu0
    %v4210 = vadd.f32 0.0, %v4209
    %v4211 = vpop.f32.mrf.mxu0
    %4212 = vmatprep.mubr.f32.mxu0 0.0
    %4213 = vmatmul.mubr.f32.gmra.mxu0 %v4138
    %v4214 = vpop.f32.mrf.mxu0
    %v4215 = vadd.f32 0.0, %v4214
    %v4216 = vpop.f32.mrf.mxu0
    %4217 = vmatprep.mubr.f32.mxu0 0.0
    %4218 = vmatmul.mubr.f32.gmra.mxu0 %v4141
    %v4219 = vpop.f32.mrf.mxu0
    %v4220 = vadd.f32 0.0, %v4219
    %v4221 = vpop.f32.mrf.mxu0
    %4222 = vdwg.mxu0
    %v4224 = vsel %vm735, %v3885, 0
    %v4227 = vsel %vm735, %v3890, 0
    %v4230 = vsel %vm735, %v3895, 0
    %4232 = vmatprep.subr.mxu0 0.0
    %4233 = vmatpush1.msra.mxu0 0.0
    %4234 = vmatprep.subr.mxu0 0.0
    %4235 = vmatpush1.msra.mxu0 0.0
    %4236 = vmatprep.subr.mxu0 0.0
    %4237 = vmatpush1.msra.mxu0 0.0
    %4238 = vmatprep.subr.mxu0 0.0
    %4239 = vmatpush1.msra.mxu0 0.0
    %4240 = vmatprep.subr.mxu0 0.0
    %4241 = vmatpush1.msra.mxu0 0.0
    %4242 = vmatprep.subr.mxu0 0.0
    %4243 = vmatpush1.msra.mxu0 0.0
    %4244 = vmatprep.subr.mxu0 0.0
    %4245 = vmatpush1.msra.mxu0 0.0
    %4246 = vmatprep.subr.mxu0 0.0
    %4247 = vmatpush1.msra.mxu0 0.0
    %4248 = vmatprep.subr.mxu0 0.0
    %4249 = vmatpush1.msra.mxu0 0.0
    %4250 = vmatprep.subr.mxu0 0.0
    %4251 = vmatpush1.msra.mxu0 0.0
    %4252 = vmatprep.subr.mxu0 0.0
    %4253 = vmatpush1.msra.mxu0 0.0
    %4254 = vmatprep.subr.mxu0 0.0
    %4255 = vmatpush1.msra.mxu0 0.0
    %4256 = vmatprep.subr.mxu0 0.0
    %4257 = vmatpush1.msra.mxu0 0.0
    %4258 = vmatprep.subr.mxu0 0.0
    %4259 = vmatpush1.msra.mxu0 0.0
    %4260 = vmatprep.subr.mxu0 0.0
    %4261 = vmatpush1.msra.mxu0 0.0
    %4262 = vmatprep.subr.mxu0 0.0
    %4263 = vmatpush1.msra.mxu0 %v3474
    %4264 = vmatprep.subr.mxu0 0.0
    %4265 = vmatpush2.msra.mxu0 0.0
    %4266 = vmatprep.subr.mxu0 0.0
    %4267 = vmatpush2.msra.mxu0 0.0
    %4268 = vmatprep.subr.mxu0 0.0
    %4269 = vmatpush2.msra.mxu0 0.0
    %4270 = vmatprep.subr.mxu0 0.0
    %4271 = vmatpush2.msra.mxu0 0.0
    %4272 = vmatprep.subr.mxu0 0.0
    %4273 = vmatpush2.msra.mxu0 0.0
    %4274 = vmatprep.subr.mxu0 0.0
    %4275 = vmatpush2.msra.mxu0 0.0
    %4276 = vmatprep.subr.mxu0 0.0
    %4277 = vmatpush2.msra.mxu0 0.0
    %4278 = vmatprep.subr.mxu0 0.0
    %4279 = vmatpush2.msra.mxu0 0.0
    %4280 = vmatprep.subr.mxu0 0.0
    %4281 = vmatpush2.msra.mxu0 0.0
    %4282 = vmatprep.subr.mxu0 0.0
    %4283 = vmatpush2.msra.mxu0 0.0
    %4284 = vmatprep.subr.mxu0 0.0
    %4285 = vmatpush2.msra.mxu0 0.0
    %4286 = vmatprep.subr.mxu0 0.0
    %4287 = vmatpush2.msra.mxu0 0.0
    %4288 = vmatprep.subr.mxu0 0.0
    %4289 = vmatpush2.msra.mxu0 0.0
    %4290 = vmatprep.subr.mxu0 0.0
    %4291 = vmatpush2.msra.mxu0 0.0
    %4292 = vmatprep.subr.mxu0 0.0
    %4293 = vmatpush2.msra.mxu0 0.0
    %4294 = vmatprep.subr.mxu0 0.0
    %4295 = vmatpush2.msra.mxu0 0.0
    %4296 = vmatprep.mubr.f32.mxu0 0.0
    %4297 = vmatmul.mubr.f32.gmra.mxu0 %v4224
    %v4298 = vpop.f32.mrf.mxu0
    %v4299 = vadd.f32 %v4210, %v4298
    %v4300 = vpop.f32.mrf.mxu0
    %4301 = vmatprep.mubr.f32.mxu0 0.0
    %4302 = vmatmul.mubr.f32.gmra.mxu0 %v4227
    %v4303 = vpop.f32.mrf.mxu0
    %v4304 = vadd.f32 %v4215, %v4303
    %v4305 = vpop.f32.mrf.mxu0
    %4306 = vmatprep.mubr.f32.mxu0 0.0
    %4307 = vmatmul.mubr.f32.gmra.mxu0 %v4230
    %v4308 = vpop.f32.mrf.mxu0
    %v4309 = vadd.f32 %v4220, %v4308
    %v4310 = vpop.f32.mrf.mxu0
    %4311 = vdwg.mxu0
    %4312 = vrot.lane.b32.xlu0 %v3656, 112
    %v4313 = vpop.permute.xlu0 %4312
    %4314 = vrot.lane.b32.xlu0 %v3657, 112
    %v4315 = vpop.permute.xlu0 %4314
    %4316 = vrot.lane.b32.xlu0 %v3658, 112
    %v4317 = vpop.permute.xlu0 %4316
    %4318 = vrot.lane.b32.xlu0 %v3643, 80
    %v4319 = vpop.permute.xlu0 %4318
    %4320 = vrot.lane.b32.xlu0 %v3648, 80
    %v4321 = vpop.permute.xlu0 %4320
    %4322 = vrot.lane.b32.xlu0 %v3653, 80
    %v4323 = vpop.permute.xlu0 %4322
    %v4324 = vsel %vm735, %v4313, 0
    %v4326 = vsel %vm735, %v4315, 0
    %v4328 = vsel %vm735, %v4317, 0
    %v4330 = vsel %vm735, %v4319, 0
    %v4332 = vsel %vm735, %v4321, 0
    %v4334 = vsel %vm735, %v4323, 0
    %4336 = vmatprep.subr.mxu0 0.0
    %4337 = vmatpush1.xpose.msra.mxu0 0.0
    %4338 = vmatprep.subr.mxu0 0.0
    %4339 = vmatpush1.xpose.msra.mxu0 0.0
    %4340 = vmatprep.subr.mxu0 0.0
    %4341 = vmatpush1.xpose.msra.mxu0 0.0
    %4342 = vmatprep.subr.mxu0 0.0
    %4343 = vmatpush1.xpose.msra.mxu0 0.0
    %4344 = vmatprep.subr.mxu0 0.0
    %4345 = vmatpush1.xpose.msra.mxu0 0.0
    %4346 = vmatprep.subr.mxu0 0.0
    %4347 = vmatpush1.xpose.msra.mxu0 0.0
    %4348 = vmatprep.subr.mxu0 0.0
    %4349 = vmatpush1.xpose.msra.mxu0 0.0
    %4350 = vmatprep.subr.mxu0 0.0
    %4351 = vmatpush1.xpose.msra.mxu0 0.0
    %4352 = vmatprep.subr.mxu0 0.0
    %4353 = vmatpush1.xpose.msra.mxu0 0.0
    %4354 = vmatprep.subr.mxu0 0.0
    %4355 = vmatpush1.xpose.msra.mxu0 0.0
    %4356 = vmatprep.subr.mxu0 0.0
    %4357 = vmatpush1.xpose.msra.mxu0 0.0
    %4358 = vmatprep.subr.mxu0 0.0
    %4359 = vmatpush1.xpose.msra.mxu0 0.0
    %4360 = vmatprep.subr.mxu0 0.0
    %4361 = vmatpush1.xpose.msra.mxu0 0.0
    %4362 = vmatprep.subr.mxu0 0.0
    %4363 = vmatpush1.xpose.msra.mxu0 %v4334
    %4364 = vmatprep.subr.mxu0 0.0
    %4365 = vmatpush1.xpose.msra.mxu0 %v4332
    %4366 = vmatprep.subr.mxu0 0.0
    %4367 = vmatpush1.xpose.msra.mxu0 %v4330
    %4368 = vmatprep.subr.mxu0 0.0
    %4369 = vmatpush2.xpose.msra.mxu0 0.0
    %4370 = vmatprep.subr.mxu0 0.0
    %4371 = vmatpush2.xpose.msra.mxu0 0.0
    %4372 = vmatprep.subr.mxu0 0.0
    %4373 = vmatpush2.xpose.msra.mxu0 0.0
    %4374 = vmatprep.subr.mxu0 0.0
    %4375 = vmatpush2.xpose.msra.mxu0 0.0
    %4376 = vmatprep.subr.mxu0 0.0
    %4377 = vmatpush2.xpose.msra.mxu0 0.0
    %4378 = vmatprep.subr.mxu0 0.0
    %4379 = vmatpush2.xpose.msra.mxu0 0.0
    %4380 = vmatprep.subr.mxu0 0.0
    %4381 = vmatpush2.xpose.msra.mxu0 0.0
    %4382 = vmatprep.subr.mxu0 0.0
    %4383 = vmatpush2.xpose.msra.mxu0 0.0
    %4384 = vmatprep.subr.mxu0 0.0
    %4385 = vmatpush2.xpose.msra.mxu0 0.0
    %4386 = vmatprep.subr.mxu0 0.0
    %4387 = vmatpush2.xpose.msra.mxu0 0.0
    %4388 = vmatprep.subr.mxu0 0.0
    %4389 = vmatpush2.xpose.msra.mxu0 0.0
    %4390 = vmatprep.subr.mxu0 0.0
    %4391 = vmatpush2.xpose.msra.mxu0 0.0
    %4392 = vmatprep.subr.mxu0 0.0
    %4393 = vmatpush2.xpose.msra.mxu0 0.0
    %4394 = vmatprep.subr.mxu0 0.0
    %4395 = vmatpush2.xpose.msra.mxu0 0.0
    %4396 = vmatprep.subr.mxu0 0.0
    %4397 = vmatpush2.xpose.msra.mxu0 0.0
    %4398 = vmatprep.subr.mxu0 0.0
    %4399 = vmatpush2.xpose.msra.mxu0 0.0
    %4400 = vmatprep.mubr.f32.mxu0 0.0
    %4401 = vmatmul.mubr.f32.gmra.mxu0 %v4324
    %v4402 = vpop.f32.mrf.mxu0
    %v4403 = vadd.f32 0.0, %v4402
    %v4404 = vpop.f32.mrf.mxu0
    %4405 = vmatprep.mubr.f32.mxu0 0.0
    %4406 = vmatmul.mubr.f32.gmra.mxu0 %v4326
    %v4407 = vpop.f32.mrf.mxu0
    %v4408 = vadd.f32 0.0, %v4407
    %v4409 = vpop.f32.mrf.mxu0
    %4410 = vmatprep.mubr.f32.mxu0 0.0
    %4411 = vmatmul.mubr.f32.gmra.mxu0 %v4328
    %v4412 = vpop.f32.mrf.mxu0
    %v4413 = vadd.f32 0.0, %v4412
    %v4414 = vpop.f32.mrf.mxu0
    %4415 = vdwg.mxu0
    %v4416 = vsel %vm3763, %v4403, -inf
    %4417 = vmax.xlane.f32.xlu0 %v4416
    %v4418 = vpop.xlane.xlu0 %4417
    %v4419 = vsel %vm3763, %v4408, -inf
    %4420 = vmax.xlane.f32.xlu0 %v4419
    %v4421 = vpop.xlane.xlu0 %4420
    %v4422 = vsel %vm3770, %v4413, -inf
    %4423 = vmax.xlane.f32.xlu0 %v4422
    %v4424 = vpop.xlane.xlu0 %4423
    %v4425 = vsub.f32 %v4403, %v4418
    %v4426 = vsub.f32 %v4408, %v4421
    %v4427 = vsub.f32 %v4413, %v4424
    %v4428 = vmul.f32 %v4425, 1.442695
    %v4429 = vpow.pop %v4428
    %v4430 = vmul.f32 %v4426, 1.442695
    %v4431 = vpow.pop %v4430
    %v4432 = vmul.f32 %v4427, 1.442695
    %v4433 = vpow.pop %v4432
    %v4434 = vsel %vm3763, %v4429, 0.0
    %4435 = vadd.xlane.f32.xlu0 %v4434
    %v4436 = vpop.xlane.xlu0 %4435
    %v4437 = vsel %vm3763, %v4431, 0.0
    %4438 = vadd.xlane.f32.xlu0 %v4437
    %v4439 = vpop.xlane.xlu0 %4438
    %v4440 = vsel %vm3770, %v4433, 0.0
    %4441 = vadd.xlane.f32.xlu0 %v4440
    %v4442 = vpop.xlane.xlu0 %4441
    %v4443 = vrcp.pop %v4436
    %v4444 = vmul.f32 %v4429, %v4443
    %v4445 = vrcp.pop %v4439
    %v4446 = vmul.f32 %v4431, %v4445
    %v4447 = vrcp.pop %v4442
    %v4448 = vmul.f32 %v4433, %v4447
    %4449 = vrot.lane.b32.xlu0 %v3643, 48
    %v4450 = vpop.permute.xlu0 %4449
    %4451 = vrot.lane.b32.xlu0 %v3648, 48
    %v4452 = vpop.permute.xlu0 %4451
    %4453 = vrot.lane.b32.xlu0 %v3653, 48
    %v4454 = vpop.permute.xlu0 %4453
    %v4458 = vsel %vm3763, %v4444, 0
    %v4461 = vsel %vm3763, %v4446, 0
    %v4464 = vsel %vm3763, %v4448, 0
    %v4466 = vsel %vm3815, %v4454, 0
    %4468 = vmatprep.subr.mxu0 0.0
    %4469 = vmatpush1.msra.mxu0 0.0
    %4470 = vmatprep.subr.mxu0 0.0
    %4471 = vmatpush1.msra.mxu0 0.0
    %4472 = vmatprep.subr.mxu0 0.0
    %4473 = vmatpush1.msra.mxu0 0.0
    %4474 = vmatprep.subr.mxu0 0.0
    %4475 = vmatpush1.msra.mxu0 0.0
    %4476 = vmatprep.subr.mxu0 0.0
    %4477 = vmatpush1.msra.mxu0 0.0
    %4478 = vmatprep.subr.mxu0 0.0
    %4479 = vmatpush1.msra.mxu0 0.0
    %4480 = vmatprep.subr.mxu0 0.0
    %4481 = vmatpush1.msra.mxu0 0.0
    %4482 = vmatprep.subr.mxu0 0.0
    %4483 = vmatpush1.msra.mxu0 0.0
    %4484 = vmatprep.subr.mxu0 0.0
    %4485 = vmatpush1.msra.mxu0 0.0
    %4486 = vmatprep.subr.mxu0 0.0
    %4487 = vmatpush1.msra.mxu0 0.0
    %4488 = vmatprep.subr.mxu0 0.0
    %4489 = vmatpush1.msra.mxu0 0.0
    %4490 = vmatprep.subr.mxu0 0.0
    %4491 = vmatpush1.msra.mxu0 0.0
    %4492 = vmatprep.subr.mxu0 0.0
    %4493 = vmatpush1.msra.mxu0 0.0
    %4494 = vmatprep.subr.mxu0 0.0
    %4495 = vmatpush1.msra.mxu0 %v4466
    %4496 = vmatprep.subr.mxu0 0.0
    %4497 = vmatpush1.msra.mxu0 %v4452
    %4498 = vmatprep.subr.mxu0 0.0
    %4499 = vmatpush1.msra.mxu0 %v4450
    %4500 = vmatprep.subr.mxu0 0.0
    %4501 = vmatpush2.msra.mxu0 0.0
    %4502 = vmatprep.subr.mxu0 0.0
    %4503 = vmatpush2.msra.mxu0 0.0
    %4504 = vmatprep.subr.mxu0 0.0
    %4505 = vmatpush2.msra.mxu0 0.0
    %4506 = vmatprep.subr.mxu0 0.0
    %4507 = vmatpush2.msra.mxu0 0.0
    %4508 = vmatprep.subr.mxu0 0.0
    %4509 = vmatpush2.msra.mxu0 0.0
    %4510 = vmatprep.subr.mxu0 0.0
    %4511 = vmatpush2.msra.mxu0 0.0
    %4512 = vmatprep.subr.mxu0 0.0
    %4513 = vmatpush2.msra.mxu0 0.0
    %4514 = vmatprep.subr.mxu0 0.0
    %4515 = vmatpush2.msra.mxu0 0.0
    %4516 = vmatprep.subr.mxu0 0.0
    %4517 = vmatpush2.msra.mxu0 0.0
    %4518 = vmatprep.subr.mxu0 0.0
    %4519 = vmatpush2.msra.mxu0 0.0
    %4520 = vmatprep.subr.mxu0 0.0
    %4521 = vmatpush2.msra.mxu0 0.0
    %4522 = vmatprep.subr.mxu0 0.0
    %4523 = vmatpush2.msra.mxu0 0.0
    %4524 = vmatprep.subr.mxu0 0.0
    %4525 = vmatpush2.msra.mxu0 0.0
    %4526 = vmatprep.subr.mxu0 0.0
    %4527 = vmatpush2.msra.mxu0 0.0
    %4528 = vmatprep.subr.mxu0 0.0
    %4529 = vmatpush2.msra.mxu0 0.0
    %4530 = vmatprep.subr.mxu0 0.0
    %4531 = vmatpush2.msra.mxu0 0.0
    %4532 = vmatprep.mubr.f32.mxu0 0.0
    %4533 = vmatmul.mubr.f32.gmra.mxu0 %v4458
    %v4534 = vpop.f32.mrf.mxu0
    %v4535 = vadd.f32 0.0, %v4534
    %v4536 = vpop.f32.mrf.mxu0
    %4537 = vmatprep.mubr.f32.mxu0 0.0
    %4538 = vmatmul.mubr.f32.gmra.mxu0 %v4461
    %v4539 = vpop.f32.mrf.mxu0
    %v4540 = vadd.f32 0.0, %v4539
    %v4541 = vpop.f32.mrf.mxu0
    %4542 = vmatprep.mubr.f32.mxu0 0.0
    %4543 = vmatmul.mubr.f32.gmra.mxu0 %v4464
    %v4544 = vpop.f32.mrf.mxu0
    %v4545 = vadd.f32 0.0, %v4544
    %v4546 = vpop.f32.mrf.mxu0
    %4547 = vdwg.mxu0
    %v4549 = vsel %vm735, %v4535, 0
    %v4552 = vsel %vm735, %v4540, 0
    %v4555 = vsel %vm735, %v4545, 0
    %4557 = vmatprep.subr.mxu0 0.0
    %4558 = vmatpush1.msra.mxu0 0.0
    %4559 = vmatprep.subr.mxu0 0.0
    %4560 = vmatpush1.msra.mxu0 0.0
    %4561 = vmatprep.subr.mxu0 0.0
    %4562 = vmatpush1.msra.mxu0 0.0
    %4563 = vmatprep.subr.mxu0 0.0
    %4564 = vmatpush1.msra.mxu0 0.0
    %4565 = vmatprep.subr.mxu0 0.0
    %4566 = vmatpush1.msra.mxu0 0.0
    %4567 = vmatprep.subr.mxu0 0.0
    %4568 = vmatpush1.msra.mxu0 0.0
    %4569 = vmatprep.subr.mxu0 0.0
    %4570 = vmatpush1.msra.mxu0 0.0
    %4571 = vmatprep.subr.mxu0 0.0
    %4572 = vmatpush1.msra.mxu0 0.0
    %4573 = vmatprep.subr.mxu0 0.0
    %4574 = vmatpush1.msra.mxu0 0.0
    %4575 = vmatprep.subr.mxu0 0.0
    %4576 = vmatpush1.msra.mxu0 0.0
    %4577 = vmatprep.subr.mxu0 0.0
    %4578 = vmatpush1.msra.mxu0 0.0
    %4579 = vmatprep.subr.mxu0 0.0
    %4580 = vmatpush1.msra.mxu0 0.0
    %4581 = vmatprep.subr.mxu0 0.0
    %4582 = vmatpush1.msra.mxu0 0.0
    %4583 = vmatprep.subr.mxu0 0.0
    %4584 = vmatpush1.msra.mxu0 0.0
    %4585 = vmatprep.subr.mxu0 0.0
    %4586 = vmatpush1.msra.mxu0 0.0
    %4587 = vmatprep.subr.mxu0 0.0
    %4588 = vmatpush1.msra.mxu0 %v3476
    %4589 = vmatprep.subr.mxu0 0.0
    %4590 = vmatpush2.msra.mxu0 0.0
    %4591 = vmatprep.subr.mxu0 0.0
    %4592 = vmatpush2.msra.mxu0 0.0
    %4593 = vmatprep.subr.mxu0 0.0
    %4594 = vmatpush2.msra.mxu0 0.0
    %4595 = vmatprep.subr.mxu0 0.0
    %4596 = vmatpush2.msra.mxu0 0.0
    %4597 = vmatprep.subr.mxu0 0.0
    %4598 = vmatpush2.msra.mxu0 0.0
    %4599 = vmatprep.subr.mxu0 0.0
    %4600 = vmatpush2.msra.mxu0 0.0
    %4601 = vmatprep.subr.mxu0 0.0
    %4602 = vmatpush2.msra.mxu0 0.0
    %4603 = vmatprep.subr.mxu0 0.0
    %4604 = vmatpush2.msra.mxu0 0.0
    %4605 = vmatprep.subr.mxu0 0.0
    %4606 = vmatpush2.msra.mxu0 0.0
    %4607 = vmatprep.subr.mxu0 0.0
    %4608 = vmatpush2.msra.mxu0 0.0
    %4609 = vmatprep.subr.mxu0 0.0
    %4610 = vmatpush2.msra.mxu0 0.0
    %4611 = vmatprep.subr.mxu0 0.0
    %4612 = vmatpush2.msra.mxu0 0.0
    %4613 = vmatprep.subr.mxu0 0.0
    %4614 = vmatpush2.msra.mxu0 0.0
    %4615 = vmatprep.subr.mxu0 0.0
    %4616 = vmatpush2.msra.mxu0 0.0
    %4617 = vmatprep.subr.mxu0 0.0
    %4618 = vmatpush2.msra.mxu0 0.0
    %4619 = vmatprep.subr.mxu0 0.0
    %4620 = vmatpush2.msra.mxu0 0.0
    %4621 = vmatprep.mubr.f32.mxu0 0.0
    %4622 = vmatmul.mubr.f32.gmra.mxu0 %v4549
    %v4623 = vpop.f32.mrf.mxu0
    %v4624 = vadd.f32 0.0, %v4623
    %v4625 = vpop.f32.mrf.mxu0
    %4626 = vmatprep.mubr.f32.mxu0 0.0
    %4627 = vmatmul.mubr.f32.gmra.mxu0 %v4552
    %v4628 = vpop.f32.mrf.mxu0
    %v4629 = vadd.f32 0.0, %v4628
    %v4630 = vpop.f32.mrf.mxu0
    %4631 = vmatprep.mubr.f32.mxu0 0.0
    %4632 = vmatmul.mubr.f32.gmra.mxu0 %v4555
    %v4633 = vpop.f32.mrf.mxu0
    %v4634 = vadd.f32 0.0, %v4633
    %v4635 = vpop.f32.mrf.mxu0
    %4636 = vdwg.mxu0
    %v4637 = vadd.f32 %v4299, %v4624
    %v4638 = vadd.f32 %v4304, %v4629
    %v4639 = vadd.f32 %v4309, %v4634
    %4640 = vrot.lane.b32.xlu0 %v3656, 104
    %v4641 = vpop.permute.xlu0 %4640
    %4642 = vrot.lane.b32.xlu0 %v3657, 104
    %v4643 = vpop.permute.xlu0 %4642
    %4644 = vrot.lane.b32.xlu0 %v3658, 104
    %v4645 = vpop.permute.xlu0 %4644
    %4646 = vrot.lane.b32.xlu0 %v3643, 72
    %v4647 = vpop.permute.xlu0 %4646
    %4648 = vrot.lane.b32.xlu0 %v3648, 72
    %v4649 = vpop.permute.xlu0 %4648
    %4650 = vrot.lane.b32.xlu0 %v3653, 72
    %v4651 = vpop.permute.xlu0 %4650
    %v4652 = vsel %vm735, %v4641, 0
    %v4654 = vsel %vm735, %v4643, 0
    %v4656 = vsel %vm735, %v4645, 0
    %v4658 = vsel %vm735, %v4647, 0
    %v4660 = vsel %vm735, %v4649, 0
    %v4662 = vsel %vm735, %v4651, 0
    %4664 = vmatprep.subr.mxu0 0.0
    %4665 = vmatpush1.xpose.msra.mxu0 0.0
    %4666 = vmatprep.subr.mxu0 0.0
    %4667 = vmatpush1.xpose.msra.mxu0 0.0
    %4668 = vmatprep.subr.mxu0 0.0
    %4669 = vmatpush1.xpose.msra.mxu0 0.0
    %4670 = vmatprep.subr.mxu0 0.0
    %4671 = vmatpush1.xpose.msra.mxu0 0.0
    %4672 = vmatprep.subr.mxu0 0.0
    %4673 = vmatpush1.xpose.msra.mxu0 0.0
    %4674 = vmatprep.subr.mxu0 0.0
    %4675 = vmatpush1.xpose.msra.mxu0 0.0
    %4676 = vmatprep.subr.mxu0 0.0
    %4677 = vmatpush1.xpose.msra.mxu0 0.0
    %4678 = vmatprep.subr.mxu0 0.0
    %4679 = vmatpush1.xpose.msra.mxu0 0.0
    %4680 = vmatprep.subr.mxu0 0.0
    %4681 = vmatpush1.xpose.msra.mxu0 0.0
    %4682 = vmatprep.subr.mxu0 0.0
    %4683 = vmatpush1.xpose.msra.mxu0 0.0
    %4684 = vmatprep.subr.mxu0 0.0
    %4685 = vmatpush1.xpose.msra.mxu0 0.0
    %4686 = vmatprep.subr.mxu0 0.0
    %4687 = vmatpush1.xpose.msra.mxu0 0.0
    %4688 = vmatprep.subr.mxu0 0.0
    %4689 = vmatpush1.xpose.msra.mxu0 0.0
    %4690 = vmatprep.subr.mxu0 0.0
    %4691 = vmatpush1.xpose.msra.mxu0 %v4662
    %4692 = vmatprep.subr.mxu0 0.0
    %4693 = vmatpush1.xpose.msra.mxu0 %v4660
    %4694 = vmatprep.subr.mxu0 0.0
    %4695 = vmatpush1.xpose.msra.mxu0 %v4658
    %4696 = vmatprep.subr.mxu0 0.0
    %4697 = vmatpush2.xpose.msra.mxu0 0.0
    %4698 = vmatprep.subr.mxu0 0.0
    %4699 = vmatpush2.xpose.msra.mxu0 0.0
    %4700 = vmatprep.subr.mxu0 0.0
    %4701 = vmatpush2.xpose.msra.mxu0 0.0
    %4702 = vmatprep.subr.mxu0 0.0
    %4703 = vmatpush2.xpose.msra.mxu0 0.0
    %4704 = vmatprep.subr.mxu0 0.0
    %4705 = vmatpush2.xpose.msra.mxu0 0.0
    %4706 = vmatprep.subr.mxu0 0.0
    %4707 = vmatpush2.xpose.msra.mxu0 0.0
    %4708 = vmatprep.subr.mxu0 0.0
    %4709 = vmatpush2.xpose.msra.mxu0 0.0
    %4710 = vmatprep.subr.mxu0 0.0
    %4711 = vmatpush2.xpose.msra.mxu0 0.0
    %4712 = vmatprep.subr.mxu0 0.0
    %4713 = vmatpush2.xpose.msra.mxu0 0.0
    %4714 = vmatprep.subr.mxu0 0.0
    %4715 = vmatpush2.xpose.msra.mxu0 0.0
    %4716 = vmatprep.subr.mxu0 0.0
    %4717 = vmatpush2.xpose.msra.mxu0 0.0
    %4718 = vmatprep.subr.mxu0 0.0
    %4719 = vmatpush2.xpose.msra.mxu0 0.0
    %4720 = vmatprep.subr.mxu0 0.0
    %4721 = vmatpush2.xpose.msra.mxu0 0.0
    %4722 = vmatprep.subr.mxu0 0.0
    %4723 = vmatpush2.xpose.msra.mxu0 0.0
    %4724 = vmatprep.subr.mxu0 0.0
    %4725 = vmatpush2.xpose.msra.mxu0 0.0
    %4726 = vmatprep.subr.mxu0 0.0
    %4727 = vmatpush2.xpose.msra.mxu0 0.0
    %4728 = vmatprep.mubr.f32.mxu0 0.0
    %4729 = vmatmul.mubr.f32.gmra.mxu0 %v4652
    %v4730 = vpop.f32.mrf.mxu0
    %v4731 = vadd.f32 0.0, %v4730
    %v4732 = vpop.f32.mrf.mxu0
    %4733 = vmatprep.mubr.f32.mxu0 0.0
    %4734 = vmatmul.mubr.f32.gmra.mxu0 %v4654
    %v4735 = vpop.f32.mrf.mxu0
    %v4736 = vadd.f32 0.0, %v4735
    %v4737 = vpop.f32.mrf.mxu0
    %4738 = vmatprep.mubr.f32.mxu0 0.0
    %4739 = vmatmul.mubr.f32.gmra.mxu0 %v4656
    %v4740 = vpop.f32.mrf.mxu0
    %v4741 = vadd.f32 0.0, %v4740
    %v4742 = vpop.f32.mrf.mxu0
    %4743 = vdwg.mxu0
    %v4744 = vsel %vm3763, %v4731, -inf
    %4745 = vmax.xlane.f32.xlu0 %v4744
    %v4746 = vpop.xlane.xlu0 %4745
    %v4747 = vsel %vm3763, %v4736, -inf
    %4748 = vmax.xlane.f32.xlu0 %v4747
    %v4749 = vpop.xlane.xlu0 %4748
    %v4750 = vsel %vm3770, %v4741, -inf
    %4751 = vmax.xlane.f32.xlu0 %v4750
    %v4752 = vpop.xlane.xlu0 %4751
    %v4753 = vsub.f32 %v4731, %v4746
    %v4754 = vsub.f32 %v4736, %v4749
    %v4755 = vsub.f32 %v4741, %v4752
    %v4756 = vmul.f32 %v4753, 1.442695
    %v4757 = vpow.pop %v4756
    %v4758 = vmul.f32 %v4754, 1.442695
    %v4759 = vpow.pop %v4758
    %v4760 = vmul.f32 %v4755, 1.442695
    %v4761 = vpow.pop %v4760
    %v4762 = vsel %vm3763, %v4757, 0.0
    %4763 = vadd.xlane.f32.xlu0 %v4762
    %v4764 = vpop.xlane.xlu0 %4763
    %v4765 = vsel %vm3763, %v4759, 0.0
    %4766 = vadd.xlane.f32.xlu0 %v4765
    %v4767 = vpop.xlane.xlu0 %4766
    %v4768 = vsel %vm3770, %v4761, 0.0
    %4769 = vadd.xlane.f32.xlu0 %v4768
    %v4770 = vpop.xlane.xlu0 %4769
    %v4771 = vrcp.pop %v4764
    %v4772 = vmul.f32 %v4757, %v4771
    %v4773 = vrcp.pop %v4767
    %v4774 = vmul.f32 %v4759, %v4773
    %v4775 = vrcp.pop %v4770
    %v4776 = vmul.f32 %v4761, %v4775
    %4777 = vrot.lane.b32.xlu0 %v3643, 40
    %v4778 = vpop.permute.xlu0 %4777
    %4779 = vrot.lane.b32.xlu0 %v3648, 40
    %v4780 = vpop.permute.xlu0 %4779
    %4781 = vrot.lane.b32.xlu0 %v3653, 40
    %v4782 = vpop.permute.xlu0 %4781
    %v4786 = vsel %vm3763, %v4772, 0
    %v4789 = vsel %vm3763, %v4774, 0
    %v4792 = vsel %vm3763, %v4776, 0
    %v4794 = vsel %vm3815, %v4782, 0
    %4796 = vmatprep.subr.mxu0 0.0
    %4797 = vmatpush1.msra.mxu0 0.0
    %4798 = vmatprep.subr.mxu0 0.0
    %4799 = vmatpush1.msra.mxu0 0.0
    %4800 = vmatprep.subr.mxu0 0.0
    %4801 = vmatpush1.msra.mxu0 0.0
    %4802 = vmatprep.subr.mxu0 0.0
    %4803 = vmatpush1.msra.mxu0 0.0
    %4804 = vmatprep.subr.mxu0 0.0
    %4805 = vmatpush1.msra.mxu0 0.0
    %4806 = vmatprep.subr.mxu0 0.0
    %4807 = vmatpush1.msra.mxu0 0.0
    %4808 = vmatprep.subr.mxu0 0.0
    %4809 = vmatpush1.msra.mxu0 0.0
    %4810 = vmatprep.subr.mxu0 0.0
    %4811 = vmatpush1.msra.mxu0 0.0
    %4812 = vmatprep.subr.mxu0 0.0
    %4813 = vmatpush1.msra.mxu0 0.0
    %4814 = vmatprep.subr.mxu0 0.0
    %4815 = vmatpush1.msra.mxu0 0.0
    %4816 = vmatprep.subr.mxu0 0.0
    %4817 = vmatpush1.msra.mxu0 0.0
    %4818 = vmatprep.subr.mxu0 0.0
    %4819 = vmatpush1.msra.mxu0 0.0
    %4820 = vmatprep.subr.mxu0 0.0
    %4821 = vmatpush1.msra.mxu0 0.0
    %4822 = vmatprep.subr.mxu0 0.0
    %4823 = vmatpush1.msra.mxu0 %v4794
    %4824 = vmatprep.subr.mxu0 0.0
    %4825 = vmatpush1.msra.mxu0 %v4780
    %4826 = vmatprep.subr.mxu0 0.0
    %4827 = vmatpush1.msra.mxu0 %v4778
    %4828 = vmatprep.subr.mxu0 0.0
    %4829 = vmatpush2.msra.mxu0 0.0
    %4830 = vmatprep.subr.mxu0 0.0
    %4831 = vmatpush2.msra.mxu0 0.0
    %4832 = vmatprep.subr.mxu0 0.0
    %4833 = vmatpush2.msra.mxu0 0.0
    %4834 = vmatprep.subr.mxu0 0.0
    %4835 = vmatpush2.msra.mxu0 0.0
    %4836 = vmatprep.subr.mxu0 0.0
    %4837 = vmatpush2.msra.mxu0 0.0
    %4838 = vmatprep.subr.mxu0 0.0
    %4839 = vmatpush2.msra.mxu0 0.0
    %4840 = vmatprep.subr.mxu0 0.0
    %4841 = vmatpush2.msra.mxu0 0.0
    %4842 = vmatprep.subr.mxu0 0.0
    %4843 = vmatpush2.msra.mxu0 0.0
    %4844 = vmatprep.subr.mxu0 0.0
    %4845 = vmatpush2.msra.mxu0 0.0
    %4846 = vmatprep.subr.mxu0 0.0
    %4847 = vmatpush2.msra.mxu0 0.0
    %4848 = vmatprep.subr.mxu0 0.0
    %4849 = vmatpush2.msra.mxu0 0.0
    %4850 = vmatprep.subr.mxu0 0.0
    %4851 = vmatpush2.msra.mxu0 0.0
    %4852 = vmatprep.subr.mxu0 0.0
    %4853 = vmatpush2.msra.mxu0 0.0
    %4854 = vmatprep.subr.mxu0 0.0
    %4855 = vmatpush2.msra.mxu0 0.0
    %4856 = vmatprep.subr.mxu0 0.0
    %4857 = vmatpush2.msra.mxu0 0.0
    %4858 = vmatprep.subr.mxu0 0.0
    %4859 = vmatpush2.msra.mxu0 0.0
    %4860 = vmatprep.mubr.f32.mxu0 0.0
    %4861 = vmatmul.mubr.f32.gmra.mxu0 %v4786
    %v4862 = vpop.f32.mrf.mxu0
    %v4863 = vadd.f32 0.0, %v4862
    %v4864 = vpop.f32.mrf.mxu0
    %4865 = vmatprep.mubr.f32.mxu0 0.0
    %4866 = vmatmul.mubr.f32.gmra.mxu0 %v4789
    %v4867 = vpop.f32.mrf.mxu0
    %v4868 = vadd.f32 0.0, %v4867
    %v4869 = vpop.f32.mrf.mxu0
    %4870 = vmatprep.mubr.f32.mxu0 0.0
    %4871 = vmatmul.mubr.f32.gmra.mxu0 %v4792
    %v4872 = vpop.f32.mrf.mxu0
    %v4873 = vadd.f32 0.0, %v4872
    %v4874 = vpop.f32.mrf.mxu0
    %4875 = vdwg.mxu0
    %v4877 = vsel %vm735, %v4863, 0
    %v4880 = vsel %vm735, %v4868, 0
    %v4883 = vsel %vm735, %v4873, 0
    %4885 = vmatprep.subr.mxu0 0.0
    %4886 = vmatpush1.msra.mxu0 0.0
    %4887 = vmatprep.subr.mxu0 0.0
    %4888 = vmatpush1.msra.mxu0 0.0
    %4889 = vmatprep.subr.mxu0 0.0
    %4890 = vmatpush1.msra.mxu0 0.0
    %4891 = vmatprep.subr.mxu0 0.0
    %4892 = vmatpush1.msra.mxu0 0.0
    %4893 = vmatprep.subr.mxu0 0.0
    %4894 = vmatpush1.msra.mxu0 0.0
    %4895 = vmatprep.subr.mxu0 0.0
    %4896 = vmatpush1.msra.mxu0 0.0
    %4897 = vmatprep.subr.mxu0 0.0
    %4898 = vmatpush1.msra.mxu0 0.0
    %4899 = vmatprep.subr.mxu0 0.0
    %4900 = vmatpush1.msra.mxu0 0.0
    %4901 = vmatprep.subr.mxu0 0.0
    %4902 = vmatpush1.msra.mxu0 0.0
    %4903 = vmatprep.subr.mxu0 0.0
    %4904 = vmatpush1.msra.mxu0 0.0
    %4905 = vmatprep.subr.mxu0 0.0
    %4906 = vmatpush1.msra.mxu0 0.0
    %4907 = vmatprep.subr.mxu0 0.0
    %4908 = vmatpush1.msra.mxu0 0.0
    %4909 = vmatprep.subr.mxu0 0.0
    %4910 = vmatpush1.msra.mxu0 0.0
    %4911 = vmatprep.subr.mxu0 0.0
    %4912 = vmatpush1.msra.mxu0 0.0
    %4913 = vmatprep.subr.mxu0 0.0
    %4914 = vmatpush1.msra.mxu0 0.0
    %4915 = vmatprep.subr.mxu0 0.0
    %4916 = vmatpush1.msra.mxu0 %v3477
    %4917 = vmatprep.subr.mxu0 0.0
    %4918 = vmatpush2.msra.mxu0 0.0
    %4919 = vmatprep.subr.mxu0 0.0
    %4920 = vmatpush2.msra.mxu0 0.0
    %4921 = vmatprep.subr.mxu0 0.0
    %4922 = vmatpush2.msra.mxu0 0.0
    %4923 = vmatprep.subr.mxu0 0.0
    %4924 = vmatpush2.msra.mxu0 0.0
    %4925 = vmatprep.subr.mxu0 0.0
    %4926 = vmatpush2.msra.mxu0 0.0
    %4927 = vmatprep.subr.mxu0 0.0
    %4928 = vmatpush2.msra.mxu0 0.0
    %4929 = vmatprep.subr.mxu0 0.0
    %4930 = vmatpush2.msra.mxu0 0.0
    %4931 = vmatprep.subr.mxu0 0.0
    %4932 = vmatpush2.msra.mxu0 0.0
    %4933 = vmatprep.subr.mxu0 0.0
    %4934 = vmatpush2.msra.mxu0 0.0
    %4935 = vmatprep.subr.mxu0 0.0
    %4936 = vmatpush2.msra.mxu0 0.0
    %4937 = vmatprep.subr.mxu0 0.0
    %4938 = vmatpush2.msra.mxu0 0.0
    %4939 = vmatprep.subr.mxu0 0.0
    %4940 = vmatpush2.msra.mxu0 0.0
    %4941 = vmatprep.subr.mxu0 0.0
    %4942 = vmatpush2.msra.mxu0 0.0
    %4943 = vmatprep.subr.mxu0 0.0
    %4944 = vmatpush2.msra.mxu0 0.0
    %4945 = vmatprep.subr.mxu0 0.0
    %4946 = vmatpush2.msra.mxu0 0.0
    %4947 = vmatprep.subr.mxu0 0.0
    %4948 = vmatpush2.msra.mxu0 0.0
    %4949 = vmatprep.mubr.f32.mxu0 0.0
    %4950 = vmatmul.mubr.f32.gmra.mxu0 %v4877
    %v4951 = vpop.f32.mrf.mxu0
    %v4952 = vadd.f32 0.0, %v4951
    %v4953 = vpop.f32.mrf.mxu0
    %4954 = vmatprep.mubr.f32.mxu0 0.0
    %4955 = vmatmul.mubr.f32.gmra.mxu0 %v4880
    %v4956 = vpop.f32.mrf.mxu0
    %v4957 = vadd.f32 0.0, %v4956
    %v4958 = vpop.f32.mrf.mxu0
    %4959 = vmatprep.mubr.f32.mxu0 0.0
    %4960 = vmatmul.mubr.f32.gmra.mxu0 %v4883
    %v4961 = vpop.f32.mrf.mxu0
    %v4962 = vadd.f32 0.0, %v4961
    %v4963 = vpop.f32.mrf.mxu0
    %4964 = vdwg.mxu0
    %v4965 = vadd.f32 %v4637, %v4952
    %v4966 = vadd.f32 %v4638, %v4957
    %v4967 = vadd.f32 %v4639, %v4962
    %v4968 = vadd.f32 %v3463, %v4965
    %v4969 = vadd.f32 %v3464, %v4966
    %v4970 = vadd.f32 %v206, %v4967
    %v4972 = vlaneseq
    %v4973 = vshrl.u32 %v4972, 7
    %v4974 = vsub.s32 0, %v4973
    %v4975 = vrot.slane %v3478, %v4974
    %v4977 = vadd.f32 %v4968, %v4975
    %v4978 = vadd.f32 %v4969, %v4975
    %v4979 = vadd.f32 %v4970, %v4975
    %v4980 = vsel %vm459, %v4977, 0.0
    %4981 = vadd.xlane.f32.xlu0 %v4980
    %v4982 = vpop.xlane.xlu0 %4981
    %v4983 = vsel %vm459, %v4978, 0.0
    %4984 = vadd.xlane.f32.xlu0 %v4983
    %v4985 = vpop.xlane.xlu0 %4984
    %v4986 = vsel %vm3509, %v4979, 0.0
    %4987 = vadd.xlane.f32.xlu0 %v4986
    %v4988 = vpop.xlane.xlu0 %4987
    %v4989 = vmul.f32 %v4982, %v472
    %v4990 = vmul.f32 %v4985, %v472
    %v4991 = vmul.f32 %v4988, %v472
    %v4992 = vsub.f32 %v4977, %v4989
    %v4993 = vsub.f32 %v4978, %v4990
    %v4994 = vsub.f32 %v4979, %v4991
    %v4995 = vmul.f32 %v4992, %v4992
    %v4996 = vmul.f32 %v4993, %v4993
    %v4997 = vmul.f32 %v4994, %v4994
    %v4998 = vsel %vm459, %v4995, 0.0
    %4999 = vadd.xlane.f32.xlu0 %v4998
    %v5000 = vpop.xlane.xlu0 %4999
    %v5001 = vsel %vm459, %v4996, 0.0
    %5002 = vadd.xlane.f32.xlu0 %v5001
    %v5003 = vpop.xlane.xlu0 %5002
    %v5004 = vsel %vm3509, %v4997, 0.0
    %5005 = vadd.xlane.f32.xlu0 %v5004
    %v5006 = vpop.xlane.xlu0 %5005
    %v5007 = vmul.f32 %v5000, %v472
    %v5008 = vmul.f32 %v5003, %v472
    %v5009 = vmul.f32 %v5006, %v472
    %v5010 = vadd.f32 %v5007, 1e-06
    %v5011 = vadd.f32 %v5008, 1e-06
    %v5012 = vadd.f32 %v5009, 1e-06
    %v5013 = vrsqrt.pop %v5010
    %v5014 = vrsqrt.pop %v5011
    %v5015 = vrsqrt.pop %v5012
    %v5016 = vmul.f32 %v4992, %v5013
    %v5017 = vmul.f32 %v4993, %v5014
    %v5018 = vmul.f32 %v4994, %v5015
    %v5020 = vlaneseq
    %v5021 = vshrl.u32 %v5020, 7
    %v5022 = vsub.s32 0, %v5021
    %v5023 = vrot.slane %v3479, %v5022
    %v5025 = vmul.f32 %v5016, %v5023
    %v5026 = vmul.f32 %v5017, %v5023
    %v5027 = vmul.f32 %v5018, %v5023
    %v5029 = vlaneseq
    %v5030 = vshrl.u32 %v5029, 7
    %v5031 = vsub.s32 0, %v5030
    %v5032 = vrot.slane %v3480, %v5031
    %v5034 = vadd.f32 %v5025, %v5032
    %v5035 = vadd.f32 %v5026, %v5032
    %v5036 = vadd.f32 %v5027, %v5032
    %v5038 = vlaneseq
    %v5039 = vshrl.u32 %v5038, 7
    %v5040 = vsub.s32 0, %v5039
    %v5041 = vrot.slane %v3485, %v5040
    %v5044 = vsel %vm459, %v5034, 0
    %v5047 = vsel %vm459, %v5035, 0
    %v5050 = vsel %vm459, %v5036, 0
    %5052 = vmatprep.subr.mxu0 0.0
    %5053 = vmatpush1.msra.mxu0 0.0
    %5054 = vmatprep.subr.mxu0 0.0
    %5055 = vmatpush1.msra.mxu0 0.0
    %5056 = vmatprep.subr.mxu0 0.0
    %5057 = vmatpush1.msra.mxu0 0.0
    %5058 = vmatprep.subr.mxu0 0.0
    %5059 = vmatpush1.msra.mxu0 0.0
    %5060 = vmatprep.subr.mxu0 0.0
    %5061 = vmatpush1.msra.mxu0 0.0
    %5062 = vmatprep.subr.mxu0 0.0
    %5063 = vmatpush1.msra.mxu0 0.0
    %5064 = vmatprep.subr.mxu0 0.0
    %5065 = vmatpush1.msra.mxu0 0.0
    %5066 = vmatprep.subr.mxu0 0.0
    %5067 = vmatpush1.msra.mxu0 0.0
    %5068 = vmatprep.subr.mxu0 0.0
    %5069 = vmatpush1.msra.mxu0 0.0
    %5070 = vmatprep.subr.mxu0 0.0
    %5071 = vmatpush1.msra.mxu0 0.0
    %5072 = vmatprep.subr.mxu0 0.0
    %5073 = vmatpush1.msra.mxu0 0.0
    %5074 = vmatprep.subr.mxu0 0.0
    %5075 = vmatpush1.msra.mxu0 0.0
    %5076 = vmatprep.subr.mxu0 0.0
    %5077 = vmatpush1.msra.mxu0 %v3484
    %5078 = vmatprep.subr.mxu0 0.0
    %5079 = vmatpush1.msra.mxu0 %v3483
    %5080 = vmatprep.subr.mxu0 0.0
    %5081 = vmatpush1.msra.mxu0 %v3482
    %5082 = vmatprep.subr.mxu0 0.0
    %5083 = vmatpush1.msra.mxu0 %v3481
    %5084 = vmatprep.subr.mxu0 0.0
    %5085 = vmatpush2.msra.mxu0 0.0
    %5086 = vmatprep.subr.mxu0 0.0
    %5087 = vmatpush2.msra.mxu0 0.0
    %5088 = vmatprep.subr.mxu0 0.0
    %5089 = vmatpush2.msra.mxu0 0.0
    %5090 = vmatprep.subr.mxu0 0.0
    %5091 = vmatpush2.msra.mxu0 0.0
    %5092 = vmatprep.subr.mxu0 0.0
    %5093 = vmatpush2.msra.mxu0 0.0
    %5094 = vmatprep.subr.mxu0 0.0
    %5095 = vmatpush2.msra.mxu0 0.0
    %5096 = vmatprep.subr.mxu0 0.0
    %5097 = vmatpush2.msra.mxu0 0.0
    %5098 = vmatprep.subr.mxu0 0.0
    %5099 = vmatpush2.msra.mxu0 0.0
    %5100 = vmatprep.subr.mxu0 0.0
    %5101 = vmatpush2.msra.mxu0 0.0
    %5102 = vmatprep.subr.mxu0 0.0
    %5103 = vmatpush2.msra.mxu0 0.0
    %5104 = vmatprep.subr.mxu0 0.0
    %5105 = vmatpush2.msra.mxu0 0.0
    %5106 = vmatprep.subr.mxu0 0.0
    %5107 = vmatpush2.msra.mxu0 0.0
    %5108 = vmatprep.subr.mxu0 0.0
    %5109 = vmatpush2.msra.mxu0 0.0
    %5110 = vmatprep.subr.mxu0 0.0
    %5111 = vmatpush2.msra.mxu0 0.0
    %5112 = vmatprep.subr.mxu0 0.0
    %5113 = vmatpush2.msra.mxu0 0.0
    %5114 = vmatprep.subr.mxu0 0.0
    %5115 = vmatpush2.msra.mxu0 0.0
    %5116 = vmatprep.mubr.f32.mxu0 0.0
    %5117 = vmatmul.mubr.f32.gmra.mxu0 %v5044
    %v5118 = vpop.f32.mrf.mxu0
    %v5119 = vadd.f32 %v5041, %v5118
    %v5120 = vpop.f32.mrf.mxu0
    %5121 = vmatprep.mubr.f32.mxu0 0.0
    %5122 = vmatmul.mubr.f32.gmra.mxu0 %v5047
    %v5123 = vpop.f32.mrf.mxu0
    %v5124 = vadd.f32 %v5041, %v5123
    %v5125 = vpop.f32.mrf.mxu0
    %5126 = vmatprep.mubr.f32.mxu0 0.0
    %5127 = vmatmul.mubr.f32.gmra.mxu0 %v5050
    %v5128 = vpop.f32.mrf.mxu0
    %v5129 = vadd.f32 %v5041, %v5128
    %v5130 = vpop.f32.mrf.mxu0
    %5131 = vdwg.mxu0
    %v5132 = vmul.f32 %v5119, 0.5
    %v5133 = vmul.f32 %v5124, 0.5
    %v5134 = vmul.f32 %v5129, 0.5
    %v5135 = vmul.f32 %v5119, 0.044715
    %v5136 = vmul.f32 %v5124, 0.044715
    %v5137 = vmul.f32 %v5129, 0.044715
    %v5138 = vmul.f32 %v5135, %v5119
    %v5139 = vmul.f32 %v5136, %v5124
    %v5140 = vmul.f32 %v5137, %v5129
    %v5141 = vmul.f32 %v5138, %v5119
    %v5142 = vmul.f32 %v5139, %v5124
    %v5143 = vmul.f32 %v5140, %v5129
    %v5144 = vadd.f32 %v5119, %v5141
    %v5145 = vadd.f32 %v5124, %v5142
    %v5146 = vadd.f32 %v5129, %v5143
    %v5147 = vmul.f32 %v5144, 0.7978846
    %v5148 = vmul.f32 %v5145, 0.7978846
    %v5149 = vmul.f32 %v5146, 0.7978846
    %v5150 = vtanh.pop %v5147
    %v5151 = vtanh.pop %v5148
    %v5152 = vtanh.pop %v5149
    %v5153 = vadd.f32 %v5150, 1.0
    %v5154 = vadd.f32 %v5151, 1.0
    %v5155 = vadd.f32 %v5152, 1.0
    %v5156 = vmul.f32 %v5132, %v5153
    %v5157 = vmul.f32 %v5133, %v5154
    %v5158 = vmul.f32 %v5134, %v5155
    %5159 = vmatprep.subr.mxu0 0.0
    %5160 = vmatpush1.msra.mxu0 %v3501
    %5161 = vmatprep.subr.mxu0 0.0
    %5162 = vmatpush1.msra.mxu0 %v3500
    %5163 = vmatprep.subr.mxu0 0.0
    %5164 = vmatpush1.msra.mxu0 %v3499
    %5165 = vmatprep.subr.mxu0 0.0
    %5166 = vmatpush1.msra.mxu0 %v3498
    %5167 = vmatprep.subr.mxu0 0.0
    %5168 = vmatpush1.msra.mxu0 %v3497
    %5169 = vmatprep.subr.mxu0 0.0
    %5170 = vmatpush1.msra.mxu0 %v3496
    %5171 = vmatprep.subr.mxu0 0.0
    %5172 = vmatpush1.msra.mxu0 %v3495
    %5173 = vmatprep.subr.mxu0 0.0
    %5174 = vmatpush1.msra.mxu0 %v3494
    %5175 = vmatprep.subr.mxu0 0.0
    %5176 = vmatpush1.msra.mxu0 %v3493
    %5177 = vmatprep.subr.mxu0 0.0
    %5178 = vmatpush1.msra.mxu0 %v3492
    %5179 = vmatprep.subr.mxu0 0.0
    %5180 = vmatpush1.msra.mxu0 %v3491
    %5181 = vmatprep.subr.mxu0 0.0
    %5182 = vmatpush1.msra.mxu0 %v3490
    %5183 = vmatprep.subr.mxu0 0.0
    %5184 = vmatpush1.msra.mxu0 %v3489
    %5185 = vmatprep.subr.mxu0 0.0
    %5186 = vmatpush1.msra.mxu0 %v3488
    %5187 = vmatprep.subr.mxu0 0.0
    %5188 = vmatpush1.msra.mxu0 %v3487
    %5189 = vmatprep.subr.mxu0 0.0
    %5190 = vmatpush1.msra.mxu0 %v3486
    %5191 = vmatprep.subr.mxu0 0.0
    %5192 = vmatpush2.msra.mxu0 0.0
    %5193 = vmatprep.subr.mxu0 0.0
    %5194 = vmatpush2.msra.mxu0 0.0
    %5195 = vmatprep.subr.mxu0 0.0
    %5196 = vmatpush2.msra.mxu0 0.0
    %5197 = vmatprep.subr.mxu0 0.0
    %5198 = vmatpush2.msra.mxu0 0.0
    %5199 = vmatprep.subr.mxu0 0.0
    %5200 = vmatpush2.msra.mxu0 0.0
    %5201 = vmatprep.subr.mxu0 0.0
    %5202 = vmatpush2.msra.mxu0 0.0
    %5203 = vmatprep.subr.mxu0 0.0
    %5204 = vmatpush2.msra.mxu0 0.0
    %5205 = vmatprep.subr.mxu0 0.0
    %5206 = vmatpush2.msra.mxu0 0.0
    %5207 = vmatprep.subr.mxu0 0.0
    %5208 = vmatpush2.msra.mxu0 0.0
    %5209 = vmatprep.subr.mxu0 0.0
    %5210 = vmatpush2.msra.mxu0 0.0
    %5211 = vmatprep.subr.mxu0 0.0
    %5212 = vmatpush2.msra.mxu0 0.0
    %5213 = vmatprep.subr.mxu0 0.0
    %5214 = vmatpush2.msra.mxu0 0.0
    %5215 = vmatprep.subr.mxu0 0.0
    %5216 = vmatpush2.msra.mxu0 0.0
    %5217 = vmatprep.subr.mxu0 0.0
    %5218 = vmatpush2.msra.mxu0 0.0
    %5219 = vmatprep.subr.mxu0 0.0
    %5220 = vmatpush2.msra.mxu0 0.0
    %5221 = vmatprep.subr.mxu0 0.0
    %5222 = vmatpush2.msra.mxu0 0.0
    %5223 = vmatprep.mubr.f32.mxu0 0.0
    %5224 = vmatmul.mubr.f32.gmra.mxu0 %v5156
    %v5225 = vpop.f32.mrf.mxu0
    %v5226 = vpop.f32.mrf.mxu0
    %5227 = vmatprep.mubr.f32.mxu0 0.0
    %5228 = vmatmul.mubr.f32.gmra.mxu0 %v5157
    %v5229 = vpop.f32.mrf.mxu0
    %v5230 = vpop.f32.mrf.mxu0
    %5231 = vmatprep.mubr.f32.mxu0 0.0
    %5232 = vmatmul.mubr.f32.gmra.mxu0 %v5158
    %v5233 = vpop.f32.mrf.mxu0
    %v5234 = vadd.f32 0.0, %v5233
    %v5235 = vpop.f32.mrf.mxu0
    %5236 = vdwg.mxu0
    %v5237 = vadd.f32 %v4979, %v5234
    %v5239 = vlaneseq
    %v5240 = vshrl.u32 %v5239, 7
    %v5241 = vsub.s32 0, %v5240
    %v5242 = vrot.slane %v3502, %v5241
    %v5244 = vadd.f32 %v5237, %v5242
    %v5245 = vsel %vm459, %v3465, 0.0
    %5246 = vadd.xlane.f32.xlu0 %v5245
    %v5247 = vpop.xlane.xlu0 %5246
    %v5248 = vsel %vm459, %v3466, 0.0
    %5249 = vadd.xlane.f32.xlu0 %v5248
    %v5250 = vpop.xlane.xlu0 %5249
    %v5251 = vmul.f32 %v5247, %v472
    %v5252 = vmul.f32 %v5250, %v472
    %v5253 = vsub.f32 %v3465, %v5251
    %v5254 = vsub.f32 %v3466, %v5252
    %v5255 = vmul.f32 %v5253, %v5253
    %v5256 = vmul.f32 %v5254, %v5254
    %v5257 = vsel %vm459, %v5255, 0.0
    %5258 = vadd.xlane.f32.xlu0 %v5257
    %v5259 = vpop.xlane.xlu0 %5258
    %v5260 = vsel %vm459, %v5256, 0.0
    %5261 = vadd.xlane.f32.xlu0 %v5260
    %v5262 = vpop.xlane.xlu0 %5261
    %v5263 = vmul.f32 %v5259, %v472
    %v5264 = vmul.f32 %v5262, %v472
    %v5265 = vadd.f32 %v5263, 1e-06
    %v5266 = vadd.f32 %v5264, 1e-06
    %v5267 = vrsqrt.pop %v5265
    %v5268 = vrsqrt.pop %v5266
    %v5269 = vmul.f32 %v5253, %v5267
    %v5270 = vmul.f32 %v5254, %v5268
    %v5271 = vmul.f32 %v5269, %v3547
    %v5272 = vmul.f32 %v5270, %v3547
    %v5273 = vadd.f32 %v5271, %v3556
    %v5274 = vadd.f32 %v5272, %v3556
    %v5276 = vsel %vm459, %v5273, 0
    %v5279 = vsel %vm459, %v5274, 0
    %5281 = vmatprep.subr.mxu0 0.0
    %5282 = vmatpush1.msra.mxu0 0.0
    %5283 = vmatprep.subr.mxu0 0.0
    %5284 = vmatpush1.msra.mxu0 0.0
    %5285 = vmatprep.subr.mxu0 0.0
    %5286 = vmatpush1.msra.mxu0 0.0
    %5287 = vmatprep.subr.mxu0 0.0
    %5288 = vmatpush1.msra.mxu0 0.0
    %5289 = vmatprep.subr.mxu0 0.0
    %5290 = vmatpush1.msra.mxu0 0.0
    %5291 = vmatprep.subr.mxu0 0.0
    %5292 = vmatpush1.msra.mxu0 0.0
    %5293 = vmatprep.subr.mxu0 0.0
    %5294 = vmatpush1.msra.mxu0 0.0
    %5295 = vmatprep.subr.mxu0 0.0
    %5296 = vmatpush1.msra.mxu0 0.0
    %5297 = vmatprep.subr.mxu0 0.0
    %5298 = vmatpush1.msra.mxu0 0.0
    %5299 = vmatprep.subr.mxu0 0.0
    %5300 = vmatpush1.msra.mxu0 0.0
    %5301 = vmatprep.subr.mxu0 0.0
    %5302 = vmatpush1.msra.mxu0 0.0
    %5303 = vmatprep.subr.mxu0 0.0
    %5304 = vmatpush1.msra.mxu0 0.0
    %5305 = vmatprep.subr.mxu0 0.0
    %5306 = vmatpush1.msra.mxu0 %v3472
    %5307 = vmatprep.subr.mxu0 0.0
    %5308 = vmatpush1.msra.mxu0 %v3471
    %5309 = vmatprep.subr.mxu0 0.0
    %5310 = vmatpush1.msra.mxu0 %v3470
    %5311 = vmatprep.subr.mxu0 0.0
    %5312 = vmatpush1.msra.mxu0 %v3469
    %5313 = vmatprep.subr.mxu0 0.0
    %5314 = vmatpush2.msra.mxu0 0.0
    %5315 = vmatprep.subr.mxu0 0.0
    %5316 = vmatpush2.msra.mxu0 0.0
    %5317 = vmatprep.subr.mxu0 0.0
    %5318 = vmatpush2.msra.mxu0 0.0
    %5319 = vmatprep.subr.mxu0 0.0
    %5320 = vmatpush2.msra.mxu0 0.0
    %5321 = vmatprep.subr.mxu0 0.0
    %5322 = vmatpush2.msra.mxu0 0.0
    %5323 = vmatprep.subr.mxu0 0.0
    %5324 = vmatpush2.msra.mxu0 0.0
    %5325 = vmatprep.subr.mxu0 0.0
    %5326 = vmatpush2.msra.mxu0 0.0
    %5327 = vmatprep.subr.mxu0 0.0
    %5328 = vmatpush2.msra.mxu0 0.0
    %5329 = vmatprep.subr.mxu0 0.0
    %5330 = vmatpush2.msra.mxu0 0.0
    %5331 = vmatprep.subr.mxu0 0.0
    %5332 = vmatpush2.msra.mxu0 0.0
    %5333 = vmatprep.subr.mxu0 0.0
    %5334 = vmatpush2.msra.mxu0 0.0
    %5335 = vmatprep.subr.mxu0 0.0
    %5336 = vmatpush2.msra.mxu0 0.0
    %5337 = vmatprep.subr.mxu0 0.0
    %5338 = vmatpush2.msra.mxu0 0.0
    %5339 = vmatprep.subr.mxu0 0.0
    %5340 = vmatpush2.msra.mxu0 0.0
    %5341 = vmatprep.subr.mxu0 0.0
    %5342 = vmatpush2.msra.mxu0 0.0
    %5343 = vmatprep.subr.mxu0 0.0
    %5344 = vmatpush2.msra.mxu0 0.0
    %5345 = vmatprep.mubr.f32.mxu0 0.0
    %5346 = vmatmul.mubr.f32.gmra.mxu0 %v5276
    %v5347 = vpop.f32.mrf.mxu0
    %v5348 = vadd.f32 %v3565, %v5347
    %v5349 = vpop.f32.mrf.mxu0
    %5350 = vmatprep.mubr.f32.mxu0 0.0
    %5351 = vmatmul.mubr.f32.gmra.mxu0 %v5279
    %v5352 = vpop.f32.mrf.mxu0
    %v5353 = vadd.f32 %v3565, %v5352
    %v5354 = vpop.f32.mrf.mxu0
    %5355 = vmatprep.mubr.f32.mxu0 0.0
    %5356 = vmatmul.mubr.f32.gmra.mxu0 %v3574
    %v5357 = vpop.f32.mrf.mxu0
    %v5358 = vadd.f32 %v3565, %v5357
    %v5359 = vpop.f32.mrf.mxu0
    %5360 = vdwg.mxu0
    %v5361 = vmul.f32 %v5348, 0.35355338
    %v5362 = vmul.f32 %v5353, 0.35355338
    %v5363 = vmul.f32 %v5358, 0.35355338
    %5367 = vrot.lane.b32.xlu0 %v5348, 96
    %v5368 = vpop.permute.xlu0 %5367
    %5369 = vrot.lane.b32.xlu0 %v5353, 96
    %v5370 = vpop.permute.xlu0 %5369
    %5371 = vrot.lane.b32.xlu0 %v5358, 96
    %v5372 = vpop.permute.xlu0 %5371
    %v5374 = vsel %vm735, %v5361, 0
    %v5377 = vsel %vm735, %v5362, 0
    %v5380 = vsel %vm735, %v5363, 0
    %v5382 = vsel %vm735, %v5368, 0
    %v5384 = vsel %vm735, %v5370, 0
    %v5386 = vsel %vm735, %v5372, 0
    %5388 = vmatprep.subr.mxu0 0.0
    %5389 = vmatpush1.xpose.msra.mxu0 0.0
    %5390 = vmatprep.subr.mxu0 0.0
    %5391 = vmatpush1.xpose.msra.mxu0 0.0
    %5392 = vmatprep.subr.mxu0 0.0
    %5393 = vmatpush1.xpose.msra.mxu0 0.0
    %5394 = vmatprep.subr.mxu0 0.0
    %5395 = vmatpush1.xpose.msra.mxu0 0.0
    %5396 = vmatprep.subr.mxu0 0.0
    %5397 = vmatpush1.xpose.msra.mxu0 0.0
    %5398 = vmatprep.subr.mxu0 0.0
    %5399 = vmatpush1.xpose.msra.mxu0 0.0
    %5400 = vmatprep.subr.mxu0 0.0
    %5401 = vmatpush1.xpose.msra.mxu0 0.0
    %5402 = vmatprep.subr.mxu0 0.0
    %5403 = vmatpush1.xpose.msra.mxu0 0.0
    %5404 = vmatprep.subr.mxu0 0.0
    %5405 = vmatpush1.xpose.msra.mxu0 0.0
    %5406 = vmatprep.subr.mxu0 0.0
    %5407 = vmatpush1.xpose.msra.mxu0 0.0
    %5408 = vmatprep.subr.mxu0 0.0
    %5409 = vmatpush1.xpose.msra.mxu0 0.0
    %5410 = vmatprep.subr.mxu0 0.0
    %5411 = vmatpush1.xpose.msra.mxu0 0.0
    %5412 = vmatprep.subr.mxu0 0.0
    %5413 = vmatpush1.xpose.msra.mxu0 0.0
    %5414 = vmatprep.subr.mxu0 0.0
    %5415 = vmatpush1.xpose.msra.mxu0 %v5386
    %5416 = vmatprep.subr.mxu0 0.0
    %5417 = vmatpush1.xpose.msra.mxu0 %v5384
    %5418 = vmatprep.subr.mxu0 0.0
    %5419 = vmatpush1.xpose.msra.mxu0 %v5382
    %5420 = vmatprep.subr.mxu0 0.0
    %5421 = vmatpush2.xpose.msra.mxu0 0.0
    %5422 = vmatprep.subr.mxu0 0.0
    %5423 = vmatpush2.xpose.msra.mxu0 0.0
    %5424 = vmatprep.subr.mxu0 0.0
    %5425 = vmatpush2.xpose.msra.mxu0 0.0
    %5426 = vmatprep.subr.mxu0 0.0
    %5427 = vmatpush2.xpose.msra.mxu0 0.0
    %5428 = vmatprep.subr.mxu0 0.0
    %5429 = vmatpush2.xpose.msra.mxu0 0.0
    %5430 = vmatprep.subr.mxu0 0.0
    %5431 = vmatpush2.xpose.msra.mxu0 0.0
    %5432 = vmatprep.subr.mxu0 0.0
    %5433 = vmatpush2.xpose.msra.mxu0 0.0
    %5434 = vmatprep.subr.mxu0 0.0
    %5435 = vmatpush2.xpose.msra.mxu0 0.0
    %5436 = vmatprep.subr.mxu0 0.0
    %5437 = vmatpush2.xpose.msra.mxu0 0.0
    %5438 = vmatprep.subr.mxu0 0.0
    %5439 = vmatpush2.xpose.msra.mxu0 0.0
    %5440 = vmatprep.subr.mxu0 0.0
    %5441 = vmatpush2.xpose.msra.mxu0 0.0
    %5442 = vmatprep.subr.mxu0 0.0
    %5443 = vmatpush2.xpose.msra.mxu0 0.0
    %5444 = vmatprep.subr.mxu0 0.0
    %5445 = vmatpush2.xpose.msra.mxu0 0.0
    %5446 = vmatprep.subr.mxu0 0.0
    %5447 = vmatpush2.xpose.msra.mxu0 0.0
    %5448 = vmatprep.subr.mxu0 0.0
    %5449 = vmatpush2.xpose.msra.mxu0 0.0
    %5450 = vmatprep.subr.mxu0 0.0
    %5451 = vmatpush2.xpose.msra.mxu0 0.0
    %5452 = vmatprep.mubr.f32.mxu0 0.0
    %5453 = vmatmul.mubr.f32.gmra.mxu0 %v5374
    %v5454 = vpop.f32.mrf.mxu0
    %v5455 = vadd.f32 0.0, %v5454
    %v5456 = vpop.f32.mrf.mxu0
    %5457 = vmatprep.mubr.f32.mxu0 0.0
    %5458 = vmatmul.mubr.f32.gmra.mxu0 %v5377
    %v5459 = vpop.f32.mrf.mxu0
    %v5460 = vadd.f32 0.0, %v5459
    %v5461 = vpop.f32.mrf.mxu0
    %5462 = vmatprep.mubr.f32.mxu0 0.0
    %5463 = vmatmul.mubr.f32.gmra.mxu0 %v5380
    %v5464 = vpop.f32.mrf.mxu0
    %v5465 = vadd.f32 0.0, %v5464
    %v5466 = vpop.f32.mrf.mxu0
    %5467 = vdwg.mxu0
    %v5468 = vsel %vm3763, %v5455, -inf
    %5469 = vmax.xlane.f32.xlu0 %v5468
    %v5470 = vpop.xlane.xlu0 %5469
    %v5471 = vsel %vm3763, %v5460, -inf
    %5472 = vmax.xlane.f32.xlu0 %v5471
    %v5473 = vpop.xlane.xlu0 %5472
    %v5474 = vsel %vm3770, %v5465, -inf
    %5475 = vmax.xlane.f32.xlu0 %v5474
    %v5476 = vpop.xlane.xlu0 %5475
    %v5477 = vsub.f32 %v5455, %v5470
    %v5478 = vsub.f32 %v5460, %v5473
    %v5479 = vsub.f32 %v5465, %v5476
    %v5480 = vmul.f32 %v5477, 1.442695
    %v5481 = vpow.pop %v5480
    %v5482 = vmul.f32 %v5478, 1.442695
    %v5483 = vpow.pop %v5482
    %v5484 = vmul.f32 %v5479, 1.442695
    %v5485 = vpow.pop %v5484
    %v5486 = vsel %vm3763, %v5481, 0.0
    %5487 = vadd.xlane.f32.xlu0 %v5486
    %v5488 = vpop.xlane.xlu0 %5487
    %v5489 = vsel %vm3763, %v5483, 0.0
    %5490 = vadd.xlane.f32.xlu0 %v5489
    %v5491 = vpop.xlane.xlu0 %5490
    %v5492 = vsel %vm3770, %v5485, 0.0
    %5493 = vadd.xlane.f32.xlu0 %v5492
    %v5494 = vpop.xlane.xlu0 %5493
    %v5495 = vrcp.pop %v5488
    %v5496 = vmul.f32 %v5481, %v5495
    %v5497 = vrcp.pop %v5491
    %v5498 = vmul.f32 %v5483, %v5497
    %v5499 = vrcp.pop %v5494
    %v5500 = vmul.f32 %v5485, %v5499
    %5501 = vrot.lane.b32.xlu0 %v5348, 64
    %v5502 = vpop.permute.xlu0 %5501
    %5503 = vrot.lane.b32.xlu0 %v5353, 64
    %v5504 = vpop.permute.xlu0 %5503
    %5505 = vrot.lane.b32.xlu0 %v5358, 64
    %v5506 = vpop.permute.xlu0 %5505
    %v5510 = vsel %vm3763, %v5496, 0
    %v5513 = vsel %vm3763, %v5498, 0
    %v5516 = vsel %vm3763, %v5500, 0
    %v5518 = vsel %vm3815, %v5506, 0
    %5520 = vmatprep.subr.mxu0 0.0
    %5521 = vmatpush1.msra.mxu0 0.0
    %5522 = vmatprep.subr.mxu0 0.0
    %5523 = vmatpush1.msra.mxu0 0.0
    %5524 = vmatprep.subr.mxu0 0.0
    %5525 = vmatpush1.msra.mxu0 0.0
    %5526 = vmatprep.subr.mxu0 0.0
    %5527 = vmatpush1.msra.mxu0 0.0
    %5528 = vmatprep.subr.mxu0 0.0
    %5529 = vmatpush1.msra.mxu0 0.0
    %5530 = vmatprep.subr.mxu0 0.0
    %5531 = vmatpush1.msra.mxu0 0.0
    %5532 = vmatprep.subr.mxu0 0.0
    %5533 = vmatpush1.msra.mxu0 0.0
    %5534 = vmatprep.subr.mxu0 0.0
    %5535 = vmatpush1.msra.mxu0 0.0
    %5536 = vmatprep.subr.mxu0 0.0
    %5537 = vmatpush1.msra.mxu0 0.0
    %5538 = vmatprep.subr.mxu0 0.0
    %5539 = vmatpush1.msra.mxu0 0.0
    %5540 = vmatprep.subr.mxu0 0.0
    %5541 = vmatpush1.msra.mxu0 0.0
    %5542 = vmatprep.subr.mxu0 0.0
    %5543 = vmatpush1.msra.mxu0 0.0
    %5544 = vmatprep.subr.mxu0 0.0
    %5545 = vmatpush1.msra.mxu0 0.0
    %5546 = vmatprep.subr.mxu0 0.0
    %5547 = vmatpush1.msra.mxu0 %v5518
    %5548 = vmatprep.subr.mxu0 0.0
    %5549 = vmatpush1.msra.mxu0 %v5504
    %5550 = vmatprep.subr.mxu0 0.0
    %5551 = vmatpush1.msra.mxu0 %v5502
    %5552 = vmatprep.subr.mxu0 0.0
    %5553 = vmatpush2.msra.mxu0 0.0
    %5554 = vmatprep.subr.mxu0 0.0
    %5555 = vmatpush2.msra.mxu0 0.0
    %5556 = vmatprep.subr.mxu0 0.0
    %5557 = vmatpush2.msra.mxu0 0.0
    %5558 = vmatprep.subr.mxu0 0.0
    %5559 = vmatpush2.msra.mxu0 0.0
    %5560 = vmatprep.subr.mxu0 0.0
    %5561 = vmatpush2.msra.mxu0 0.0
    %5562 = vmatprep.subr.mxu0 0.0
    %5563 = vmatpush2.msra.mxu0 0.0
    %5564 = vmatprep.subr.mxu0 0.0
    %5565 = vmatpush2.msra.mxu0 0.0
    %5566 = vmatprep.subr.mxu0 0.0
    %5567 = vmatpush2.msra.mxu0 0.0
    %5568 = vmatprep.subr.mxu0 0.0
    %5569 = vmatpush2.msra.mxu0 0.0
    %5570 = vmatprep.subr.mxu0 0.0
    %5571 = vmatpush2.msra.mxu0 0.0
    %5572 = vmatprep.subr.mxu0 0.0
    %5573 = vmatpush2.msra.mxu0 0.0
    %5574 = vmatprep.subr.mxu0 0.0
    %5575 = vmatpush2.msra.mxu0 0.0
    %5576 = vmatprep.subr.mxu0 0.0
    %5577 = vmatpush2.msra.mxu0 0.0
    %5578 = vmatprep.subr.mxu0 0.0
    %5579 = vmatpush2.msra.mxu0 0.0
    %5580 = vmatprep.subr.mxu0 0.0
    %5581 = vmatpush2.msra.mxu0 0.0
    %5582 = vmatprep.subr.mxu0 0.0
    %5583 = vmatpush2.msra.mxu0 0.0
    %5584 = vmatprep.mubr.f32.mxu0 0.0
    %5585 = vmatmul.mubr.f32.gmra.mxu0 %v5510
    %v5586 = vpop.f32.mrf.mxu0
    %v5587 = vadd.f32 0.0, %v5586
    %v5588 = vpop.f32.mrf.mxu0
    %5589 = vmatprep.mubr.f32.mxu0 0.0
    %5590 = vmatmul.mubr.f32.gmra.mxu0 %v5513
    %v5591 = vpop.f32.mrf.mxu0
    %v5592 = vadd.f32 0.0, %v5591
    %v5593 = vpop.f32.mrf.mxu0
    %5594 = vmatprep.mubr.f32.mxu0 0.0
    %5595 = vmatmul.mubr.f32.gmra.mxu0 %v5516
    %v5596 = vpop.f32.mrf.mxu0
    %v5597 = vadd.f32 0.0, %v5596
    %v5598 = vpop.f32.mrf.mxu0
    %5599 = vdwg.mxu0
    %5600 = vrot.lane.b32.xlu0 %v5361, 120
    %v5601 = vpop.permute.xlu0 %5600
    %5602 = vrot.lane.b32.xlu0 %v5362, 120
    %v5603 = vpop.permute.xlu0 %5602
    %5604 = vrot.lane.b32.xlu0 %v5363, 120
    %v5605 = vpop.permute.xlu0 %5604
    %5606 = vrot.lane.b32.xlu0 %v5348, 88
    %v5607 = vpop.permute.xlu0 %5606
    %5608 = vrot.lane.b32.xlu0 %v5353, 88
    %v5609 = vpop.permute.xlu0 %5608
    %5610 = vrot.lane.b32.xlu0 %v5358, 88
    %v5611 = vpop.permute.xlu0 %5610
    %v5612 = vsel %vm735, %v5601, 0
    %v5614 = vsel %vm735, %v5603, 0
    %v5616 = vsel %vm735, %v5605, 0
    %v5618 = vsel %vm735, %v5607, 0
    %v5620 = vsel %vm735, %v5609, 0
    %v5622 = vsel %vm735, %v5611, 0
    %5624 = vmatprep.subr.mxu0 0.0
    %5625 = vmatpush1.xpose.msra.mxu0 0.0
    %5626 = vmatprep.subr.mxu0 0.0
    %5627 = vmatpush1.xpose.msra.mxu0 0.0
    %5628 = vmatprep.subr.mxu0 0.0
    %5629 = vmatpush1.xpose.msra.mxu0 0.0
    %5630 = vmatprep.subr.mxu0 0.0
    %5631 = vmatpush1.xpose.msra.mxu0 0.0
    %5632 = vmatprep.subr.mxu0 0.0
    %5633 = vmatpush1.xpose.msra.mxu0 0.0
    %5634 = vmatprep.subr.mxu0 0.0
    %5635 = vmatpush1.xpose.msra.mxu0 0.0
    %5636 = vmatprep.subr.mxu0 0.0
    %5637 = vmatpush1.xpose.msra.mxu0 0.0
    %5638 = vmatprep.subr.mxu0 0.0
    %5639 = vmatpush1.xpose.msra.mxu0 0.0
    %5640 = vmatprep.subr.mxu0 0.0
    %5641 = vmatpush1.xpose.msra.mxu0 0.0
    %5642 = vmatprep.subr.mxu0 0.0
    %5643 = vmatpush1.xpose.msra.mxu0 0.0
    %5644 = vmatprep.subr.mxu0 0.0
    %5645 = vmatpush1.xpose.msra.mxu0 0.0
    %5646 = vmatprep.subr.mxu0 0.0
    %5647 = vmatpush1.xpose.msra.mxu0 0.0
    %5648 = vmatprep.subr.mxu0 0.0
    %5649 = vmatpush1.xpose.msra.mxu0 0.0
    %5650 = vmatprep.subr.mxu0 0.0
    %5651 = vmatpush1.xpose.msra.mxu0 %v5622
    %5652 = vmatprep.subr.mxu0 0.0
    %5653 = vmatpush1.xpose.msra.mxu0 %v5620
    %5654 = vmatprep.subr.mxu0 0.0
    %5655 = vmatpush1.xpose.msra.mxu0 %v5618
    %5656 = vmatprep.subr.mxu0 0.0
    %5657 = vmatpush2.xpose.msra.mxu0 0.0
    %5658 = vmatprep.subr.mxu0 0.0
    %5659 = vmatpush2.xpose.msra.mxu0 0.0
    %5660 = vmatprep.subr.mxu0 0.0
    %5661 = vmatpush2.xpose.msra.mxu0 0.0
    %5662 = vmatprep.subr.mxu0 0.0
    %5663 = vmatpush2.xpose.msra.mxu0 0.0
    %5664 = vmatprep.subr.mxu0 0.0
    %5665 = vmatpush2.xpose.msra.mxu0 0.0
    %5666 = vmatprep.subr.mxu0 0.0
    %5667 = vmatpush2.xpose.msra.mxu0 0.0
    %5668 = vmatprep.subr.mxu0 0.0
    %5669 = vmatpush2.xpose.msra.mxu0 0.0
    %5670 = vmatprep.subr.mxu0 0.0
    %5671 = vmatpush2.xpose.msra.mxu0 0.0
    %5672 = vmatprep.subr.mxu0 0.0
    %5673 = vmatpush2.xpose.msra.mxu0 0.0
    %5674 = vmatprep.subr.mxu0 0.0
    %5675 = vmatpush2.xpose.msra.mxu0 0.0
    %5676 = vmatprep.subr.mxu0 0.0
    %5677 = vmatpush2.xpose.msra.mxu0 0.0
    %5678 = vmatprep.subr.mxu0 0.0
    %5679 = vmatpush2.xpose.msra.mxu0 0.0
    %5680 = vmatprep.subr.mxu0 0.0
    %5681 = vmatpush2.xpose.msra.mxu0 0.0
    %5682 = vmatprep.subr.mxu0 0.0
    %5683 = vmatpush2.xpose.msra.mxu0 0.0
    %5684 = vmatprep.subr.mxu0 0.0
    %5685 = vmatpush2.xpose.msra.mxu0 0.0
    %5686 = vmatprep.subr.mxu0 0.0
    %5687 = vmatpush2.xpose.msra.mxu0 0.0
    %5688 = vmatprep.mubr.f32.mxu0 0.0
    %5689 = vmatmul.mubr.f32.gmra.mxu0 %v5612
    %v5690 = vpop.f32.mrf.mxu0
    %v5691 = vadd.f32 0.0, %v5690
    %v5692 = vpop.f32.mrf.mxu0
    %5693 = vmatprep.mubr.f32.mxu0 0.0
    %5694 = vmatmul.mubr.f32.gmra.mxu0 %v5614
    %v5695 = vpop.f32.mrf.mxu0
    %v5696 = vadd.f32 0.0, %v5695
    %v5697 = vpop.f32.mrf.mxu0
    %5698 = vmatprep.mubr.f32.mxu0 0.0
    %5699 = vmatmul.mubr.f32.gmra.mxu0 %v5616
    %v5700 = vpop.f32.mrf.mxu0
    %v5701 = vadd.f32 0.0, %v5700
    %v5702 = vpop.f32.mrf.mxu0
    %5703 = vdwg.mxu0
    %v5704 = vsel %vm3763, %v5691, -inf
    %5705 = vmax.xlane.f32.xlu0 %v5704
    %v5706 = vpop.xlane.xlu0 %5705
    %v5707 = vsel %vm3763, %v5696, -inf
    %5708 = vmax.xlane.f32.xlu0 %v5707
    %v5709 = vpop.xlane.xlu0 %5708
    %v5710 = vsel %vm3770, %v5701, -inf
    %5711 = vmax.xlane.f32.xlu0 %v5710
    %v5712 = vpop.xlane.xlu0 %5711
    %v5713 = vsub.f32 %v5691, %v5706
    %v5714 = vsub.f32 %v5696, %v5709
    %v5715 = vsub.f32 %v5701, %v5712
    %v5716 = vmul.f32 %v5713, 1.442695
    %v5717 = vpow.pop %v5716
    %v5718 = vmul.f32 %v5714, 1.442695
    %v5719 = vpow.pop %v5718
    %v5720 = vmul.f32 %v5715, 1.442695
    %v5721 = vpow.pop %v5720
    %v5722 = vsel %vm3763, %v5717, 0.0
    %5723 = vadd.xlane.f32.xlu0 %v5722
    %v5724 = vpop.xlane.xlu0 %5723
    %v5725 = vsel %vm3763, %v5719, 0.0
    %5726 = vadd.xlane.f32.xlu0 %v5725
    %v5727 = vpop.xlane.xlu0 %5726
    %v5728 = vsel %vm3770, %v5721, 0.0
    %5729 = vadd.xlane.f32.xlu0 %v5728
    %v5730 = vpop.xlane.xlu0 %5729
    %v5731 = vrcp.pop %v5724
    %v5732 = vmul.f32 %v5717, %v5731
    %v5733 = vrcp.pop %v5727
    %v5734 = vmul.f32 %v5719, %v5733
    %v5735 = vrcp.pop %v5730
    %v5736 = vmul.f32 %v5721, %v5735
    %5737 = vrot.lane.b32.xlu0 %v5348, 56
    %v5738 = vpop.permute.xlu0 %5737
    %5739 = vrot.lane.b32.xlu0 %v5353, 56
    %v5740 = vpop.permute.xlu0 %5739
    %5741 = vrot.lane.b32.xlu0 %v5358, 56
    %v5742 = vpop.permute.xlu0 %5741
    %v5746 = vsel %vm3763, %v5732, 0
    %v5749 = vsel %vm3763, %v5734, 0
    %v5752 = vsel %vm3763, %v5736, 0
    %v5754 = vsel %vm3815, %v5742, 0
    %5756 = vmatprep.subr.mxu0 0.0
    %5757 = vmatpush1.msra.mxu0 0.0
    %5758 = vmatprep.subr.mxu0 0.0
    %5759 = vmatpush1.msra.mxu0 0.0
    %5760 = vmatprep.subr.mxu0 0.0
    %5761 = vmatpush1.msra.mxu0 0.0
    %5762 = vmatprep.subr.mxu0 0.0
    %5763 = vmatpush1.msra.mxu0 0.0
    %5764 = vmatprep.subr.mxu0 0.0
    %5765 = vmatpush1.msra.mxu0 0.0
    %5766 = vmatprep.subr.mxu0 0.0
    %5767 = vmatpush1.msra.mxu0 0.0
    %5768 = vmatprep.subr.mxu0 0.0
    %5769 = vmatpush1.msra.mxu0 0.0
    %5770 = vmatprep.subr.mxu0 0.0
    %5771 = vmatpush1.msra.mxu0 0.0
    %5772 = vmatprep.subr.mxu0 0.0
    %5773 = vmatpush1.msra.mxu0 0.0
    %5774 = vmatprep.subr.mxu0 0.0
    %5775 = vmatpush1.msra.mxu0 0.0
    %5776 = vmatprep.subr.mxu0 0.0
    %5777 = vmatpush1.msra.mxu0 0.0
    %5778 = vmatprep.subr.mxu0 0.0
    %5779 = vmatpush1.msra.mxu0 0.0
    %5780 = vmatprep.subr.mxu0 0.0
    %5781 = vmatpush1.msra.mxu0 0.0
    %5782 = vmatprep.subr.mxu0 0.0
    %5783 = vmatpush1.msra.mxu0 %v5754
    %5784 = vmatprep.subr.mxu0 0.0
    %5785 = vmatpush1.msra.mxu0 %v5740
    %5786 = vmatprep.subr.mxu0 0.0
    %5787 = vmatpush1.msra.mxu0 %v5738
    %5788 = vmatprep.subr.mxu0 0.0
    %5789 = vmatpush2.msra.mxu0 0.0
    %5790 = vmatprep.subr.mxu0 0.0
    %5791 = vmatpush2.msra.mxu0 0.0
    %5792 = vmatprep.subr.mxu0 0.0
    %5793 = vmatpush2.msra.mxu0 0.0
    %5794 = vmatprep.subr.mxu0 0.0
    %5795 = vmatpush2.msra.mxu0 0.0
    %5796 = vmatprep.subr.mxu0 0.0
    %5797 = vmatpush2.msra.mxu0 0.0
    %5798 = vmatprep.subr.mxu0 0.0
    %5799 = vmatpush2.msra.mxu0 0.0
    %5800 = vmatprep.subr.mxu0 0.0
    %5801 = vmatpush2.msra.mxu0 0.0
    %5802 = vmatprep.subr.mxu0 0.0
    %5803 = vmatpush2.msra.mxu0 0.0
    %5804 = vmatprep.subr.mxu0 0.0
    %5805 = vmatpush2.msra.mxu0 0.0
    %5806 = vmatprep.subr.mxu0 0.0
    %5807 = vmatpush2.msra.mxu0 0.0
    %5808 = vmatprep.subr.mxu0 0.0
    %5809 = vmatpush2.msra.mxu0 0.0
    %5810 = vmatprep.subr.mxu0 0.0
    %5811 = vmatpush2.msra.mxu0 0.0
    %5812 = vmatprep.subr.mxu0 0.0
    %5813 = vmatpush2.msra.mxu0 0.0
    %5814 = vmatprep.subr.mxu0 0.0
    %5815 = vmatpush2.msra.mxu0 0.0
    %5816 = vmatprep.subr.mxu0 0.0
    %5817 = vmatpush2.msra.mxu0 0.0
    %5818 = vmatprep.subr.mxu0 0.0
    %5819 = vmatpush2.msra.mxu0 0.0
    %5820 = vmatprep.mubr.f32.mxu0 0.0
    %5821 = vmatmul.mubr.f32.gmra.mxu0 %v5746
    %v5822 = vpop.f32.mrf.mxu0
    %v5823 = vadd.f32 0.0, %v5822
    %v5824 = vpop.f32.mrf.mxu0
    %5825 = vmatprep.mubr.f32.mxu0 0.0
    %5826 = vmatmul.mubr.f32.gmra.mxu0 %v5749
    %v5827 = vpop.f32.mrf.mxu0
    %v5828 = vadd.f32 0.0, %v5827
    %v5829 = vpop.f32.mrf.mxu0
    %5830 = vmatprep.mubr.f32.mxu0 0.0
    %5831 = vmatmul.mubr.f32.gmra.mxu0 %v5752
    %v5832 = vpop.f32.mrf.mxu0
    %v5833 = vadd.f32 0.0, %v5832
    %v5834 = vpop.f32.mrf.mxu0
    %5835 = vdwg.mxu0
    %v5837 = vsel %vm735, %v5823, 0
    %v5840 = vsel %vm735, %v5828, 0
    %v5843 = vsel %vm735, %v5833, 0
    %5845 = vmatprep.subr.mxu0 0.0
    %5846 = vmatpush1.msra.mxu0 0.0
    %5847 = vmatprep.subr.mxu0 0.0
    %5848 = vmatpush1.msra.mxu0 0.0
    %5849 = vmatprep.subr.mxu0 0.0
    %5850 = vmatpush1.msra.mxu0 0.0
    %5851 = vmatprep.subr.mxu0 0.0
    %5852 = vmatpush1.msra.mxu0 0.0
    %5853 = vmatprep.subr.mxu0 0.0
    %5854 = vmatpush1.msra.mxu0 0.0
    %5855 = vmatprep.subr.mxu0 0.0
    %5856 = vmatpush1.msra.mxu0 0.0
    %5857 = vmatprep.subr.mxu0 0.0
    %5858 = vmatpush1.msra.mxu0 0.0
    %5859 = vmatprep.subr.mxu0 0.0
    %5860 = vmatpush1.msra.mxu0 0.0
    %5861 = vmatprep.subr.mxu0 0.0
    %5862 = vmatpush1.msra.mxu0 0.0
    %5863 = vmatprep.subr.mxu0 0.0
    %5864 = vmatpush1.msra.mxu0 0.0
    %5865 = vmatprep.subr.mxu0 0.0
    %5866 = vmatpush1.msra.mxu0 0.0
    %5867 = vmatprep.subr.mxu0 0.0
    %5868 = vmatpush1.msra.mxu0 0.0
    %5869 = vmatprep.subr.mxu0 0.0
    %5870 = vmatpush1.msra.mxu0 0.0
    %5871 = vmatprep.subr.mxu0 0.0
    %5872 = vmatpush1.msra.mxu0 0.0
    %5873 = vmatprep.subr.mxu0 0.0
    %5874 = vmatpush1.msra.mxu0 0.0
    %5875 = vmatprep.subr.mxu0 0.0
    %5876 = vmatpush1.msra.mxu0 %v3475
    %5877 = vmatprep.subr.mxu0 0.0
    %5878 = vmatpush2.msra.mxu0 0.0
    %5879 = vmatprep.subr.mxu0 0.0
    %5880 = vmatpush2.msra.mxu0 0.0
    %5881 = vmatprep.subr.mxu0 0.0
    %5882 = vmatpush2.msra.mxu0 0.0
    %5883 = vmatprep.subr.mxu0 0.0
    %5884 = vmatpush2.msra.mxu0 0.0
    %5885 = vmatprep.subr.mxu0 0.0
    %5886 = vmatpush2.msra.mxu0 0.0
    %5887 = vmatprep.subr.mxu0 0.0
    %5888 = vmatpush2.msra.mxu0 0.0
    %5889 = vmatprep.subr.mxu0 0.0
    %5890 = vmatpush2.msra.mxu0 0.0
    %5891 = vmatprep.subr.mxu0 0.0
    %5892 = vmatpush2.msra.mxu0 0.0
    %5893 = vmatprep.subr.mxu0 0.0
    %5894 = vmatpush2.msra.mxu0 0.0
    %5895 = vmatprep.subr.mxu0 0.0
    %5896 = vmatpush2.msra.mxu0 0.0
    %5897 = vmatprep.subr.mxu0 0.0
    %5898 = vmatpush2.msra.mxu0 0.0
    %5899 = vmatprep.subr.mxu0 0.0
    %5900 = vmatpush2.msra.mxu0 0.0
    %5901 = vmatprep.subr.mxu0 0.0
    %5902 = vmatpush2.msra.mxu0 0.0
    %5903 = vmatprep.subr.mxu0 0.0
    %5904 = vmatpush2.msra.mxu0 0.0
    %5905 = vmatprep.subr.mxu0 0.0
    %5906 = vmatpush2.msra.mxu0 0.0
    %5907 = vmatprep.subr.mxu0 0.0
    %5908 = vmatpush2.msra.mxu0 0.0
    %5909 = vmatprep.mubr.f32.mxu0 0.0
    %5910 = vmatmul.mubr.f32.gmra.mxu0 %v5837
    %v5911 = vpop.f32.mrf.mxu0
    %v5912 = vadd.f32 0.0, %v5911
    %v5913 = vpop.f32.mrf.mxu0
    %5914 = vmatprep.mubr.f32.mxu0 0.0
    %5915 = vmatmul.mubr.f32.gmra.mxu0 %v5840
    %v5916 = vpop.f32.mrf.mxu0
    %v5917 = vadd.f32 0.0, %v5916
    %v5918 = vpop.f32.mrf.mxu0
    %5919 = vmatprep.mubr.f32.mxu0 0.0
    %5920 = vmatmul.mubr.f32.gmra.mxu0 %v5843
    %v5921 = vpop.f32.mrf.mxu0
    %v5922 = vadd.f32 0.0, %v5921
    %v5923 = vpop.f32.mrf.mxu0
    %5924 = vdwg.mxu0
    %v5926 = vsel %vm735, %v5587, 0
    %v5929 = vsel %vm735, %v5592, 0
    %v5932 = vsel %vm735, %v5597, 0
    %5934 = vmatprep.subr.mxu0 0.0
    %5935 = vmatpush1.msra.mxu0 0.0
    %5936 = vmatprep.subr.mxu0 0.0
    %5937 = vmatpush1.msra.mxu0 0.0
    %5938 = vmatprep.subr.mxu0 0.0
    %5939 = vmatpush1.msra.mxu0 0.0
    %5940 = vmatprep.subr.mxu0 0.0
    %5941 = vmatpush1.msra.mxu0 0.0
    %5942 = vmatprep.subr.mxu0 0.0
    %5943 = vmatpush1.msra.mxu0 0.0
    %5944 = vmatprep.subr.mxu0 0.0
    %5945 = vmatpush1.msra.mxu0 0.0
    %5946 = vmatprep.subr.mxu0 0.0
    %5947 = vmatpush1.msra.mxu0 0.0
    %5948 = vmatprep.subr.mxu0 0.0
    %5949 = vmatpush1.msra.mxu0 0.0
    %5950 = vmatprep.subr.mxu0 0.0
    %5951 = vmatpush1.msra.mxu0 0.0
    %5952 = vmatprep.subr.mxu0 0.0
    %5953 = vmatpush1.msra.mxu0 0.0
    %5954 = vmatprep.subr.mxu0 0.0
    %5955 = vmatpush1.msra.mxu0 0.0
    %5956 = vmatprep.subr.mxu0 0.0
    %5957 = vmatpush1.msra.mxu0 0.0
    %5958 = vmatprep.subr.mxu0 0.0
    %5959 = vmatpush1.msra.mxu0 0.0
    %5960 = vmatprep.subr.mxu0 0.0
    %5961 = vmatpush1.msra.mxu0 0.0
    %5962 = vmatprep.subr.mxu0 0.0
    %5963 = vmatpush1.msra.mxu0 0.0
    %5964 = vmatprep.subr.mxu0 0.0
    %5965 = vmatpush1.msra.mxu0 %v3474
    %5966 = vmatprep.subr.mxu0 0.0
    %5967 = vmatpush2.msra.mxu0 0.0
    %5968 = vmatprep.subr.mxu0 0.0
    %5969 = vmatpush2.msra.mxu0 0.0
    %5970 = vmatprep.subr.mxu0 0.0
    %5971 = vmatpush2.msra.mxu0 0.0
    %5972 = vmatprep.subr.mxu0 0.0
    %5973 = vmatpush2.msra.mxu0 0.0
    %5974 = vmatprep.subr.mxu0 0.0
    %5975 = vmatpush2.msra.mxu0 0.0
    %5976 = vmatprep.subr.mxu0 0.0
    %5977 = vmatpush2.msra.mxu0 0.0
    %5978 = vmatprep.subr.mxu0 0.0
    %5979 = vmatpush2.msra.mxu0 0.0
    %5980 = vmatprep.subr.mxu0 0.0
    %5981 = vmatpush2.msra.mxu0 0.0
    %5982 = vmatprep.subr.mxu0 0.0
    %5983 = vmatpush2.msra.mxu0 0.0
    %5984 = vmatprep.subr.mxu0 0.0
    %5985 = vmatpush2.msra.mxu0 0.0
    %5986 = vmatprep.subr.mxu0 0.0
    %5987 = vmatpush2.msra.mxu0 0.0
    %5988 = vmatprep.subr.mxu0 0.0
    %5989 = vmatpush2.msra.mxu0 0.0
    %5990 = vmatprep.subr.mxu0 0.0
    %5991 = vmatpush2.msra.mxu0 0.0
    %5992 = vmatprep.subr.mxu0 0.0
    %5993 = vmatpush2.msra.mxu0 0.0
    %5994 = vmatprep.subr.mxu0 0.0
    %5995 = vmatpush2.msra.mxu0 0.0
    %5996 = vmatprep.subr.mxu0 0.0
    %5997 = vmatpush2.msra.mxu0 0.0
    %5998 = vmatprep.mubr.f32.mxu0 0.0
    %5999 = vmatmul.mubr.f32.gmra.mxu0 %v5926
    %v6000 = vpop.f32.mrf.mxu0
    %v6001 = vadd.f32 %v5912, %v6000
    %v6002 = vpop.f32.mrf.mxu0
    %6003 = vmatprep.mubr.f32.mxu0 0.0
    %6004 = vmatmul.mubr.f32.gmra.mxu0 %v5929
    %v6005 = vpop.f32.mrf.mxu0
    %v6006 = vadd.f32 %v5917, %v6005
    %v6007 = vpop.f32.mrf.mxu0
    %6008 = vmatprep.mubr.f32.mxu0 0.0
    %6009 = vmatmul.mubr.f32.gmra.mxu0 %v5932
    %v6010 = vpop.f32.mrf.mxu0
    %v6011 = vadd.f32 %v5922, %v6010
    %v6012 = vpop.f32.mrf.mxu0
    %6013 = vdwg.mxu0
    %6014 = vrot.lane.b32.xlu0 %v5361, 112
    %v6015 = vpop.permute.xlu0 %6014
    %6016 = vrot.lane.b32.xlu0 %v5362, 112
    %v6017 = vpop.permute.xlu0 %6016
    %6018 = vrot.lane.b32.xlu0 %v5363, 112
    %v6019 = vpop.permute.xlu0 %6018
    %6020 = vrot.lane.b32.xlu0 %v5348, 80
    %v6021 = vpop.permute.xlu0 %6020
    %6022 = vrot.lane.b32.xlu0 %v5353, 80
    %v6023 = vpop.permute.xlu0 %6022
    %6024 = vrot.lane.b32.xlu0 %v5358, 80
    %v6025 = vpop.permute.xlu0 %6024
    %v6026 = vsel %vm735, %v6015, 0
    %v6028 = vsel %vm735, %v6017, 0
    %v6030 = vsel %vm735, %v6019, 0
    %v6032 = vsel %vm735, %v6021, 0
    %v6034 = vsel %vm735, %v6023, 0
    %v6036 = vsel %vm735, %v6025, 0
    %6038 = vmatprep.subr.mxu0 0.0
    %6039 = vmatpush1.xpose.msra.mxu0 0.0
    %6040 = vmatprep.subr.mxu0 0.0
    %6041 = vmatpush1.xpose.msra.mxu0 0.0
    %6042 = vmatprep.subr.mxu0 0.0
    %6043 = vmatpush1.xpose.msra.mxu0 0.0
    %6044 = vmatprep.subr.mxu0 0.0
    %6045 = vmatpush1.xpose.msra.mxu0 0.0
    %6046 = vmatprep.subr.mxu0 0.0
    %6047 = vmatpush1.xpose.msra.mxu0 0.0
    %6048 = vmatprep.subr.mxu0 0.0
    %6049 = vmatpush1.xpose.msra.mxu0 0.0
    %6050 = vmatprep.subr.mxu0 0.0
    %6051 = vmatpush1.xpose.msra.mxu0 0.0
    %6052 = vmatprep.subr.mxu0 0.0
    %6053 = vmatpush1.xpose.msra.mxu0 0.0
    %6054 = vmatprep.subr.mxu0 0.0
    %6055 = vmatpush1.xpose.msra.mxu0 0.0
    %6056 = vmatprep.subr.mxu0 0.0
    %6057 = vmatpush1.xpose.msra.mxu0 0.0
    %6058 = vmatprep.subr.mxu0 0.0
    %6059 = vmatpush1.xpose.msra.mxu0 0.0
    %6060 = vmatprep.subr.mxu0 0.0
    %6061 = vmatpush1.xpose.msra.mxu0 0.0
    %6062 = vmatprep.subr.mxu0 0.0
    %6063 = vmatpush1.xpose.msra.mxu0 0.0
    %6064 = vmatprep.subr.mxu0 0.0
    %6065 = vmatpush1.xpose.msra.mxu0 %v6036
    %6066 = vmatprep.subr.mxu0 0.0
    %6067 = vmatpush1.xpose.msra.mxu0 %v6034
    %6068 = vmatprep.subr.mxu0 0.0
    %6069 = vmatpush1.xpose.msra.mxu0 %v6032
    %6070 = vmatprep.subr.mxu0 0.0
    %6071 = vmatpush2.xpose.msra.mxu0 0.0
    %6072 = vmatprep.subr.mxu0 0.0
    %6073 = vmatpush2.xpose.msra.mxu0 0.0
    %6074 = vmatprep.subr.mxu0 0.0
    %6075 = vmatpush2.xpose.msra.mxu0 0.0
    %6076 = vmatprep.subr.mxu0 0.0
    %6077 = vmatpush2.xpose.msra.mxu0 0.0
    %6078 = vmatprep.subr.mxu0 0.0
    %6079 = vmatpush2.xpose.msra.mxu0 0.0
    %6080 = vmatprep.subr.mxu0 0.0
    %6081 = vmatpush2.xpose.msra.mxu0 0.0
    %6082 = vmatprep.subr.mxu0 0.0
    %6083 = vmatpush2.xpose.msra.mxu0 0.0
    %6084 = vmatprep.subr.mxu0 0.0
    %6085 = vmatpush2.xpose.msra.mxu0 0.0
    %6086 = vmatprep.subr.mxu0 0.0
    %6087 = vmatpush2.xpose.msra.mxu0 0.0
    %6088 = vmatprep.subr.mxu0 0.0
    %6089 = vmatpush2.xpose.msra.mxu0 0.0
    %6090 = vmatprep.subr.mxu0 0.0
    %6091 = vmatpush2.xpose.msra.mxu0 0.0
    %6092 = vmatprep.subr.mxu0 0.0
    %6093 = vmatpush2.xpose.msra.mxu0 0.0
    %6094 = vmatprep.subr.mxu0 0.0
    %6095 = vmatpush2.xpose.msra.mxu0 0.0
    %6096 = vmatprep.subr.mxu0 0.0
    %6097 = vmatpush2.xpose.msra.mxu0 0.0
    %6098 = vmatprep.subr.mxu0 0.0
    %6099 = vmatpush2.xpose.msra.mxu0 0.0
    %6100 = vmatprep.subr.mxu0 0.0
    %6101 = vmatpush2.xpose.msra.mxu0 0.0
    %6102 = vmatprep.mubr.f32.mxu0 0.0
    %6103 = vmatmul.mubr.f32.gmra.mxu0 %v6026
    %v6104 = vpop.f32.mrf.mxu0
    %v6105 = vadd.f32 0.0, %v6104
    %v6106 = vpop.f32.mrf.mxu0
    %6107 = vmatprep.mubr.f32.mxu0 0.0
    %6108 = vmatmul.mubr.f32.gmra.mxu0 %v6028
    %v6109 = vpop.f32.mrf.mxu0
    %v6110 = vadd.f32 0.0, %v6109
    %v6111 = vpop.f32.mrf.mxu0
    %6112 = vmatprep.mubr.f32.mxu0 0.0
    %6113 = vmatmul.mubr.f32.gmra.mxu0 %v6030
    %v6114 = vpop.f32.mrf.mxu0
    %v6115 = vadd.f32 0.0, %v6114
    %v6116 = vpop.f32.mrf.mxu0
    %6117 = vdwg.mxu0
    %v6118 = vsel %vm3763, %v6105, -inf
    %6119 = vmax.xlane.f32.xlu0 %v6118
    %v6120 = vpop.xlane.xlu0 %6119
    %v6121 = vsel %vm3763, %v6110, -inf
    %6122 = vmax.xlane.f32.xlu0 %v6121
    %v6123 = vpop.xlane.xlu0 %6122
    %v6124 = vsel %vm3770, %v6115, -inf
    %6125 = vmax.xlane.f32.xlu0 %v6124
    %v6126 = vpop.xlane.xlu0 %6125
    %v6127 = vsub.f32 %v6105, %v6120
    %v6128 = vsub.f32 %v6110, %v6123
    %v6129 = vsub.f32 %v6115, %v6126
    %v6130 = vmul.f32 %v6127, 1.442695
    %v6131 = vpow.pop %v6130
    %v6132 = vmul.f32 %v6128, 1.442695
    %v6133 = vpow.pop %v6132
    %v6134 = vmul.f32 %v6129, 1.442695
    %v6135 = vpow.pop %v6134
    %v6136 = vsel %vm3763, %v6131, 0.0
    %6137 = vadd.xlane.f32.xlu0 %v6136
    %v6138 = vpop.xlane.xlu0 %6137
    %v6139 = vsel %vm3763, %v6133, 0.0
    %6140 = vadd.xlane.f32.xlu0 %v6139
    %v6141 = vpop.xlane.xlu0 %6140
    %v6142 = vsel %vm3770, %v6135, 0.0
    %6143 = vadd.xlane.f32.xlu0 %v6142
    %v6144 = vpop.xlane.xlu0 %6143
    %v6145 = vrcp.pop %v6138
    %v6146 = vmul.f32 %v6131, %v6145
    %v6147 = vrcp.pop %v6141
    %v6148 = vmul.f32 %v6133, %v6147
    %v6149 = vrcp.pop %v6144
    %v6150 = vmul.f32 %v6135, %v6149
    %6151 = vrot.lane.b32.xlu0 %v5348, 48
    %v6152 = vpop.permute.xlu0 %6151
    %6153 = vrot.lane.b32.xlu0 %v5353, 48
    %v6154 = vpop.permute.xlu0 %6153
    %6155 = vrot.lane.b32.xlu0 %v5358, 48
    %v6156 = vpop.permute.xlu0 %6155
    %v6160 = vsel %vm3763, %v6146, 0
    %v6163 = vsel %vm3763, %v6148, 0
    %v6166 = vsel %vm3763, %v6150, 0
    %v6168 = vsel %vm3815, %v6156, 0
    %6170 = vmatprep.subr.mxu0 0.0
    %6171 = vmatpush1.msra.mxu0 0.0
    %6172 = vmatprep.subr.mxu0 0.0
    %6173 = vmatpush1.msra.mxu0 0.0
    %6174 = vmatprep.subr.mxu0 0.0
    %6175 = vmatpush1.msra.mxu0 0.0
    %6176 = vmatprep.subr.mxu0 0.0
    %6177 = vmatpush1.msra.mxu0 0.0
    %6178 = vmatprep.subr.mxu0 0.0
    %6179 = vmatpush1.msra.mxu0 0.0
    %6180 = vmatprep.subr.mxu0 0.0
    %6181 = vmatpush1.msra.mxu0 0.0
    %6182 = vmatprep.subr.mxu0 0.0
    %6183 = vmatpush1.msra.mxu0 0.0
    %6184 = vmatprep.subr.mxu0 0.0
    %6185 = vmatpush1.msra.mxu0 0.0
    %6186 = vmatprep.subr.mxu0 0.0
    %6187 = vmatpush1.msra.mxu0 0.0
    %6188 = vmatprep.subr.mxu0 0.0
    %6189 = vmatpush1.msra.mxu0 0.0
    %6190 = vmatprep.subr.mxu0 0.0
    %6191 = vmatpush1.msra.mxu0 0.0
    %6192 = vmatprep.subr.mxu0 0.0
    %6193 = vmatpush1.msra.mxu0 0.0
    %6194 = vmatprep.subr.mxu0 0.0
    %6195 = vmatpush1.msra.mxu0 0.0
    %6196 = vmatprep.subr.mxu0 0.0
    %6197 = vmatpush1.msra.mxu0 %v6168
    %6198 = vmatprep.subr.mxu0 0.0
    %6199 = vmatpush1.msra.mxu0 %v6154
    %6200 = vmatprep.subr.mxu0 0.0
    %6201 = vmatpush1.msra.mxu0 %v6152
    %6202 = vmatprep.subr.mxu0 0.0
    %6203 = vmatpush2.msra.mxu0 0.0
    %6204 = vmatprep.subr.mxu0 0.0
    %6205 = vmatpush2.msra.mxu0 0.0
    %6206 = vmatprep.subr.mxu0 0.0
    %6207 = vmatpush2.msra.mxu0 0.0
    %6208 = vmatprep.subr.mxu0 0.0
    %6209 = vmatpush2.msra.mxu0 0.0
    %6210 = vmatprep.subr.mxu0 0.0
    %6211 = vmatpush2.msra.mxu0 0.0
    %6212 = vmatprep.subr.mxu0 0.0
    %6213 = vmatpush2.msra.mxu0 0.0
    %6214 = vmatprep.subr.mxu0 0.0
    %6215 = vmatpush2.msra.mxu0 0.0
    %6216 = vmatprep.subr.mxu0 0.0
    %6217 = vmatpush2.msra.mxu0 0.0
    %6218 = vmatprep.subr.mxu0 0.0
    %6219 = vmatpush2.msra.mxu0 0.0
    %6220 = vmatprep.subr.mxu0 0.0
    %6221 = vmatpush2.msra.mxu0 0.0
    %6222 = vmatprep.subr.mxu0 0.0
    %6223 = vmatpush2.msra.mxu0 0.0
    %6224 = vmatprep.subr.mxu0 0.0
    %6225 = vmatpush2.msra.mxu0 0.0
    %6226 = vmatprep.subr.mxu0 0.0
    %6227 = vmatpush2.msra.mxu0 0.0
    %6228 = vmatprep.subr.mxu0 0.0
    %6229 = vmatpush2.msra.mxu0 0.0
    %6230 = vmatprep.subr.mxu0 0.0
    %6231 = vmatpush2.msra.mxu0 0.0
    %6232 = vmatprep.subr.mxu0 0.0
    %6233 = vmatpush2.msra.mxu0 0.0
    %6234 = vmatprep.mubr.f32.mxu0 0.0
    %6235 = vmatmul.mubr.f32.gmra.mxu0 %v6160
    %v6236 = vpop.f32.mrf.mxu0
    %v6237 = vadd.f32 0.0, %v6236
    %v6238 = vpop.f32.mrf.mxu0
    %6239 = vmatprep.mubr.f32.mxu0 0.0
    %6240 = vmatmul.mubr.f32.gmra.mxu0 %v6163
    %v6241 = vpop.f32.mrf.mxu0
    %v6242 = vadd.f32 0.0, %v6241
    %v6243 = vpop.f32.mrf.mxu0
    %6244 = vmatprep.mubr.f32.mxu0 0.0
    %6245 = vmatmul.mubr.f32.gmra.mxu0 %v6166
    %v6246 = vpop.f32.mrf.mxu0
    %v6247 = vadd.f32 0.0, %v6246
    %v6248 = vpop.f32.mrf.mxu0
    %6249 = vdwg.mxu0
    %v6251 = vsel %vm735, %v6237, 0
    %v6254 = vsel %vm735, %v6242, 0
    %v6257 = vsel %vm735, %v6247, 0
    %6259 = vmatprep.subr.mxu0 0.0
    %6260 = vmatpush1.msra.mxu0 0.0
    %6261 = vmatprep.subr.mxu0 0.0
    %6262 = vmatpush1.msra.mxu0 0.0
    %6263 = vmatprep.subr.mxu0 0.0
    %6264 = vmatpush1.msra.mxu0 0.0
    %6265 = vmatprep.subr.mxu0 0.0
    %6266 = vmatpush1.msra.mxu0 0.0
    %6267 = vmatprep.subr.mxu0 0.0
    %6268 = vmatpush1.msra.mxu0 0.0
    %6269 = vmatprep.subr.mxu0 0.0
    %6270 = vmatpush1.msra.mxu0 0.0
    %6271 = vmatprep.subr.mxu0 0.0
    %6272 = vmatpush1.msra.mxu0 0.0
    %6273 = vmatprep.subr.mxu0 0.0
    %6274 = vmatpush1.msra.mxu0 0.0
    %6275 = vmatprep.subr.mxu0 0.0
    %6276 = vmatpush1.msra.mxu0 0.0
    %6277 = vmatprep.subr.mxu0 0.0
    %6278 = vmatpush1.msra.mxu0 0.0
    %6279 = vmatprep.subr.mxu0 0.0
    %6280 = vmatpush1.msra.mxu0 0.0
    %6281 = vmatprep.subr.mxu0 0.0
    %6282 = vmatpush1.msra.mxu0 0.0
    %6283 = vmatprep.subr.mxu0 0.0
    %6284 = vmatpush1.msra.mxu0 0.0
    %6285 = vmatprep.subr.mxu0 0.0
    %6286 = vmatpush1.msra.mxu0 0.0
    %6287 = vmatprep.subr.mxu0 0.0
    %6288 = vmatpush1.msra.mxu0 0.0
    %6289 = vmatprep.subr.mxu0 0.0
    %6290 = vmatpush1.msra.mxu0 %v3476
    %6291 = vmatprep.subr.mxu0 0.0
    %6292 = vmatpush2.msra.mxu0 0.0
    %6293 = vmatprep.subr.mxu0 0.0
    %6294 = vmatpush2.msra.mxu0 0.0
    %6295 = vmatprep.subr.mxu0 0.0
    %6296 = vmatpush2.msra.mxu0 0.0
    %6297 = vmatprep.subr.mxu0 0.0
    %6298 = vmatpush2.msra.mxu0 0.0
    %6299 = vmatprep.subr.mxu0 0.0
    %6300 = vmatpush2.msra.mxu0 0.0
    %6301 = vmatprep.subr.mxu0 0.0
    %6302 = vmatpush2.msra.mxu0 0.0
    %6303 = vmatprep.subr.mxu0 0.0
    %6304 = vmatpush2.msra.mxu0 0.0
    %6305 = vmatprep.subr.mxu0 0.0
    %6306 = vmatpush2.msra.mxu0 0.0
    %6307 = vmatprep.subr.mxu0 0.0
    %6308 = vmatpush2.msra.mxu0 0.0
    %6309 = vmatprep.subr.mxu0 0.0
    %6310 = vmatpush2.msra.mxu0 0.0
    %6311 = vmatprep.subr.mxu0 0.0
    %6312 = vmatpush2.msra.mxu0 0.0
    %6313 = vmatprep.subr.mxu0 0.0
    %6314 = vmatpush2.msra.mxu0 0.0
    %6315 = vmatprep.subr.mxu0 0.0
    %6316 = vmatpush2.msra.mxu0 0.0
    %6317 = vmatprep.subr.mxu0 0.0
    %6318 = vmatpush2.msra.mxu0 0.0
    %6319 = vmatprep.subr.mxu0 0.0
    %6320 = vmatpush2.msra.mxu0 0.0
    %6321 = vmatprep.subr.mxu0 0.0
    %6322 = vmatpush2.msra.mxu0 0.0
    %6323 = vmatprep.mubr.f32.mxu0 0.0
    %6324 = vmatmul.mubr.f32.gmra.mxu0 %v6251
    %v6325 = vpop.f32.mrf.mxu0
    %v6326 = vadd.f32 0.0, %v6325
    %v6327 = vpop.f32.mrf.mxu0
    %6328 = vmatprep.mubr.f32.mxu0 0.0
    %6329 = vmatmul.mubr.f32.gmra.mxu0 %v6254
    %v6330 = vpop.f32.mrf.mxu0
    %v6331 = vadd.f32 0.0, %v6330
    %v6332 = vpop.f32.mrf.mxu0
    %6333 = vmatprep.mubr.f32.mxu0 0.0
    %6334 = vmatmul.mubr.f32.gmra.mxu0 %v6257
    %v6335 = vpop.f32.mrf.mxu0
    %v6336 = vadd.f32 0.0, %v6335
    %v6337 = vpop.f32.mrf.mxu0
    %6338 = vdwg.mxu0
    %v6339 = vadd.f32 %v6001, %v6326
    %v6340 = vadd.f32 %v6006, %v6331
    %v6341 = vadd.f32 %v6011, %v6336
    %6342 = vrot.lane.b32.xlu0 %v5361, 104
    %v6343 = vpop.permute.xlu0 %6342
    %6344 = vrot.lane.b32.xlu0 %v5362, 104
    %v6345 = vpop.permute.xlu0 %6344
    %6346 = vrot.lane.b32.xlu0 %v5363, 104
    %v6347 = vpop.permute.xlu0 %6346
    %6348 = vrot.lane.b32.xlu0 %v5348, 72
    %v6349 = vpop.permute.xlu0 %6348
    %6350 = vrot.lane.b32.xlu0 %v5353, 72
    %v6351 = vpop.permute.xlu0 %6350
    %6352 = vrot.lane.b32.xlu0 %v5358, 72
    %v6353 = vpop.permute.xlu0 %6352
    %v6354 = vsel %vm735, %v6343, 0
    %v6356 = vsel %vm735, %v6345, 0
    %v6358 = vsel %vm735, %v6347, 0
    %v6360 = vsel %vm735, %v6349, 0
    %v6362 = vsel %vm735, %v6351, 0
    %v6364 = vsel %vm735, %v6353, 0
    %6366 = vmatprep.subr.mxu0 0.0
    %6367 = vmatpush1.xpose.msra.mxu0 0.0
    %6368 = vmatprep.subr.mxu0 0.0
    %6369 = vmatpush1.xpose.msra.mxu0 0.0
    %6370 = vmatprep.subr.mxu0 0.0
    %6371 = vmatpush1.xpose.msra.mxu0 0.0
    %6372 = vmatprep.subr.mxu0 0.0
    %6373 = vmatpush1.xpose.msra.mxu0 0.0
    %6374 = vmatprep.subr.mxu0 0.0
    %6375 = vmatpush1.xpose.msra.mxu0 0.0
    %6376 = vmatprep.subr.mxu0 0.0
    %6377 = vmatpush1.xpose.msra.mxu0 0.0
    %6378 = vmatprep.subr.mxu0 0.0
    %6379 = vmatpush1.xpose.msra.mxu0 0.0
    %6380 = vmatprep.subr.mxu0 0.0
    %6381 = vmatpush1.xpose.msra.mxu0 0.0
    %6382 = vmatprep.subr.mxu0 0.0
    %6383 = vmatpush1.xpose.msra.mxu0 0.0
    %6384 = vmatprep.subr.mxu0 0.0
    %6385 = vmatpush1.xpose.msra.mxu0 0.0
    %6386 = vmatprep.subr.mxu0 0.0
    %6387 = vmatpush1.xpose.msra.mxu0 0.0
    %6388 = vmatprep.subr.mxu0 0.0
    %6389 = vmatpush1.xpose.msra.mxu0 0.0
    %6390 = vmatprep.subr.mxu0 0.0
    %6391 = vmatpush1.xpose.msra.mxu0 0.0
    %6392 = vmatprep.subr.mxu0 0.0
    %6393 = vmatpush1.xpose.msra.mxu0 %v6364
    %6394 = vmatprep.subr.mxu0 0.0
    %6395 = vmatpush1.xpose.msra.mxu0 %v6362
    %6396 = vmatprep.subr.mxu0 0.0
    %6397 = vmatpush1.xpose.msra.mxu0 %v6360
    %6398 = vmatprep.subr.mxu0 0.0
    %6399 = vmatpush2.xpose.msra.mxu0 0.0
    %6400 = vmatprep.subr.mxu0 0.0
    %6401 = vmatpush2.xpose.msra.mxu0 0.0
    %6402 = vmatprep.subr.mxu0 0.0
    %6403 = vmatpush2.xpose.msra.mxu0 0.0
    %6404 = vmatprep.subr.mxu0 0.0
    %6405 = vmatpush2.xpose.msra.mxu0 0.0
    %6406 = vmatprep.subr.mxu0 0.0
    %6407 = vmatpush2.xpose.msra.mxu0 0.0
    %6408 = vmatprep.subr.mxu0 0.0
    %6409 = vmatpush2.xpose.msra.mxu0 0.0
    %6410 = vmatprep.subr.mxu0 0.0
    %6411 = vmatpush2.xpose.msra.mxu0 0.0
    %6412 = vmatprep.subr.mxu0 0.0
    %6413 = vmatpush2.xpose.msra.mxu0 0.0
    %6414 = vmatprep.subr.mxu0 0.0
    %6415 = vmatpush2.xpose.msra.mxu0 0.0
    %6416 = vmatprep.subr.mxu0 0.0
    %6417 = vmatpush2.xpose.msra.mxu0 0.0
    %6418 = vmatprep.subr.mxu0 0.0
    %6419 = vmatpush2.xpose.msra.mxu0 0.0
    %6420 = vmatprep.subr.mxu0 0.0
    %6421 = vmatpush2.xpose.msra.mxu0 0.0
    %6422 = vmatprep.subr.mxu0 0.0
    %6423 = vmatpush2.xpose.msra.mxu0 0.0
    %6424 = vmatprep.subr.mxu0 0.0
    %6425 = vmatpush2.xpose.msra.mxu0 0.0
    %6426 = vmatprep.subr.mxu0 0.0
    %6427 = vmatpush2.xpose.msra.mxu0 0.0
    %6428 = vmatprep.subr.mxu0 0.0
    %6429 = vmatpush2.xpose.msra.mxu0 0.0
    %6430 = vmatprep.mubr.f32.mxu0 0.0
    %6431 = vmatmul.mubr.f32.gmra.mxu0 %v6354
    %v6432 = vpop.f32.mrf.mxu0
    %v6433 = vadd.f32 0.0, %v6432
    %v6434 = vpop.f32.mrf.mxu0
    %6435 = vmatprep.mubr.f32.mxu0 0.0
    %6436 = vmatmul.mubr.f32.gmra.mxu0 %v6356
    %v6437 = vpop.f32.mrf.mxu0
    %v6438 = vadd.f32 0.0, %v6437
    %v6439 = vpop.f32.mrf.mxu0
    %6440 = vmatprep.mubr.f32.mxu0 0.0
    %6441 = vmatmul.mubr.f32.gmra.mxu0 %v6358
    %v6442 = vpop.f32.mrf.mxu0
    %v6443 = vadd.f32 0.0, %v6442
    %v6444 = vpop.f32.mrf.mxu0
    %6445 = vdwg.mxu0
    %v6446 = vsel %vm3763, %v6433, -inf
    %6447 = vmax.xlane.f32.xlu0 %v6446
    %v6448 = vpop.xlane.xlu0 %6447
    %v6449 = vsel %vm3763, %v6438, -inf
    %6450 = vmax.xlane.f32.xlu0 %v6449
    %v6451 = vpop.xlane.xlu0 %6450
    %v6452 = vsel %vm3770, %v6443, -inf
    %6453 = vmax.xlane.f32.xlu0 %v6452
    %v6454 = vpop.xlane.xlu0 %6453
    %v6455 = vsub.f32 %v6433, %v6448
    %v6456 = vsub.f32 %v6438, %v6451
    %v6457 = vsub.f32 %v6443, %v6454
    %v6458 = vmul.f32 %v6455, 1.442695
    %v6459 = vpow.pop %v6458
    %v6460 = vmul.f32 %v6456, 1.442695
    %v6461 = vpow.pop %v6460
    %v6462 = vmul.f32 %v6457, 1.442695
    %v6463 = vpow.pop %v6462
    %v6464 = vsel %vm3763, %v6459, 0.0
    %6465 = vadd.xlane.f32.xlu0 %v6464
    %v6466 = vpop.xlane.xlu0 %6465
    %v6467 = vsel %vm3763, %v6461, 0.0
    %6468 = vadd.xlane.f32.xlu0 %v6467
    %v6469 = vpop.xlane.xlu0 %6468
    %v6470 = vsel %vm3770, %v6463, 0.0
    %6471 = vadd.xlane.f32.xlu0 %v6470
    %v6472 = vpop.xlane.xlu0 %6471
    %v6473 = vrcp.pop %v6466
    %v6474 = vmul.f32 %v6459, %v6473
    %v6475 = vrcp.pop %v6469
    %v6476 = vmul.f32 %v6461, %v6475
    %v6477 = vrcp.pop %v6472
    %v6478 = vmul.f32 %v6463, %v6477
    %6479 = vrot.lane.b32.xlu0 %v5348, 40
    %v6480 = vpop.permute.xlu0 %6479
    %6481 = vrot.lane.b32.xlu0 %v5353, 40
    %v6482 = vpop.permute.xlu0 %6481
    %6483 = vrot.lane.b32.xlu0 %v5358, 40
    %v6484 = vpop.permute.xlu0 %6483
    %v6488 = vsel %vm3763, %v6474, 0
    %v6491 = vsel %vm3763, %v6476, 0
    %v6494 = vsel %vm3763, %v6478, 0
    %v6496 = vsel %vm3815, %v6484, 0
    %6498 = vmatprep.subr.mxu0 0.0
    %6499 = vmatpush1.msra.mxu0 0.0
    %6500 = vmatprep.subr.mxu0 0.0
    %6501 = vmatpush1.msra.mxu0 0.0
    %6502 = vmatprep.subr.mxu0 0.0
    %6503 = vmatpush1.msra.mxu0 0.0
    %6504 = vmatprep.subr.mxu0 0.0
    %6505 = vmatpush1.msra.mxu0 0.0
    %6506 = vmatprep.subr.mxu0 0.0
    %6507 = vmatpush1.msra.mxu0 0.0
    %6508 = vmatprep.subr.mxu0 0.0
    %6509 = vmatpush1.msra.mxu0 0.0
    %6510 = vmatprep.subr.mxu0 0.0
    %6511 = vmatpush1.msra.mxu0 0.0
    %6512 = vmatprep.subr.mxu0 0.0
    %6513 = vmatpush1.msra.mxu0 0.0
    %6514 = vmatprep.subr.mxu0 0.0
    %6515 = vmatpush1.msra.mxu0 0.0
    %6516 = vmatprep.subr.mxu0 0.0
    %6517 = vmatpush1.msra.mxu0 0.0
    %6518 = vmatprep.subr.mxu0 0.0
    %6519 = vmatpush1.msra.mxu0 0.0
    %6520 = vmatprep.subr.mxu0 0.0
    %6521 = vmatpush1.msra.mxu0 0.0
    %6522 = vmatprep.subr.mxu0 0.0
    %6523 = vmatpush1.msra.mxu0 0.0
    %6524 = vmatprep.subr.mxu0 0.0
    %6525 = vmatpush1.msra.mxu0 %v6496
    %6526 = vmatprep.subr.mxu0 0.0
    %6527 = vmatpush1.msra.mxu0 %v6482
    %6528 = vmatprep.subr.mxu0 0.0
    %6529 = vmatpush1.msra.mxu0 %v6480
    %6530 = vmatprep.subr.mxu0 0.0
    %6531 = vmatpush2.msra.mxu0 0.0
    %6532 = vmatprep.subr.mxu0 0.0
    %6533 = vmatpush2.msra.mxu0 0.0
    %6534 = vmatprep.subr.mxu0 0.0
    %6535 = vmatpush2.msra.mxu0 0.0
    %6536 = vmatprep.subr.mxu0 0.0
    %6537 = vmatpush2.msra.mxu0 0.0
    %6538 = vmatprep.subr.mxu0 0.0
    %6539 = vmatpush2.msra.mxu0 0.0
    %6540 = vmatprep.subr.mxu0 0.0
    %6541 = vmatpush2.msra.mxu0 0.0
    %6542 = vmatprep.subr.mxu0 0.0
    %6543 = vmatpush2.msra.mxu0 0.0
    %6544 = vmatprep.subr.mxu0 0.0
    %6545 = vmatpush2.msra.mxu0 0.0
    %6546 = vmatprep.subr.mxu0 0.0
    %6547 = vmatpush2.msra.mxu0 0.0
    %6548 = vmatprep.subr.mxu0 0.0
    %6549 = vmatpush2.msra.mxu0 0.0
    %6550 = vmatprep.subr.mxu0 0.0
    %6551 = vmatpush2.msra.mxu0 0.0
    %6552 = vmatprep.subr.mxu0 0.0
    %6553 = vmatpush2.msra.mxu0 0.0
    %6554 = vmatprep.subr.mxu0 0.0
    %6555 = vmatpush2.msra.mxu0 0.0
    %6556 = vmatprep.subr.mxu0 0.0
    %6557 = vmatpush2.msra.mxu0 0.0
    %6558 = vmatprep.subr.mxu0 0.0
    %6559 = vmatpush2.msra.mxu0 0.0
    %6560 = vmatprep.subr.mxu0 0.0
    %6561 = vmatpush2.msra.mxu0 0.0
    %6562 = vmatprep.mubr.f32.mxu0 0.0
    %6563 = vmatmul.mubr.f32.gmra.mxu0 %v6488
    %v6564 = vpop.f32.mrf.mxu0
    %v6565 = vadd.f32 0.0, %v6564
    %v6566 = vpop.f32.mrf.mxu0
    %6567 = vmatprep.mubr.f32.mxu0 0.0
    %6568 = vmatmul.mubr.f32.gmra.mxu0 %v6491
    %v6569 = vpop.f32.mrf.mxu0
    %v6570 = vadd.f32 0.0, %v6569
    %v6571 = vpop.f32.mrf.mxu0
    %6572 = vmatprep.mubr.f32.mxu0 0.0
    %6573 = vmatmul.mubr.f32.gmra.mxu0 %v6494
    %v6574 = vpop.f32.mrf.mxu0
    %v6575 = vadd.f32 0.0, %v6574
    %v6576 = vpop.f32.mrf.mxu0
    %6577 = vdwg.mxu0
    %v6579 = vsel %vm735, %v6565, 0
    %v6582 = vsel %vm735, %v6570, 0
    %v6585 = vsel %vm735, %v6575, 0
    %6587 = vmatprep.subr.mxu0 0.0
    %6588 = vmatpush1.msra.mxu0 0.0
    %6589 = vmatprep.subr.mxu0 0.0
    %6590 = vmatpush1.msra.mxu0 0.0
    %6591 = vmatprep.subr.mxu0 0.0
    %6592 = vmatpush1.msra.mxu0 0.0
    %6593 = vmatprep.subr.mxu0 0.0
    %6594 = vmatpush1.msra.mxu0 0.0
    %6595 = vmatprep.subr.mxu0 0.0
    %6596 = vmatpush1.msra.mxu0 0.0
    %6597 = vmatprep.subr.mxu0 0.0
    %6598 = vmatpush1.msra.mxu0 0.0
    %6599 = vmatprep.subr.mxu0 0.0
    %6600 = vmatpush1.msra.mxu0 0.0
    %6601 = vmatprep.subr.mxu0 0.0
    %6602 = vmatpush1.msra.mxu0 0.0
    %6603 = vmatprep.subr.mxu0 0.0
    %6604 = vmatpush1.msra.mxu0 0.0
    %6605 = vmatprep.subr.mxu0 0.0
    %6606 = vmatpush1.msra.mxu0 0.0
    %6607 = vmatprep.subr.mxu0 0.0
    %6608 = vmatpush1.msra.mxu0 0.0
    %6609 = vmatprep.subr.mxu0 0.0
    %6610 = vmatpush1.msra.mxu0 0.0
    %6611 = vmatprep.subr.mxu0 0.0
    %6612 = vmatpush1.msra.mxu0 0.0
    %6613 = vmatprep.subr.mxu0 0.0
    %6614 = vmatpush1.msra.mxu0 0.0
    %6615 = vmatprep.subr.mxu0 0.0
    %6616 = vmatpush1.msra.mxu0 0.0
    %6617 = vmatprep.subr.mxu0 0.0
    %6618 = vmatpush1.msra.mxu0 %v3477
    %6619 = vmatprep.subr.mxu0 0.0
    %6620 = vmatpush2.msra.mxu0 0.0
    %6621 = vmatprep.subr.mxu0 0.0
    %6622 = vmatpush2.msra.mxu0 0.0
    %6623 = vmatprep.subr.mxu0 0.0
    %6624 = vmatpush2.msra.mxu0 0.0
    %6625 = vmatprep.subr.mxu0 0.0
    %6626 = vmatpush2.msra.mxu0 0.0
    %6627 = vmatprep.subr.mxu0 0.0
    %6628 = vmatpush2.msra.mxu0 0.0
    %6629 = vmatprep.subr.mxu0 0.0
    %6630 = vmatpush2.msra.mxu0 0.0
    %6631 = vmatprep.subr.mxu0 0.0
    %6632 = vmatpush2.msra.mxu0 0.0
    %6633 = vmatprep.subr.mxu0 0.0
    %6634 = vmatpush2.msra.mxu0 0.0
    %6635 = vmatprep.subr.mxu0 0.0
    %6636 = vmatpush2.msra.mxu0 0.0
    %6637 = vmatprep.subr.mxu0 0.0
    %6638 = vmatpush2.msra.mxu0 0.0
    %6639 = vmatprep.subr.mxu0 0.0
    %6640 = vmatpush2.msra.mxu0 0.0
    %6641 = vmatprep.subr.mxu0 0.0
    %6642 = vmatpush2.msra.mxu0 0.0
    %6643 = vmatprep.subr.mxu0 0.0
    %6644 = vmatpush2.msra.mxu0 0.0
    %6645 = vmatprep.subr.mxu0 0.0
    %6646 = vmatpush2.msra.mxu0 0.0
    %6647 = vmatprep.subr.mxu0 0.0
    %6648 = vmatpush2.msra.mxu0 0.0
    %6649 = vmatprep.subr.mxu0 0.0
    %6650 = vmatpush2.msra.mxu0 0.0
    %6651 = vmatprep.mubr.f32.mxu0 0.0
    %6652 = vmatmul.mubr.f32.gmra.mxu0 %v6579
    %v6653 = vpop.f32.mrf.mxu0
    %v6654 = vadd.f32 0.0, %v6653
    %v6655 = vpop.f32.mrf.mxu0
    %6656 = vmatprep.mubr.f32.mxu0 0.0
    %6657 = vmatmul.mubr.f32.gmra.mxu0 %v6582
    %v6658 = vpop.f32.mrf.mxu0
    %v6659 = vadd.f32 0.0, %v6658
    %v6660 = vpop.f32.mrf.mxu0
    %6661 = vmatprep.mubr.f32.mxu0 0.0
    %6662 = vmatmul.mubr.f32.gmra.mxu0 %v6585
    %v6663 = vpop.f32.mrf.mxu0
    %v6664 = vadd.f32 0.0, %v6663
    %v6665 = vpop.f32.mrf.mxu0
    %6666 = vdwg.mxu0
    %v6667 = vadd.f32 %v6339, %v6654
    %v6668 = vadd.f32 %v6340, %v6659
    %v6669 = vadd.f32 %v6341, %v6664
    %v6670 = vadd.f32 %v3465, %v6667
    %v6671 = vadd.f32 %v3466, %v6668
    %v6672 = vadd.f32 %v206, %v6669
    %v6673 = vadd.f32 %v6670, %v4975
    %v6674 = vadd.f32 %v6671, %v4975
    %v6675 = vadd.f32 %v6672, %v4975
    %v6676 = vsel %vm459, %v6673, 0.0
    %6677 = vadd.xlane.f32.xlu0 %v6676
    %v6678 = vpop.xlane.xlu0 %6677
    %v6679 = vsel %vm459, %v6674, 0.0
    %6680 = vadd.xlane.f32.xlu0 %v6679
    %v6681 = vpop.xlane.xlu0 %6680
    %v6682 = vsel %vm3509, %v6675, 0.0
    %6683 = vadd.xlane.f32.xlu0 %v6682
    %v6684 = vpop.xlane.xlu0 %6683
    %v6685 = vmul.f32 %v6678, %v472
    %v6686 = vmul.f32 %v6681, %v472
    %v6687 = vmul.f32 %v6684, %v472
    %v6688 = vsub.f32 %v6673, %v6685
    %v6689 = vsub.f32 %v6674, %v6686
    %v6690 = vsub.f32 %v6675, %v6687
    %v6691 = vmul.f32 %v6688, %v6688
    %v6692 = vmul.f32 %v6689, %v6689
    %v6693 = vmul.f32 %v6690, %v6690
    %v6694 = vsel %vm459, %v6691, 0.0
    %6695 = vadd.xlane.f32.xlu0 %v6694
    %v6696 = vpop.xlane.xlu0 %6695
    %v6697 = vsel %vm459, %v6692, 0.0
    %6698 = vadd.xlane.f32.xlu0 %v6697
    %v6699 = vpop.xlane.xlu0 %6698
    %v6700 = vsel %vm3509, %v6693, 0.0
    %6701 = vadd.xlane.f32.xlu0 %v6700
    %v6702 = vpop.xlane.xlu0 %6701
    %v6703 = vmul.f32 %v6696, %v472
    %v6704 = vmul.f32 %v6699, %v472
    %v6705 = vmul.f32 %v6702, %v472
    %v6706 = vadd.f32 %v6703, 1e-06
    %v6707 = vadd.f32 %v6704, 1e-06
    %v6708 = vadd.f32 %v6705, 1e-06
    %v6709 = vrsqrt.pop %v6706
    %v6710 = vrsqrt.pop %v6707
    %v6711 = vrsqrt.pop %v6708
    %v6712 = vmul.f32 %v6688, %v6709
    %v6713 = vmul.f32 %v6689, %v6710
    %v6714 = vmul.f32 %v6690, %v6711
    %v6715 = vmul.f32 %v6712, %v5023
    %v6716 = vmul.f32 %v6713, %v5023
    %v6717 = vmul.f32 %v6714, %v5023
    %v6718 = vadd.f32 %v6715, %v5032
    %v6719 = vadd.f32 %v6716, %v5032
    %v6720 = vadd.f32 %v6717, %v5032
    %v6722 = vsel %vm459, %v6718, 0
    %v6725 = vsel %vm459, %v6719, 0
    %v6728 = vsel %vm459, %v6720, 0
    %6730 = vmatprep.subr.mxu0 0.0
    %6731 = vmatpush1.msra.mxu0 0.0
    %6732 = vmatprep.subr.mxu0 0.0
    %6733 = vmatpush1.msra.mxu0 0.0
    %6734 = vmatprep.subr.mxu0 0.0
    %6735 = vmatpush1.msra.mxu0 0.0
    %6736 = vmatprep.subr.mxu0 0.0
    %6737 = vmatpush1.msra.mxu0 0.0
    %6738 = vmatprep.subr.mxu0 0.0
    %6739 = vmatpush1.msra.mxu0 0.0
    %6740 = vmatprep.subr.mxu0 0.0
    %6741 = vmatpush1.msra.mxu0 0.0
    %6742 = vmatprep.subr.mxu0 0.0
    %6743 = vmatpush1.msra.mxu0 0.0
    %6744 = vmatprep.subr.mxu0 0.0
    %6745 = vmatpush1.msra.mxu0 0.0
    %6746 = vmatprep.subr.mxu0 0.0
    %6747 = vmatpush1.msra.mxu0 0.0
    %6748 = vmatprep.subr.mxu0 0.0
    %6749 = vmatpush1.msra.mxu0 0.0
    %6750 = vmatprep.subr.mxu0 0.0
    %6751 = vmatpush1.msra.mxu0 0.0
    %6752 = vmatprep.subr.mxu0 0.0
    %6753 = vmatpush1.msra.mxu0 0.0
    %6754 = vmatprep.subr.mxu0 0.0
    %6755 = vmatpush1.msra.mxu0 %v3484
    %6756 = vmatprep.subr.mxu0 0.0
    %6757 = vmatpush1.msra.mxu0 %v3483
    %6758 = vmatprep.subr.mxu0 0.0
    %6759 = vmatpush1.msra.mxu0 %v3482
    %6760 = vmatprep.subr.mxu0 0.0
    %6761 = vmatpush1.msra.mxu0 %v3481
    %6762 = vmatprep.subr.mxu0 0.0
    %6763 = vmatpush2.msra.mxu0 0.0
    %6764 = vmatprep.subr.mxu0 0.0
    %6765 = vmatpush2.msra.mxu0 0.0
    %6766 = vmatprep.subr.mxu0 0.0
    %6767 = vmatpush2.msra.mxu0 0.0
    %6768 = vmatprep.subr.mxu0 0.0
    %6769 = vmatpush2.msra.mxu0 0.0
    %6770 = vmatprep.subr.mxu0 0.0
    %6771 = vmatpush2.msra.mxu0 0.0
    %6772 = vmatprep.subr.mxu0 0.0
    %6773 = vmatpush2.msra.mxu0 0.0
    %6774 = vmatprep.subr.mxu0 0.0
    %6775 = vmatpush2.msra.mxu0 0.0
    %6776 = vmatprep.subr.mxu0 0.0
    %6777 = vmatpush2.msra.mxu0 0.0
    %6778 = vmatprep.subr.mxu0 0.0
    %6779 = vmatpush2.msra.mxu0 0.0
    %6780 = vmatprep.subr.mxu0 0.0
    %6781 = vmatpush2.msra.mxu0 0.0
    %6782 = vmatprep.subr.mxu0 0.0
    %6783 = vmatpush2.msra.mxu0 0.0
    %6784 = vmatprep.subr.mxu0 0.0
    %6785 = vmatpush2.msra.mxu0 0.0
    %6786 = vmatprep.subr.mxu0 0.0
    %6787 = vmatpush2.msra.mxu0 0.0
    %6788 = vmatprep.subr.mxu0 0.0
    %6789 = vmatpush2.msra.mxu0 0.0
    %6790 = vmatprep.subr.mxu0 0.0
    %6791 = vmatpush2.msra.mxu0 0.0
    %6792 = vmatprep.subr.mxu0 0.0
    %6793 = vmatpush2.msra.mxu0 0.0
    %6794 = vmatprep.mubr.f32.mxu0 0.0
    %6795 = vmatmul.mubr.f32.gmra.mxu0 %v6722
    %v6796 = vpop.f32.mrf.mxu0
    %v6797 = vadd.f32 %v5041, %v6796
    %v6798 = vpop.f32.mrf.mxu0
    %6799 = vmatprep.mubr.f32.mxu0 0.0
    %6800 = vmatmul.mubr.f32.gmra.mxu0 %v6725
    %v6801 = vpop.f32.mrf.mxu0
    %v6802 = vadd.f32 %v5041, %v6801
    %v6803 = vpop.f32.mrf.mxu0
    %6804 = vmatprep.mubr.f32.mxu0 0.0
    %6805 = vmatmul.mubr.f32.gmra.mxu0 %v6728
    %v6806 = vpop.f32.mrf.mxu0
    %v6807 = vadd.f32 %v5041, %v6806
    %v6808 = vpop.f32.mrf.mxu0
    %6809 = vdwg.mxu0
    %v6810 = vmul.f32 %v6797, 0.5
    %v6811 = vmul.f32 %v6802, 0.5
    %v6812 = vmul.f32 %v6807, 0.5
    %v6813 = vmul.f32 %v6797, 0.044715
    %v6814 = vmul.f32 %v6802, 0.044715
    %v6815 = vmul.f32 %v6807, 0.044715
    %v6816 = vmul.f32 %v6813, %v6797
    %v6817 = vmul.f32 %v6814, %v6802
    %v6818 = vmul.f32 %v6815, %v6807
    %v6819 = vmul.f32 %v6816, %v6797
    %v6820 = vmul.f32 %v6817, %v6802
    %v6821 = vmul.f32 %v6818, %v6807
    %v6822 = vadd.f32 %v6797, %v6819
    %v6823 = vadd.f32 %v6802, %v6820
    %v6824 = vadd.f32 %v6807, %v6821
    %v6825 = vmul.f32 %v6822, 0.7978846
    %v6826 = vmul.f32 %v6823, 0.7978846
    %v6827 = vmul.f32 %v6824, 0.7978846
    %v6828 = vtanh.pop %v6825
    %v6829 = vtanh.pop %v6826
    %v6830 = vtanh.pop %v6827
    %v6831 = vadd.f32 %v6828, 1.0
    %v6832 = vadd.f32 %v6829, 1.0
    %v6833 = vadd.f32 %v6830, 1.0
    %v6834 = vmul.f32 %v6810, %v6831
    %v6835 = vmul.f32 %v6811, %v6832
    %v6836 = vmul.f32 %v6812, %v6833
    %6837 = vmatprep.subr.mxu0 0.0
    %6838 = vmatpush1.msra.mxu0 %v3501
    %6839 = vmatprep.subr.mxu0 0.0
    %6840 = vmatpush1.msra.mxu0 %v3500
    %6841 = vmatprep.subr.mxu0 0.0
    %6842 = vmatpush1.msra.mxu0 %v3499
    %6843 = vmatprep.subr.mxu0 0.0
    %6844 = vmatpush1.msra.mxu0 %v3498
    %6845 = vmatprep.subr.mxu0 0.0
    %6846 = vmatpush1.msra.mxu0 %v3497
    %6847 = vmatprep.subr.mxu0 0.0
    %6848 = vmatpush1.msra.mxu0 %v3496
    %6849 = vmatprep.subr.mxu0 0.0
    %6850 = vmatpush1.msra.mxu0 %v3495
    %6851 = vmatprep.subr.mxu0 0.0
    %6852 = vmatpush1.msra.mxu0 %v3494
    %6853 = vmatprep.subr.mxu0 0.0
    %6854 = vmatpush1.msra.mxu0 %v3493
    %6855 = vmatprep.subr.mxu0 0.0
    %6856 = vmatpush1.msra.mxu0 %v3492
    %6857 = vmatprep.subr.mxu0 0.0
    %6858 = vmatpush1.msra.mxu0 %v3491
    %6859 = vmatprep.subr.mxu0 0.0
    %6860 = vmatpush1.msra.mxu0 %v3490
    %6861 = vmatprep.subr.mxu0 0.0
    %6862 = vmatpush1.msra.mxu0 %v3489
    %6863 = vmatprep.subr.mxu0 0.0
    %6864 = vmatpush1.msra.mxu0 %v3488
    %6865 = vmatprep.subr.mxu0 0.0
    %6866 = vmatpush1.msra.mxu0 %v3487
    %6867 = vmatprep.subr.mxu0 0.0
    %6868 = vmatpush1.msra.mxu0 %v3486
    %6869 = vmatprep.subr.mxu0 0.0
    %6870 = vmatpush2.msra.mxu0 0.0
    %6871 = vmatprep.subr.mxu0 0.0
    %6872 = vmatpush2.msra.mxu0 0.0
    %6873 = vmatprep.subr.mxu0 0.0
    %6874 = vmatpush2.msra.mxu0 0.0
    %6875 = vmatprep.subr.mxu0 0.0
    %6876 = vmatpush2.msra.mxu0 0.0
    %6877 = vmatprep.subr.mxu0 0.0
    %6878 = vmatpush2.msra.mxu0 0.0
    %6879 = vmatprep.subr.mxu0 0.0
    %6880 = vmatpush2.msra.mxu0 0.0
    %6881 = vmatprep.subr.mxu0 0.0
    %6882 = vmatpush2.msra.mxu0 0.0
    %6883 = vmatprep.subr.mxu0 0.0
    %6884 = vmatpush2.msra.mxu0 0.0
    %6885 = vmatprep.subr.mxu0 0.0
    %6886 = vmatpush2.msra.mxu0 0.0
    %6887 = vmatprep.subr.mxu0 0.0
    %6888 = vmatpush2.msra.mxu0 0.0
    %6889 = vmatprep.subr.mxu0 0.0
    %6890 = vmatpush2.msra.mxu0 0.0
    %6891 = vmatprep.subr.mxu0 0.0
    %6892 = vmatpush2.msra.mxu0 0.0
    %6893 = vmatprep.subr.mxu0 0.0
    %6894 = vmatpush2.msra.mxu0 0.0
    %6895 = vmatprep.subr.mxu0 0.0
    %6896 = vmatpush2.msra.mxu0 0.0
    %6897 = vmatprep.subr.mxu0 0.0
    %6898 = vmatpush2.msra.mxu0 0.0
    %6899 = vmatprep.subr.mxu0 0.0
    %6900 = vmatpush2.msra.mxu0 0.0
    %6901 = vmatprep.mubr.f32.mxu0 0.0
    %6902 = vmatmul.mubr.f32.gmra.mxu0 %v6834
    %v6903 = vpop.f32.mrf.mxu0
    %v6904 = vpop.f32.mrf.mxu0
    %6905 = vmatprep.mubr.f32.mxu0 0.0
    %6906 = vmatmul.mubr.f32.gmra.mxu0 %v6835
    %v6907 = vpop.f32.mrf.mxu0
    %v6908 = vpop.f32.mrf.mxu0
    %6909 = vmatprep.mubr.f32.mxu0 0.0
    %6910 = vmatmul.mubr.f32.gmra.mxu0 %v6836
    %v6911 = vpop.f32.mrf.mxu0
    %v6912 = vadd.f32 0.0, %v6911
    %v6913 = vpop.f32.mrf.mxu0
    %6914 = vdwg.mxu0
    %v6915 = vadd.f32 %v6675, %v6912
    %v6916 = vadd.f32 %v6915, %v5242
    %v6917 = vld [vmem:[%s67] sm:$0x1]
    %v6918 = vld [vmem:[%s69] sm:$0x1]
    %v6919 = vld [vmem:[%s71] sm:$0xff]
    %v6920 = vld [vmem:[%s71 + $0x8] sm:$0xff]
    %v6921 = vld [vmem:[%s71 + $0x10] sm:$0xff]
    %v6922 = vld [vmem:[%s71 + $0x18] sm:$0xff]
    %v6923 = vld [vmem:[%s71 + $0x20] sm:$0xff]
    %v6924 = vld [vmem:[%s71 + $0x28] sm:$0xff]
    %v6925 = vld [vmem:[%s71 + $0x30] sm:$0xff]
    %v6926 = vld [vmem:[%s71 + $0x38] sm:$0xff]
    %v6927 = vld [vmem:[%s71 + $0x40] sm:$0xff]
    %v6928 = vld [vmem:[%s71 + $0x48] sm:$0xff]
    %v6929 = vld [vmem:[%s71 + $0x50] sm:$0xff]
    %v6930 = vld [vmem:[%s71 + $0x58] sm:$0xff]
    %v6931 = vld [vmem:[%s71 + $0x60] sm:$0xff]
    %v6932 = vld [vmem:[%s71 + $0x68] sm:$0xff]
    %v6933 = vld [vmem:[%s71 + $0x70] sm:$0xff]
    %v6934 = vld [vmem:[%s71 + $0x78] sm:$0xff]
    %v6935 = vld [vmem:[%s71 + $0x80] sm:$0xff]
    %v6936 = vld [vmem:[%s71 + $0x88] sm:$0xff]
    %v6937 = vld [vmem:[%s71 + $0x90] sm:$0xff]
    %v6938 = vld [vmem:[%s71 + $0x98] sm:$0xff]
    %v6939 = vld [vmem:[%s71 + $0xa0] sm:$0xff]
    %v6940 = vld [vmem:[%s71 + $0xa8] sm:$0xff]
    %v6941 = vld [vmem:[%s71 + $0xb0] sm:$0xff]
    %v6942 = vld [vmem:[%s71 + $0xb8] sm:$0xff]
    %v6943 = vld [vmem:[%s71 + $0xc0] sm:$0xff]
    %v6944 = vld [vmem:[%s71 + $0xc8] sm:$0xff]
    %v6945 = vld [vmem:[%s71 + $0xd0] sm:$0xff]
    %v6946 = vld [vmem:[%s71 + $0xd8] sm:$0xff]
    %v6947 = vld [vmem:[%s71 + $0xe0] sm:$0xff]
    %v6948 = vld [vmem:[%s71 + $0xe8] sm:$0xff]
    %v6949 = vld [vmem:[%s71 + $0xf0] sm:$0xff]
    %v6950 = vld [vmem:[%s71 + $0xf8] sm:$0xff]
    %v6951 = vld [vmem:[%s73] sm:$0xff]
    %v6952 = vld [vmem:[#allocation2] sm:$0x1]
    %v6953 = vld [vmem:[%s77] sm:$0xff]
    %v6954 = vld [vmem:[%s79] sm:$0xff]
    %v6955 = vld [vmem:[%s81] sm:$0xff]
    %v6956 = vld [vmem:[%s83] sm:$0xff]
    %v6957 = vld [vmem:[%s85] sm:$0xff]
    %v6958 = vld [vmem:[%s85 + $0x8] sm:$0xff]
    %v6959 = vld [vmem:[%s85 + $0x10] sm:$0xff]
    %v6960 = vld [vmem:[%s85 + $0x18] sm:$0xff]
    %v6961 = vld [vmem:[%s85 + $0x20] sm:$0xff]
    %v6962 = vld [vmem:[%s85 + $0x28] sm:$0xff]
    %v6963 = vld [vmem:[%s85 + $0x30] sm:$0xff]
    %v6964 = vld [vmem:[%s85 + $0x38] sm:$0xff]
    %v6965 = vld [vmem:[%s85 + $0x40] sm:$0xff]
    %v6966 = vld [vmem:[%s85 + $0x48] sm:$0xff]
    %v6967 = vld [vmem:[%s85 + $0x50] sm:$0xff]
    %v6968 = vld [vmem:[%s85 + $0x58] sm:$0xff]
    %v6969 = vld [vmem:[%s85 + $0x60] sm:$0xff]
    %v6970 = vld [vmem:[%s85 + $0x68] sm:$0xff]
    %v6971 = vld [vmem:[%s85 + $0x70] sm:$0xff]
    %v6972 = vld [vmem:[%s85 + $0x78] sm:$0xff]
    %v6973 = vld [vmem:[%s85 + $0x80] sm:$0xff]
    %v6974 = vld [vmem:[%s85 + $0x88] sm:$0xff]
    %v6975 = vld [vmem:[%s85 + $0x90] sm:$0xff]
    %v6976 = vld [vmem:[%s85 + $0x98] sm:$0xff]
    %v6977 = vld [vmem:[%s85 + $0xa0] sm:$0xff]
    %v6978 = vld [vmem:[%s85 + $0xa8] sm:$0xff]
    %v6979 = vld [vmem:[%s85 + $0xb0] sm:$0xff]
    %v6980 = vld [vmem:[%s85 + $0xb8] sm:$0xff]
    %v6981 = vld [vmem:[%s85 + $0xc0] sm:$0xff]
    %v6982 = vld [vmem:[%s85 + $0xc8] sm:$0xff]
    %v6983 = vld [vmem:[%s85 + $0xd0] sm:$0xff]
    %v6984 = vld [vmem:[%s85 + $0xd8] sm:$0xff]
    %v6985 = vld [vmem:[%s85 + $0xe0] sm:$0xff]
    %v6986 = vld [vmem:[%s85 + $0xe8] sm:$0xff]
    %v6987 = vld [vmem:[%s85 + $0xf0] sm:$0xff]
    %v6988 = vld [vmem:[%s85 + $0xf8] sm:$0xff]
    %v6989 = vld [vmem:[%s85 + $0x100] sm:$0xff]
    %v6990 = vld [vmem:[%s85 + $0x108] sm:$0xff]
    %v6991 = vld [vmem:[%s85 + $0x110] sm:$0xff]
    %v6992 = vld [vmem:[%s85 + $0x118] sm:$0xff]
    %v6993 = vld [vmem:[%s85 + $0x120] sm:$0xff]
    %v6994 = vld [vmem:[%s85 + $0x128] sm:$0xff]
    %v6995 = vld [vmem:[%s85 + $0x130] sm:$0xff]
    %v6996 = vld [vmem:[%s85 + $0x138] sm:$0xff]
    %v6997 = vld [vmem:[%s85 + $0x140] sm:$0xff]
    %v6998 = vld [vmem:[%s85 + $0x148] sm:$0xff]
    %v6999 = vld [vmem:[%s85 + $0x150] sm:$0xff]
    %v7000 = vld [vmem:[%s85 + $0x158] sm:$0xff]
    %v7001 = vld [vmem:[%s85 + $0x160] sm:$0xff]
    %v7002 = vld [vmem:[%s85 + $0x168] sm:$0xff]
    %v7003 = vld [vmem:[%s85 + $0x170] sm:$0xff]
    %v7004 = vld [vmem:[%s85 + $0x178] sm:$0xff]
    %v7005 = vld [vmem:[%s85 + $0x180] sm:$0xff]
    %v7006 = vld [vmem:[%s85 + $0x188] sm:$0xff]
    %v7007 = vld [vmem:[%s85 + $0x190] sm:$0xff]
    %v7008 = vld [vmem:[%s85 + $0x198] sm:$0xff]
    %v7009 = vld [vmem:[%s85 + $0x1a0] sm:$0xff]
    %v7010 = vld [vmem:[%s85 + $0x1a8] sm:$0xff]
    %v7011 = vld [vmem:[%s85 + $0x1b0] sm:$0xff]
    %v7012 = vld [vmem:[%s85 + $0x1b8] sm:$0xff]
    %v7013 = vld [vmem:[%s85 + $0x1c0] sm:$0xff]
    %v7014 = vld [vmem:[%s85 + $0x1c8] sm:$0xff]
    %v7015 = vld [vmem:[%s85 + $0x1d0] sm:$0xff]
    %v7016 = vld [vmem:[%s85 + $0x1d8] sm:$0xff]
    %v7017 = vld [vmem:[%s85 + $0x1e0] sm:$0xff]
    %v7018 = vld [vmem:[%s85 + $0x1e8] sm:$0xff]
    %v7019 = vld [vmem:[%s85 + $0x1f0] sm:$0xff]
    %v7020 = vld [vmem:[%s85 + $0x1f8] sm:$0xff]
    %v7021 = vld [vmem:[%s85 + $0x200] sm:$0xff]
    %v7022 = vld [vmem:[%s85 + $0x208] sm:$0xff]
    %v7023 = vld [vmem:[%s85 + $0x210] sm:$0xff]
    %v7024 = vld [vmem:[%s85 + $0x218] sm:$0xff]
    %v7025 = vld [vmem:[%s85 + $0x220] sm:$0xff]
    %v7026 = vld [vmem:[%s85 + $0x228] sm:$0xff]
    %v7027 = vld [vmem:[%s85 + $0x230] sm:$0xff]
    %v7028 = vld [vmem:[%s85 + $0x238] sm:$0xff]
    %v7029 = vld [vmem:[%s85 + $0x240] sm:$0xff]
    %v7030 = vld [vmem:[%s85 + $0x248] sm:$0xff]
    %v7031 = vld [vmem:[%s85 + $0x250] sm:$0xff]
    %v7032 = vld [vmem:[%s85 + $0x258] sm:$0xff]
    %v7033 = vld [vmem:[%s85 + $0x260] sm:$0xff]
    %v7034 = vld [vmem:[%s85 + $0x268] sm:$0xff]
    %v7035 = vld [vmem:[%s85 + $0x270] sm:$0xff]
    %v7036 = vld [vmem:[%s85 + $0x278] sm:$0xff]
    %v7037 = vld [vmem:[%s85 + $0x280] sm:$0xff]
    %v7038 = vld [vmem:[%s85 + $0x288] sm:$0xff]
    %v7039 = vld [vmem:[%s85 + $0x290] sm:$0xff]
    %v7040 = vld [vmem:[%s85 + $0x298] sm:$0xff]
    %v7041 = vld [vmem:[%s85 + $0x2a0] sm:$0xff]
    %v7042 = vld [vmem:[%s85 + $0x2a8] sm:$0xff]
    %v7043 = vld [vmem:[%s85 + $0x2b0] sm:$0xff]
    %v7044 = vld [vmem:[%s85 + $0x2b8] sm:$0xff]
    %v7045 = vld [vmem:[%s85 + $0x2c0] sm:$0xff]
    %v7046 = vld [vmem:[%s85 + $0x2c8] sm:$0xff]
    %v7047 = vld [vmem:[%s85 + $0x2d0] sm:$0xff]
    %v7048 = vld [vmem:[%s85 + $0x2d8] sm:$0xff]
    %v7049 = vld [vmem:[%s85 + $0x2e0] sm:$0xff]
    %v7050 = vld [vmem:[%s85 + $0x2e8] sm:$0xff]
    %v7051 = vld [vmem:[%s85 + $0x2f0] sm:$0xff]
    %v7052 = vld [vmem:[%s85 + $0x2f8] sm:$0xff]
    %v7053 = vld [vmem:[%s85 + $0x300] sm:$0xff]
    %v7054 = vld [vmem:[%s85 + $0x308] sm:$0xff]
    %v7055 = vld [vmem:[%s85 + $0x310] sm:$0xff]
    %v7056 = vld [vmem:[%s85 + $0x318] sm:$0xff]
    %v7057 = vld [vmem:[%s85 + $0x320] sm:$0xff]
    %v7058 = vld [vmem:[%s85 + $0x328] sm:$0xff]
    %v7059 = vld [vmem:[%s85 + $0x330] sm:$0xff]
    %v7060 = vld [vmem:[%s85 + $0x338] sm:$0xff]
    %v7061 = vld [vmem:[%s85 + $0x340] sm:$0xff]
    %v7062 = vld [vmem:[%s85 + $0x348] sm:$0xff]
    %v7063 = vld [vmem:[%s85 + $0x350] sm:$0xff]
    %v7064 = vld [vmem:[%s85 + $0x358] sm:$0xff]
    %v7065 = vld [vmem:[%s85 + $0x360] sm:$0xff]
    %v7066 = vld [vmem:[%s85 + $0x368] sm:$0xff]
    %v7067 = vld [vmem:[%s85 + $0x370] sm:$0xff]
    %v7068 = vld [vmem:[%s85 + $0x378] sm:$0xff]
    %v7069 = vld [vmem:[%s85 + $0x380] sm:$0xff]
    %v7070 = vld [vmem:[%s85 + $0x388] sm:$0xff]
    %v7071 = vld [vmem:[%s85 + $0x390] sm:$0xff]
    %v7072 = vld [vmem:[%s85 + $0x398] sm:$0xff]
    %v7073 = vld [vmem:[%s85 + $0x3a0] sm:$0xff]
    %v7074 = vld [vmem:[%s85 + $0x3a8] sm:$0xff]
    %v7075 = vld [vmem:[%s85 + $0x3b0] sm:$0xff]
    %v7076 = vld [vmem:[%s85 + $0x3b8] sm:$0xff]
    %v7077 = vld [vmem:[%s85 + $0x3c0] sm:$0xff]
    %v7078 = vld [vmem:[%s85 + $0x3c8] sm:$0xff]
    %v7079 = vld [vmem:[%s85 + $0x3d0] sm:$0xff]
    %v7080 = vld [vmem:[%s85 + $0x3d8] sm:$0xff]
    %v7081 = vld [vmem:[%s85 + $0x3e0] sm:$0xff]
    %v7082 = vld [vmem:[%s85 + $0x3e8] sm:$0xff]
    %v7083 = vld [vmem:[%s85 + $0x3f0] sm:$0xff]
    %v7084 = vld [vmem:[%s85 + $0x3f8] sm:$0xff]
    %v7085 = vld [vmem:[#allocation3] sm:$0x1]
    %v7087 = vrot.slane %v6916, 7
    %v7089 = vsel %vm3815, %v5244, %v7087
    %vm7090 = vcmask 254976
    %v7091 = vsel %vm7090, %v7089, 0.0
    %7092 = vadd.xlane.f32.xlu0 %v7091
    %v7093 = vpop.xlane.xlu0 %7092
    %v7094 = vmul.f32 %v7093, %v472
    %v7095 = vsub.f32 %v7089, %v7094
    %v7096 = vmul.f32 %v7095, %v7095
    %v7097 = vsel %vm7090, %v7096, 0.0
    %7098 = vadd.xlane.f32.xlu0 %v7097
    %v7099 = vpop.xlane.xlu0 %7098
    %v7100 = vmul.f32 %v7099, %v472
    %v7101 = vadd.f32 %v7100, 1e-06
    %v7102 = vrsqrt.pop %v7101
    %v7103 = vmul.f32 %v7095, %v7102
    %v7105 = vlaneseq
    %v7106 = vshrl.u32 %v7105, 7
    %v7107 = vsub.s32 0, %v7106
    %v7108 = vrot.slane %v6917, %v7107
    %v7110 = vmul.f32 %v7103, %v7108
    %v7112 = vlaneseq
    %v7113 = vshrl.u32 %v7112, 7
    %v7114 = vsub.s32 0, %v7113
    %v7115 = vrot.slane %v6918, %v7114
    %v7117 = vadd.f32 %v7110, %v7115
    %v7119 = vlaneseq
    %v7120 = vshrl.u32 %v7119, 7
    %v7121 = vsub.s32 0, %v7120
    %v7122 = vrot.slane %v6951, %v7121
    %v7123 = vlaneseq
    %v7124 = vshrl.u32 %v7123, 7
    %v7125 = vsub.s32 1, %v7124
    %v7126 = vrot.slane %v6951, %v7125
    %v7127 = vlaneseq
    %v7128 = vshrl.u32 %v7127, 7
    %v7129 = vsub.s32 2, %v7128
    %v7130 = vrot.slane %v6951, %v7129
    %v7131 = vlaneseq
    %v7132 = vshrl.u32 %v7131, 7
    %v7133 = vsub.s32 3, %v7132
    %v7134 = vrot.slane %v6951, %v7133
    %v7135 = vlaneseq
    %v7136 = vshrl.u32 %v7135, 7
    %v7137 = vsub.s32 4, %v7136
    %v7138 = vrot.slane %v6951, %v7137
    %v7139 = vlaneseq
    %v7140 = vshrl.u32 %v7139, 7
    %v7141 = vsub.s32 5, %v7140
    %v7142 = vrot.slane %v6951, %v7141
    %v7143 = vlaneseq
    %v7144 = vshrl.u32 %v7143, 7
    %v7145 = vsub.s32 6, %v7144
    %v7146 = vrot.slane %v6951, %v7145
    %v7147 = vlaneseq
    %v7148 = vshrl.u32 %v7147, 7
    %v7149 = vsub.s32 7, %v7148
    %v7150 = vrot.slane %v6951, %v7149
    %v7160 = vsel %vm459, %v7117, 0
    %7162 = vmatprep.subr.mxu0 0.0
    %7163 = vmatpush1.msra.mxu0 0.0
    %7164 = vmatprep.subr.mxu0 0.0
    %7165 = vmatpush1.msra.mxu0 0.0
    %7166 = vmatprep.subr.mxu0 0.0
    %7167 = vmatpush1.msra.mxu0 0.0
    %7168 = vmatprep.subr.mxu0 0.0
    %7169 = vmatpush1.msra.mxu0 0.0
    %7170 = vmatprep.subr.mxu0 0.0
    %7171 = vmatpush1.msra.mxu0 0.0
    %7172 = vmatprep.subr.mxu0 0.0
    %7173 = vmatpush1.msra.mxu0 0.0
    %7174 = vmatprep.subr.mxu0 0.0
    %7175 = vmatpush1.msra.mxu0 0.0
    %7176 = vmatprep.subr.mxu0 0.0
    %7177 = vmatpush1.msra.mxu0 0.0
    %7178 = vmatprep.subr.mxu0 0.0
    %7179 = vmatpush1.msra.mxu0 0.0
    %7180 = vmatprep.subr.mxu0 0.0
    %7181 = vmatpush1.msra.mxu0 0.0
    %7182 = vmatprep.subr.mxu0 0.0
    %7183 = vmatpush1.msra.mxu0 0.0
    %7184 = vmatprep.subr.mxu0 0.0
    %7185 = vmatpush1.msra.mxu0 0.0
    %7186 = vmatprep.subr.mxu0 %v6944
    %7187 = vmatpush1.msra.mxu0 %v6943
    %7188 = vmatprep.subr.mxu0 %v6936
    %7189 = vmatpush1.msra.mxu0 %v6935
    %7190 = vmatprep.subr.mxu0 %v6928
    %7191 = vmatpush1.msra.mxu0 %v6927
    %7192 = vmatprep.subr.mxu0 %v6920
    %7193 = vmatpush1.msra.mxu0 %v6919
    %7194 = vmatprep.subr.mxu0 0.0
    %7195 = vmatpush2.msra.mxu0 0.0
    %7196 = vmatprep.subr.mxu0 0.0
    %7197 = vmatpush2.msra.mxu0 0.0
    %7198 = vmatprep.subr.mxu0 0.0
    %7199 = vmatpush2.msra.mxu0 0.0
    %7200 = vmatprep.subr.mxu0 0.0
    %7201 = vmatpush2.msra.mxu0 0.0
    %7202 = vmatprep.subr.mxu0 0.0
    %7203 = vmatpush2.msra.mxu0 0.0
    %7204 = vmatprep.subr.mxu0 0.0
    %7205 = vmatpush2.msra.mxu0 0.0
    %7206 = vmatprep.subr.mxu0 0.0
    %7207 = vmatpush2.msra.mxu0 0.0
    %7208 = vmatprep.subr.mxu0 0.0
    %7209 = vmatpush2.msra.mxu0 0.0
    %7210 = vmatprep.subr.mxu0 0.0
    %7211 = vmatpush2.msra.mxu0 0.0
    %7212 = vmatprep.subr.mxu0 0.0
    %7213 = vmatpush2.msra.mxu0 0.0
    %7214 = vmatprep.subr.mxu0 0.0
    %7215 = vmatpush2.msra.mxu0 0.0
    %7216 = vmatprep.subr.mxu0 0.0
    %7217 = vmatpush2.msra.mxu0 0.0
    %7218 = vmatprep.subr.mxu0 0.0
    %7219 = vmatpush2.msra.mxu0 0.0
    %7220 = vmatprep.subr.mxu0 0.0
    %7221 = vmatpush2.msra.mxu0 0.0
    %7222 = vmatprep.subr.mxu0 0.0
    %7223 = vmatpush2.msra.mxu0 0.0
    %7224 = vmatprep.subr.mxu0 0.0
    %7225 = vmatpush2.msra.mxu0 0.0
    %7226 = vmatprep.mubr.f32.mxu0 0.0
    %7227 = vmatmul.mubr.f32.gmra.mxu0 %v7160
    %v7228 = vpop.f32.mrf.mxu0
    %v7229 = vadd.f32 %v7122, %v7228
    %v7230 = vpop.f32.mrf.mxu0
    %v7231 = vadd.f32 %v7126, %v7230
    %7232 = vdwg.mxu0
    %7233 = vmatprep.subr.mxu0 0.0
    %7234 = vmatpush1.msra.mxu0 0.0
    %7235 = vmatprep.subr.mxu0 0.0
    %7236 = vmatpush1.msra.mxu0 0.0
    %7237 = vmatprep.subr.mxu0 0.0
    %7238 = vmatpush1.msra.mxu0 0.0
    %7239 = vmatprep.subr.mxu0 0.0
    %7240 = vmatpush1.msra.mxu0 0.0
    %7241 = vmatprep.subr.mxu0 0.0
    %7242 = vmatpush1.msra.mxu0 0.0
    %7243 = vmatprep.subr.mxu0 0.0
    %7244 = vmatpush1.msra.mxu0 0.0
    %7245 = vmatprep.subr.mxu0 0.0
    %7246 = vmatpush1.msra.mxu0 0.0
    %7247 = vmatprep.subr.mxu0 0.0
    %7248 = vmatpush1.msra.mxu0 0.0
    %7249 = vmatprep.subr.mxu0 0.0
    %7250 = vmatpush1.msra.mxu0 0.0
    %7251 = vmatprep.subr.mxu0 0.0
    %7252 = vmatpush1.msra.mxu0 0.0
    %7253 = vmatprep.subr.mxu0 0.0
    %7254 = vmatpush1.msra.mxu0 0.0
    %7255 = vmatprep.subr.mxu0 0.0
    %7256 = vmatpush1.msra.mxu0 0.0
    %7257 = vmatprep.subr.mxu0 %v6946
    %7258 = vmatpush1.msra.mxu0 %v6945
    %7259 = vmatprep.subr.mxu0 %v6938
    %7260 = vmatpush1.msra.mxu0 %v6937
    %7261 = vmatprep.subr.mxu0 %v6930
    %7262 = vmatpush1.msra.mxu0 %v6929
    %7263 = vmatprep.subr.mxu0 %v6922
    %7264 = vmatpush1.msra.mxu0 %v6921
    %7265 = vmatprep.subr.mxu0 0.0
    %7266 = vmatpush2.msra.mxu0 0.0
    %7267 = vmatprep.subr.mxu0 0.0
    %7268 = vmatpush2.msra.mxu0 0.0
    %7269 = vmatprep.subr.mxu0 0.0
    %7270 = vmatpush2.msra.mxu0 0.0
    %7271 = vmatprep.subr.mxu0 0.0
    %7272 = vmatpush2.msra.mxu0 0.0
    %7273 = vmatprep.subr.mxu0 0.0
    %7274 = vmatpush2.msra.mxu0 0.0
    %7275 = vmatprep.subr.mxu0 0.0
    %7276 = vmatpush2.msra.mxu0 0.0
    %7277 = vmatprep.subr.mxu0 0.0
    %7278 = vmatpush2.msra.mxu0 0.0
    %7279 = vmatprep.subr.mxu0 0.0
    %7280 = vmatpush2.msra.mxu0 0.0
    %7281 = vmatprep.subr.mxu0 0.0
    %7282 = vmatpush2.msra.mxu0 0.0
    %7283 = vmatprep.subr.mxu0 0.0
    %7284 = vmatpush2.msra.mxu0 0.0
    %7285 = vmatprep.subr.mxu0 0.0
    %7286 = vmatpush2.msra.mxu0 0.0
    %7287 = vmatprep.subr.mxu0 0.0
    %7288 = vmatpush2.msra.mxu0 0.0
    %7289 = vmatprep.subr.mxu0 0.0
    %7290 = vmatpush2.msra.mxu0 0.0
    %7291 = vmatprep.subr.mxu0 0.0
    %7292 = vmatpush2.msra.mxu0 0.0
    %7293 = vmatprep.subr.mxu0 0.0
    %7294 = vmatpush2.msra.mxu0 0.0
    %7295 = vmatprep.subr.mxu0 0.0
    %7296 = vmatpush2.msra.mxu0 0.0
    %7297 = vmatprep.mubr.f32.mxu0 0.0
    %7298 = vmatmul.mubr.f32.gmra.mxu0 %v7160
    %v7299 = vpop.f32.mrf.mxu0
    %v7300 = vadd.f32 %v7130, %v7299
    %v7301 = vpop.f32.mrf.mxu0
    %v7302 = vadd.f32 %v7134, %v7301
    %7303 = vdwg.mxu0
    %7304 = vmatprep.subr.mxu0 0.0
    %7305 = vmatpush1.msra.mxu0 0.0
    %7306 = vmatprep.subr.mxu0 0.0
    %7307 = vmatpush1.msra.mxu0 0.0
    %7308 = vmatprep.subr.mxu0 0.0
    %7309 = vmatpush1.msra.mxu0 0.0
    %7310 = vmatprep.subr.mxu0 0.0
    %7311 = vmatpush1.msra.mxu0 0.0
    %7312 = vmatprep.subr.mxu0 0.0
    %7313 = vmatpush1.msra.mxu0 0.0
    %7314 = vmatprep.subr.mxu0 0.0
    %7315 = vmatpush1.msra.mxu0 0.0
    %7316 = vmatprep.subr.mxu0 0.0
    %7317 = vmatpush1.msra.mxu0 0.0
    %7318 = vmatprep.subr.mxu0 0.0
    %7319 = vmatpush1.msra.mxu0 0.0
    %7320 = vmatprep.subr.mxu0 0.0
    %7321 = vmatpush1.msra.mxu0 0.0
    %7322 = vmatprep.subr.mxu0 0.0
    %7323 = vmatpush1.msra.mxu0 0.0
    %7324 = vmatprep.subr.mxu0 0.0
    %7325 = vmatpush1.msra.mxu0 0.0
    %7326 = vmatprep.subr.mxu0 0.0
    %7327 = vmatpush1.msra.mxu0 0.0
    %7328 = vmatprep.subr.mxu0 %v6948
    %7329 = vmatpush1.msra.mxu0 %v6947
    %7330 = vmatprep.subr.mxu0 %v6940
    %7331 = vmatpush1.msra.mxu0 %v6939
    %7332 = vmatprep.subr.mxu0 %v6932
    %7333 = vmatpush1.msra.mxu0 %v6931
    %7334 = vmatprep.subr.mxu0 %v6924
    %7335 = vmatpush1.msra.mxu0 %v6923
    %7336 = vmatprep.subr.mxu0 0.0
    %7337 = vmatpush2.msra.mxu0 0.0
    %7338 = vmatprep.subr.mxu0 0.0
    %7339 = vmatpush2.msra.mxu0 0.0
    %7340 = vmatprep.subr.mxu0 0.0
    %7341 = vmatpush2.msra.mxu0 0.0
    %7342 = vmatprep.subr.mxu0 0.0
    %7343 = vmatpush2.msra.mxu0 0.0
    %7344 = vmatprep.subr.mxu0 0.0
    %7345 = vmatpush2.msra.mxu0 0.0
    %7346 = vmatprep.subr.mxu0 0.0
    %7347 = vmatpush2.msra.mxu0 0.0
    %7348 = vmatprep.subr.mxu0 0.0
    %7349 = vmatpush2.msra.mxu0 0.0
    %7350 = vmatprep.subr.mxu0 0.0
    %7351 = vmatpush2.msra.mxu0 0.0
    %7352 = vmatprep.subr.mxu0 0.0
    %7353 = vmatpush2.msra.mxu0 0.0
    %7354 = vmatprep.subr.mxu0 0.0
    %7355 = vmatpush2.msra.mxu0 0.0
    %7356 = vmatprep.subr.mxu0 0.0
    %7357 = vmatpush2.msra.mxu0 0.0
    %7358 = vmatprep.subr.mxu0 0.0
    %7359 = vmatpush2.msra.mxu0 0.0
    %7360 = vmatprep.subr.mxu0 0.0
    %7361 = vmatpush2.msra.mxu0 0.0
    %7362 = vmatprep.subr.mxu0 0.0
    %7363 = vmatpush2.msra.mxu0 0.0
    %7364 = vmatprep.subr.mxu0 0.0
    %7365 = vmatpush2.msra.mxu0 0.0
    %7366 = vmatprep.subr.mxu0 0.0
    %7367 = vmatpush2.msra.mxu0 0.0
    %7368 = vmatprep.mubr.f32.mxu0 0.0
    %7369 = vmatmul.mubr.f32.gmra.mxu0 %v7160
    %v7370 = vpop.f32.mrf.mxu0
    %v7371 = vadd.f32 %v7138, %v7370
    %v7372 = vpop.f32.mrf.mxu0
    %v7373 = vadd.f32 %v7142, %v7372
    %7374 = vdwg.mxu0
    %7375 = vmatprep.subr.mxu0 0.0
    %7376 = vmatpush1.msra.mxu0 0.0
    %7377 = vmatprep.subr.mxu0 0.0
    %7378 = vmatpush1.msra.mxu0 0.0
    %7379 = vmatprep.subr.mxu0 0.0
    %7380 = vmatpush1.msra.mxu0 0.0
    %7381 = vmatprep.subr.mxu0 0.0
    %7382 = vmatpush1.msra.mxu0 0.0
    %7383 = vmatprep.subr.mxu0 0.0
    %7384 = vmatpush1.msra.mxu0 0.0
    %7385 = vmatprep.subr.mxu0 0.0
    %7386 = vmatpush1.msra.mxu0 0.0
    %7387 = vmatprep.subr.mxu0 0.0
    %7388 = vmatpush1.msra.mxu0 0.0
    %7389 = vmatprep.subr.mxu0 0.0
    %7390 = vmatpush1.msra.mxu0 0.0
    %7391 = vmatprep.subr.mxu0 0.0
    %7392 = vmatpush1.msra.mxu0 0.0
    %7393 = vmatprep.subr.mxu0 0.0
    %7394 = vmatpush1.msra.mxu0 0.0
    %7395 = vmatprep.subr.mxu0 0.0
    %7396 = vmatpush1.msra.mxu0 0.0
    %7397 = vmatprep.subr.mxu0 0.0
    %7398 = vmatpush1.msra.mxu0 0.0
    %7399 = vmatprep.subr.mxu0 %v6950
    %7400 = vmatpush1.msra.mxu0 %v6949
    %7401 = vmatprep.subr.mxu0 %v6942
    %7402 = vmatpush1.msra.mxu0 %v6941
    %7403 = vmatprep.subr.mxu0 %v6934
    %7404 = vmatpush1.msra.mxu0 %v6933
    %7405 = vmatprep.subr.mxu0 %v6926
    %7406 = vmatpush1.msra.mxu0 %v6925
    %7407 = vmatprep.subr.mxu0 0.0
    %7408 = vmatpush2.msra.mxu0 0.0
    %7409 = vmatprep.subr.mxu0 0.0
    %7410 = vmatpush2.msra.mxu0 0.0
    %7411 = vmatprep.subr.mxu0 0.0
    %7412 = vmatpush2.msra.mxu0 0.0
    %7413 = vmatprep.subr.mxu0 0.0
    %7414 = vmatpush2.msra.mxu0 0.0
    %7415 = vmatprep.subr.mxu0 0.0
    %7416 = vmatpush2.msra.mxu0 0.0
    %7417 = vmatprep.subr.mxu0 0.0
    %7418 = vmatpush2.msra.mxu0 0.0
    %7419 = vmatprep.subr.mxu0 0.0
    %7420 = vmatpush2.msra.mxu0 0.0
    %7421 = vmatprep.subr.mxu0 0.0
    %7422 = vmatpush2.msra.mxu0 0.0
    %7423 = vmatprep.subr.mxu0 0.0
    %7424 = vmatpush2.msra.mxu0 0.0
    %7425 = vmatprep.subr.mxu0 0.0
    %7426 = vmatpush2.msra.mxu0 0.0
    %7427 = vmatprep.subr.mxu0 0.0
    %7428 = vmatpush2.msra.mxu0 0.0
    %7429 = vmatprep.subr.mxu0 0.0
    %7430 = vmatpush2.msra.mxu0 0.0
    %7431 = vmatprep.subr.mxu0 0.0
    %7432 = vmatpush2.msra.mxu0 0.0
    %7433 = vmatprep.subr.mxu0 0.0
    %7434 = vmatpush2.msra.mxu0 0.0
    %7435 = vmatprep.subr.mxu0 0.0
    %7436 = vmatpush2.msra.mxu0 0.0
    %7437 = vmatprep.subr.mxu0 0.0
    %7438 = vmatpush2.msra.mxu0 0.0
    %7439 = vmatprep.mubr.f32.mxu0 0.0
    %7440 = vmatmul.mubr.f32.gmra.mxu0 %v7160
    %v7441 = vpop.f32.mrf.mxu0
    %v7442 = vadd.f32 %v7146, %v7441
    %v7443 = vpop.f32.mrf.mxu0
    %v7444 = vadd.f32 %v7150, %v7443
    %7445 = vdwg.mxu0
    %v7446 = vmax.f32 %v7229, 0.0
    %v7447 = vmax.f32 %v7231, 0.0
    %v7448 = vmax.f32 %v7300, 0.0
    %v7449 = vmax.f32 %v7302, 0.0
    %v7450 = vmax.f32 %v7371, 0.0
    %v7451 = vmax.f32 %v7373, 0.0
    %v7452 = vmax.f32 %v7442, 0.0
    %v7453 = vmax.f32 %v7444, 0.0
    %v7454 = vmin.f32 %v7229, 0.0
    %v7455 = vmin.f32 %v7231, 0.0
    %v7456 = vmin.f32 %v7300, 0.0
    %v7457 = vmin.f32 %v7302, 0.0
    %v7458 = vmin.f32 %v7371, 0.0
    %v7459 = vmin.f32 %v7373, 0.0
    %v7460 = vmin.f32 %v7442, 0.0
    %v7461 = vmin.f32 %v7444, 0.0
    %v7463 = vlaneseq
    %v7464 = vshrl.u32 %v7463, 7
    %v7465 = vsub.s32 0, %v7464
    %v7466 = vrot.slane %v6952, %v7465
    %7467 = vset.pattern.permute.xlu0 0
    %7468 = vperm.xlu0 %7467, %v7466
    %v7469 = vpop.permute.xlu0 %7468
    %v7471 = vmul.f32 %v7469, %v7454
    %v7472 = vmul.f32 %v7469, %v7455
    %v7473 = vmul.f32 %v7469, %v7456
    %v7474 = vmul.f32 %v7469, %v7457
    %v7475 = vmul.f32 %v7469, %v7458
    %v7476 = vmul.f32 %v7469, %v7459
    %v7477 = vmul.f32 %v7469, %v7460
    %v7478 = vmul.f32 %v7469, %v7461
    %v7479 = vadd.f32 %v7446, %v7471
    %v7480 = vadd.f32 %v7447, %v7472
    %v7481 = vadd.f32 %v7448, %v7473
    %v7482 = vadd.f32 %v7449, %v7474
    %v7483 = vadd.f32 %v7450, %v7475
    %v7484 = vadd.f32 %v7451, %v7476
    %v7485 = vadd.f32 %v7452, %v7477
    %v7486 = vadd.f32 %v7453, %v7478
    %v7488 = vlaneseq
    %v7489 = vshrl.u32 %v7488, 7
    %v7490 = vsub.s32 0, %v7489
    %v7491 = vrot.slane %v6955, %v7490
    %v7492 = vlaneseq
    %v7493 = vshrl.u32 %v7492, 7
    %v7494 = vsub.s32 1, %v7493
    %v7495 = vrot.slane %v6955, %v7494
    %v7496 = vlaneseq
    %v7497 = vshrl.u32 %v7496, 7
    %v7498 = vsub.s32 2, %v7497
    %v7499 = vrot.slane %v6955, %v7498
    %v7500 = vlaneseq
    %v7501 = vshrl.u32 %v7500, 7
    %v7502 = vsub.s32 3, %v7501
    %v7503 = vrot.slane %v6955, %v7502
    %v7504 = vlaneseq
    %v7505 = vshrl.u32 %v7504, 7
    %v7506 = vsub.s32 4, %v7505
    %v7507 = vrot.slane %v6955, %v7506
    %v7508 = vlaneseq
    %v7509 = vshrl.u32 %v7508, 7
    %v7510 = vsub.s32 5, %v7509
    %v7511 = vrot.slane %v6955, %v7510
    %v7512 = vlaneseq
    %v7513 = vshrl.u32 %v7512, 7
    %v7514 = vsub.s32 6, %v7513
    %v7515 = vrot.slane %v6955, %v7514
    %v7516 = vlaneseq
    %v7517 = vshrl.u32 %v7516, 7
    %v7518 = vsub.s32 7, %v7517
    %v7519 = vrot.slane %v6955, %v7518
    %v7528 = vsub.f32 %v7479, %v7491
    %v7529 = vsub.f32 %v7480, %v7495
    %v7530 = vsub.f32 %v7481, %v7499
    %v7531 = vsub.f32 %v7482, %v7503
    %v7532 = vsub.f32 %v7483, %v7507
    %v7533 = vsub.f32 %v7484, %v7511
    %v7534 = vsub.f32 %v7485, %v7515
    %v7535 = vsub.f32 %v7486, %v7519
    %v7536 = vadd.f32 %v6956, 1e-05
    %v7537 = vrsqrt.pop %v7536
    %v7539 = vlaneseq
    %v7540 = vshrl.u32 %v7539, 7
    %v7541 = vsub.s32 0, %v7540
    %v7542 = vrot.slane %v7537, %v7541
    %v7543 = vlaneseq
    %v7544 = vshrl.u32 %v7543, 7
    %v7545 = vsub.s32 1, %v7544
    %v7546 = vrot.slane %v7537, %v7545
    %v7547 = vlaneseq
    %v7548 = vshrl.u32 %v7547, 7
    %v7549 = vsub.s32 2, %v7548
    %v7550 = vrot.slane %v7537, %v7549
    %v7551 = vlaneseq
    %v7552 = vshrl.u32 %v7551, 7
    %v7553 = vsub.s32 3, %v7552
    %v7554 = vrot.slane %v7537, %v7553
    %v7555 = vlaneseq
    %v7556 = vshrl.u32 %v7555, 7
    %v7557 = vsub.s32 4, %v7556
    %v7558 = vrot.slane %v7537, %v7557
    %v7559 = vlaneseq
    %v7560 = vshrl.u32 %v7559, 7
    %v7561 = vsub.s32 5, %v7560
    %v7562 = vrot.slane %v7537, %v7561
    %v7563 = vlaneseq
    %v7564 = vshrl.u32 %v7563, 7
    %v7565 = vsub.s32 6, %v7564
    %v7566 = vrot.slane %v7537, %v7565
    %v7567 = vlaneseq
    %v7568 = vshrl.u32 %v7567, 7
    %v7569 = vsub.s32 7, %v7568
    %v7570 = vrot.slane %v7537, %v7569
    %v7579 = vmul.f32 %v7528, %v7542
    %v7580 = vmul.f32 %v7529, %v7546
    %v7581 = vmul.f32 %v7530, %v7550
    %v7582 = vmul.f32 %v7531, %v7554
    %v7583 = vmul.f32 %v7532, %v7558
    %v7584 = vmul.f32 %v7533, %v7562
    %v7585 = vmul.f32 %v7534, %v7566
    %v7586 = vmul.f32 %v7535, %v7570
    %v7588 = vlaneseq
    %v7589 = vshrl.u32 %v7588, 7
    %v7590 = vsub.s32 0, %v7589
    %v7591 = vrot.slane %v6953, %v7590
    %v7592 = vlaneseq
    %v7593 = vshrl.u32 %v7592, 7
    %v7594 = vsub.s32 1, %v7593
    %v7595 = vrot.slane %v6953, %v7594
    %v7596 = vlaneseq
    %v7597 = vshrl.u32 %v7596, 7
    %v7598 = vsub.s32 2, %v7597
    %v7599 = vrot.slane %v6953, %v7598
    %v7600 = vlaneseq
    %v7601 = vshrl.u32 %v7600, 7
    %v7602 = vsub.s32 3, %v7601
    %v7603 = vrot.slane %v6953, %v7602
    %v7604 = vlaneseq
    %v7605 = vshrl.u32 %v7604, 7
    %v7606 = vsub.s32 4, %v7605
    %v7607 = vrot.slane %v6953, %v7606
    %v7608 = vlaneseq
    %v7609 = vshrl.u32 %v7608, 7
    %v7610 = vsub.s32 5, %v7609
    %v7611 = vrot.slane %v6953, %v7610
    %v7612 = vlaneseq
    %v7613 = vshrl.u32 %v7612, 7
    %v7614 = vsub.s32 6, %v7613
    %v7615 = vrot.slane %v6953, %v7614
    %v7616 = vlaneseq
    %v7617 = vshrl.u32 %v7616, 7
    %v7618 = vsub.s32 7, %v7617
    %v7619 = vrot.slane %v6953, %v7618
    %v7628 = vmul.f32 %v7579, %v7591
    %v7629 = vmul.f32 %v7580, %v7595
    %v7630 = vmul.f32 %v7581, %v7599
    %v7631 = vmul.f32 %v7582, %v7603
    %v7632 = vmul.f32 %v7583, %v7607
    %v7633 = vmul.f32 %v7584, %v7611
    %v7634 = vmul.f32 %v7585, %v7615
    %v7635 = vmul.f32 %v7586, %v7619
    %v7637 = vlaneseq
    %v7638 = vshrl.u32 %v7637, 7
    %v7639 = vsub.s32 0, %v7638
    %v7640 = vrot.slane %v6954, %v7639
    %v7641 = vlaneseq
    %v7642 = vshrl.u32 %v7641, 7
    %v7643 = vsub.s32 1, %v7642
    %v7644 = vrot.slane %v6954, %v7643
    %v7645 = vlaneseq
    %v7646 = vshrl.u32 %v7645, 7
    %v7647 = vsub.s32 2, %v7646
    %v7648 = vrot.slane %v6954, %v7647
    %v7649 = vlaneseq
    %v7650 = vshrl.u32 %v7649, 7
    %v7651 = vsub.s32 3, %v7650
    %v7652 = vrot.slane %v6954, %v7651
    %v7653 = vlaneseq
    %v7654 = vshrl.u32 %v7653, 7
    %v7655 = vsub.s32 4, %v7654
    %v7656 = vrot.slane %v6954, %v7655
    %v7657 = vlaneseq
    %v7658 = vshrl.u32 %v7657, 7
    %v7659 = vsub.s32 5, %v7658
    %v7660 = vrot.slane %v6954, %v7659
    %v7661 = vlaneseq
    %v7662 = vshrl.u32 %v7661, 7
    %v7663 = vsub.s32 6, %v7662
    %v7664 = vrot.slane %v6954, %v7663
    %v7665 = vlaneseq
    %v7666 = vshrl.u32 %v7665, 7
    %v7667 = vsub.s32 7, %v7666
    %v7668 = vrot.slane %v6954, %v7667
    %v7677 = vadd.f32 %v7628, %v7640
    %v7678 = vadd.f32 %v7629, %v7644
    %v7679 = vadd.f32 %v7630, %v7648
    %v7680 = vadd.f32 %v7631, %v7652
    %v7681 = vadd.f32 %v7632, %v7656
    %v7682 = vadd.f32 %v7633, %v7660
    %v7683 = vadd.f32 %v7634, %v7664
    %v7684 = vadd.f32 %v7635, %v7668
    %v7686 = vlaneseq
    %v7687 = vshrl.u32 %v7686, 7
    %v7688 = vsub.s32 0, %v7687
    %v7689 = vrot.slane %v7085, %v7688
    %7691 = vmatprep.subr.mxu0 0.0
    %7692 = vmatpush1.msra.mxu0 %v6972
    %7693 = vmatprep.subr.mxu0 0.0
    %7694 = vmatpush1.msra.mxu0 %v6971
    %7695 = vmatprep.subr.mxu0 0.0
    %7696 = vmatpush1.msra.mxu0 %v6970
    %7697 = vmatprep.subr.mxu0 0.0
    %7698 = vmatpush1.msra.mxu0 %v6969
    %7699 = vmatprep.subr.mxu0 0.0
    %7700 = vmatpush1.msra.mxu0 %v6968
    %7701 = vmatprep.subr.mxu0 0.0
    %7702 = vmatpush1.msra.mxu0 %v6967
    %7703 = vmatprep.subr.mxu0 0.0
    %7704 = vmatpush1.msra.mxu0 %v6966
    %7705 = vmatprep.subr.mxu0 0.0
    %7706 = vmatpush1.msra.mxu0 %v6965
    %7707 = vmatprep.subr.mxu0 0.0
    %7708 = vmatpush1.msra.mxu0 %v6964
    %7709 = vmatprep.subr.mxu0 0.0
    %7710 = vmatpush1.msra.mxu0 %v6963
    %7711 = vmatprep.subr.mxu0 0.0
    %7712 = vmatpush1.msra.mxu0 %v6962
    %7713 = vmatprep.subr.mxu0 0.0
    %7714 = vmatpush1.msra.mxu0 %v6961
    %7715 = vmatprep.subr.mxu0 0.0
    %7716 = vmatpush1.msra.mxu0 %v6960
    %7717 = vmatprep.subr.mxu0 0.0
    %7718 = vmatpush1.msra.mxu0 %v6959
    %7719 = vmatprep.subr.mxu0 0.0
    %7720 = vmatpush1.msra.mxu0 %v6958
    %7721 = vmatprep.subr.mxu0 0.0
    %7722 = vmatpush1.msra.mxu0 %v6957
    %7723 = vmatprep.subr.mxu0 0.0
    %7724 = vmatpush2.msra.mxu0 %v6988
    %7725 = vmatprep.subr.mxu0 0.0
    %7726 = vmatpush2.msra.mxu0 %v6987
    %7727 = vmatprep.subr.mxu0 0.0
    %7728 = vmatpush2.msra.mxu0 %v6986
    %7729 = vmatprep.subr.mxu0 0.0
    %7730 = vmatpush2.msra.mxu0 %v6985
    %7731 = vmatprep.subr.mxu0 0.0
    %7732 = vmatpush2.msra.mxu0 %v6984
    %7733 = vmatprep.subr.mxu0 0.0
    %7734 = vmatpush2.msra.mxu0 %v6983
    %7735 = vmatprep.subr.mxu0 0.0
    %7736 = vmatpush2.msra.mxu0 %v6982
    %7737 = vmatprep.subr.mxu0 0.0
    %7738 = vmatpush2.msra.mxu0 %v6981
    %7739 = vmatprep.subr.mxu0 0.0
    %7740 = vmatpush2.msra.mxu0 %v6980
    %7741 = vmatprep.subr.mxu0 0.0
    %7742 = vmatpush2.msra.mxu0 %v6979
    %7743 = vmatprep.subr.mxu0 0.0
    %7744 = vmatpush2.msra.mxu0 %v6978
    %7745 = vmatprep.subr.mxu0 0.0
    %7746 = vmatpush2.msra.mxu0 %v6977
    %7747 = vmatprep.subr.mxu0 0.0
    %7748 = vmatpush2.msra.mxu0 %v6976
    %7749 = vmatprep.subr.mxu0 0.0
    %7750 = vmatpush2.msra.mxu0 %v6975
    %7751 = vmatprep.subr.mxu0 0.0
    %7752 = vmatpush2.msra.mxu0 %v6974
    %7753 = vmatprep.subr.mxu0 0.0
    %7754 = vmatpush2.msra.mxu0 %v6973
    %7755 = vmatprep.mubr.f32.mxu0 %v7678
    %7756 = vmatmul.mubr.f32.gmra.mxu0 %v7677
    %v7757 = vpop.f32.mrf.mxu0
    %v7758 = vadd.f32 %v7689, %v7757
    %v7759 = vpop.f32.mrf.mxu0
    %7760 = vdwg.mxu0
    %7761 = vmatprep.subr.mxu0 0.0
    %7762 = vmatpush1.msra.mxu0 %v7004
    %7763 = vmatprep.subr.mxu0 0.0
    %7764 = vmatpush1.msra.mxu0 %v7003
    %7765 = vmatprep.subr.mxu0 0.0
    %7766 = vmatpush1.msra.mxu0 %v7002
    %7767 = vmatprep.subr.mxu0 0.0
    %7768 = vmatpush1.msra.mxu0 %v7001
    %7769 = vmatprep.subr.mxu0 0.0
    %7770 = vmatpush1.msra.mxu0 %v7000
    %7771 = vmatprep.subr.mxu0 0.0
    %7772 = vmatpush1.msra.mxu0 %v6999
    %7773 = vmatprep.subr.mxu0 0.0
    %7774 = vmatpush1.msra.mxu0 %v6998
    %7775 = vmatprep.subr.mxu0 0.0
    %7776 = vmatpush1.msra.mxu0 %v6997
    %7777 = vmatprep.subr.mxu0 0.0
    %7778 = vmatpush1.msra.mxu0 %v6996
    %7779 = vmatprep.subr.mxu0 0.0
    %7780 = vmatpush1.msra.mxu0 %v6995
    %7781 = vmatprep.subr.mxu0 0.0
    %7782 = vmatpush1.msra.mxu0 %v6994
    %7783 = vmatprep.subr.mxu0 0.0
    %7784 = vmatpush1.msra.mxu0 %v6993
    %7785 = vmatprep.subr.mxu0 0.0
    %7786 = vmatpush1.msra.mxu0 %v6992
    %7787 = vmatprep.subr.mxu0 0.0
    %7788 = vmatpush1.msra.mxu0 %v6991
    %7789 = vmatprep.subr.mxu0 0.0
    %7790 = vmatpush1.msra.mxu0 %v6990
    %7791 = vmatprep.subr.mxu0 0.0
    %7792 = vmatpush1.msra.mxu0 %v6989
    %7793 = vmatprep.subr.mxu0 0.0
    %7794 = vmatpush2.msra.mxu0 %v7020
    %7795 = vmatprep.subr.mxu0 0.0
    %7796 = vmatpush2.msra.mxu0 %v7019
    %7797 = vmatprep.subr.mxu0 0.0
    %7798 = vmatpush2.msra.mxu0 %v7018
    %7799 = vmatprep.subr.mxu0 0.0
    %7800 = vmatpush2.msra.mxu0 %v7017
    %7801 = vmatprep.subr.mxu0 0.0
    %7802 = vmatpush2.msra.mxu0 %v7016
    %7803 = vmatprep.subr.mxu0 0.0
    %7804 = vmatpush2.msra.mxu0 %v7015
    %7805 = vmatprep.subr.mxu0 0.0
    %7806 = vmatpush2.msra.mxu0 %v7014
    %7807 = vmatprep.subr.mxu0 0.0
    %7808 = vmatpush2.msra.mxu0 %v7013
    %7809 = vmatprep.subr.mxu0 0.0
    %7810 = vmatpush2.msra.mxu0 %v7012
    %7811 = vmatprep.subr.mxu0 0.0
    %7812 = vmatpush2.msra.mxu0 %v7011
    %7813 = vmatprep.subr.mxu0 0.0
    %7814 = vmatpush2.msra.mxu0 %v7010
    %7815 = vmatprep.subr.mxu0 0.0
    %7816 = vmatpush2.msra.mxu0 %v7009
    %7817 = vmatprep.subr.mxu0 0.0
    %7818 = vmatpush2.msra.mxu0 %v7008
    %7819 = vmatprep.subr.mxu0 0.0
    %7820 = vmatpush2.msra.mxu0 %v7007
    %7821 = vmatprep.subr.mxu0 0.0
    %7822 = vmatpush2.msra.mxu0 %v7006
    %7823 = vmatprep.subr.mxu0 0.0
    %7824 = vmatpush2.msra.mxu0 %v7005
    %7825 = vmatprep.mubr.f32.mxu0 %v7680
    %7826 = vmatmul.mubr.f32.gmra.mxu0 %v7679
    %v7827 = vpop.f32.mrf.mxu0
    %v7828 = vadd.f32 %v7758, %v7827
    %v7829 = vpop.f32.mrf.mxu0
    %7830 = vdwg.mxu0
    %7831 = vmatprep.subr.mxu0 0.0
    %7832 = vmatpush1.msra.mxu0 %v7036
    %7833 = vmatprep.subr.mxu0 0.0
    %7834 = vmatpush1.msra.mxu0 %v7035
    %7835 = vmatprep.subr.mxu0 0.0
    %7836 = vmatpush1.msra.mxu0 %v7034
    %7837 = vmatprep.subr.mxu0 0.0
    %7838 = vmatpush1.msra.mxu0 %v7033
    %7839 = vmatprep.subr.mxu0 0.0
    %7840 = vmatpush1.msra.mxu0 %v7032
    %7841 = vmatprep.subr.mxu0 0.0
    %7842 = vmatpush1.msra.mxu0 %v7031
    %7843 = vmatprep.subr.mxu0 0.0
    %7844 = vmatpush1.msra.mxu0 %v7030
    %7845 = vmatprep.subr.mxu0 0.0
    %7846 = vmatpush1.msra.mxu0 %v7029
    %7847 = vmatprep.subr.mxu0 0.0
    %7848 = vmatpush1.msra.mxu0 %v7028
    %7849 = vmatprep.subr.mxu0 0.0
    %7850 = vmatpush1.msra.mxu0 %v7027
    %7851 = vmatprep.subr.mxu0 0.0
    %7852 = vmatpush1.msra.mxu0 %v7026
    %7853 = vmatprep.subr.mxu0 0.0
    %7854 = vmatpush1.msra.mxu0 %v7025
    %7855 = vmatprep.subr.mxu0 0.0
    %7856 = vmatpush1.msra.mxu0 %v7024
    %7857 = vmatprep.subr.mxu0 0.0
    %7858 = vmatpush1.msra.mxu0 %v7023
    %7859 = vmatprep.subr.mxu0 0.0
    %7860 = vmatpush1.msra.mxu0 %v7022
    %7861 = vmatprep.subr.mxu0 0.0
    %7862 = vmatpush1.msra.mxu0 %v7021
    %7863 = vmatprep.subr.mxu0 0.0
    %7864 = vmatpush2.msra.mxu0 %v7052
    %7865 = vmatprep.subr.mxu0 0.0
    %7866 = vmatpush2.msra.mxu0 %v7051
    %7867 = vmatprep.subr.mxu0 0.0
    %7868 = vmatpush2.msra.mxu0 %v7050
    %7869 = vmatprep.subr.mxu0 0.0
    %7870 = vmatpush2.msra.mxu0 %v7049
    %7871 = vmatprep.subr.mxu0 0.0
    %7872 = vmatpush2.msra.mxu0 %v7048
    %7873 = vmatprep.subr.mxu0 0.0
    %7874 = vmatpush2.msra.mxu0 %v7047
    %7875 = vmatprep.subr.mxu0 0.0
    %7876 = vmatpush2.msra.mxu0 %v7046
    %7877 = vmatprep.subr.mxu0 0.0
    %7878 = vmatpush2.msra.mxu0 %v7045
    %7879 = vmatprep.subr.mxu0 0.0
    %7880 = vmatpush2.msra.mxu0 %v7044
    %7881 = vmatprep.subr.mxu0 0.0
    %7882 = vmatpush2.msra.mxu0 %v7043
    %7883 = vmatprep.subr.mxu0 0.0
    %7884 = vmatpush2.msra.mxu0 %v7042
    %7885 = vmatprep.subr.mxu0 0.0
    %7886 = vmatpush2.msra.mxu0 %v7041
    %7887 = vmatprep.subr.mxu0 0.0
    %7888 = vmatpush2.msra.mxu0 %v7040
    %7889 = vmatprep.subr.mxu0 0.0
    %7890 = vmatpush2.msra.mxu0 %v7039
    %7891 = vmatprep.subr.mxu0 0.0
    %7892 = vmatpush2.msra.mxu0 %v7038
    %7893 = vmatprep.subr.mxu0 0.0
    %7894 = vmatpush2.msra.mxu0 %v7037
    %7895 = vmatprep.mubr.f32.mxu0 %v7682
    %7896 = vmatmul.mubr.f32.gmra.mxu0 %v7681
    %v7897 = vpop.f32.mrf.mxu0
    %v7898 = vadd.f32 %v7828, %v7897
    %v7899 = vpop.f32.mrf.mxu0
    %7900 = vdwg.mxu0
    %7901 = vmatprep.subr.mxu0 0.0
    %7902 = vmatpush1.msra.mxu0 %v7068
    %7903 = vmatprep.subr.mxu0 0.0
    %7904 = vmatpush1.msra.mxu0 %v7067
    %7905 = vmatprep.subr.mxu0 0.0
    %7906 = vmatpush1.msra.mxu0 %v7066
    %7907 = vmatprep.subr.mxu0 0.0
    %7908 = vmatpush1.msra.mxu0 %v7065
    %7909 = vmatprep.subr.mxu0 0.0
    %7910 = vmatpush1.msra.mxu0 %v7064
    %7911 = vmatprep.subr.mxu0 0.0
    %7912 = vmatpush1.msra.mxu0 %v7063
    %7913 = vmatprep.subr.mxu0 0.0
    %7914 = vmatpush1.msra.mxu0 %v7062
    %7915 = vmatprep.subr.mxu0 0.0
    %7916 = vmatpush1.msra.mxu0 %v7061
    %7917 = vmatprep.subr.mxu0 0.0
    %7918 = vmatpush1.msra.mxu0 %v7060
    %7919 = vmatprep.subr.mxu0 0.0
    %7920 = vmatpush1.msra.mxu0 %v7059
    %7921 = vmatprep.subr.mxu0 0.0
    %7922 = vmatpush1.msra.mxu0 %v7058
    %7923 = vmatprep.subr.mxu0 0.0
    %7924 = vmatpush1.msra.mxu0 %v7057
    %7925 = vmatprep.subr.mxu0 0.0
    %7926 = vmatpush1.msra.mxu0 %v7056
    %7927 = vmatprep.subr.mxu0 0.0
    %7928 = vmatpush1.msra.mxu0 %v7055
    %7929 = vmatprep.subr.mxu0 0.0
    %7930 = vmatpush1.msra.mxu0 %v7054
    %7931 = vmatprep.subr.mxu0 0.0
    %7932 = vmatpush1.msra.mxu0 %v7053
    %7933 = vmatprep.subr.mxu0 0.0
    %7934 = vmatpush2.msra.mxu0 %v7084
    %7935 = vmatprep.subr.mxu0 0.0
    %7936 = vmatpush2.msra.mxu0 %v7083
    %7937 = vmatprep.subr.mxu0 0.0
    %7938 = vmatpush2.msra.mxu0 %v7082
    %7939 = vmatprep.subr.mxu0 0.0
    %7940 = vmatpush2.msra.mxu0 %v7081
    %7941 = vmatprep.subr.mxu0 0.0
    %7942 = vmatpush2.msra.mxu0 %v7080
    %7943 = vmatprep.subr.mxu0 0.0
    %7944 = vmatpush2.msra.mxu0 %v7079
    %7945 = vmatprep.subr.mxu0 0.0
    %7946 = vmatpush2.msra.mxu0 %v7078
    %7947 = vmatprep.subr.mxu0 0.0
    %7948 = vmatpush2.msra.mxu0 %v7077
    %7949 = vmatprep.subr.mxu0 0.0
    %7950 = vmatpush2.msra.mxu0 %v7076
    %7951 = vmatprep.subr.mxu0 0.0
    %7952 = vmatpush2.msra.mxu0 %v7075
    %7953 = vmatprep.subr.mxu0 0.0
    %7954 = vmatpush2.msra.mxu0 %v7074
    %7955 = vmatprep.subr.mxu0 0.0
    %7956 = vmatpush2.msra.mxu0 %v7073
    %7957 = vmatprep.subr.mxu0 0.0
    %7958 = vmatpush2.msra.mxu0 %v7072
    %7959 = vmatprep.subr.mxu0 0.0
    %7960 = vmatpush2.msra.mxu0 %v7071
    %7961 = vmatprep.subr.mxu0 0.0
    %7962 = vmatpush2.msra.mxu0 %v7070
    %7963 = vmatprep.subr.mxu0 0.0
    %7964 = vmatpush2.msra.mxu0 %v7069
    %7965 = vmatprep.mubr.f32.mxu0 %v7684
    %7966 = vmatmul.mubr.f32.gmra.mxu0 %v7683
    %v7967 = vpop.f32.mrf.mxu0
    %v7968 = vadd.f32 %v7898, %v7967
    %v7969 = vpop.f32.mrf.mxu0
    %7970 = vdwg.mxu0
    %vm7971 = vcmask 17408
    %7972 = vst.msk [vmem:[#allocation6] sm:$0x3] %vm7971, %v7968
    // Predicated region
    $region182: #{convit_forward.1} parent=1 // pred_check
      _
    $region183: #{convit_forward.1} parent=1 // pred_check_branch
      %7974 = sbr.rel (0) target = $region185
    $region184: #{convit_forward.1} parent=1 // pred_region
      %s7976 = ssub.s32 32, 32
      %7977 = vsyncadd [#allocation5], %s7976
      %s7979 = sshll.u32 [#allocation6], 4
      %s7980 = int_to_ptr.vmem [resolvable:$true] %s7979
      %7982 = dma.vmem_to_hbm [thread:$0]  %s7980, 32, %s89, [#allocation5]
    $region185: #{convit_forward.1} parent=1 // pred_fallthru
      _
    // Predicated region
    $region186: #{convit_forward.1} parent=1 // pred_check
      _
    $region187: #{convit_forward.1} parent=1 // pred_check_branch
      %7984 = sbr.rel (0) target = $region189
    $region188: #{convit_forward.1} parent=1 // pred_region
      %7985 = dma.done [#allocation5], 32
    $region189: #{convit_forward.1} parent=1 // pred_fallthru
      _
    %7986 = vsyncpa [#allocation4], 1
    %7987 = vsyncpa [#allocation5], 1

</llo_original>
